<compile_context>
chip_gen: v6e
topology: v6e:2x2x1
jax: 0.10.0
libtpu: 0.0.40
codegen_flags: <defaults>
</compile_context>

<pallas_src>
import jax
import jax.numpy as jnp
from jax.experimental import pallas as pl
from jax.experimental.pallas import tpu as pltpu

EPS = 1e-5
CIN_PAD = 8          # layer-1 input channels padded 3 -> 8 for alignment


# ----------------------------------------------------------------------------
# In-kernel helpers (all operate on VMEM-resident values / scratch refs).
# ----------------------------------------------------------------------------
def _conv_bn_relu(pad_ref, w_ref, gamma_ref, beta_ref, N, H, W):
    """3x3 'same' conv (single im2col matmul) + train-mode BN + ReLU.

    pad_ref : (N, H+2, W+2, Cin) zero-padded input (VMEM scratch ref)
    w_ref   : (9*Cin, Cout) weights, tap-major ((ky,kx) outer, Cin inner)
    gamma_ref, beta_ref : (1, Cout)
    returns : (N*H*W, Cout) fp32 activations, rows ordered (n, h, w)
    """
    # Gather the 9 shifted windows and build the im2col patch once.
    taps = []
    for ky in range(3):
        for kx in range(3):
            taps.append(pad_ref[:, ky:ky + H, kx:kx + W, :])     # (N,H,W,Cin)
    patch = jnp.concatenate(taps, axis=-1)                       # (N,H,W,9*Cin)
    k = patch.shape[-1]
    patch = patch.reshape(N * H * W, k)

    # Single MXU matmul per layer (fp32 operands; bf16 operands would be a
    # further v6e/v7x-only speedup but change numerics slightly).
    y = jnp.dot(patch, w_ref[...], preferred_element_type=jnp.float32)

    # Train-mode BatchNorm: batch mean + biased variance over all (n,h,w) rows.
    mean = jnp.mean(y, axis=0, keepdims=True)                    # (1, Cout)
    var = jnp.mean(jnp.square(y - mean), axis=0, keepdims=True)  # (1, Cout)
    scale = gamma_ref[...] * jax.lax.rsqrt(var + EPS)            # (1, Cout)
    shift = beta_ref[...] - mean * scale
    return jnp.maximum(y * scale + shift, 0.0)                   # (N*H*W, Cout)


def _maxpool2x2(z, N, H, W, C):
    """2x2 stride-2 max pool on row-flattened (N*H*W, C) -> (N, H/2, W/2, C).

    Lane dim (C) is untouched; only major/sublane dims are re-factored.
    """
    z6 = z.reshape(N, H // 2, 2, W // 2, 2, C)
    return jnp.maximum(
        jnp.maximum(z6[:, :, 0, :, 0, :], z6[:, :, 0, :, 1, :]),
        jnp.maximum(z6[:, :, 1, :, 0, :], z6[:, :, 1, :, 1, :]))


# ----------------------------------------------------------------------------
# The single fused kernel: all 4 blocks, whole batch in VMEM.
# ----------------------------------------------------------------------------
def custom_cnn_kernel(x_ref, w1_ref, w2_ref, w3_ref, w4_ref,
                      g1_ref, b1_ref, g2_ref, b2_ref,
                      g3_ref, b3_ref, g4_ref, b4_ref,
                      o_ref,
                      pad1, pad2, pad3, pad4):
    N, H, W, _ = x_ref.shape                     # (N, 16, 16, CIN_PAD)

    # ---- Block 1: conv(3->32) + BN + ReLU + maxpool -------------------------
    pad1[...] = jnp.zeros_like(pad1)             # zero borders (and interior)
    pad1[:, 1:1 + H, 1:1 + W, :] = x_ref[...]
    z1 = _conv_bn_relu(pad1, w1_ref, g1_ref, b1_ref, N, H, W)   # (N*256, 32)
    p1 = _maxpool2x2(z1, N, H, W, 32)                           # (N, 8, 8, 32)

    # ---- Block 2: conv(32->64) + BN + ReLU + maxpool ------------------------
    H2, W2 = H // 2, W // 2
    pad2[...] = jnp.zeros_like(pad2)
    pad2[:, 1:1 + H2, 1:1 + W2, :] = p1
    z2 = _conv_bn_relu(pad2, w2_ref, g2_ref, b2_ref, N, H2, W2)  # (N*64, 64)
    p2 = _maxpool2x2(z2, N, H2, W2, 64)                          # (N, 4, 4, 64)

    # ---- Block 3: conv(64->128) + BN + ReLU + maxpool -----------------------
    H3, W3 = H2 // 2, W2 // 2
    pad3[...] = jnp.zeros_like(pad3)
    pad3[:, 1:1 + H3, 1:1 + W3, :] = p2
    z3 = _conv_bn_relu(pad3, w3_ref, g3_ref, b3_ref, N, H3, W3)  # (N*16, 128)
    p3 = _maxpool2x2(z3, N, H3, W3, 128)                         # (N, 2, 2, 128)

    # ---- Block 4: conv(128->256) + BN + ReLU + global average pool ----------
    H4, W4 = H3 // 2, W3 // 2
    pad4[...] = jnp.zeros_like(pad4)
    pad4[:, 1:1 + H4, 1:1 + W4, :] = p3
    z4 = _conv_bn_relu(pad4, w4_ref, g4_ref, b4_ref, N, H4, W4)  # (N*4, 256)
    z4 = z4.reshape(N, H4 * W4, 256)
    o_ref[...] = jnp.mean(z4, axis=1)                            # (N, 256)


# ----------------------------------------------------------------------------
# Wrapper: layout plumbing + one pallas_call.
# ----------------------------------------------------------------------------
def custom_cnn_forward(x_nchw, params):
    N, cin, H, W = x_nchw.shape
    x = jnp.transpose(x_nchw, (0, 2, 3, 1)).astype(jnp.float32)       # NHWC
    x = jnp.pad(x, ((0, 0), (0, 0), (0, 0), (0, CIN_PAD - cin)))      # 3 -> 8

    (w1, g1, b1), (w2, g2, b2), (w3, g3, b3), (w4, g4, b4) = params
    # Flatten conv weights (3,3,Cin,Cout) -> (9*Cin, Cout), tap-major /
    # channel-minor, matching the in-kernel im2col concat order.
    w1f = jnp.pad(w1, ((0, 0), (0, 0), (0, CIN_PAD - cin), (0, 0))
                  ).reshape(9 * CIN_PAD, 32)
    w2f = w2.reshape(9 * 32, 64)
    w3f = w3.reshape(9 * 64, 128)
    w4f = w4.reshape(9 * 128, 256)

    def full(shape):
        return pl.BlockSpec(shape, lambda i, _s=shape: (0,) * len(_s))

    pooled = pl.pallas_call(
        custom_cnn_kernel,
        out_shape=jax.ShapeDtypeStruct((N, 256), jnp.float32),
        grid=(1,),
        in_specs=[
            full((N, H, W, CIN_PAD)),
            full((9 * CIN_PAD, 32)), full((9 * 32, 64)),
            full((9 * 64, 128)), full((9 * 128, 256)),
            full((1, 32)), full((1, 32)),
            full((1, 64)), full((1, 64)),
            full((1, 128)), full((1, 128)),
            full((1, 256)), full((1, 256)),
        ],
        out_specs=full((N, 256)),
        scratch_shapes=[
            pltpu.VMEM((N, H + 2, W + 2, CIN_PAD), jnp.float32),
            pltpu.VMEM((N, H // 2 + 2, W // 2 + 2, 32), jnp.float32),
            pltpu.VMEM((N, H // 4 + 2, W // 4 + 2, 64), jnp.float32),
            pltpu.VMEM((N, H // 8 + 2, W // 8 + 2, 128), jnp.float32),
        ],
        compiler_params=pltpu.CompilerParams(
            dimension_semantics=("arbitrary",)),
    )(x, w1f, w2f, w3f, w4f,
      g1.reshape(1, 32), b1.reshape(1, 32),
      g2.reshape(1, 64), b2.reshape(1, 64),
      g3.reshape(1, 128), b3.reshape(1, 128),
      g4.reshape(1, 256), b4.reshape(1, 256))

    return pooled.reshape(N, 256, 1, 1)          # PyTorch output layout


# ----------------------------------------------------------------------------
# Parameters (deterministic, matching the module's shapes: 3->32->64->128->256).
# Conv biases are omitted: with train-mode BatchNorm right after each conv,
# a per-channel bias is cancelled exactly by the batch-mean subtraction.
# ----------------------------------------------------------------------------
def init_params(key):
    chans = [3, 32, 64, 128, 256]
    params = []
    for i in range(4):
        cin, cout = chans[i], chans[i + 1]
        key, kw = jax.random.split(key)
        bound = 1.0 / jnp.sqrt(jnp.float32(cin * 9))    # kaiming-uniform-ish
        w = jax.random.uniform(kw, (3, 3, cin, cout), jnp.float32, -bound, bound)
        gamma = jnp.ones((cout,), jnp.float32)          # PyTorch BN init
        beta = jnp.zeros((cout,), jnp.float32)
        params.append((w, gamma, beta))
    return params
# TODO(synk): BatchNorm running_mean/running_var are not updated (train-mode
# state side effect); it does not affect the forward output.


if __name__ == "__main__":
    key = jax.random.PRNGKey(0)
    kx, kp = jax.random.split(key)
    # Typical CustomCNN input: batch=2, 3 channels, 16x16 (NCHW).
    x = jax.random.normal(kx, (2, 3, 16, 16), dtype=jnp.float32)
    params = init_params(kp)

    out = jax.jit(custom_cnn_forward)(x, params)
    out = jax.block_until_ready(out)
    assert out.shape == (2, 256, 1, 1)
    assert bool(jnp.all(jnp.isfinite(out)))
    print("KERNEL_OK")
</pallas_src>

<mosaic_0001>
module attributes {stable_mosaic.version = 11 : i64} {
  func.func @custom_cnn_kernel(%arg0: i32, %arg1: memref<2x16x16x8xf32, #tpu.memory_space<vmem>>, %arg2: memref<72x32xf32, #tpu.memory_space<vmem>>, %arg3: memref<288x64xf32, #tpu.memory_space<vmem>>, %arg4: memref<576x128xf32, #tpu.memory_space<vmem>>, %arg5: memref<1152x256xf32, #tpu.memory_space<vmem>>, %arg6: memref<1x32xf32, #tpu.memory_space<vmem>>, %arg7: memref<1x32xf32, #tpu.memory_space<vmem>>, %arg8: memref<1x64xf32, #tpu.memory_space<vmem>>, %arg9: memref<1x64xf32, #tpu.memory_space<vmem>>, %arg10: memref<1x128xf32, #tpu.memory_space<vmem>>, %arg11: memref<1x128xf32, #tpu.memory_space<vmem>>, %arg12: memref<1x256xf32, #tpu.memory_space<vmem>>, %arg13: memref<1x256xf32, #tpu.memory_space<vmem>>, %arg14: memref<2x256xf32, #tpu.memory_space<vmem>>, %arg15: memref<2x18x18x8xf32, #tpu.memory_space<vmem>>, %arg16: memref<2x10x10x32xf32, #tpu.memory_space<vmem>>, %arg17: memref<2x6x6x64xf32, #tpu.memory_space<vmem>>, %arg18: memref<2x4x4x128xf32, #tpu.memory_space<vmem>>) attributes {dimension_semantics = [#tpu.dimension_semantics<arbitrary>], iteration_bounds = array<i64: 1>, scalar_prefetch = 0 : i64, scratch_operands = 4 : i64, tpu.core_type = #tpu.core_type<tc>, window_params = [{pipeline_mode = #tpu.pipeline_mode<synchronous>, transform_indices = @transform_0, window_bounds = array<i64: 2, 16, 16, 8>}, {pipeline_mode = #tpu.pipeline_mode<synchronous>, transform_indices = @transform_1, window_bounds = array<i64: 72, 32>}, {pipeline_mode = #tpu.pipeline_mode<synchronous>, transform_indices = @transform_2, window_bounds = array<i64: 288, 64>}, {pipeline_mode = #tpu.pipeline_mode<synchronous>, transform_indices = @transform_3, window_bounds = array<i64: 576, 128>}, {pipeline_mode = #tpu.pipeline_mode<synchronous>, transform_indices = @transform_4, window_bounds = array<i64: 1152, 256>}, {pipeline_mode = #tpu.pipeline_mode<synchronous>, transform_indices = @transform_5, window_bounds = array<i64: 1, 32>}, {pipeline_mode = #tpu.pipeline_mode<synchronous>, transform_indices = @transform_6, window_bounds = array<i64: 1, 32>}, {pipeline_mode = #tpu.pipeline_mode<synchronous>, transform_indices = @transform_7, window_bounds = array<i64: 1, 64>}, {pipeline_mode = #tpu.pipeline_mode<synchronous>, transform_indices = @transform_8, window_bounds = array<i64: 1, 64>}, {pipeline_mode = #tpu.pipeline_mode<synchronous>, transform_indices = @transform_9, window_bounds = array<i64: 1, 128>}, {pipeline_mode = #tpu.pipeline_mode<synchronous>, transform_indices = @transform_10, window_bounds = array<i64: 1, 128>}, {pipeline_mode = #tpu.pipeline_mode<synchronous>, transform_indices = @transform_11, window_bounds = array<i64: 1, 256>}, {pipeline_mode = #tpu.pipeline_mode<synchronous>, transform_indices = @transform_12, window_bounds = array<i64: 1, 256>}, {pipeline_mode = #tpu.pipeline_mode<synchronous>, transform_indices = @transform_13, window_bounds = array<i64: 2, 256>}]} {
    %cst = arith.constant 0.000000e+00 : f32
    %0 = vector.broadcast %cst : f32 to vector<2x18x18x8xf32>
    %c0 = arith.constant 0 : index
    %c0_0 = arith.constant 0 : index
    %c0_1 = arith.constant 0 : index
    %c0_2 = arith.constant 0 : index
    %1 = vector.load %arg15[%c0, %c0_0, %c0_1, %c0_2] : memref<2x18x18x8xf32, #tpu.memory_space<vmem>>, vector<2x18x18x8xf32>
    tpu.vector_store %arg15[%c0, %c0_0, %c0_1, %c0_2], %0 {strides = array<i32>} : memref<2x18x18x8xf32, #tpu.memory_space<vmem>>, vector<2x18x18x8xf32>,
    %c0_3 = arith.constant 0 : index
    %c0_4 = arith.constant 0 : index
    %c0_5 = arith.constant 0 : index
    %c0_6 = arith.constant 0 : index
    %2 = vector.load %arg1[%c0_3, %c0_4, %c0_5, %c0_6] : memref<2x16x16x8xf32, #tpu.memory_space<vmem>>, vector<2x16x16x8xf32>
    %c0_7 = arith.constant 0 : index
    %c1 = arith.constant 1 : index
    %c1_8 = arith.constant 1 : index
    %c0_9 = arith.constant 0 : index
    %3 = vector.load %arg15[%c0_7, %c1, %c1_8, %c0_9] : memref<2x18x18x8xf32, #tpu.memory_space<vmem>>, vector<2x16x16x8xf32>
    tpu.vector_store %arg15[%c0_7, %c1, %c1_8, %c0_9], %2 {strides = array<i32>} : memref<2x18x18x8xf32, #tpu.memory_space<vmem>>, vector<2x16x16x8xf32>,
    %c0_10 = arith.constant 0 : index
    %c0_11 = arith.constant 0 : index
    %c0_12 = arith.constant 0 : index
    %c0_13 = arith.constant 0 : index
    %4 = vector.load %arg15[%c0_10, %c0_11, %c0_12, %c0_13] : memref<2x18x18x8xf32, #tpu.memory_space<vmem>>, vector<2x16x16x8xf32>
    %c0_14 = arith.constant 0 : index
    %c0_15 = arith.constant 0 : index
    %c1_16 = arith.constant 1 : index
    %c0_17 = arith.constant 0 : index
    %5 = vector.load %arg15[%c0_14, %c0_15, %c1_16, %c0_17] : memref<2x18x18x8xf32, #tpu.memory_space<vmem>>, vector<2x16x16x8xf32>
    %c0_18 = arith.constant 0 : index
    %c0_19 = arith.constant 0 : index
    %c2 = arith.constant 2 : index
    %c0_20 = arith.constant 0 : index
    %6 = vector.load %arg15[%c0_18, %c0_19, %c2, %c0_20] : memref<2x18x18x8xf32, #tpu.memory_space<vmem>>, vector<2x16x16x8xf32>
    %c0_21 = arith.constant 0 : index
    %c1_22 = arith.constant 1 : index
    %c0_23 = arith.constant 0 : index
    %c0_24 = arith.constant 0 : index
    %7 = vector.load %arg15[%c0_21, %c1_22, %c0_23, %c0_24] : memref<2x18x18x8xf32, #tpu.memory_space<vmem>>, vector<2x16x16x8xf32>
    %c0_25 = arith.constant 0 : index
    %c1_26 = arith.constant 1 : index
    %c1_27 = arith.constant 1 : index
    %c0_28 = arith.constant 0 : index
    %8 = vector.load %arg15[%c0_25, %c1_26, %c1_27, %c0_28] : memref<2x18x18x8xf32, #tpu.memory_space<vmem>>, vector<2x16x16x8xf32>
    %c0_29 = arith.constant 0 : index
    %c1_30 = arith.constant 1 : index
    %c2_31 = arith.constant 2 : index
    %c0_32 = arith.constant 0 : index
    %9 = vector.load %arg15[%c0_29, %c1_30, %c2_31, %c0_32] : memref<2x18x18x8xf32, #tpu.memory_space<vmem>>, vector<2x16x16x8xf32>
    %c0_33 = arith.constant 0 : index
    %c2_34 = arith.constant 2 : index
    %c0_35 = arith.constant 0 : index
    %c0_36 = arith.constant 0 : index
    %10 = vector.load %arg15[%c0_33, %c2_34, %c0_35, %c0_36] : memref<2x18x18x8xf32, #tpu.memory_space<vmem>>, vector<2x16x16x8xf32>
    %c0_37 = arith.constant 0 : index
    %c2_38 = arith.constant 2 : index
    %c1_39 = arith.constant 1 : index
    %c0_40 = arith.constant 0 : index
    %11 = vector.load %arg15[%c0_37, %c2_38, %c1_39, %c0_40] : memref<2x18x18x8xf32, #tpu.memory_space<vmem>>, vector<2x16x16x8xf32>
    %c0_41 = arith.constant 0 : index
    %c2_42 = arith.constant 2 : index
    %c2_43 = arith.constant 2 : index
    %c0_44 = arith.constant 0 : index
    %12 = vector.load %arg15[%c0_41, %c2_42, %c2_43, %c0_44] : memref<2x18x18x8xf32, #tpu.memory_space<vmem>>, vector<2x16x16x8xf32>
    %13 = tpu.concatenate %4, %5, %6, %7, %8, %9, %10, %11, %12 in 3 : vector<2x16x16x8xf32>, vector<2x16x16x8xf32>, vector<2x16x16x8xf32>, vector<2x16x16x8xf32>, vector<2x16x16x8xf32>, vector<2x16x16x8xf32>, vector<2x16x16x8xf32>, vector<2x16x16x8xf32>, vector<2x16x16x8xf32> -> vector<2x16x16x72xf32>
    %14 = vector.shape_cast %13 : vector<2x16x16x72xf32> to vector<512x72xf32>
    %c0_45 = arith.constant 0 : index
    %c0_46 = arith.constant 0 : index
    %15 = vector.load %arg2[%c0_45, %c0_46] : memref<72x32xf32, #tpu.memory_space<vmem>>, vector<72x32xf32>
    %cst_47 = arith.constant dense<0.000000e+00> : vector<512x32xf32>
    %16 = tpu.matmul %14, %15, %cst_47 {dimension_numbers = #tpu.dot_dimension_numbers<[1], [0], [0], [1], [0, 0, 1, 1], [], []>} : vector<512x72xf32>, vector<72x32xf32>, vector<512x32xf32> -> vector<512x32xf32>
    %cst_48 = arith.constant dense<0.000000e+00> : vector<32xf32>
    %17 = vector.multi_reduction <add>, %16, %cst_48 [0] : vector<512x32xf32> to vector<32xf32>
    %18 = vector.shape_cast %17 : vector<32xf32> to vector<1x32xf32>
    %cst_49 = arith.constant 5.120000e+02 : f32
    %19 = vector.broadcast %cst_49 : f32 to vector<1x32xf32>
    %20 = arith.divf %18, %19 : vector<1x32xf32>
    %21 = vector.broadcast %20 : vector<1x32xf32> to vector<512x32xf32>
    %22 = arith.subf %16, %21 : vector<512x32xf32>
    %23 = arith.mulf %22, %22 : vector<512x32xf32>
    %cst_50 = arith.constant dense<0.000000e+00> : vector<32xf32>
    %24 = vector.multi_reduction <add>, %23, %cst_50 [0] : vector<512x32xf32> to vector<32xf32>
    %25 = vector.shape_cast %24 : vector<32xf32> to vector<1x32xf32>
    %cst_51 = arith.constant 5.120000e+02 : f32
    %26 = vector.broadcast %cst_51 : f32 to vector<1x32xf32>
    %27 = arith.divf %25, %26 : vector<1x32xf32>
    %c0_52 = arith.constant 0 : index
    %c0_53 = arith.constant 0 : index
    %28 = vector.load %arg6[%c0_52, %c0_53] : memref<1x32xf32, #tpu.memory_space<vmem>>, vector<1x32xf32>
    %cst_54 = arith.constant 9.99999974E-6 : f32
    %29 = vector.broadcast %cst_54 : f32 to vector<1x32xf32>
    %30 = arith.addf %27, %29 : vector<1x32xf32>
    %31 = math.rsqrt %30 : vector<1x32xf32>
    %32 = arith.mulf %28, %31 : vector<1x32xf32>
    %c0_55 = arith.constant 0 : index
    %c0_56 = arith.constant 0 : index
    %33 = vector.load %arg7[%c0_55, %c0_56] : memref<1x32xf32, #tpu.memory_space<vmem>>, vector<1x32xf32>
    %34 = arith.mulf %20, %32 : vector<1x32xf32>
    %35 = arith.subf %33, %34 : vector<1x32xf32>
    %36 = vector.broadcast %32 : vector<1x32xf32> to vector<512x32xf32>
    %37 = arith.mulf %16, %36 : vector<512x32xf32>
    %38 = vector.broadcast %35 : vector<1x32xf32> to vector<512x32xf32>
    %39 = arith.addf %37, %38 : vector<512x32xf32>
    %cst_57 = arith.constant 0.000000e+00 : f32
    %40 = vector.broadcast %cst_57 : f32 to vector<512x32xf32>
    %41 = arith.maximumf %39, %40 : vector<512x32xf32>
    %42 = vector.shape_cast %41 : vector<512x32xf32> to vector<2x8x2x8x2x32xf32>
    %43 = vector.extract_strided_slice %42 {offsets = [0, 0, 0, 0, 0, 0], sizes = [2, 8, 1, 8, 1, 32], strides = [1, 1, 1, 1, 1, 1]} : vector<2x8x2x8x2x32xf32> to vector<2x8x1x8x1x32xf32>
    %44 = vector.shape_cast %43 : vector<2x8x1x8x1x32xf32> to vector<2x8x8x32xf32>
    %45 = vector.extract_strided_slice %42 {offsets = [0, 0, 0, 0, 1, 0], sizes = [2, 8, 1, 8, 1, 32], strides = [1, 1, 1, 1, 1, 1]} : vector<2x8x2x8x2x32xf32> to vector<2x8x1x8x1x32xf32>
    %46 = vector.shape_cast %45 : vector<2x8x1x8x1x32xf32> to vector<2x8x8x32xf32>
    %47 = arith.maximumf %44, %46 : vector<2x8x8x32xf32>
    %48 = vector.extract_strided_slice %42 {offsets = [0, 0, 1, 0, 0, 0], sizes = [2, 8, 1, 8, 1, 32], strides = [1, 1, 1, 1, 1, 1]} : vector<2x8x2x8x2x32xf32> to vector<2x8x1x8x1x32xf32>
    %49 = vector.shape_cast %48 : vector<2x8x1x8x1x32xf32> to vector<2x8x8x32xf32>
    %50 = vector.extract_strided_slice %42 {offsets = [0, 0, 1, 0, 1, 0], sizes = [2, 8, 1, 8, 1, 32], strides = [1, 1, 1, 1, 1, 1]} : vector<2x8x2x8x2x32xf32> to vector<2x8x1x8x1x32xf32>
    %51 = vector.shape_cast %50 : vector<2x8x1x8x1x32xf32> to vector<2x8x8x32xf32>
    %52 = arith.maximumf %49, %51 : vector<2x8x8x32xf32>
    %53 = arith.maximumf %47, %52 : vector<2x8x8x32xf32>
    %cst_58 = arith.constant 0.000000e+00 : f32
    %54 = vector.broadcast %cst_58 : f32 to vector<2x10x10x32xf32>
    %c0_59 = arith.constant 0 : index
    %c0_60 = arith.constant 0 : index
    %c0_61 = arith.constant 0 : index
    %c0_62 = arith.constant 0 : index
    %55 = vector.load %arg16[%c0_59, %c0_60, %c0_61, %c0_62] : memref<2x10x10x32xf32, #tpu.memory_space<vmem>>, vector<2x10x10x32xf32>
    tpu.vector_store %arg16[%c0_59, %c0_60, %c0_61, %c0_62], %54 {strides = array<i32>} : memref<2x10x10x32xf32, #tpu.memory_space<vmem>>, vector<2x10x10x32xf32>,
    %c0_63 = arith.constant 0 : index
    %c1_64 = arith.constant 1 : index
    %c1_65 = arith.constant 1 : index
    %c0_66 = arith.constant 0 : index
    %56 = vector.load %arg16[%c0_63, %c1_64, %c1_65, %c0_66] : memref<2x10x10x32xf32, #tpu.memory_space<vmem>>, vector<2x8x8x32xf32>
    tpu.vector_store %arg16[%c0_63, %c1_64, %c1_65, %c0_66], %53 {strides = array<i32>} : memref<2x10x10x32xf32, #tpu.memory_space<vmem>>, vector<2x8x8x32xf32>,
    %c0_67 = arith.constant 0 : index
    %c0_68 = arith.constant 0 : index
    %c0_69 = arith.constant 0 : index
    %c0_70 = arith.constant 0 : index
    %57 = vector.load %arg16[%c0_67, %c0_68, %c0_69, %c0_70] : memref<2x10x10x32xf32, #tpu.memory_space<vmem>>, vector<2x8x8x32xf32>
    %c0_71 = arith.constant 0 : index
    %c0_72 = arith.constant 0 : index
    %c1_73 = arith.constant 1 : index
    %c0_74 = arith.constant 0 : index
    %58 = vector.load %arg16[%c0_71, %c0_72, %c1_73, %c0_74] : memref<2x10x10x32xf32, #tpu.memory_space<vmem>>, vector<2x8x8x32xf32>
    %c0_75 = arith.constant 0 : index
    %c0_76 = arith.constant 0 : index
    %c2_77 = arith.constant 2 : index
    %c0_78 = arith.constant 0 : index
    %59 = vector.load %arg16[%c0_75, %c0_76, %c2_77, %c0_78] : memref<2x10x10x32xf32, #tpu.memory_space<vmem>>, vector<2x8x8x32xf32>
    %c0_79 = arith.constant 0 : index
    %c1_80 = arith.constant 1 : index
    %c0_81 = arith.constant 0 : index
    %c0_82 = arith.constant 0 : index
    %60 = vector.load %arg16[%c0_79, %c1_80, %c0_81, %c0_82] : memref<2x10x10x32xf32, #tpu.memory_space<vmem>>, vector<2x8x8x32xf32>
    %c0_83 = arith.constant 0 : index
    %c1_84 = arith.constant 1 : index
    %c1_85 = arith.constant 1 : index
    %c0_86 = arith.constant 0 : index
    %61 = vector.load %arg16[%c0_83, %c1_84, %c1_85, %c0_86] : memref<2x10x10x32xf32, #tpu.memory_space<vmem>>, vector<2x8x8x32xf32>
    %c0_87 = arith.constant 0 : index
    %c1_88 = arith.constant 1 : index
    %c2_89 = arith.constant 2 : index
    %c0_90 = arith.constant 0 : index
    %62 = vector.load %arg16[%c0_87, %c1_88, %c2_89, %c0_90] : memref<2x10x10x32xf32, #tpu.memory_space<vmem>>, vector<2x8x8x32xf32>
    %c0_91 = arith.constant 0 : index
    %c2_92 = arith.constant 2 : index
    %c0_93 = arith.constant 0 : index
    %c0_94 = arith.constant 0 : index
    %63 = vector.load %arg16[%c0_91, %c2_92, %c0_93, %c0_94] : memref<2x10x10x32xf32, #tpu.memory_space<vmem>>, vector<2x8x8x32xf32>
    %c0_95 = arith.constant 0 : index
    %c2_96 = arith.constant 2 : index
    %c1_97 = arith.constant 1 : index
    %c0_98 = arith.constant 0 : index
    %64 = vector.load %arg16[%c0_95, %c2_96, %c1_97, %c0_98] : memref<2x10x10x32xf32, #tpu.memory_space<vmem>>, vector<2x8x8x32xf32>
    %c0_99 = arith.constant 0 : index
    %c2_100 = arith.constant 2 : index
    %c2_101 = arith.constant 2 : index
    %c0_102 = arith.constant 0 : index
    %65 = vector.load %arg16[%c0_99, %c2_100, %c2_101, %c0_102] : memref<2x10x10x32xf32, #tpu.memory_space<vmem>>, vector<2x8x8x32xf32>
    %66 = tpu.concatenate %57, %58, %59, %60, %61, %62, %63, %64, %65 in 3 : vector<2x8x8x32xf32>, vector<2x8x8x32xf32>, vector<2x8x8x32xf32>, vector<2x8x8x32xf32>, vector<2x8x8x32xf32>, vector<2x8x8x32xf32>, vector<2x8x8x32xf32>, vector<2x8x8x32xf32>, vector<2x8x8x32xf32> -> vector<2x8x8x288xf32>
    %67 = vector.shape_cast %66 : vector<2x8x8x288xf32> to vector<128x288xf32>
    %c0_103 = arith.constant 0 : index
    %c0_104 = arith.constant 0 : index
    %68 = vector.load %arg3[%c0_103, %c0_104] : memref<288x64xf32, #tpu.memory_space<vmem>>, vector<288x64xf32>
    %cst_105 = arith.constant dense<0.000000e+00> : vector<128x64xf32>
    %69 = tpu.matmul %67, %68, %cst_105 {dimension_numbers = #tpu.dot_dimension_numbers<[1], [0], [0], [1], [0, 0, 1, 1], [], []>} : vector<128x288xf32>, vector<288x64xf32>, vector<128x64xf32> -> vector<128x64xf32>
    %cst_106 = arith.constant dense<0.000000e+00> : vector<64xf32>
    %70 = vector.multi_reduction <add>, %69, %cst_106 [0] : vector<128x64xf32> to vector<64xf32>
    %71 = vector.shape_cast %70 : vector<64xf32> to vector<1x64xf32>
    %cst_107 = arith.constant 1.280000e+02 : f32
    %72 = vector.broadcast %cst_107 : f32 to vector<1x64xf32>
    %73 = arith.divf %71, %72 : vector<1x64xf32>
    %74 = vector.broadcast %73 : vector<1x64xf32> to vector<128x64xf32>
    %75 = arith.subf %69, %74 : vector<128x64xf32>
    %76 = arith.mulf %75, %75 : vector<128x64xf32>
    %cst_108 = arith.constant dense<0.000000e+00> : vector<64xf32>
    %77 = vector.multi_reduction <add>, %76, %cst_108 [0] : vector<128x64xf32> to vector<64xf32>
    %78 = vector.shape_cast %77 : vector<64xf32> to vector<1x64xf32>
    %cst_109 = arith.constant 1.280000e+02 : f32
    %79 = vector.broadcast %cst_109 : f32 to vector<1x64xf32>
    %80 = arith.divf %78, %79 : vector<1x64xf32>
    %c0_110 = arith.constant 0 : index
    %c0_111 = arith.constant 0 : index
    %81 = vector.load %arg8[%c0_110, %c0_111] : memref<1x64xf32, #tpu.memory_space<vmem>>, vector<1x64xf32>
    %cst_112 = arith.constant 9.99999974E-6 : f32
    %82 = vector.broadcast %cst_112 : f32 to vector<1x64xf32>
    %83 = arith.addf %80, %82 : vector<1x64xf32>
    %84 = math.rsqrt %83 : vector<1x64xf32>
    %85 = arith.mulf %81, %84 : vector<1x64xf32>
    %c0_113 = arith.constant 0 : index
    %c0_114 = arith.constant 0 : index
    %86 = vector.load %arg9[%c0_113, %c0_114] : memref<1x64xf32, #tpu.memory_space<vmem>>, vector<1x64xf32>
    %87 = arith.mulf %73, %85 : vector<1x64xf32>
    %88 = arith.subf %86, %87 : vector<1x64xf32>
    %89 = vector.broadcast %85 : vector<1x64xf32> to vector<128x64xf32>
    %90 = arith.mulf %69, %89 : vector<128x64xf32>
    %91 = vector.broadcast %88 : vector<1x64xf32> to vector<128x64xf32>
    %92 = arith.addf %90, %91 : vector<128x64xf32>
    %cst_115 = arith.constant 0.000000e+00 : f32
    %93 = vector.broadcast %cst_115 : f32 to vector<128x64xf32>
    %94 = arith.maximumf %92, %93 : vector<128x64xf32>
    %95 = vector.shape_cast %94 : vector<128x64xf32> to vector<2x4x2x4x2x64xf32>
    %96 = vector.extract_strided_slice %95 {offsets = [0, 0, 0, 0, 0, 0], sizes = [2, 4, 1, 4, 1, 64], strides = [1, 1, 1, 1, 1, 1]} : vector<2x4x2x4x2x64xf32> to vector<2x4x1x4x1x64xf32>
    %97 = vector.shape_cast %96 : vector<2x4x1x4x1x64xf32> to vector<2x4x4x64xf32>
    %98 = vector.extract_strided_slice %95 {offsets = [0, 0, 0, 0, 1, 0], sizes = [2, 4, 1, 4, 1, 64], strides = [1, 1, 1, 1, 1, 1]} : vector<2x4x2x4x2x64xf32> to vector<2x4x1x4x1x64xf32>
    %99 = vector.shape_cast %98 : vector<2x4x1x4x1x64xf32> to vector<2x4x4x64xf32>
    %100 = arith.maximumf %97, %99 : vector<2x4x4x64xf32>
    %101 = vector.extract_strided_slice %95 {offsets = [0, 0, 1, 0, 0, 0], sizes = [2, 4, 1, 4, 1, 64], strides = [1, 1, 1, 1, 1, 1]} : vector<2x4x2x4x2x64xf32> to vector<2x4x1x4x1x64xf32>
    %102 = vector.shape_cast %101 : vector<2x4x1x4x1x64xf32> to vector<2x4x4x64xf32>
    %103 = vector.extract_strided_slice %95 {offsets = [0, 0, 1, 0, 1, 0], sizes = [2, 4, 1, 4, 1, 64], strides = [1, 1, 1, 1, 1, 1]} : vector<2x4x2x4x2x64xf32> to vector<2x4x1x4x1x64xf32>
    %104 = vector.shape_cast %103 : vector<2x4x1x4x1x64xf32> to vector<2x4x4x64xf32>
    %105 = arith.maximumf %102, %104 : vector<2x4x4x64xf32>
    %106 = arith.maximumf %100, %105 : vector<2x4x4x64xf32>
    %cst_116 = arith.constant 0.000000e+00 : f32
    %107 = vector.broadcast %cst_116 : f32 to vector<2x6x6x64xf32>
    %c0_117 = arith.constant 0 : index
    %c0_118 = arith.constant 0 : index
    %c0_119 = arith.constant 0 : index
    %c0_120 = arith.constant 0 : index
    %108 = vector.load %arg17[%c0_117, %c0_118, %c0_119, %c0_120] : memref<2x6x6x64xf32, #tpu.memory_space<vmem>>, vector<2x6x6x64xf32>
    tpu.vector_store %arg17[%c0_117, %c0_118, %c0_119, %c0_120], %107 {strides = array<i32>} : memref<2x6x6x64xf32, #tpu.memory_space<vmem>>, vector<2x6x6x64xf32>,
    %c0_121 = arith.constant 0 : index
    %c1_122 = arith.constant 1 : index
    %c1_123 = arith.constant 1 : index
    %c0_124 = arith.constant 0 : index
    %109 = vector.load %arg17[%c0_121, %c1_122, %c1_123, %c0_124] : memref<2x6x6x64xf32, #tpu.memory_space<vmem>>, vector<2x4x4x64xf32>
    tpu.vector_store %arg17[%c0_121, %c1_122, %c1_123, %c0_124], %106 {strides = array<i32>} : memref<2x6x6x64xf32, #tpu.memory_space<vmem>>, vector<2x4x4x64xf32>,
    %c0_125 = arith.constant 0 : index
    %c0_126 = arith.constant 0 : index
    %c0_127 = arith.constant 0 : index
    %c0_128 = arith.constant 0 : index
    %110 = vector.load %arg17[%c0_125, %c0_126, %c0_127, %c0_128] : memref<2x6x6x64xf32, #tpu.memory_space<vmem>>, vector<2x4x4x64xf32>
    %c0_129 = arith.constant 0 : index
    %c0_130 = arith.constant 0 : index
    %c1_131 = arith.constant 1 : index
    %c0_132 = arith.constant 0 : index
    %111 = vector.load %arg17[%c0_129, %c0_130, %c1_131, %c0_132] : memref<2x6x6x64xf32, #tpu.memory_space<vmem>>, vector<2x4x4x64xf32>
    %c0_133 = arith.constant 0 : index
    %c0_134 = arith.constant 0 : index
    %c2_135 = arith.constant 2 : index
    %c0_136 = arith.constant 0 : index
    %112 = vector.load %arg17[%c0_133, %c0_134, %c2_135, %c0_136] : memref<2x6x6x64xf32, #tpu.memory_space<vmem>>, vector<2x4x4x64xf32>
    %c0_137 = arith.constant 0 : index
    %c1_138 = arith.constant 1 : index
    %c0_139 = arith.constant 0 : index
    %c0_140 = arith.constant 0 : index
    %113 = vector.load %arg17[%c0_137, %c1_138, %c0_139, %c0_140] : memref<2x6x6x64xf32, #tpu.memory_space<vmem>>, vector<2x4x4x64xf32>
    %c0_141 = arith.constant 0 : index
    %c1_142 = arith.constant 1 : index
    %c1_143 = arith.constant 1 : index
    %c0_144 = arith.constant 0 : index
    %114 = vector.load %arg17[%c0_141, %c1_142, %c1_143, %c0_144] : memref<2x6x6x64xf32, #tpu.memory_space<vmem>>, vector<2x4x4x64xf32>
    %c0_145 = arith.constant 0 : index
    %c1_146 = arith.constant 1 : index
    %c2_147 = arith.constant 2 : index
    %c0_148 = arith.constant 0 : index
    %115 = vector.load %arg17[%c0_145, %c1_146, %c2_147, %c0_148] : memref<2x6x6x64xf32, #tpu.memory_space<vmem>>, vector<2x4x4x64xf32>
    %c0_149 = arith.constant 0 : index
    %c2_150 = arith.constant 2 : index
    %c0_151 = arith.constant 0 : index
    %c0_152 = arith.constant 0 : index
    %116 = vector.load %arg17[%c0_149, %c2_150, %c0_151, %c0_152] : memref<2x6x6x64xf32, #tpu.memory_space<vmem>>, vector<2x4x4x64xf32>
    %c0_153 = arith.constant 0 : index
    %c2_154 = arith.constant 2 : index
    %c1_155 = arith.constant 1 : index
    %c0_156 = arith.constant 0 : index
    %117 = vector.load %arg17[%c0_153, %c2_154, %c1_155, %c0_156] : memref<2x6x6x64xf32, #tpu.memory_space<vmem>>, vector<2x4x4x64xf32>
    %c0_157 = arith.constant 0 : index
    %c2_158 = arith.constant 2 : index
    %c2_159 = arith.constant 2 : index
    %c0_160 = arith.constant 0 : index
    %118 = vector.load %arg17[%c0_157, %c2_158, %c2_159, %c0_160] : memref<2x6x6x64xf32, #tpu.memory_space<vmem>>, vector<2x4x4x64xf32>
    %119 = tpu.concatenate %110, %111, %112, %113, %114, %115, %116, %117, %118 in 3 : vector<2x4x4x64xf32>, vector<2x4x4x64xf32>, vector<2x4x4x64xf32>, vector<2x4x4x64xf32>, vector<2x4x4x64xf32>, vector<2x4x4x64xf32>, vector<2x4x4x64xf32>, vector<2x4x4x64xf32>, vector<2x4x4x64xf32> -> vector<2x4x4x576xf32>
    %120 = vector.shape_cast %119 : vector<2x4x4x576xf32> to vector<32x576xf32>
    %c0_161 = arith.constant 0 : index
    %c0_162 = arith.constant 0 : index
    %121 = vector.load %arg4[%c0_161, %c0_162] : memref<576x128xf32, #tpu.memory_space<vmem>>, vector<576x128xf32>
    %cst_163 = arith.constant dense<0.000000e+00> : vector<32x128xf32>
    %122 = tpu.matmul %120, %121, %cst_163 {dimension_numbers = #tpu.dot_dimension_numbers<[1], [0], [0], [1], [0, 0, 1, 1], [], []>} : vector<32x576xf32>, vector<576x128xf32>, vector<32x128xf32> -> vector<32x128xf32>
    %cst_164 = arith.constant dense<0.000000e+00> : vector<128xf32>
    %123 = vector.multi_reduction <add>, %122, %cst_164 [0] : vector<32x128xf32> to vector<128xf32>
    %124 = vector.shape_cast %123 : vector<128xf32> to vector<1x128xf32>
    %cst_165 = arith.constant 3.200000e+01 : f32
    %125 = vector.broadcast %cst_165 : f32 to vector<1x128xf32>
    %126 = arith.divf %124, %125 : vector<1x128xf32>
    %127 = vector.broadcast %126 : vector<1x128xf32> to vector<32x128xf32>
    %128 = arith.subf %122, %127 : vector<32x128xf32>
    %129 = arith.mulf %128, %128 : vector<32x128xf32>
    %cst_166 = arith.constant dense<0.000000e+00> : vector<128xf32>
    %130 = vector.multi_reduction <add>, %129, %cst_166 [0] : vector<32x128xf32> to vector<128xf32>
    %131 = vector.shape_cast %130 : vector<128xf32> to vector<1x128xf32>
    %cst_167 = arith.constant 3.200000e+01 : f32
    %132 = vector.broadcast %cst_167 : f32 to vector<1x128xf32>
    %133 = arith.divf %131, %132 : vector<1x128xf32>
    %c0_168 = arith.constant 0 : index
    %c0_169 = arith.constant 0 : index
    %134 = vector.load %arg10[%c0_168, %c0_169] : memref<1x128xf32, #tpu.memory_space<vmem>>, vector<1x128xf32>
    %cst_170 = arith.constant 9.99999974E-6 : f32
    %135 = vector.broadcast %cst_170 : f32 to vector<1x128xf32>
    %136 = arith.addf %133, %135 : vector<1x128xf32>
    %137 = math.rsqrt %136 : vector<1x128xf32>
    %138 = arith.mulf %134, %137 : vector<1x128xf32>
    %c0_171 = arith.constant 0 : index
    %c0_172 = arith.constant 0 : index
    %139 = vector.load %arg11[%c0_171, %c0_172] : memref<1x128xf32, #tpu.memory_space<vmem>>, vector<1x128xf32>
    %140 = arith.mulf %126, %138 : vector<1x128xf32>
    %141 = arith.subf %139, %140 : vector<1x128xf32>
    %142 = vector.broadcast %138 : vector<1x128xf32> to vector<32x128xf32>
    %143 = arith.mulf %122, %142 : vector<32x128xf32>
    %144 = vector.broadcast %141 : vector<1x128xf32> to vector<32x128xf32>
    %145 = arith.addf %143, %144 : vector<32x128xf32>
    %cst_173 = arith.constant 0.000000e+00 : f32
    %146 = vector.broadcast %cst_173 : f32 to vector<32x128xf32>
    %147 = arith.maximumf %145, %146 : vector<32x128xf32>
    %148 = vector.shape_cast %147 : vector<32x128xf32> to vector<2x2x2x2x2x128xf32>
    %149 = vector.extract_strided_slice %148 {offsets = [0, 0, 0, 0, 0, 0], sizes = [2, 2, 1, 2, 1, 128], strides = [1, 1, 1, 1, 1, 1]} : vector<2x2x2x2x2x128xf32> to vector<2x2x1x2x1x128xf32>
    %150 = vector.shape_cast %149 : vector<2x2x1x2x1x128xf32> to vector<2x2x2x128xf32>
    %151 = vector.extract_strided_slice %148 {offsets = [0, 0, 0, 0, 1, 0], sizes = [2, 2, 1, 2, 1, 128], strides = [1, 1, 1, 1, 1, 1]} : vector<2x2x2x2x2x128xf32> to vector<2x2x1x2x1x128xf32>
    %152 = vector.shape_cast %151 : vector<2x2x1x2x1x128xf32> to vector<2x2x2x128xf32>
    %153 = arith.maximumf %150, %152 : vector<2x2x2x128xf32>
    %154 = vector.extract_strided_slice %148 {offsets = [0, 0, 1, 0, 0, 0], sizes = [2, 2, 1, 2, 1, 128], strides = [1, 1, 1, 1, 1, 1]} : vector<2x2x2x2x2x128xf32> to vector<2x2x1x2x1x128xf32>
    %155 = vector.shape_cast %154 : vector<2x2x1x2x1x128xf32> to vector<2x2x2x128xf32>
    %156 = vector.extract_strided_slice %148 {offsets = [0, 0, 1, 0, 1, 0], sizes = [2, 2, 1, 2, 1, 128], strides = [1, 1, 1, 1, 1, 1]} : vector<2x2x2x2x2x128xf32> to vector<2x2x1x2x1x128xf32>
    %157 = vector.shape_cast %156 : vector<2x2x1x2x1x128xf32> to vector<2x2x2x128xf32>
    %158 = arith.maximumf %155, %157 : vector<2x2x2x128xf32>
    %159 = arith.maximumf %153, %158 : vector<2x2x2x128xf32>
    %cst_174 = arith.constant 0.000000e+00 : f32
    %160 = vector.broadcast %cst_174 : f32 to vector<2x4x4x128xf32>
    %c0_175 = arith.constant 0 : index
    %c0_176 = arith.constant 0 : index
    %c0_177 = arith.constant 0 : index
    %c0_178 = arith.constant 0 : index
    %161 = vector.load %arg18[%c0_175, %c0_176, %c0_177, %c0_178] : memref<2x4x4x128xf32, #tpu.memory_space<vmem>>, vector<2x4x4x128xf32>
    tpu.vector_store %arg18[%c0_175, %c0_176, %c0_177, %c0_178], %160 {strides = array<i32>} : memref<2x4x4x128xf32, #tpu.memory_space<vmem>>, vector<2x4x4x128xf32>,
    %c0_179 = arith.constant 0 : index
    %c1_180 = arith.constant 1 : index
    %c1_181 = arith.constant 1 : index
    %c0_182 = arith.constant 0 : index
    %162 = vector.load %arg18[%c0_179, %c1_180, %c1_181, %c0_182] : memref<2x4x4x128xf32, #tpu.memory_space<vmem>>, vector<2x2x2x128xf32>
    tpu.vector_store %arg18[%c0_179, %c1_180, %c1_181, %c0_182], %159 {strides = array<i32>} : memref<2x4x4x128xf32, #tpu.memory_space<vmem>>, vector<2x2x2x128xf32>,
    %c0_183 = arith.constant 0 : index
    %c0_184 = arith.constant 0 : index
    %c0_185 = arith.constant 0 : index
    %c0_186 = arith.constant 0 : index
    %163 = vector.load %arg18[%c0_183, %c0_184, %c0_185, %c0_186] : memref<2x4x4x128xf32, #tpu.memory_space<vmem>>, vector<2x2x2x128xf32>
    %c0_187 = arith.constant 0 : index
    %c0_188 = arith.constant 0 : index
    %c1_189 = arith.constant 1 : index
    %c0_190 = arith.constant 0 : index
    %164 = vector.load %arg18[%c0_187, %c0_188, %c1_189, %c0_190] : memref<2x4x4x128xf32, #tpu.memory_space<vmem>>, vector<2x2x2x128xf32>
    %c0_191 = arith.constant 0 : index
    %c0_192 = arith.constant 0 : index
    %c2_193 = arith.constant 2 : index
    %c0_194 = arith.constant 0 : index
    %165 = vector.load %arg18[%c0_191, %c0_192, %c2_193, %c0_194] : memref<2x4x4x128xf32, #tpu.memory_space<vmem>>, vector<2x2x2x128xf32>
    %c0_195 = arith.constant 0 : index
    %c1_196 = arith.constant 1 : index
    %c0_197 = arith.constant 0 : index
    %c0_198 = arith.constant 0 : index
    %166 = vector.load %arg18[%c0_195, %c1_196, %c0_197, %c0_198] : memref<2x4x4x128xf32, #tpu.memory_space<vmem>>, vector<2x2x2x128xf32>
    %c0_199 = arith.constant 0 : index
    %c1_200 = arith.constant 1 : index
    %c1_201 = arith.constant 1 : index
    %c0_202 = arith.constant 0 : index
    %167 = vector.load %arg18[%c0_199, %c1_200, %c1_201, %c0_202] : memref<2x4x4x128xf32, #tpu.memory_space<vmem>>, vector<2x2x2x128xf32>
    %c0_203 = arith.constant 0 : index
    %c1_204 = arith.constant 1 : index
    %c2_205 = arith.constant 2 : index
    %c0_206 = arith.constant 0 : index
    %168 = vector.load %arg18[%c0_203, %c1_204, %c2_205, %c0_206] : memref<2x4x4x128xf32, #tpu.memory_space<vmem>>, vector<2x2x2x128xf32>
    %c0_207 = arith.constant 0 : index
    %c2_208 = arith.constant 2 : index
    %c0_209 = arith.constant 0 : index
    %c0_210 = arith.constant 0 : index
    %169 = vector.load %arg18[%c0_207, %c2_208, %c0_209, %c0_210] : memref<2x4x4x128xf32, #tpu.memory_space<vmem>>, vector<2x2x2x128xf32>
    %c0_211 = arith.constant 0 : index
    %c2_212 = arith.constant 2 : index
    %c1_213 = arith.constant 1 : index
    %c0_214 = arith.constant 0 : index
    %170 = vector.load %arg18[%c0_211, %c2_212, %c1_213, %c0_214] : memref<2x4x4x128xf32, #tpu.memory_space<vmem>>, vector<2x2x2x128xf32>
    %c0_215 = arith.constant 0 : index
    %c2_216 = arith.constant 2 : index
    %c2_217 = arith.constant 2 : index
    %c0_218 = arith.constant 0 : index
    %171 = vector.load %arg18[%c0_215, %c2_216, %c2_217, %c0_218] : memref<2x4x4x128xf32, #tpu.memory_space<vmem>>, vector<2x2x2x128xf32>
    %172 = tpu.concatenate %163, %164, %165, %166, %167, %168, %169, %170, %171 in 3 : vector<2x2x2x128xf32>, vector<2x2x2x128xf32>, vector<2x2x2x128xf32>, vector<2x2x2x128xf32>, vector<2x2x2x128xf32>, vector<2x2x2x128xf32>, vector<2x2x2x128xf32>, vector<2x2x2x128xf32>, vector<2x2x2x128xf32> -> vector<2x2x2x1152xf32>
    %173 = vector.shape_cast %172 : vector<2x2x2x1152xf32> to vector<8x1152xf32>
    %c0_219 = arith.constant 0 : index
    %c0_220 = arith.constant 0 : index
    %174 = vector.load %arg5[%c0_219, %c0_220] : memref<1152x256xf32, #tpu.memory_space<vmem>>, vector<1152x256xf32>
    %cst_221 = arith.constant dense<0.000000e+00> : vector<8x256xf32>
    %175 = tpu.matmul %173, %174, %cst_221 {dimension_numbers = #tpu.dot_dimension_numbers<[1], [0], [0], [1], [0, 0, 1, 1], [], []>} : vector<8x1152xf32>, vector<1152x256xf32>, vector<8x256xf32> -> vector<8x256xf32>
    %cst_222 = arith.constant dense<0.000000e+00> : vector<256xf32>
    %176 = vector.multi_reduction <add>, %175, %cst_222 [0] : vector<8x256xf32> to vector<256xf32>
    %177 = vector.shape_cast %176 : vector<256xf32> to vector<1x256xf32>
    %cst_223 = arith.constant 8.000000e+00 : f32
    %178 = vector.broadcast %cst_223 : f32 to vector<1x256xf32>
    %179 = arith.divf %177, %178 : vector<1x256xf32>
    %180 = vector.broadcast %179 : vector<1x256xf32> to vector<8x256xf32>
    %181 = arith.subf %175, %180 : vector<8x256xf32>
    %182 = arith.mulf %181, %181 : vector<8x256xf32>
    %cst_224 = arith.constant dense<0.000000e+00> : vector<256xf32>
    %183 = vector.multi_reduction <add>, %182, %cst_224 [0] : vector<8x256xf32> to vector<256xf32>
    %184 = vector.shape_cast %183 : vector<256xf32> to vector<1x256xf32>
    %cst_225 = arith.constant 8.000000e+00 : f32
    %185 = vector.broadcast %cst_225 : f32 to vector<1x256xf32>
    %186 = arith.divf %184, %185 : vector<1x256xf32>
    %c0_226 = arith.constant 0 : index
    %c0_227 = arith.constant 0 : index
    %187 = vector.load %arg12[%c0_226, %c0_227] : memref<1x256xf32, #tpu.memory_space<vmem>>, vector<1x256xf32>
    %cst_228 = arith.constant 9.99999974E-6 : f32
    %188 = vector.broadcast %cst_228 : f32 to vector<1x256xf32>
    %189 = arith.addf %186, %188 : vector<1x256xf32>
    %190 = math.rsqrt %189 : vector<1x256xf32>
    %191 = arith.mulf %187, %190 : vector<1x256xf32>
    %c0_229 = arith.constant 0 : index
    %c0_230 = arith.constant 0 : index
    %192 = vector.load %arg13[%c0_229, %c0_230] : memref<1x256xf32, #tpu.memory_space<vmem>>, vector<1x256xf32>
    %193 = arith.mulf %179, %191 : vector<1x256xf32>
    %194 = arith.subf %192, %193 : vector<1x256xf32>
    %195 = vector.broadcast %191 : vector<1x256xf32> to vector<8x256xf32>
    %196 = arith.mulf %175, %195 : vector<8x256xf32>
    %197 = vector.broadcast %194 : vector<1x256xf32> to vector<8x256xf32>
    %198 = arith.addf %196, %197 : vector<8x256xf32>
    %cst_231 = arith.constant 0.000000e+00 : f32
    %199 = vector.broadcast %cst_231 : f32 to vector<8x256xf32>
    %200 = arith.maximumf %198, %199 : vector<8x256xf32>
    %201 = vector.shape_cast %200 : vector<8x256xf32> to vector<2x4x256xf32>
    %cst_232 = arith.constant dense<0.000000e+00> : vector<2x256xf32>
    %202 = vector.multi_reduction <add>, %201, %cst_232 [1] : vector<2x4x256xf32> to vector<2x256xf32>
    %cst_233 = arith.constant 4.000000e+00 : f32
    %203 = vector.broadcast %cst_233 : f32 to vector<2x256xf32>
    %204 = arith.divf %202, %203 : vector<2x256xf32>
    %c0_234 = arith.constant 0 : index
    %c0_235 = arith.constant 0 : index
    %205 = vector.load %arg14[%c0_234, %c0_235] : memref<2x256xf32, #tpu.memory_space<vmem>>, vector<2x256xf32>
    tpu.vector_store %arg14[%c0_234, %c0_235], %204 {strides = array<i32>} : memref<2x256xf32, #tpu.memory_space<vmem>>, vector<2x256xf32>,
    return
  }
  func.func @transform_0(%arg0: i32) -> (i32, i32, i32, i32) {
    %c0_i32 = arith.constant 0 : i32
    %c0_i32_0 = arith.constant 0 : i32
    %c0_i32_1 = arith.constant 0 : i32
    %c0_i32_2 = arith.constant 0 : i32
    %c0_i32_3 = arith.constant 0 : i32
    return %c0_i32, %c0_i32_0, %c0_i32_1, %c0_i32_2 : i32, i32, i32, i32
  }
  func.func @transform_1(%arg0: i32) -> (i32, i32) {
    %c0_i32 = arith.constant 0 : i32
    %c0_i32_0 = arith.constant 0 : i32
    %c0_i32_1 = arith.constant 0 : i32
    return %c0_i32, %c0_i32_0 : i32, i32
  }
  func.func @transform_2(%arg0: i32) -> (i32, i32) {
    %c0_i32 = arith.constant 0 : i32
    %c0_i32_0 = arith.constant 0 : i32
    %c0_i32_1 = arith.constant 0 : i32
    return %c0_i32, %c0_i32_0 : i32, i32
  }
  func.func @transform_3(%arg0: i32) -> (i32, i32) {
    %c0_i32 = arith.constant 0 : i32
    %c0_i32_0 = arith.constant 0 : i32
    %c0_i32_1 = arith.constant 0 : i32
    return %c0_i32, %c0_i32_0 : i32, i32
  }
  func.func @transform_4(%arg0: i32) -> (i32, i32) {
    %c0_i32 = arith.constant 0 : i32
    %c0_i32_0 = arith.constant 0 : i32
    %c0_i32_1 = arith.constant 0 : i32
    return %c0_i32, %c0_i32_0 : i32, i32
  }
  func.func @transform_5(%arg0: i32) -> (i32, i32) {
    %c0_i32 = arith.constant 0 : i32
    %c0_i32_0 = arith.constant 0 : i32
    %c0_i32_1 = arith.constant 0 : i32
    return %c0_i32, %c0_i32_0 : i32, i32
  }
  func.func @transform_6(%arg0: i32) -> (i32, i32) {
    %c0_i32 = arith.constant 0 : i32
    %c0_i32_0 = arith.constant 0 : i32
    %c0_i32_1 = arith.constant 0 : i32
    return %c0_i32, %c0_i32_0 : i32, i32
  }
  func.func @transform_7(%arg0: i32) -> (i32, i32) {
    %c0_i32 = arith.constant 0 : i32
    %c0_i32_0 = arith.constant 0 : i32
    %c0_i32_1 = arith.constant 0 : i32
    return %c0_i32, %c0_i32_0 : i32, i32
  }
  func.func @transform_8(%arg0: i32) -> (i32, i32) {
    %c0_i32 = arith.constant 0 : i32
    %c0_i32_0 = arith.constant 0 : i32
    %c0_i32_1 = arith.constant 0 : i32
    return %c0_i32, %c0_i32_0 : i32, i32
  }
  func.func @transform_9(%arg0: i32) -> (i32, i32) {
    %c0_i32 = arith.constant 0 : i32
    %c0_i32_0 = arith.constant 0 : i32
    %c0_i32_1 = arith.constant 0 : i32
    return %c0_i32, %c0_i32_0 : i32, i32
  }
  func.func @transform_10(%arg0: i32) -> (i32, i32) {
    %c0_i32 = arith.constant 0 : i32
    %c0_i32_0 = arith.constant 0 : i32
    %c0_i32_1 = arith.constant 0 : i32
    return %c0_i32, %c0_i32_0 : i32, i32
  }
  func.func @transform_11(%arg0: i32) -> (i32, i32) {
    %c0_i32 = arith.constant 0 : i32
    %c0_i32_0 = arith.constant 0 : i32
    %c0_i32_1 = arith.constant 0 : i32
    return %c0_i32, %c0_i32_0 : i32, i32
  }
  func.func @transform_12(%arg0: i32) -> (i32, i32) {
    %c0_i32 = arith.constant 0 : i32
    %c0_i32_0 = arith.constant 0 : i32
    %c0_i32_1 = arith.constant 0 : i32
    return %c0_i32, %c0_i32_0 : i32, i32
  }
  func.func @transform_13(%arg0: i32) -> (i32, i32) {
    %c0_i32 = arith.constant 0 : i32
    %c0_i32_0 = arith.constant 0 : i32
    %c0_i32_1 = arith.constant 0 : i32
    return %c0_i32, %c0_i32_0 : i32, i32
  }
}

</mosaic_0001>

<llo_original>
// kernel: custom_cnn_forward.1
$region0: #{custom_cnn_forward.1}
  #allocation0 [shape = 'u32[]', space=smem, size = 0x4, offset = 0x4, fixed_abs, tag = 'smem constant byte address 0x4 - core index']
  #allocation1 [shape = 'u32[144,128]{1,0:T(1,128)}', space=vmem, size = 0x12000, scoped, tag = 'internal scratch']
  #allocation2 [shape = 'f32[2,18,18,8]{3,2,1,0:T(8,128)}', space=vmem, size = 0x6c000, scoped, tag = 'scratch operand']
  #allocation3 [shape = 'f32[2,10,10,32]{3,2,1,0:T(8,128)}', space=vmem, size = 0x28000, scoped, tag = 'scratch operand']
  #allocation4 [shape = 'f32[2,6,6,64]{3,2,1,0:T(8,128)}', space=vmem, size = 0xc000, scoped, tag = 'scratch operand']
  #allocation5 [shape = 'f32[2,4,4,128]{3,2,1,0:T(4,128)}', space=vmem, size = 0x4000, scoped, tag = 'scratch operand']
  %s0 = inlined_call_operand.vmem [shape: f32[2,16,16,8], index: 0, kind: input, shape index: {}]
  %s1 = inlined_call_operand.vmem [shape: f32[72,32], index: 1, kind: input, shape index: {}]
  %s2 = inlined_call_operand.hbm [shape: f32[288,64], index: 2, kind: input, shape index: {}]
  %s3 = inlined_call_operand.vmem [shape: f32[576,128], index: 3, kind: input, shape index: {}]
  %s4 = inlined_call_operand.hbm [shape: f32[1152,256], index: 4, kind: input, shape index: {}]
  %s5 = inlined_call_operand.hbm [shape: f32[1,32], index: 5, kind: input, shape index: {}]
  %s6 = inlined_call_operand.hbm [shape: f32[1,32], index: 6, kind: input, shape index: {}]
  %s7 = inlined_call_operand.hbm [shape: f32[1,64], index: 7, kind: input, shape index: {}]
  %s8 = inlined_call_operand.hbm [shape: f32[1,64], index: 8, kind: input, shape index: {}]
  %s9 = inlined_call_operand.hbm [shape: f32[1,128], index: 9, kind: input, shape index: {}]
  %s10 = inlined_call_operand.hbm [shape: f32[1,128], index: 10, kind: input, shape index: {}]
  %s11 = inlined_call_operand.hbm [shape: f32[1,256], index: 11, kind: input, shape index: {}]
  %s12 = inlined_call_operand.hbm [shape: f32[1,256], index: 12, kind: input, shape index: {}]
  %s13 = inlined_call_operand.vmem [shape: f32[2,256], index: 13, kind: output, shape index: {}]
  %s14 = sld [smem:[#allocation0]]
  $region102: #{custom_cnn_forward.1} parent=0
    _
  %s16 = ssub.s32 1, %s14
  %s17 = scalar_select 0, %s16, %s14
  $region1: #{custom_cnn_forward.1} parent=0
    #allocation6 [shape = 'u8[147456]{0}', space=vmem, size = 0x24000, scoped, tag = 'input window, operand 2, single buffered']
    #allocation7 [shape = 's32[1]{0}', space=sflag, size = 0x4, scoped, tag = 'scoped memory for custom_cnn_forward.1']
    #allocation8 [shape = 'u8[1179648]{0}', space=vmem, size = 0x120000, scoped, tag = 'input window, operand 4, single buffered']
    #allocation9 [shape = 's32[1]{0}', space=sflag, size = 0x4, scoped, tag = 'scoped memory for custom_cnn_forward.1']
    #allocation10 [shape = 'u8[512]{0}', space=vmem, size = 0x400, scoped, tag = 'input window, operand 5, single buffered']
    #allocation11 [shape = 'u8[512]{0}', space=vmem, size = 0x400, scoped, tag = 'input window, operand 6, single buffered']
    #allocation12 [shape = 's32[1]{0}', space=sflag, size = 0x4, scoped, tag = 'scoped memory for custom_cnn_forward.1']
    #allocation13 [shape = 'u8[512]{0}', space=vmem, size = 0x400, scoped, tag = 'input window, operand 7, single buffered']
    #allocation14 [shape = 'u8[512]{0}', space=vmem, size = 0x400, scoped, tag = 'input window, operand 8, single buffered']
    #allocation15 [shape = 's32[1]{0}', space=sflag, size = 0x4, scoped, tag = 'scoped memory for custom_cnn_forward.1']
    #allocation16 [shape = 'u8[512]{0}', space=vmem, size = 0x400, scoped, tag = 'input window, operand 9, single buffered']
    #allocation17 [shape = 'u8[512]{0}', space=vmem, size = 0x400, scoped, tag = 'input window, operand 10, single buffered']
    #allocation18 [shape = 's32[1]{0}', space=sflag, size = 0x4, scoped, tag = 'scoped memory for custom_cnn_forward.1']
    #allocation19 [shape = 'u8[1024]{0}', space=vmem, size = 0x400, scoped, tag = 'input window, operand 11, single buffered']
    #allocation20 [shape = 'u8[1024]{0}', space=vmem, size = 0x400, scoped, tag = 'input window, operand 12, single buffered']
    #allocation21 [shape = 's32[1]{0}', space=sflag, size = 0x4, scoped, tag = 'scoped memory for custom_cnn_forward.1']
    %18 = vsyncpa [#allocation7], 0
    %19 = vsyncpa [#allocation9], 0
    %20 = vsyncpa [#allocation12], 0
    %21 = vsyncpa [#allocation15], 0
    %22 = vsyncpa [#allocation18], 0
    %23 = vsyncpa [#allocation21], 0
    // Predicated region
    $region2: #{custom_cnn_forward.1} parent=1 // pred_check
      _
    $region3: #{custom_cnn_forward.1} parent=1 // pred_check_branch
      %25 = sbr.rel (0) target = $region5
    $region4: #{custom_cnn_forward.1} parent=1 // pred_region
      _
    $region5: #{custom_cnn_forward.1} parent=1 // pred_fallthru
      _
    // Predicated region
    $region6: #{custom_cnn_forward.1} parent=1 // pred_check
      _
    $region7: #{custom_cnn_forward.1} parent=1 // pred_check_branch
      %27 = sbr.rel (0) target = $region9
    $region8: #{custom_cnn_forward.1} parent=1 // pred_region
      _
    $region9: #{custom_cnn_forward.1} parent=1 // pred_fallthru
      _
    // Predicated region
    $region10: #{custom_cnn_forward.1} parent=1 // pred_check
      _
    $region11: #{custom_cnn_forward.1} parent=1 // pred_check_branch
      %29 = sbr.rel (0) target = $region13
    $region12: #{custom_cnn_forward.1} parent=1 // pred_region
      %s31 = ssub.s32 4608, 4608
      %32 = vsyncadd [#allocation7], %s31
      %s33 = sshll.u32 [#allocation6], 4
      %s34 = int_to_ptr.vmem [resolvable:$true] %s33
      %39 = dma.hbm_to_vmem [thread:$0]  %s2, 4608, %s34, [#allocation7], 128, 128, 8
    $region13: #{custom_cnn_forward.1} parent=1 // pred_fallthru
      _
    // Predicated region
    $region14: #{custom_cnn_forward.1} parent=1 // pred_check
      _
    $region15: #{custom_cnn_forward.1} parent=1 // pred_check_branch
      %41 = sbr.rel (0) target = $region17
    $region16: #{custom_cnn_forward.1} parent=1 // pred_region
      _
    $region17: #{custom_cnn_forward.1} parent=1 // pred_fallthru
      _
    // Predicated region
    $region18: #{custom_cnn_forward.1} parent=1 // pred_check
      _
    $region19: #{custom_cnn_forward.1} parent=1 // pred_check_branch
      %43 = sbr.rel (0) target = $region21
    $region20: #{custom_cnn_forward.1} parent=1 // pred_region
      %s45 = ssub.s32 36864, 36864
      %46 = vsyncadd [#allocation9], %s45
      %s47 = sshll.u32 [#allocation8], 4
      %s48 = int_to_ptr.vmem [resolvable:$true] %s47
      %53 = dma.hbm_to_vmem [thread:$0]  %s4, 36864, %s48, [#allocation9], 256, 256, 16
    $region21: #{custom_cnn_forward.1} parent=1 // pred_fallthru
      _
    // Predicated region
    $region22: #{custom_cnn_forward.1} parent=1 // pred_check
      _
    $region23: #{custom_cnn_forward.1} parent=1 // pred_check_branch
      %55 = sbr.rel (0) target = $region25
    $region24: #{custom_cnn_forward.1} parent=1 // pred_region
      %s57 = ssub.s32 16, 16
      %58 = vsyncadd [#allocation9], %s57
      %s60 = sshll.u32 [#allocation10], 4
      %s61 = int_to_ptr.vmem [resolvable:$true] %s60
      %63 = dma.hbm_to_vmem [thread:$0]  %s5, 16, %s61, [#allocation9]
    $region25: #{custom_cnn_forward.1} parent=1 // pred_fallthru
      _
    // Predicated region
    $region26: #{custom_cnn_forward.1} parent=1 // pred_check
      _
    $region27: #{custom_cnn_forward.1} parent=1 // pred_check_branch
      %65 = sbr.rel (0) target = $region29
    $region28: #{custom_cnn_forward.1} parent=1 // pred_region
      %s67 = ssub.s32 16, 16
      %68 = vsyncadd [#allocation12], %s67
      %s70 = sshll.u32 [#allocation11], 4
      %s71 = int_to_ptr.vmem [resolvable:$true] %s70
      %73 = dma.hbm_to_vmem [thread:$0]  %s6, 16, %s71, [#allocation12]
    $region29: #{custom_cnn_forward.1} parent=1 // pred_fallthru
      _
    // Predicated region
    $region30: #{custom_cnn_forward.1} parent=1 // pred_check
      _
    $region31: #{custom_cnn_forward.1} parent=1 // pred_check_branch
      %75 = sbr.rel (0) target = $region33
    $region32: #{custom_cnn_forward.1} parent=1 // pred_region
      %s77 = ssub.s32 16, 16
      %78 = vsyncadd [#allocation12], %s77
      %s80 = sshll.u32 [#allocation13], 4
      %s81 = int_to_ptr.vmem [resolvable:$true] %s80
      %83 = dma.hbm_to_vmem [thread:$0]  %s7, 16, %s81, [#allocation12]
    $region33: #{custom_cnn_forward.1} parent=1 // pred_fallthru
      _
    // Predicated region
    $region34: #{custom_cnn_forward.1} parent=1 // pred_check
      _
    $region35: #{custom_cnn_forward.1} parent=1 // pred_check_branch
      %85 = sbr.rel (0) target = $region37
    $region36: #{custom_cnn_forward.1} parent=1 // pred_region
      %s87 = ssub.s32 16, 16
      %88 = vsyncadd [#allocation15], %s87
      %s90 = sshll.u32 [#allocation14], 4
      %s91 = int_to_ptr.vmem [resolvable:$true] %s90
      %93 = dma.hbm_to_vmem [thread:$0]  %s8, 16, %s91, [#allocation15]
    $region37: #{custom_cnn_forward.1} parent=1 // pred_fallthru
      _
    // Predicated region
    $region38: #{custom_cnn_forward.1} parent=1 // pred_check
      _
    $region39: #{custom_cnn_forward.1} parent=1 // pred_check_branch
      %95 = sbr.rel (0) target = $region41
    $region40: #{custom_cnn_forward.1} parent=1 // pred_region
      %s97 = ssub.s32 16, 16
      %98 = vsyncadd [#allocation15], %s97
      %s100 = sshll.u32 [#allocation16], 4
      %s101 = int_to_ptr.vmem [resolvable:$true] %s100
      %103 = dma.hbm_to_vmem [thread:$0]  %s9, 16, %s101, [#allocation15]
    $region41: #{custom_cnn_forward.1} parent=1 // pred_fallthru
      _
    // Predicated region
    $region42: #{custom_cnn_forward.1} parent=1 // pred_check
      _
    $region43: #{custom_cnn_forward.1} parent=1 // pred_check_branch
      %105 = sbr.rel (0) target = $region45
    $region44: #{custom_cnn_forward.1} parent=1 // pred_region
      %s107 = ssub.s32 16, 16
      %108 = vsyncadd [#allocation18], %s107
      %s110 = sshll.u32 [#allocation17], 4
      %s111 = int_to_ptr.vmem [resolvable:$true] %s110
      %113 = dma.hbm_to_vmem [thread:$0]  %s10, 16, %s111, [#allocation18]
    $region45: #{custom_cnn_forward.1} parent=1 // pred_fallthru
      _
    // Predicated region
    $region46: #{custom_cnn_forward.1} parent=1 // pred_check
      _
    $region47: #{custom_cnn_forward.1} parent=1 // pred_check_branch
      %115 = sbr.rel (0) target = $region49
    $region48: #{custom_cnn_forward.1} parent=1 // pred_region
      %s117 = ssub.s32 32, 32
      %118 = vsyncadd [#allocation18], %s117
      %s120 = sshll.u32 [#allocation19], 4
      %s121 = int_to_ptr.vmem [resolvable:$true] %s120
      %123 = dma.hbm_to_vmem [thread:$0]  %s11, 32, %s121, [#allocation18]
    $region49: #{custom_cnn_forward.1} parent=1 // pred_fallthru
      _
    // Predicated region
    $region50: #{custom_cnn_forward.1} parent=1 // pred_check
      _
    $region51: #{custom_cnn_forward.1} parent=1 // pred_check_branch
      %125 = sbr.rel (0) target = $region53
    $region52: #{custom_cnn_forward.1} parent=1 // pred_region
      %s127 = ssub.s32 32, 32
      %128 = vsyncadd [#allocation21], %s127
      %s130 = sshll.u32 [#allocation20], 4
      %s131 = int_to_ptr.vmem [resolvable:$true] %s130
      %133 = dma.hbm_to_vmem [thread:$0]  %s12, 32, %s131, [#allocation21]
    $region53: #{custom_cnn_forward.1} parent=1 // pred_fallthru
      _
    // Predicated region
    $region54: #{custom_cnn_forward.1} parent=1 // pred_check
      _
    $region55: #{custom_cnn_forward.1} parent=1 // pred_check_branch
      %135 = sbr.rel (0) target = $region57
    $region56: #{custom_cnn_forward.1} parent=1 // pred_region
      %136 = dma.done [#allocation7], 4608
    $region57: #{custom_cnn_forward.1} parent=1 // pred_fallthru
      _
    // Predicated region
    $region58: #{custom_cnn_forward.1} parent=1 // pred_check
      _
    $region59: #{custom_cnn_forward.1} parent=1 // pred_check_branch
      %138 = sbr.rel (0) target = $region61
    $region60: #{custom_cnn_forward.1} parent=1 // pred_region
      %139 = dma.done [#allocation9], 36864
    $region61: #{custom_cnn_forward.1} parent=1 // pred_fallthru
      _
    // Predicated region
    $region62: #{custom_cnn_forward.1} parent=1 // pred_check
      _
    $region63: #{custom_cnn_forward.1} parent=1 // pred_check_branch
      %141 = sbr.rel (0) target = $region65
    $region64: #{custom_cnn_forward.1} parent=1 // pred_region
      %142 = dma.done [#allocation9], 16
    $region65: #{custom_cnn_forward.1} parent=1 // pred_fallthru
      _
    // Predicated region
    $region66: #{custom_cnn_forward.1} parent=1 // pred_check
      _
    $region67: #{custom_cnn_forward.1} parent=1 // pred_check_branch
      %144 = sbr.rel (0) target = $region69
    $region68: #{custom_cnn_forward.1} parent=1 // pred_region
      %145 = dma.done [#allocation12], 16
    $region69: #{custom_cnn_forward.1} parent=1 // pred_fallthru
      _
    // Predicated region
    $region70: #{custom_cnn_forward.1} parent=1 // pred_check
      _
    $region71: #{custom_cnn_forward.1} parent=1 // pred_check_branch
      %147 = sbr.rel (0) target = $region73
    $region72: #{custom_cnn_forward.1} parent=1 // pred_region
      %148 = dma.done [#allocation12], 16
    $region73: #{custom_cnn_forward.1} parent=1 // pred_fallthru
      _
    // Predicated region
    $region74: #{custom_cnn_forward.1} parent=1 // pred_check
      _
    $region75: #{custom_cnn_forward.1} parent=1 // pred_check_branch
      %150 = sbr.rel (0) target = $region77
    $region76: #{custom_cnn_forward.1} parent=1 // pred_region
      %151 = dma.done [#allocation15], 16
    $region77: #{custom_cnn_forward.1} parent=1 // pred_fallthru
      _
    // Predicated region
    $region78: #{custom_cnn_forward.1} parent=1 // pred_check
      _
    $region79: #{custom_cnn_forward.1} parent=1 // pred_check_branch
      %153 = sbr.rel (0) target = $region81
    $region80: #{custom_cnn_forward.1} parent=1 // pred_region
      %154 = dma.done [#allocation15], 16
    $region81: #{custom_cnn_forward.1} parent=1 // pred_fallthru
      _
    // Predicated region
    $region82: #{custom_cnn_forward.1} parent=1 // pred_check
      _
    $region83: #{custom_cnn_forward.1} parent=1 // pred_check_branch
      %156 = sbr.rel (0) target = $region85
    $region84: #{custom_cnn_forward.1} parent=1 // pred_region
      %157 = dma.done [#allocation18], 16
    $region85: #{custom_cnn_forward.1} parent=1 // pred_fallthru
      _
    // Predicated region
    $region86: #{custom_cnn_forward.1} parent=1 // pred_check
      _
    $region87: #{custom_cnn_forward.1} parent=1 // pred_check_branch
      %159 = sbr.rel (0) target = $region89
    $region88: #{custom_cnn_forward.1} parent=1 // pred_region
      %160 = dma.done [#allocation18], 32
    $region89: #{custom_cnn_forward.1} parent=1 // pred_fallthru
      _
    // Predicated region
    $region90: #{custom_cnn_forward.1} parent=1 // pred_check
      _
    $region91: #{custom_cnn_forward.1} parent=1 // pred_check_branch
      %162 = sbr.rel (0) target = $region93
    $region92: #{custom_cnn_forward.1} parent=1 // pred_region
      %163 = dma.done [#allocation21], 32
    $region93: #{custom_cnn_forward.1} parent=1 // pred_fallthru
      _
    %vm164 = vcmask 64512
    %165 = vst.msk [vmem:[#allocation2] sm:$0xff] %vm164, 0.0
    %166 = vst.msk [vmem:[#allocation2 + $0x8] sm:$0xff] %vm164, 0.0
    %vm167 = vcmask 58368
    %168 = vst.msk [vmem:[#allocation2 + $0x10] sm:$0x3] %vm167, 0.0
    %169 = vst.msk [vmem:[#allocation2 + $0x18] sm:$0xff] %vm164, 0.0
    %170 = vst.msk [vmem:[#allocation2 + $0x20] sm:$0xff] %vm164, 0.0
    %171 = vst.msk [vmem:[#allocation2 + $0x28] sm:$0x3] %vm167, 0.0
    %172 = vst.msk [vmem:[#allocation2 + $0x30] sm:$0xff] %vm164, 0.0
    %173 = vst.msk [vmem:[#allocation2 + $0x38] sm:$0xff] %vm164, 0.0
    %174 = vst.msk [vmem:[#allocation2 + $0x40] sm:$0x3] %vm167, 0.0
    %175 = vst.msk [vmem:[#allocation2 + $0x48] sm:$0xff] %vm164, 0.0
    %176 = vst.msk [vmem:[#allocation2 + $0x50] sm:$0xff] %vm164, 0.0
    %177 = vst.msk [vmem:[#allocation2 + $0x58] sm:$0x3] %vm167, 0.0
    %178 = vst.msk [vmem:[#allocation2 + $0x60] sm:$0xff] %vm164, 0.0
    %179 = vst.msk [vmem:[#allocation2 + $0x68] sm:$0xff] %vm164, 0.0
    %180 = vst.msk [vmem:[#allocation2 + $0x70] sm:$0x3] %vm167, 0.0
    %181 = vst.msk [vmem:[#allocation2 + $0x78] sm:$0xff] %vm164, 0.0
    %182 = vst.msk [vmem:[#allocation2 + $0x80] sm:$0xff] %vm164, 0.0
    %183 = vst.msk [vmem:[#allocation2 + $0x88] sm:$0x3] %vm167, 0.0
    %184 = vst.msk [vmem:[#allocation2 + $0x90] sm:$0xff] %vm164, 0.0
    %185 = vst.msk [vmem:[#allocation2 + $0x98] sm:$0xff] %vm164, 0.0
    %186 = vst.msk [vmem:[#allocation2 + $0xa0] sm:$0x3] %vm167, 0.0
    %187 = vst.msk [vmem:[#allocation2 + $0xa8] sm:$0xff] %vm164, 0.0
    %188 = vst.msk [vmem:[#allocation2 + $0xb0] sm:$0xff] %vm164, 0.0
    %189 = vst.msk [vmem:[#allocation2 + $0xb8] sm:$0x3] %vm167, 0.0
    %190 = vst.msk [vmem:[#allocation2 + $0xc0] sm:$0xff] %vm164, 0.0
    %191 = vst.msk [vmem:[#allocation2 + $0xc8] sm:$0xff] %vm164, 0.0
    %192 = vst.msk [vmem:[#allocation2 + $0xd0] sm:$0x3] %vm167, 0.0
    %193 = vst.msk [vmem:[#allocation2 + $0xd8] sm:$0xff] %vm164, 0.0
    %194 = vst.msk [vmem:[#allocation2 + $0xe0] sm:$0xff] %vm164, 0.0
    %195 = vst.msk [vmem:[#allocation2 + $0xe8] sm:$0x3] %vm167, 0.0
    %196 = vst.msk [vmem:[#allocation2 + $0xf0] sm:$0xff] %vm164, 0.0
    %197 = vst.msk [vmem:[#allocation2 + $0xf8] sm:$0xff] %vm164, 0.0
    %198 = vst.msk [vmem:[#allocation2 + $0x100] sm:$0x3] %vm167, 0.0
    %199 = vst.msk [vmem:[#allocation2 + $0x108] sm:$0xff] %vm164, 0.0
    %200 = vst.msk [vmem:[#allocation2 + $0x110] sm:$0xff] %vm164, 0.0
    %201 = vst.msk [vmem:[#allocation2 + $0x118] sm:$0x3] %vm167, 0.0
    %202 = vst.msk [vmem:[#allocation2 + $0x120] sm:$0xff] %vm164, 0.0
    %203 = vst.msk [vmem:[#allocation2 + $0x128] sm:$0xff] %vm164, 0.0
    %204 = vst.msk [vmem:[#allocation2 + $0x130] sm:$0x3] %vm167, 0.0
    %205 = vst.msk [vmem:[#allocation2 + $0x138] sm:$0xff] %vm164, 0.0
    %206 = vst.msk [vmem:[#allocation2 + $0x140] sm:$0xff] %vm164, 0.0
    %207 = vst.msk [vmem:[#allocation2 + $0x148] sm:$0x3] %vm167, 0.0
    %208 = vst.msk [vmem:[#allocation2 + $0x150] sm:$0xff] %vm164, 0.0
    %209 = vst.msk [vmem:[#allocation2 + $0x158] sm:$0xff] %vm164, 0.0
    %210 = vst.msk [vmem:[#allocation2 + $0x160] sm:$0x3] %vm167, 0.0
    %211 = vst.msk [vmem:[#allocation2 + $0x168] sm:$0xff] %vm164, 0.0
    %212 = vst.msk [vmem:[#allocation2 + $0x170] sm:$0xff] %vm164, 0.0
    %213 = vst.msk [vmem:[#allocation2 + $0x178] sm:$0x3] %vm167, 0.0
    %214 = vst.msk [vmem:[#allocation2 + $0x180] sm:$0xff] %vm164, 0.0
    %215 = vst.msk [vmem:[#allocation2 + $0x188] sm:$0xff] %vm164, 0.0
    %216 = vst.msk [vmem:[#allocation2 + $0x190] sm:$0x3] %vm167, 0.0
    %217 = vst.msk [vmem:[#allocation2 + $0x198] sm:$0xff] %vm164, 0.0
    %218 = vst.msk [vmem:[#allocation2 + $0x1a0] sm:$0xff] %vm164, 0.0
    %219 = vst.msk [vmem:[#allocation2 + $0x1a8] sm:$0x3] %vm167, 0.0
    %220 = vst.msk [vmem:[#allocation2 + $0x1b0] sm:$0xff] %vm164, 0.0
    %221 = vst.msk [vmem:[#allocation2 + $0x1b8] sm:$0xff] %vm164, 0.0
    %222 = vst.msk [vmem:[#allocation2 + $0x1c0] sm:$0x3] %vm167, 0.0
    %223 = vst.msk [vmem:[#allocation2 + $0x1c8] sm:$0xff] %vm164, 0.0
    %224 = vst.msk [vmem:[#allocation2 + $0x1d0] sm:$0xff] %vm164, 0.0
    %225 = vst.msk [vmem:[#allocation2 + $0x1d8] sm:$0x3] %vm167, 0.0
    %226 = vst.msk [vmem:[#allocation2 + $0x1e0] sm:$0xff] %vm164, 0.0
    %227 = vst.msk [vmem:[#allocation2 + $0x1e8] sm:$0xff] %vm164, 0.0
    %228 = vst.msk [vmem:[#allocation2 + $0x1f0] sm:$0x3] %vm167, 0.0
    %229 = vst.msk [vmem:[#allocation2 + $0x1f8] sm:$0xff] %vm164, 0.0
    %230 = vst.msk [vmem:[#allocation2 + $0x200] sm:$0xff] %vm164, 0.0
    %231 = vst.msk [vmem:[#allocation2 + $0x208] sm:$0x3] %vm167, 0.0
    %232 = vst.msk [vmem:[#allocation2 + $0x210] sm:$0xff] %vm164, 0.0
    %233 = vst.msk [vmem:[#allocation2 + $0x218] sm:$0xff] %vm164, 0.0
    %234 = vst.msk [vmem:[#allocation2 + $0x220] sm:$0x3] %vm167, 0.0
    %235 = vst.msk [vmem:[#allocation2 + $0x228] sm:$0xff] %vm164, 0.0
    %236 = vst.msk [vmem:[#allocation2 + $0x230] sm:$0xff] %vm164, 0.0
    %237 = vst.msk [vmem:[#allocation2 + $0x238] sm:$0x3] %vm167, 0.0
    %238 = vst.msk [vmem:[#allocation2 + $0x240] sm:$0xff] %vm164, 0.0
    %239 = vst.msk [vmem:[#allocation2 + $0x248] sm:$0xff] %vm164, 0.0
    %240 = vst.msk [vmem:[#allocation2 + $0x250] sm:$0x3] %vm167, 0.0
    %241 = vst.msk [vmem:[#allocation2 + $0x258] sm:$0xff] %vm164, 0.0
    %242 = vst.msk [vmem:[#allocation2 + $0x260] sm:$0xff] %vm164, 0.0
    %243 = vst.msk [vmem:[#allocation2 + $0x268] sm:$0x3] %vm167, 0.0
    %244 = vst.msk [vmem:[#allocation2 + $0x270] sm:$0xff] %vm164, 0.0
    %245 = vst.msk [vmem:[#allocation2 + $0x278] sm:$0xff] %vm164, 0.0
    %246 = vst.msk [vmem:[#allocation2 + $0x280] sm:$0x3] %vm167, 0.0
    %247 = vst.msk [vmem:[#allocation2 + $0x288] sm:$0xff] %vm164, 0.0
    %248 = vst.msk [vmem:[#allocation2 + $0x290] sm:$0xff] %vm164, 0.0
    %249 = vst.msk [vmem:[#allocation2 + $0x298] sm:$0x3] %vm167, 0.0
    %250 = vst.msk [vmem:[#allocation2 + $0x2a0] sm:$0xff] %vm164, 0.0
    %251 = vst.msk [vmem:[#allocation2 + $0x2a8] sm:$0xff] %vm164, 0.0
    %252 = vst.msk [vmem:[#allocation2 + $0x2b0] sm:$0x3] %vm167, 0.0
    %253 = vst.msk [vmem:[#allocation2 + $0x2b8] sm:$0xff] %vm164, 0.0
    %254 = vst.msk [vmem:[#allocation2 + $0x2c0] sm:$0xff] %vm164, 0.0
    %255 = vst.msk [vmem:[#allocation2 + $0x2c8] sm:$0x3] %vm167, 0.0
    %256 = vst.msk [vmem:[#allocation2 + $0x2d0] sm:$0xff] %vm164, 0.0
    %257 = vst.msk [vmem:[#allocation2 + $0x2d8] sm:$0xff] %vm164, 0.0
    %258 = vst.msk [vmem:[#allocation2 + $0x2e0] sm:$0x3] %vm167, 0.0
    %259 = vst.msk [vmem:[#allocation2 + $0x2e8] sm:$0xff] %vm164, 0.0
    %260 = vst.msk [vmem:[#allocation2 + $0x2f0] sm:$0xff] %vm164, 0.0
    %261 = vst.msk [vmem:[#allocation2 + $0x2f8] sm:$0x3] %vm167, 0.0
    %262 = vst.msk [vmem:[#allocation2 + $0x300] sm:$0xff] %vm164, 0.0
    %263 = vst.msk [vmem:[#allocation2 + $0x308] sm:$0xff] %vm164, 0.0
    %264 = vst.msk [vmem:[#allocation2 + $0x310] sm:$0x3] %vm167, 0.0
    %265 = vst.msk [vmem:[#allocation2 + $0x318] sm:$0xff] %vm164, 0.0
    %266 = vst.msk [vmem:[#allocation2 + $0x320] sm:$0xff] %vm164, 0.0
    %267 = vst.msk [vmem:[#allocation2 + $0x328] sm:$0x3] %vm167, 0.0
    %268 = vst.msk [vmem:[#allocation2 + $0x330] sm:$0xff] %vm164, 0.0
    %269 = vst.msk [vmem:[#allocation2 + $0x338] sm:$0xff] %vm164, 0.0
    %270 = vst.msk [vmem:[#allocation2 + $0x340] sm:$0x3] %vm167, 0.0
    %271 = vst.msk [vmem:[#allocation2 + $0x348] sm:$0xff] %vm164, 0.0
    %272 = vst.msk [vmem:[#allocation2 + $0x350] sm:$0xff] %vm164, 0.0
    %273 = vst.msk [vmem:[#allocation2 + $0x358] sm:$0x3] %vm167, 0.0
    %v274 = vld [vmem:[%s0] sm:$0xff]
    %v275 = vld [vmem:[%s0 + $0x8] sm:$0xff]
    %v276 = vld [vmem:[%s0 + $0x10] sm:$0xff]
    %v277 = vld [vmem:[%s0 + $0x18] sm:$0xff]
    %v278 = vld [vmem:[%s0 + $0x20] sm:$0xff]
    %v279 = vld [vmem:[%s0 + $0x28] sm:$0xff]
    %v280 = vld [vmem:[%s0 + $0x30] sm:$0xff]
    %v281 = vld [vmem:[%s0 + $0x38] sm:$0xff]
    %v282 = vld [vmem:[%s0 + $0x40] sm:$0xff]
    %v283 = vld [vmem:[%s0 + $0x48] sm:$0xff]
    %v284 = vld [vmem:[%s0 + $0x50] sm:$0xff]
    %v285 = vld [vmem:[%s0 + $0x58] sm:$0xff]
    %v286 = vld [vmem:[%s0 + $0x60] sm:$0xff]
    %v287 = vld [vmem:[%s0 + $0x68] sm:$0xff]
    %v288 = vld [vmem:[%s0 + $0x70] sm:$0xff]
    %v289 = vld [vmem:[%s0 + $0x78] sm:$0xff]
    %v290 = vld [vmem:[%s0 + $0x80] sm:$0xff]
    %v291 = vld [vmem:[%s0 + $0x88] sm:$0xff]
    %v292 = vld [vmem:[%s0 + $0x90] sm:$0xff]
    %v293 = vld [vmem:[%s0 + $0x98] sm:$0xff]
    %v294 = vld [vmem:[%s0 + $0xa0] sm:$0xff]
    %v295 = vld [vmem:[%s0 + $0xa8] sm:$0xff]
    %v296 = vld [vmem:[%s0 + $0xb0] sm:$0xff]
    %v297 = vld [vmem:[%s0 + $0xb8] sm:$0xff]
    %v298 = vld [vmem:[%s0 + $0xc0] sm:$0xff]
    %v299 = vld [vmem:[%s0 + $0xc8] sm:$0xff]
    %v300 = vld [vmem:[%s0 + $0xd0] sm:$0xff]
    %v301 = vld [vmem:[%s0 + $0xd8] sm:$0xff]
    %v302 = vld [vmem:[%s0 + $0xe0] sm:$0xff]
    %v303 = vld [vmem:[%s0 + $0xe8] sm:$0xff]
    %v304 = vld [vmem:[%s0 + $0xf0] sm:$0xff]
    %v305 = vld [vmem:[%s0 + $0xf8] sm:$0xff]
    %v306 = vld [vmem:[%s0 + $0x100] sm:$0xff]
    %v307 = vld [vmem:[%s0 + $0x108] sm:$0xff]
    %v308 = vld [vmem:[%s0 + $0x110] sm:$0xff]
    %v309 = vld [vmem:[%s0 + $0x118] sm:$0xff]
    %v310 = vld [vmem:[%s0 + $0x120] sm:$0xff]
    %v311 = vld [vmem:[%s0 + $0x128] sm:$0xff]
    %v312 = vld [vmem:[%s0 + $0x130] sm:$0xff]
    %v313 = vld [vmem:[%s0 + $0x138] sm:$0xff]
    %v314 = vld [vmem:[%s0 + $0x140] sm:$0xff]
    %v315 = vld [vmem:[%s0 + $0x148] sm:$0xff]
    %v316 = vld [vmem:[%s0 + $0x150] sm:$0xff]
    %v317 = vld [vmem:[%s0 + $0x158] sm:$0xff]
    %v318 = vld [vmem:[%s0 + $0x160] sm:$0xff]
    %v319 = vld [vmem:[%s0 + $0x168] sm:$0xff]
    %v320 = vld [vmem:[%s0 + $0x170] sm:$0xff]
    %v321 = vld [vmem:[%s0 + $0x178] sm:$0xff]
    %v322 = vld [vmem:[%s0 + $0x180] sm:$0xff]
    %v323 = vld [vmem:[%s0 + $0x188] sm:$0xff]
    %v324 = vld [vmem:[%s0 + $0x190] sm:$0xff]
    %v325 = vld [vmem:[%s0 + $0x198] sm:$0xff]
    %v326 = vld [vmem:[%s0 + $0x1a0] sm:$0xff]
    %v327 = vld [vmem:[%s0 + $0x1a8] sm:$0xff]
    %v328 = vld [vmem:[%s0 + $0x1b0] sm:$0xff]
    %v329 = vld [vmem:[%s0 + $0x1b8] sm:$0xff]
    %v330 = vld [vmem:[%s0 + $0x1c0] sm:$0xff]
    %v331 = vld [vmem:[%s0 + $0x1c8] sm:$0xff]
    %v332 = vld [vmem:[%s0 + $0x1d0] sm:$0xff]
    %v333 = vld [vmem:[%s0 + $0x1d8] sm:$0xff]
    %v334 = vld [vmem:[%s0 + $0x1e0] sm:$0xff]
    %v335 = vld [vmem:[%s0 + $0x1e8] sm:$0xff]
    %v336 = vld [vmem:[%s0 + $0x1f0] sm:$0xff]
    %v337 = vld [vmem:[%s0 + $0x1f8] sm:$0xff]
    %s338 = scalar_lea.vmem [#allocation2], 24
    %339 = vst.msk [vmem:[%s338 + $0x1] sm:$0xff] %vm164, %v274
    %340 = vst.msk [vmem:[%s338 + $0x9] sm:$0xff] %vm164, %v275
    %341 = vst.msk [vmem:[%s338 + $0x19] sm:$0xff] %vm164, %v276
    %342 = vst.msk [vmem:[%s338 + $0x21] sm:$0xff] %vm164, %v277
    %343 = vst.msk [vmem:[%s338 + $0x31] sm:$0xff] %vm164, %v278
    %344 = vst.msk [vmem:[%s338 + $0x39] sm:$0xff] %vm164, %v279
    %345 = vst.msk [vmem:[%s338 + $0x49] sm:$0xff] %vm164, %v280
    %346 = vst.msk [vmem:[%s338 + $0x51] sm:$0xff] %vm164, %v281
    %347 = vst.msk [vmem:[%s338 + $0x61] sm:$0xff] %vm164, %v282
    %348 = vst.msk [vmem:[%s338 + $0x69] sm:$0xff] %vm164, %v283
    %349 = vst.msk [vmem:[%s338 + $0x79] sm:$0xff] %vm164, %v284
    %350 = vst.msk [vmem:[%s338 + $0x81] sm:$0xff] %vm164, %v285
    %351 = vst.msk [vmem:[%s338 + $0x91] sm:$0xff] %vm164, %v286
    %352 = vst.msk [vmem:[%s338 + $0x99] sm:$0xff] %vm164, %v287
    %353 = vst.msk [vmem:[%s338 + $0xa9] sm:$0xff] %vm164, %v288
    %354 = vst.msk [vmem:[%s338 + $0xb1] sm:$0xff] %vm164, %v289
    %355 = vst.msk [vmem:[%s338 + $0xc1] sm:$0xff] %vm164, %v290
    %356 = vst.msk [vmem:[%s338 + $0xc9] sm:$0xff] %vm164, %v291
    %357 = vst.msk [vmem:[%s338 + $0xd9] sm:$0xff] %vm164, %v292
    %358 = vst.msk [vmem:[%s338 + $0xe1] sm:$0xff] %vm164, %v293
    %359 = vst.msk [vmem:[%s338 + $0xf1] sm:$0xff] %vm164, %v294
    %360 = vst.msk [vmem:[%s338 + $0xf9] sm:$0xff] %vm164, %v295
    %361 = vst.msk [vmem:[%s338 + $0x109] sm:$0xff] %vm164, %v296
    %362 = vst.msk [vmem:[%s338 + $0x111] sm:$0xff] %vm164, %v297
    %363 = vst.msk [vmem:[%s338 + $0x121] sm:$0xff] %vm164, %v298
    %364 = vst.msk [vmem:[%s338 + $0x129] sm:$0xff] %vm164, %v299
    %365 = vst.msk [vmem:[%s338 + $0x139] sm:$0xff] %vm164, %v300
    %366 = vst.msk [vmem:[%s338 + $0x141] sm:$0xff] %vm164, %v301
    %367 = vst.msk [vmem:[%s338 + $0x151] sm:$0xff] %vm164, %v302
    %368 = vst.msk [vmem:[%s338 + $0x159] sm:$0xff] %vm164, %v303
    %369 = vst.msk [vmem:[%s338 + $0x169] sm:$0xff] %vm164, %v304
    %370 = vst.msk [vmem:[%s338 + $0x171] sm:$0xff] %vm164, %v305
    %371 = vst.msk [vmem:[%s338 + $0x1b1] sm:$0xff] %vm164, %v306
    %372 = vst.msk [vmem:[%s338 + $0x1b9] sm:$0xff] %vm164, %v307
    %373 = vst.msk [vmem:[%s338 + $0x1c9] sm:$0xff] %vm164, %v308
    %374 = vst.msk [vmem:[%s338 + $0x1d1] sm:$0xff] %vm164, %v309
    %375 = vst.msk [vmem:[%s338 + $0x1e1] sm:$0xff] %vm164, %v310
    %376 = vst.msk [vmem:[%s338 + $0x1e9] sm:$0xff] %vm164, %v311
    %377 = vst.msk [vmem:[%s338 + $0x1f9] sm:$0xff] %vm164, %v312
    %378 = vst.msk [vmem:[%s338 + $0x201] sm:$0xff] %vm164, %v313
    %379 = vst.msk [vmem:[%s338 + $0x211] sm:$0xff] %vm164, %v314
    %380 = vst.msk [vmem:[%s338 + $0x219] sm:$0xff] %vm164, %v315
    %381 = vst.msk [vmem:[%s338 + $0x229] sm:$0xff] %vm164, %v316
    %382 = vst.msk [vmem:[%s338 + $0x231] sm:$0xff] %vm164, %v317
    %383 = vst.msk [vmem:[%s338 + $0x241] sm:$0xff] %vm164, %v318
    %384 = vst.msk [vmem:[%s338 + $0x249] sm:$0xff] %vm164, %v319
    %385 = vst.msk [vmem:[%s338 + $0x259] sm:$0xff] %vm164, %v320
    %386 = vst.msk [vmem:[%s338 + $0x261] sm:$0xff] %vm164, %v321
    %387 = vst.msk [vmem:[%s338 + $0x271] sm:$0xff] %vm164, %v322
    %388 = vst.msk [vmem:[%s338 + $0x279] sm:$0xff] %vm164, %v323
    %389 = vst.msk [vmem:[%s338 + $0x289] sm:$0xff] %vm164, %v324
    %390 = vst.msk [vmem:[%s338 + $0x291] sm:$0xff] %vm164, %v325
    %391 = vst.msk [vmem:[%s338 + $0x2a1] sm:$0xff] %vm164, %v326
    %392 = vst.msk [vmem:[%s338 + $0x2a9] sm:$0xff] %vm164, %v327
    %393 = vst.msk [vmem:[%s338 + $0x2b9] sm:$0xff] %vm164, %v328
    %394 = vst.msk [vmem:[%s338 + $0x2c1] sm:$0xff] %vm164, %v329
    %395 = vst.msk [vmem:[%s338 + $0x2d1] sm:$0xff] %vm164, %v330
    %396 = vst.msk [vmem:[%s338 + $0x2d9] sm:$0xff] %vm164, %v331
    %397 = vst.msk [vmem:[%s338 + $0x2e9] sm:$0xff] %vm164, %v332
    %398 = vst.msk [vmem:[%s338 + $0x2f1] sm:$0xff] %vm164, %v333
    %399 = vst.msk [vmem:[%s338 + $0x301] sm:$0xff] %vm164, %v334
    %400 = vst.msk [vmem:[%s338 + $0x309] sm:$0xff] %vm164, %v335
    %401 = vst.msk [vmem:[%s338 + $0x319] sm:$0xff] %vm164, %v336
    %402 = vst.msk [vmem:[%s338 + $0x321] sm:$0xff] %vm164, %v337
    %v403 = vld [vmem:[#allocation2] sm:$0xff]
    %v404 = vld [vmem:[#allocation2 + $0x8] sm:$0xff]
    %v405 = vld [vmem:[#allocation2 + $0x18] sm:$0xff]
    %v406 = vld [vmem:[#allocation2 + $0x20] sm:$0xff]
    %v407 = vld [vmem:[#allocation2 + $0x30] sm:$0xff]
    %v408 = vld [vmem:[#allocation2 + $0x38] sm:$0xff]
    %v409 = vld [vmem:[#allocation2 + $0x48] sm:$0xff]
    %v410 = vld [vmem:[#allocation2 + $0x50] sm:$0xff]
    %v411 = vld [vmem:[#allocation2 + $0x60] sm:$0xff]
    %v412 = vld [vmem:[#allocation2 + $0x68] sm:$0xff]
    %v413 = vld [vmem:[#allocation2 + $0x78] sm:$0xff]
    %v414 = vld [vmem:[#allocation2 + $0x80] sm:$0xff]
    %v415 = vld [vmem:[#allocation2 + $0x90] sm:$0xff]
    %v416 = vld [vmem:[#allocation2 + $0x98] sm:$0xff]
    %v417 = vld [vmem:[#allocation2 + $0xa8] sm:$0xff]
    %v418 = vld [vmem:[#allocation2 + $0xb0] sm:$0xff]
    %v419 = vld [vmem:[#allocation2 + $0xc0] sm:$0xff]
    %v420 = vld [vmem:[#allocation2 + $0xc8] sm:$0xff]
    %v421 = vld [vmem:[#allocation2 + $0xd8] sm:$0xff]
    %v422 = vld [vmem:[#allocation2 + $0xe0] sm:$0xff]
    %v423 = vld [vmem:[#allocation2 + $0xf0] sm:$0xff]
    %v424 = vld [vmem:[#allocation2 + $0xf8] sm:$0xff]
    %v425 = vld [vmem:[#allocation2 + $0x108] sm:$0xff]
    %v426 = vld [vmem:[#allocation2 + $0x110] sm:$0xff]
    %v427 = vld [vmem:[#allocation2 + $0x120] sm:$0xff]
    %v428 = vld [vmem:[#allocation2 + $0x128] sm:$0xff]
    %v429 = vld [vmem:[#allocation2 + $0x138] sm:$0xff]
    %v430 = vld [vmem:[#allocation2 + $0x140] sm:$0xff]
    %v431 = vld [vmem:[#allocation2 + $0x150] sm:$0xff]
    %v432 = vld [vmem:[#allocation2 + $0x158] sm:$0xff]
    %v433 = vld [vmem:[#allocation2 + $0x168] sm:$0xff]
    %v434 = vld [vmem:[#allocation2 + $0x170] sm:$0xff]
    %v435 = vld [vmem:[#allocation2 + $0x1b0] sm:$0xff]
    %v436 = vld [vmem:[#allocation2 + $0x1b8] sm:$0xff]
    %v437 = vld [vmem:[#allocation2 + $0x1c8] sm:$0xff]
    %v438 = vld [vmem:[#allocation2 + $0x1d0] sm:$0xff]
    %v439 = vld [vmem:[#allocation2 + $0x1e0] sm:$0xff]
    %v440 = vld [vmem:[#allocation2 + $0x1e8] sm:$0xff]
    %v441 = vld [vmem:[#allocation2 + $0x1f8] sm:$0xff]
    %v442 = vld [vmem:[#allocation2 + $0x200] sm:$0xff]
    %v443 = vld [vmem:[#allocation2 + $0x210] sm:$0xff]
    %v444 = vld [vmem:[#allocation2 + $0x218] sm:$0xff]
    %v445 = vld [vmem:[#allocation2 + $0x228] sm:$0xff]
    %v446 = vld [vmem:[#allocation2 + $0x230] sm:$0xff]
    %v447 = vld [vmem:[#allocation2 + $0x240] sm:$0xff]
    %v448 = vld [vmem:[#allocation2 + $0x248] sm:$0xff]
    %v449 = vld [vmem:[#allocation2 + $0x258] sm:$0xff]
    %v450 = vld [vmem:[#allocation2 + $0x260] sm:$0xff]
    %v451 = vld [vmem:[#allocation2 + $0x270] sm:$0xff]
    %v452 = vld [vmem:[#allocation2 + $0x278] sm:$0xff]
    %v453 = vld [vmem:[#allocation2 + $0x288] sm:$0xff]
    %v454 = vld [vmem:[#allocation2 + $0x290] sm:$0xff]
    %v455 = vld [vmem:[#allocation2 + $0x2a0] sm:$0xff]
    %v456 = vld [vmem:[#allocation2 + $0x2a8] sm:$0xff]
    %v457 = vld [vmem:[#allocation2 + $0x2b8] sm:$0xff]
    %v458 = vld [vmem:[#allocation2 + $0x2c0] sm:$0xff]
    %v459 = vld [vmem:[#allocation2 + $0x2d0] sm:$0xff]
    %v460 = vld [vmem:[#allocation2 + $0x2d8] sm:$0xff]
    %v461 = vld [vmem:[#allocation2 + $0x2e8] sm:$0xff]
    %v462 = vld [vmem:[#allocation2 + $0x2f0] sm:$0xff]
    %v463 = vld [vmem:[#allocation2 + $0x300] sm:$0xff]
    %v464 = vld [vmem:[#allocation2 + $0x308] sm:$0xff]
    %v465 = vld [vmem:[#allocation2 + $0x318] sm:$0xff]
    %v466 = vld [vmem:[#allocation2 + $0x320] sm:$0xff]
    %v467 = vld [vmem:[#allocation2 + $0x1] sm:$0xff]
    %v468 = vld [vmem:[#allocation2 + $0x9] sm:$0xff]
    %v469 = vld [vmem:[#allocation2 + $0x19] sm:$0xff]
    %v470 = vld [vmem:[#allocation2 + $0x21] sm:$0xff]
    %v471 = vld [vmem:[#allocation2 + $0x31] sm:$0xff]
    %v472 = vld [vmem:[#allocation2 + $0x39] sm:$0xff]
    %v473 = vld [vmem:[#allocation2 + $0x49] sm:$0xff]
    %v474 = vld [vmem:[#allocation2 + $0x51] sm:$0xff]
    %v475 = vld [vmem:[#allocation2 + $0x61] sm:$0xff]
    %v476 = vld [vmem:[#allocation2 + $0x69] sm:$0xff]
    %v477 = vld [vmem:[#allocation2 + $0x79] sm:$0xff]
    %v478 = vld [vmem:[#allocation2 + $0x81] sm:$0xff]
    %v479 = vld [vmem:[#allocation2 + $0x91] sm:$0xff]
    %v480 = vld [vmem:[#allocation2 + $0x99] sm:$0xff]
    %v481 = vld [vmem:[#allocation2 + $0xa9] sm:$0xff]
    %v482 = vld [vmem:[#allocation2 + $0xb1] sm:$0xff]
    %v483 = vld [vmem:[#allocation2 + $0xc1] sm:$0xff]
    %v484 = vld [vmem:[#allocation2 + $0xc9] sm:$0xff]
    %v485 = vld [vmem:[#allocation2 + $0xd9] sm:$0xff]
    %v486 = vld [vmem:[#allocation2 + $0xe1] sm:$0xff]
    %v487 = vld [vmem:[#allocation2 + $0xf1] sm:$0xff]
    %v488 = vld [vmem:[#allocation2 + $0xf9] sm:$0xff]
    %v489 = vld [vmem:[#allocation2 + $0x109] sm:$0xff]
    %v490 = vld [vmem:[#allocation2 + $0x111] sm:$0xff]
    %v491 = vld [vmem:[#allocation2 + $0x121] sm:$0xff]
    %v492 = vld [vmem:[#allocation2 + $0x129] sm:$0xff]
    %v493 = vld [vmem:[#allocation2 + $0x139] sm:$0xff]
    %v494 = vld [vmem:[#allocation2 + $0x141] sm:$0xff]
    %v495 = vld [vmem:[#allocation2 + $0x151] sm:$0xff]
    %v496 = vld [vmem:[#allocation2 + $0x159] sm:$0xff]
    %v497 = vld [vmem:[#allocation2 + $0x169] sm:$0xff]
    %v498 = vld [vmem:[#allocation2 + $0x171] sm:$0xff]
    %v499 = vld [vmem:[#allocation2 + $0x1b1] sm:$0xff]
    %v500 = vld [vmem:[#allocation2 + $0x1b9] sm:$0xff]
    %v501 = vld [vmem:[#allocation2 + $0x1c9] sm:$0xff]
    %v502 = vld [vmem:[#allocation2 + $0x1d1] sm:$0xff]
    %v503 = vld [vmem:[#allocation2 + $0x1e1] sm:$0xff]
    %v504 = vld [vmem:[#allocation2 + $0x1e9] sm:$0xff]
    %v505 = vld [vmem:[#allocation2 + $0x1f9] sm:$0xff]
    %v506 = vld [vmem:[#allocation2 + $0x201] sm:$0xff]
    %v507 = vld [vmem:[#allocation2 + $0x211] sm:$0xff]
    %v508 = vld [vmem:[#allocation2 + $0x219] sm:$0xff]
    %v509 = vld [vmem:[#allocation2 + $0x229] sm:$0xff]
    %v510 = vld [vmem:[#allocation2 + $0x231] sm:$0xff]
    %v511 = vld [vmem:[#allocation2 + $0x241] sm:$0xff]
    %v512 = vld [vmem:[#allocation2 + $0x249] sm:$0xff]
    %v513 = vld [vmem:[#allocation2 + $0x259] sm:$0xff]
    %v514 = vld [vmem:[#allocation2 + $0x261] sm:$0xff]
    %v515 = vld [vmem:[#allocation2 + $0x271] sm:$0xff]
    %v516 = vld [vmem:[#allocation2 + $0x279] sm:$0xff]
    %v517 = vld [vmem:[#allocation2 + $0x289] sm:$0xff]
    %v518 = vld [vmem:[#allocation2 + $0x291] sm:$0xff]
    %v519 = vld [vmem:[#allocation2 + $0x2a1] sm:$0xff]
    %v520 = vld [vmem:[#allocation2 + $0x2a9] sm:$0xff]
    %v521 = vld [vmem:[#allocation2 + $0x2b9] sm:$0xff]
    %v522 = vld [vmem:[#allocation2 + $0x2c1] sm:$0xff]
    %v523 = vld [vmem:[#allocation2 + $0x2d1] sm:$0xff]
    %v524 = vld [vmem:[#allocation2 + $0x2d9] sm:$0xff]
    %v525 = vld [vmem:[#allocation2 + $0x2e9] sm:$0xff]
    %v526 = vld [vmem:[#allocation2 + $0x2f1] sm:$0xff]
    %v527 = vld [vmem:[#allocation2 + $0x301] sm:$0xff]
    %v528 = vld [vmem:[#allocation2 + $0x309] sm:$0xff]
    %v529 = vld [vmem:[#allocation2 + $0x319] sm:$0xff]
    %v530 = vld [vmem:[#allocation2 + $0x321] sm:$0xff]
    %v531 = vld [vmem:[#allocation2 + $0x2] sm:$0xff]
    %v532 = vld [vmem:[#allocation2 + $0xa] sm:$0xff]
    %v533 = vld [vmem:[#allocation2 + $0x1a] sm:$0xff]
    %v534 = vld [vmem:[#allocation2 + $0x22] sm:$0xff]
    %v535 = vld [vmem:[#allocation2 + $0x32] sm:$0xff]
    %v536 = vld [vmem:[#allocation2 + $0x3a] sm:$0xff]
    %v537 = vld [vmem:[#allocation2 + $0x4a] sm:$0xff]
    %v538 = vld [vmem:[#allocation2 + $0x52] sm:$0xff]
    %v539 = vld [vmem:[#allocation2 + $0x62] sm:$0xff]
    %v540 = vld [vmem:[#allocation2 + $0x6a] sm:$0xff]
    %v541 = vld [vmem:[#allocation2 + $0x7a] sm:$0xff]
    %v542 = vld [vmem:[#allocation2 + $0x82] sm:$0xff]
    %v543 = vld [vmem:[#allocation2 + $0x92] sm:$0xff]
    %v544 = vld [vmem:[#allocation2 + $0x9a] sm:$0xff]
    %v545 = vld [vmem:[#allocation2 + $0xaa] sm:$0xff]
    %v546 = vld [vmem:[#allocation2 + $0xb2] sm:$0xff]
    %v547 = vld [vmem:[#allocation2 + $0xc2] sm:$0xff]
    %v548 = vld [vmem:[#allocation2 + $0xca] sm:$0xff]
    %v549 = vld [vmem:[#allocation2 + $0xda] sm:$0xff]
    %v550 = vld [vmem:[#allocation2 + $0xe2] sm:$0xff]
    %v551 = vld [vmem:[#allocation2 + $0xf2] sm:$0xff]
    %v552 = vld [vmem:[#allocation2 + $0xfa] sm:$0xff]
    %v553 = vld [vmem:[#allocation2 + $0x10a] sm:$0xff]
    %v554 = vld [vmem:[#allocation2 + $0x112] sm:$0xff]
    %v555 = vld [vmem:[#allocation2 + $0x122] sm:$0xff]
    %v556 = vld [vmem:[#allocation2 + $0x12a] sm:$0xff]
    %v557 = vld [vmem:[#allocation2 + $0x13a] sm:$0xff]
    %v558 = vld [vmem:[#allocation2 + $0x142] sm:$0xff]
    %v559 = vld [vmem:[#allocation2 + $0x152] sm:$0xff]
    %v560 = vld [vmem:[#allocation2 + $0x15a] sm:$0xff]
    %v561 = vld [vmem:[#allocation2 + $0x16a] sm:$0xff]
    %v562 = vld [vmem:[#allocation2 + $0x172] sm:$0xff]
    %v563 = vld [vmem:[#allocation2 + $0x1b2] sm:$0xff]
    %v564 = vld [vmem:[#allocation2 + $0x1ba] sm:$0xff]
    %v565 = vld [vmem:[#allocation2 + $0x1ca] sm:$0xff]
    %v566 = vld [vmem:[#allocation2 + $0x1d2] sm:$0xff]
    %v567 = vld [vmem:[#allocation2 + $0x1e2] sm:$0xff]
    %v568 = vld [vmem:[#allocation2 + $0x1ea] sm:$0xff]
    %v569 = vld [vmem:[#allocation2 + $0x1fa] sm:$0xff]
    %v570 = vld [vmem:[#allocation2 + $0x202] sm:$0xff]
    %v571 = vld [vmem:[#allocation2 + $0x212] sm:$0xff]
    %v572 = vld [vmem:[#allocation2 + $0x21a] sm:$0xff]
    %v573 = vld [vmem:[#allocation2 + $0x22a] sm:$0xff]
    %v574 = vld [vmem:[#allocation2 + $0x232] sm:$0xff]
    %v575 = vld [vmem:[#allocation2 + $0x242] sm:$0xff]
    %v576 = vld [vmem:[#allocation2 + $0x24a] sm:$0xff]
    %v577 = vld [vmem:[#allocation2 + $0x25a] sm:$0xff]
    %v578 = vld [vmem:[#allocation2 + $0x262] sm:$0xff]
    %v579 = vld [vmem:[#allocation2 + $0x272] sm:$0xff]
    %v580 = vld [vmem:[#allocation2 + $0x27a] sm:$0xff]
    %v581 = vld [vmem:[#allocation2 + $0x28a] sm:$0xff]
    %v582 = vld [vmem:[#allocation2 + $0x292] sm:$0xff]
    %v583 = vld [vmem:[#allocation2 + $0x2a2] sm:$0xff]
    %v584 = vld [vmem:[#allocation2 + $0x2aa] sm:$0xff]
    %v585 = vld [vmem:[#allocation2 + $0x2ba] sm:$0xff]
    %v586 = vld [vmem:[#allocation2 + $0x2c2] sm:$0xff]
    %v587 = vld [vmem:[#allocation2 + $0x2d2] sm:$0xff]
    %v588 = vld [vmem:[#allocation2 + $0x2da] sm:$0xff]
    %v589 = vld [vmem:[#allocation2 + $0x2ea] sm:$0xff]
    %v590 = vld [vmem:[#allocation2 + $0x2f2] sm:$0xff]
    %v591 = vld [vmem:[#allocation2 + $0x302] sm:$0xff]
    %v592 = vld [vmem:[#allocation2 + $0x30a] sm:$0xff]
    %v593 = vld [vmem:[#allocation2 + $0x31a] sm:$0xff]
    %v594 = vld [vmem:[#allocation2 + $0x322] sm:$0xff]
    %v595 = vld [vmem:[%s338] sm:$0xff]
    %v596 = vld [vmem:[%s338 + $0x8] sm:$0xff]
    %v597 = vld [vmem:[%s338 + $0x18] sm:$0xff]
    %v598 = vld [vmem:[%s338 + $0x20] sm:$0xff]
    %v599 = vld [vmem:[%s338 + $0x30] sm:$0xff]
    %v600 = vld [vmem:[%s338 + $0x38] sm:$0xff]
    %v601 = vld [vmem:[%s338 + $0x48] sm:$0xff]
    %v602 = vld [vmem:[%s338 + $0x50] sm:$0xff]
    %v603 = vld [vmem:[%s338 + $0x60] sm:$0xff]
    %v604 = vld [vmem:[%s338 + $0x68] sm:$0xff]
    %v605 = vld [vmem:[%s338 + $0x78] sm:$0xff]
    %v606 = vld [vmem:[%s338 + $0x80] sm:$0xff]
    %v607 = vld [vmem:[%s338 + $0x90] sm:$0xff]
    %v608 = vld [vmem:[%s338 + $0x98] sm:$0xff]
    %v609 = vld [vmem:[%s338 + $0xa8] sm:$0xff]
    %v610 = vld [vmem:[%s338 + $0xb0] sm:$0xff]
    %v611 = vld [vmem:[%s338 + $0xc0] sm:$0xff]
    %v612 = vld [vmem:[%s338 + $0xc8] sm:$0xff]
    %v613 = vld [vmem:[%s338 + $0xd8] sm:$0xff]
    %v614 = vld [vmem:[%s338 + $0xe0] sm:$0xff]
    %v615 = vld [vmem:[%s338 + $0xf0] sm:$0xff]
    %v616 = vld [vmem:[%s338 + $0xf8] sm:$0xff]
    %v617 = vld [vmem:[%s338 + $0x108] sm:$0xff]
    %v618 = vld [vmem:[%s338 + $0x110] sm:$0xff]
    %v619 = vld [vmem:[%s338 + $0x120] sm:$0xff]
    %v620 = vld [vmem:[%s338 + $0x128] sm:$0xff]
    %v621 = vld [vmem:[%s338 + $0x138] sm:$0xff]
    %v622 = vld [vmem:[%s338 + $0x140] sm:$0xff]
    %v623 = vld [vmem:[%s338 + $0x150] sm:$0xff]
    %v624 = vld [vmem:[%s338 + $0x158] sm:$0xff]
    %v625 = vld [vmem:[%s338 + $0x168] sm:$0xff]
    %v626 = vld [vmem:[%s338 + $0x170] sm:$0xff]
    %v627 = vld [vmem:[%s338 + $0x1b0] sm:$0xff]
    %v628 = vld [vmem:[%s338 + $0x1b8] sm:$0xff]
    %v629 = vld [vmem:[%s338 + $0x1c8] sm:$0xff]
    %v630 = vld [vmem:[%s338 + $0x1d0] sm:$0xff]
    %v631 = vld [vmem:[%s338 + $0x1e0] sm:$0xff]
    %v632 = vld [vmem:[%s338 + $0x1e8] sm:$0xff]
    %v633 = vld [vmem:[%s338 + $0x1f8] sm:$0xff]
    %v634 = vld [vmem:[%s338 + $0x200] sm:$0xff]
    %v635 = vld [vmem:[%s338 + $0x210] sm:$0xff]
    %v636 = vld [vmem:[%s338 + $0x218] sm:$0xff]
    %v637 = vld [vmem:[%s338 + $0x228] sm:$0xff]
    %v638 = vld [vmem:[%s338 + $0x230] sm:$0xff]
    %v639 = vld [vmem:[%s338 + $0x240] sm:$0xff]
    %v640 = vld [vmem:[%s338 + $0x248] sm:$0xff]
    %v641 = vld [vmem:[%s338 + $0x258] sm:$0xff]
    %v642 = vld [vmem:[%s338 + $0x260] sm:$0xff]
    %v643 = vld [vmem:[%s338 + $0x270] sm:$0xff]
    %v644 = vld [vmem:[%s338 + $0x278] sm:$0xff]
    %v645 = vld [vmem:[%s338 + $0x288] sm:$0xff]
    %v646 = vld [vmem:[%s338 + $0x290] sm:$0xff]
    %v647 = vld [vmem:[%s338 + $0x2a0] sm:$0xff]
    %v648 = vld [vmem:[%s338 + $0x2a8] sm:$0xff]
    %v649 = vld [vmem:[%s338 + $0x2b8] sm:$0xff]
    %v650 = vld [vmem:[%s338 + $0x2c0] sm:$0xff]
    %v651 = vld [vmem:[%s338 + $0x2d0] sm:$0xff]
    %v652 = vld [vmem:[%s338 + $0x2d8] sm:$0xff]
    %v653 = vld [vmem:[%s338 + $0x2e8] sm:$0xff]
    %v654 = vld [vmem:[%s338 + $0x2f0] sm:$0xff]
    %v655 = vld [vmem:[%s338 + $0x300] sm:$0xff]
    %v656 = vld [vmem:[%s338 + $0x308] sm:$0xff]
    %v657 = vld [vmem:[%s338 + $0x318] sm:$0xff]
    %v658 = vld [vmem:[%s338 + $0x320] sm:$0xff]
    %v659 = vld [vmem:[%s338 + $0x1] sm:$0xff]
    %v660 = vld [vmem:[%s338 + $0x9] sm:$0xff]
    %v661 = vld [vmem:[%s338 + $0x19] sm:$0xff]
    %v662 = vld [vmem:[%s338 + $0x21] sm:$0xff]
    %v663 = vld [vmem:[%s338 + $0x31] sm:$0xff]
    %v664 = vld [vmem:[%s338 + $0x39] sm:$0xff]
    %v665 = vld [vmem:[%s338 + $0x49] sm:$0xff]
    %v666 = vld [vmem:[%s338 + $0x51] sm:$0xff]
    %v667 = vld [vmem:[%s338 + $0x61] sm:$0xff]
    %v668 = vld [vmem:[%s338 + $0x69] sm:$0xff]
    %v669 = vld [vmem:[%s338 + $0x79] sm:$0xff]
    %v670 = vld [vmem:[%s338 + $0x81] sm:$0xff]
    %v671 = vld [vmem:[%s338 + $0x91] sm:$0xff]
    %v672 = vld [vmem:[%s338 + $0x99] sm:$0xff]
    %v673 = vld [vmem:[%s338 + $0xa9] sm:$0xff]
    %v674 = vld [vmem:[%s338 + $0xb1] sm:$0xff]
    %v675 = vld [vmem:[%s338 + $0xc1] sm:$0xff]
    %v676 = vld [vmem:[%s338 + $0xc9] sm:$0xff]
    %v677 = vld [vmem:[%s338 + $0xd9] sm:$0xff]
    %v678 = vld [vmem:[%s338 + $0xe1] sm:$0xff]
    %v679 = vld [vmem:[%s338 + $0xf1] sm:$0xff]
    %v680 = vld [vmem:[%s338 + $0xf9] sm:$0xff]
    %v681 = vld [vmem:[%s338 + $0x109] sm:$0xff]
    %v682 = vld [vmem:[%s338 + $0x111] sm:$0xff]
    %v683 = vld [vmem:[%s338 + $0x121] sm:$0xff]
    %v684 = vld [vmem:[%s338 + $0x129] sm:$0xff]
    %v685 = vld [vmem:[%s338 + $0x139] sm:$0xff]
    %v686 = vld [vmem:[%s338 + $0x141] sm:$0xff]
    %v687 = vld [vmem:[%s338 + $0x151] sm:$0xff]
    %v688 = vld [vmem:[%s338 + $0x159] sm:$0xff]
    %v689 = vld [vmem:[%s338 + $0x169] sm:$0xff]
    %v690 = vld [vmem:[%s338 + $0x171] sm:$0xff]
    %v691 = vld [vmem:[%s338 + $0x1b1] sm:$0xff]
    %v692 = vld [vmem:[%s338 + $0x1b9] sm:$0xff]
    %v693 = vld [vmem:[%s338 + $0x1c9] sm:$0xff]
    %v694 = vld [vmem:[%s338 + $0x1d1] sm:$0xff]
    %v695 = vld [vmem:[%s338 + $0x1e1] sm:$0xff]
    %v696 = vld [vmem:[%s338 + $0x1e9] sm:$0xff]
    %v697 = vld [vmem:[%s338 + $0x1f9] sm:$0xff]
    %v698 = vld [vmem:[%s338 + $0x201] sm:$0xff]
    %v699 = vld [vmem:[%s338 + $0x211] sm:$0xff]
    %v700 = vld [vmem:[%s338 + $0x219] sm:$0xff]
    %v701 = vld [vmem:[%s338 + $0x229] sm:$0xff]
    %v702 = vld [vmem:[%s338 + $0x231] sm:$0xff]
    %v703 = vld [vmem:[%s338 + $0x241] sm:$0xff]
    %v704 = vld [vmem:[%s338 + $0x249] sm:$0xff]
    %v705 = vld [vmem:[%s338 + $0x259] sm:$0xff]
    %v706 = vld [vmem:[%s338 + $0x261] sm:$0xff]
    %v707 = vld [vmem:[%s338 + $0x271] sm:$0xff]
    %v708 = vld [vmem:[%s338 + $0x279] sm:$0xff]
    %v709 = vld [vmem:[%s338 + $0x289] sm:$0xff]
    %v710 = vld [vmem:[%s338 + $0x291] sm:$0xff]
    %v711 = vld [vmem:[%s338 + $0x2a1] sm:$0xff]
    %v712 = vld [vmem:[%s338 + $0x2a9] sm:$0xff]
    %v713 = vld [vmem:[%s338 + $0x2b9] sm:$0xff]
    %v714 = vld [vmem:[%s338 + $0x2c1] sm:$0xff]
    %v715 = vld [vmem:[%s338 + $0x2d1] sm:$0xff]
    %v716 = vld [vmem:[%s338 + $0x2d9] sm:$0xff]
    %v717 = vld [vmem:[%s338 + $0x2e9] sm:$0xff]
    %v718 = vld [vmem:[%s338 + $0x2f1] sm:$0xff]
    %v719 = vld [vmem:[%s338 + $0x301] sm:$0xff]
    %v720 = vld [vmem:[%s338 + $0x309] sm:$0xff]
    %v721 = vld [vmem:[%s338 + $0x319] sm:$0xff]
    %v722 = vld [vmem:[%s338 + $0x321] sm:$0xff]
    %v723 = vld [vmem:[%s338 + $0x2] sm:$0xff]
    %v724 = vld [vmem:[%s338 + $0xa] sm:$0xff]
    %v725 = vld [vmem:[%s338 + $0x1a] sm:$0xff]
    %v726 = vld [vmem:[%s338 + $0x22] sm:$0xff]
    %v727 = vld [vmem:[%s338 + $0x32] sm:$0xff]
    %v728 = vld [vmem:[%s338 + $0x3a] sm:$0xff]
    %v729 = vld [vmem:[%s338 + $0x4a] sm:$0xff]
    %v730 = vld [vmem:[%s338 + $0x52] sm:$0xff]
    %v731 = vld [vmem:[%s338 + $0x62] sm:$0xff]
    %v732 = vld [vmem:[%s338 + $0x6a] sm:$0xff]
    %v733 = vld [vmem:[%s338 + $0x7a] sm:$0xff]
    %v734 = vld [vmem:[%s338 + $0x82] sm:$0xff]
    %v735 = vld [vmem:[%s338 + $0x92] sm:$0xff]
    %v736 = vld [vmem:[%s338 + $0x9a] sm:$0xff]
    %v737 = vld [vmem:[%s338 + $0xaa] sm:$0xff]
    %v738 = vld [vmem:[%s338 + $0xb2] sm:$0xff]
    %v739 = vld [vmem:[%s338 + $0xc2] sm:$0xff]
    %v740 = vld [vmem:[%s338 + $0xca] sm:$0xff]
    %v741 = vld [vmem:[%s338 + $0xda] sm:$0xff]
    %v742 = vld [vmem:[%s338 + $0xe2] sm:$0xff]
    %v743 = vld [vmem:[%s338 + $0xf2] sm:$0xff]
    %v744 = vld [vmem:[%s338 + $0xfa] sm:$0xff]
    %v745 = vld [vmem:[%s338 + $0x10a] sm:$0xff]
    %v746 = vld [vmem:[%s338 + $0x112] sm:$0xff]
    %v747 = vld [vmem:[%s338 + $0x122] sm:$0xff]
    %v748 = vld [vmem:[%s338 + $0x12a] sm:$0xff]
    %v749 = vld [vmem:[%s338 + $0x13a] sm:$0xff]
    %v750 = vld [vmem:[%s338 + $0x142] sm:$0xff]
    %v751 = vld [vmem:[%s338 + $0x152] sm:$0xff]
    %v752 = vld [vmem:[%s338 + $0x15a] sm:$0xff]
    %v753 = vld [vmem:[%s338 + $0x16a] sm:$0xff]
    %v754 = vld [vmem:[%s338 + $0x172] sm:$0xff]
    %v755 = vld [vmem:[%s338 + $0x1b2] sm:$0xff]
    %v756 = vld [vmem:[%s338 + $0x1ba] sm:$0xff]
    %v757 = vld [vmem:[%s338 + $0x1ca] sm:$0xff]
    %v758 = vld [vmem:[%s338 + $0x1d2] sm:$0xff]
    %v759 = vld [vmem:[%s338 + $0x1e2] sm:$0xff]
    %v760 = vld [vmem:[%s338 + $0x1ea] sm:$0xff]
    %v761 = vld [vmem:[%s338 + $0x1fa] sm:$0xff]
    %v762 = vld [vmem:[%s338 + $0x202] sm:$0xff]
    %v763 = vld [vmem:[%s338 + $0x212] sm:$0xff]
    %v764 = vld [vmem:[%s338 + $0x21a] sm:$0xff]
    %v765 = vld [vmem:[%s338 + $0x22a] sm:$0xff]
    %v766 = vld [vmem:[%s338 + $0x232] sm:$0xff]
    %v767 = vld [vmem:[%s338 + $0x242] sm:$0xff]
    %v768 = vld [vmem:[%s338 + $0x24a] sm:$0xff]
    %v769 = vld [vmem:[%s338 + $0x25a] sm:$0xff]
    %v770 = vld [vmem:[%s338 + $0x262] sm:$0xff]
    %v771 = vld [vmem:[%s338 + $0x272] sm:$0xff]
    %v772 = vld [vmem:[%s338 + $0x27a] sm:$0xff]
    %v773 = vld [vmem:[%s338 + $0x28a] sm:$0xff]
    %v774 = vld [vmem:[%s338 + $0x292] sm:$0xff]
    %v775 = vld [vmem:[%s338 + $0x2a2] sm:$0xff]
    %v776 = vld [vmem:[%s338 + $0x2aa] sm:$0xff]
    %v777 = vld [vmem:[%s338 + $0x2ba] sm:$0xff]
    %v778 = vld [vmem:[%s338 + $0x2c2] sm:$0xff]
    %v779 = vld [vmem:[%s338 + $0x2d2] sm:$0xff]
    %v780 = vld [vmem:[%s338 + $0x2da] sm:$0xff]
    %v781 = vld [vmem:[%s338 + $0x2ea] sm:$0xff]
    %v782 = vld [vmem:[%s338 + $0x2f2] sm:$0xff]
    %v783 = vld [vmem:[%s338 + $0x302] sm:$0xff]
    %v784 = vld [vmem:[%s338 + $0x30a] sm:$0xff]
    %v785 = vld [vmem:[%s338 + $0x31a] sm:$0xff]
    %v786 = vld [vmem:[%s338 + $0x322] sm:$0xff]
    %s787 = scalar_lea.vmem [#allocation2], 48
    %v788 = vld [vmem:[%s787] sm:$0xff]
    %v789 = vld [vmem:[%s787 + $0x8] sm:$0xff]
    %v790 = vld [vmem:[%s787 + $0x18] sm:$0xff]
    %v791 = vld [vmem:[%s787 + $0x20] sm:$0xff]
    %v792 = vld [vmem:[%s787 + $0x30] sm:$0xff]
    %v793 = vld [vmem:[%s787 + $0x38] sm:$0xff]
    %v794 = vld [vmem:[%s787 + $0x48] sm:$0xff]
    %v795 = vld [vmem:[%s787 + $0x50] sm:$0xff]
    %v796 = vld [vmem:[%s787 + $0x60] sm:$0xff]
    %v797 = vld [vmem:[%s787 + $0x68] sm:$0xff]
    %v798 = vld [vmem:[%s787 + $0x78] sm:$0xff]
    %v799 = vld [vmem:[%s787 + $0x80] sm:$0xff]
    %v800 = vld [vmem:[%s787 + $0x90] sm:$0xff]
    %v801 = vld [vmem:[%s787 + $0x98] sm:$0xff]
    %v802 = vld [vmem:[%s787 + $0xa8] sm:$0xff]
    %v803 = vld [vmem:[%s787 + $0xb0] sm:$0xff]
    %v804 = vld [vmem:[%s787 + $0xc0] sm:$0xff]
    %v805 = vld [vmem:[%s787 + $0xc8] sm:$0xff]
    %v806 = vld [vmem:[%s787 + $0xd8] sm:$0xff]
    %v807 = vld [vmem:[%s787 + $0xe0] sm:$0xff]
    %v808 = vld [vmem:[%s787 + $0xf0] sm:$0xff]
    %v809 = vld [vmem:[%s787 + $0xf8] sm:$0xff]
    %v810 = vld [vmem:[%s787 + $0x108] sm:$0xff]
    %v811 = vld [vmem:[%s787 + $0x110] sm:$0xff]
    %v812 = vld [vmem:[%s787 + $0x120] sm:$0xff]
    %v813 = vld [vmem:[%s787 + $0x128] sm:$0xff]
    %v814 = vld [vmem:[%s787 + $0x138] sm:$0xff]
    %v815 = vld [vmem:[%s787 + $0x140] sm:$0xff]
    %v816 = vld [vmem:[%s787 + $0x150] sm:$0xff]
    %v817 = vld [vmem:[%s787 + $0x158] sm:$0xff]
    %v818 = vld [vmem:[%s787 + $0x168] sm:$0xff]
    %v819 = vld [vmem:[%s787 + $0x170] sm:$0xff]
    %v820 = vld [vmem:[%s787 + $0x1b0] sm:$0xff]
    %v821 = vld [vmem:[%s787 + $0x1b8] sm:$0xff]
    %v822 = vld [vmem:[%s787 + $0x1c8] sm:$0xff]
    %v823 = vld [vmem:[%s787 + $0x1d0] sm:$0xff]
    %v824 = vld [vmem:[%s787 + $0x1e0] sm:$0xff]
    %v825 = vld [vmem:[%s787 + $0x1e8] sm:$0xff]
    %v826 = vld [vmem:[%s787 + $0x1f8] sm:$0xff]
    %v827 = vld [vmem:[%s787 + $0x200] sm:$0xff]
    %v828 = vld [vmem:[%s787 + $0x210] sm:$0xff]
    %v829 = vld [vmem:[%s787 + $0x218] sm:$0xff]
    %v830 = vld [vmem:[%s787 + $0x228] sm:$0xff]
    %v831 = vld [vmem:[%s787 + $0x230] sm:$0xff]
    %v832 = vld [vmem:[%s787 + $0x240] sm:$0xff]
    %v833 = vld [vmem:[%s787 + $0x248] sm:$0xff]
    %v834 = vld [vmem:[%s787 + $0x258] sm:$0xff]
    %v835 = vld [vmem:[%s787 + $0x260] sm:$0xff]
    %v836 = vld [vmem:[%s787 + $0x270] sm:$0xff]
    %v837 = vld [vmem:[%s787 + $0x278] sm:$0xff]
    %v838 = vld [vmem:[%s787 + $0x288] sm:$0xff]
    %v839 = vld [vmem:[%s787 + $0x290] sm:$0xff]
    %v840 = vld [vmem:[%s787 + $0x2a0] sm:$0xff]
    %v841 = vld [vmem:[%s787 + $0x2a8] sm:$0xff]
    %v842 = vld [vmem:[%s787 + $0x2b8] sm:$0xff]
    %v843 = vld [vmem:[%s787 + $0x2c0] sm:$0xff]
    %v844 = vld [vmem:[%s787 + $0x2d0] sm:$0xff]
    %v845 = vld [vmem:[%s787 + $0x2d8] sm:$0xff]
    %v846 = vld [vmem:[%s787 + $0x2e8] sm:$0xff]
    %v847 = vld [vmem:[%s787 + $0x2f0] sm:$0xff]
    %v848 = vld [vmem:[%s787 + $0x300] sm:$0xff]
    %v849 = vld [vmem:[%s787 + $0x308] sm:$0xff]
    %v850 = vld [vmem:[%s787 + $0x318] sm:$0xff]
    %v851 = vld [vmem:[%s787 + $0x320] sm:$0xff]
    %v852 = vld [vmem:[%s787 + $0x1] sm:$0xff]
    %v853 = vld [vmem:[%s787 + $0x9] sm:$0xff]
    %v854 = vld [vmem:[%s787 + $0x19] sm:$0xff]
    %v855 = vld [vmem:[%s787 + $0x21] sm:$0xff]
    %v856 = vld [vmem:[%s787 + $0x31] sm:$0xff]
    %v857 = vld [vmem:[%s787 + $0x39] sm:$0xff]
    %v858 = vld [vmem:[%s787 + $0x49] sm:$0xff]
    %v859 = vld [vmem:[%s787 + $0x51] sm:$0xff]
    %v860 = vld [vmem:[%s787 + $0x61] sm:$0xff]
    %v861 = vld [vmem:[%s787 + $0x69] sm:$0xff]
    %v862 = vld [vmem:[%s787 + $0x79] sm:$0xff]
    %v863 = vld [vmem:[%s787 + $0x81] sm:$0xff]
    %v864 = vld [vmem:[%s787 + $0x91] sm:$0xff]
    %v865 = vld [vmem:[%s787 + $0x99] sm:$0xff]
    %v866 = vld [vmem:[%s787 + $0xa9] sm:$0xff]
    %v867 = vld [vmem:[%s787 + $0xb1] sm:$0xff]
    %v868 = vld [vmem:[%s787 + $0xc1] sm:$0xff]
    %v869 = vld [vmem:[%s787 + $0xc9] sm:$0xff]
    %v870 = vld [vmem:[%s787 + $0xd9] sm:$0xff]
    %v871 = vld [vmem:[%s787 + $0xe1] sm:$0xff]
    %v872 = vld [vmem:[%s787 + $0xf1] sm:$0xff]
    %v873 = vld [vmem:[%s787 + $0xf9] sm:$0xff]
    %v874 = vld [vmem:[%s787 + $0x109] sm:$0xff]
    %v875 = vld [vmem:[%s787 + $0x111] sm:$0xff]
    %v876 = vld [vmem:[%s787 + $0x121] sm:$0xff]
    %v877 = vld [vmem:[%s787 + $0x129] sm:$0xff]
    %v878 = vld [vmem:[%s787 + $0x139] sm:$0xff]
    %v879 = vld [vmem:[%s787 + $0x141] sm:$0xff]
    %v880 = vld [vmem:[%s787 + $0x151] sm:$0xff]
    %v881 = vld [vmem:[%s787 + $0x159] sm:$0xff]
    %v882 = vld [vmem:[%s787 + $0x169] sm:$0xff]
    %v883 = vld [vmem:[%s787 + $0x171] sm:$0xff]
    %v884 = vld [vmem:[%s787 + $0x1b1] sm:$0xff]
    %v885 = vld [vmem:[%s787 + $0x1b9] sm:$0xff]
    %v886 = vld [vmem:[%s787 + $0x1c9] sm:$0xff]
    %v887 = vld [vmem:[%s787 + $0x1d1] sm:$0xff]
    %v888 = vld [vmem:[%s787 + $0x1e1] sm:$0xff]
    %v889 = vld [vmem:[%s787 + $0x1e9] sm:$0xff]
    %v890 = vld [vmem:[%s787 + $0x1f9] sm:$0xff]
    %v891 = vld [vmem:[%s787 + $0x201] sm:$0xff]
    %v892 = vld [vmem:[%s787 + $0x211] sm:$0xff]
    %v893 = vld [vmem:[%s787 + $0x219] sm:$0xff]
    %v894 = vld [vmem:[%s787 + $0x229] sm:$0xff]
    %v895 = vld [vmem:[%s787 + $0x231] sm:$0xff]
    %v896 = vld [vmem:[%s787 + $0x241] sm:$0xff]
    %v897 = vld [vmem:[%s787 + $0x249] sm:$0xff]
    %v898 = vld [vmem:[%s787 + $0x259] sm:$0xff]
    %v899 = vld [vmem:[%s787 + $0x261] sm:$0xff]
    %v900 = vld [vmem:[%s787 + $0x271] sm:$0xff]
    %v901 = vld [vmem:[%s787 + $0x279] sm:$0xff]
    %v902 = vld [vmem:[%s787 + $0x289] sm:$0xff]
    %v903 = vld [vmem:[%s787 + $0x291] sm:$0xff]
    %v904 = vld [vmem:[%s787 + $0x2a1] sm:$0xff]
    %v905 = vld [vmem:[%s787 + $0x2a9] sm:$0xff]
    %v906 = vld [vmem:[%s787 + $0x2b9] sm:$0xff]
    %v907 = vld [vmem:[%s787 + $0x2c1] sm:$0xff]
    %v908 = vld [vmem:[%s787 + $0x2d1] sm:$0xff]
    %v909 = vld [vmem:[%s787 + $0x2d9] sm:$0xff]
    %v910 = vld [vmem:[%s787 + $0x2e9] sm:$0xff]
    %v911 = vld [vmem:[%s787 + $0x2f1] sm:$0xff]
    %v912 = vld [vmem:[%s787 + $0x301] sm:$0xff]
    %v913 = vld [vmem:[%s787 + $0x309] sm:$0xff]
    %v914 = vld [vmem:[%s787 + $0x319] sm:$0xff]
    %v915 = vld [vmem:[%s787 + $0x321] sm:$0xff]
    %v916 = vld [vmem:[%s787 + $0x2] sm:$0xff]
    %v917 = vld [vmem:[%s787 + $0xa] sm:$0xff]
    %v918 = vld [vmem:[%s787 + $0x1a] sm:$0xff]
    %v919 = vld [vmem:[%s787 + $0x22] sm:$0xff]
    %v920 = vld [vmem:[%s787 + $0x32] sm:$0xff]
    %v921 = vld [vmem:[%s787 + $0x3a] sm:$0xff]
    %v922 = vld [vmem:[%s787 + $0x4a] sm:$0xff]
    %v923 = vld [vmem:[%s787 + $0x52] sm:$0xff]
    %v924 = vld [vmem:[%s787 + $0x62] sm:$0xff]
    %v925 = vld [vmem:[%s787 + $0x6a] sm:$0xff]
    %v926 = vld [vmem:[%s787 + $0x7a] sm:$0xff]
    %v927 = vld [vmem:[%s787 + $0x82] sm:$0xff]
    %v928 = vld [vmem:[%s787 + $0x92] sm:$0xff]
    %v929 = vld [vmem:[%s787 + $0x9a] sm:$0xff]
    %v930 = vld [vmem:[%s787 + $0xaa] sm:$0xff]
    %v931 = vld [vmem:[%s787 + $0xb2] sm:$0xff]
    %v932 = vld [vmem:[%s787 + $0xc2] sm:$0xff]
    %v933 = vld [vmem:[%s787 + $0xca] sm:$0xff]
    %v934 = vld [vmem:[%s787 + $0xda] sm:$0xff]
    %v935 = vld [vmem:[%s787 + $0xe2] sm:$0xff]
    %v936 = vld [vmem:[%s787 + $0xf2] sm:$0xff]
    %v937 = vld [vmem:[%s787 + $0xfa] sm:$0xff]
    %v938 = vld [vmem:[%s787 + $0x10a] sm:$0xff]
    %v939 = vld [vmem:[%s787 + $0x112] sm:$0xff]
    %v940 = vld [vmem:[%s787 + $0x122] sm:$0xff]
    %v941 = vld [vmem:[%s787 + $0x12a] sm:$0xff]
    %v942 = vld [vmem:[%s787 + $0x13a] sm:$0xff]
    %v943 = vld [vmem:[%s787 + $0x142] sm:$0xff]
    %v944 = vld [vmem:[%s787 + $0x152] sm:$0xff]
    %v945 = vld [vmem:[%s787 + $0x15a] sm:$0xff]
    %v946 = vld [vmem:[%s787 + $0x16a] sm:$0xff]
    %v947 = vld [vmem:[%s787 + $0x172] sm:$0xff]
    %v948 = vld [vmem:[%s787 + $0x1b2] sm:$0xff]
    %v949 = vld [vmem:[%s787 + $0x1ba] sm:$0xff]
    %v950 = vld [vmem:[%s787 + $0x1ca] sm:$0xff]
    %v951 = vld [vmem:[%s787 + $0x1d2] sm:$0xff]
    %v952 = vld [vmem:[%s787 + $0x1e2] sm:$0xff]
    %v953 = vld [vmem:[%s787 + $0x1ea] sm:$0xff]
    %v954 = vld [vmem:[%s787 + $0x1fa] sm:$0xff]
    %v955 = vld [vmem:[%s787 + $0x202] sm:$0xff]
    %v956 = vld [vmem:[%s787 + $0x212] sm:$0xff]
    %v957 = vld [vmem:[%s787 + $0x21a] sm:$0xff]
    %v958 = vld [vmem:[%s787 + $0x22a] sm:$0xff]
    %v959 = vld [vmem:[%s787 + $0x232] sm:$0xff]
    %v960 = vld [vmem:[%s787 + $0x242] sm:$0xff]
    %v961 = vld [vmem:[%s787 + $0x24a] sm:$0xff]
    %v962 = vld [vmem:[%s787 + $0x25a] sm:$0xff]
    %v963 = vld [vmem:[%s787 + $0x262] sm:$0xff]
    %v964 = vld [vmem:[%s787 + $0x272] sm:$0xff]
    %v965 = vld [vmem:[%s787 + $0x27a] sm:$0xff]
    %v966 = vld [vmem:[%s787 + $0x28a] sm:$0xff]
    %v967 = vld [vmem:[%s787 + $0x292] sm:$0xff]
    %v968 = vld [vmem:[%s787 + $0x2a2] sm:$0xff]
    %v969 = vld [vmem:[%s787 + $0x2aa] sm:$0xff]
    %v970 = vld [vmem:[%s787 + $0x2ba] sm:$0xff]
    %v971 = vld [vmem:[%s787 + $0x2c2] sm:$0xff]
    %v972 = vld [vmem:[%s787 + $0x2d2] sm:$0xff]
    %v973 = vld [vmem:[%s787 + $0x2da] sm:$0xff]
    %v974 = vld [vmem:[%s787 + $0x2ea] sm:$0xff]
    %v975 = vld [vmem:[%s787 + $0x2f2] sm:$0xff]
    %v976 = vld [vmem:[%s787 + $0x302] sm:$0xff]
    %v977 = vld [vmem:[%s787 + $0x30a] sm:$0xff]
    %v978 = vld [vmem:[%s787 + $0x31a] sm:$0xff]
    %v979 = vld [vmem:[%s787 + $0x322] sm:$0xff]
    %1044 = vrot.lane.b32.xlu0 %v467, 8
    %v1045 = vpop.permute.xlu0 %1044
    %1046 = vrot.lane.b32.xlu0 %v468, 8
    %v1047 = vpop.permute.xlu0 %1046
    %1048 = vrot.lane.b32.xlu0 %v469, 8
    %v1049 = vpop.permute.xlu0 %1048
    %1050 = vrot.lane.b32.xlu0 %v470, 8
    %v1051 = vpop.permute.xlu0 %1050
    %1052 = vrot.lane.b32.xlu0 %v471, 8
    %v1053 = vpop.permute.xlu0 %1052
    %1054 = vrot.lane.b32.xlu0 %v472, 8
    %v1055 = vpop.permute.xlu0 %1054
    %1056 = vrot.lane.b32.xlu0 %v473, 8
    %v1057 = vpop.permute.xlu0 %1056
    %1058 = vrot.lane.b32.xlu0 %v474, 8
    %v1059 = vpop.permute.xlu0 %1058
    %1060 = vrot.lane.b32.xlu0 %v475, 8
    %v1061 = vpop.permute.xlu0 %1060
    %1062 = vrot.lane.b32.xlu0 %v476, 8
    %v1063 = vpop.permute.xlu0 %1062
    %1064 = vrot.lane.b32.xlu0 %v477, 8
    %v1065 = vpop.permute.xlu0 %1064
    %1066 = vrot.lane.b32.xlu0 %v478, 8
    %v1067 = vpop.permute.xlu0 %1066
    %1068 = vrot.lane.b32.xlu0 %v479, 8
    %v1069 = vpop.permute.xlu0 %1068
    %1070 = vrot.lane.b32.xlu0 %v480, 8
    %v1071 = vpop.permute.xlu0 %1070
    %1072 = vrot.lane.b32.xlu0 %v481, 8
    %v1073 = vpop.permute.xlu0 %1072
    %1074 = vrot.lane.b32.xlu0 %v482, 8
    %v1075 = vpop.permute.xlu0 %1074
    %1076 = vrot.lane.b32.xlu0 %v483, 8
    %v1077 = vpop.permute.xlu0 %1076
    %1078 = vrot.lane.b32.xlu0 %v484, 8
    %v1079 = vpop.permute.xlu0 %1078
    %1080 = vrot.lane.b32.xlu0 %v485, 8
    %v1081 = vpop.permute.xlu0 %1080
    %1082 = vrot.lane.b32.xlu0 %v486, 8
    %v1083 = vpop.permute.xlu0 %1082
    %1084 = vrot.lane.b32.xlu0 %v487, 8
    %v1085 = vpop.permute.xlu0 %1084
    %1086 = vrot.lane.b32.xlu0 %v488, 8
    %v1087 = vpop.permute.xlu0 %1086
    %1088 = vrot.lane.b32.xlu0 %v489, 8
    %v1089 = vpop.permute.xlu0 %1088
    %1090 = vrot.lane.b32.xlu0 %v490, 8
    %v1091 = vpop.permute.xlu0 %1090
    %1092 = vrot.lane.b32.xlu0 %v491, 8
    %v1093 = vpop.permute.xlu0 %1092
    %1094 = vrot.lane.b32.xlu0 %v492, 8
    %v1095 = vpop.permute.xlu0 %1094
    %1096 = vrot.lane.b32.xlu0 %v493, 8
    %v1097 = vpop.permute.xlu0 %1096
    %1098 = vrot.lane.b32.xlu0 %v494, 8
    %v1099 = vpop.permute.xlu0 %1098
    %1100 = vrot.lane.b32.xlu0 %v495, 8
    %v1101 = vpop.permute.xlu0 %1100
    %1102 = vrot.lane.b32.xlu0 %v496, 8
    %v1103 = vpop.permute.xlu0 %1102
    %1104 = vrot.lane.b32.xlu0 %v497, 8
    %v1105 = vpop.permute.xlu0 %1104
    %1106 = vrot.lane.b32.xlu0 %v498, 8
    %v1107 = vpop.permute.xlu0 %1106
    %1108 = vrot.lane.b32.xlu0 %v499, 8
    %v1109 = vpop.permute.xlu0 %1108
    %1110 = vrot.lane.b32.xlu0 %v500, 8
    %v1111 = vpop.permute.xlu0 %1110
    %1112 = vrot.lane.b32.xlu0 %v501, 8
    %v1113 = vpop.permute.xlu0 %1112
    %1114 = vrot.lane.b32.xlu0 %v502, 8
    %v1115 = vpop.permute.xlu0 %1114
    %1116 = vrot.lane.b32.xlu0 %v503, 8
    %v1117 = vpop.permute.xlu0 %1116
    %1118 = vrot.lane.b32.xlu0 %v504, 8
    %v1119 = vpop.permute.xlu0 %1118
    %1120 = vrot.lane.b32.xlu0 %v505, 8
    %v1121 = vpop.permute.xlu0 %1120
    %1122 = vrot.lane.b32.xlu0 %v506, 8
    %v1123 = vpop.permute.xlu0 %1122
    %1124 = vrot.lane.b32.xlu0 %v507, 8
    %v1125 = vpop.permute.xlu0 %1124
    %1126 = vrot.lane.b32.xlu0 %v508, 8
    %v1127 = vpop.permute.xlu0 %1126
    %1128 = vrot.lane.b32.xlu0 %v509, 8
    %v1129 = vpop.permute.xlu0 %1128
    %1130 = vrot.lane.b32.xlu0 %v510, 8
    %v1131 = vpop.permute.xlu0 %1130
    %1132 = vrot.lane.b32.xlu0 %v511, 8
    %v1133 = vpop.permute.xlu0 %1132
    %1134 = vrot.lane.b32.xlu0 %v512, 8
    %v1135 = vpop.permute.xlu0 %1134
    %1136 = vrot.lane.b32.xlu0 %v513, 8
    %v1137 = vpop.permute.xlu0 %1136
    %1138 = vrot.lane.b32.xlu0 %v514, 8
    %v1139 = vpop.permute.xlu0 %1138
    %1140 = vrot.lane.b32.xlu0 %v515, 8
    %v1141 = vpop.permute.xlu0 %1140
    %1142 = vrot.lane.b32.xlu0 %v516, 8
    %v1143 = vpop.permute.xlu0 %1142
    %1144 = vrot.lane.b32.xlu0 %v517, 8
    %v1145 = vpop.permute.xlu0 %1144
    %1146 = vrot.lane.b32.xlu0 %v518, 8
    %v1147 = vpop.permute.xlu0 %1146
    %1148 = vrot.lane.b32.xlu0 %v519, 8
    %v1149 = vpop.permute.xlu0 %1148
    %1150 = vrot.lane.b32.xlu0 %v520, 8
    %v1151 = vpop.permute.xlu0 %1150
    %1152 = vrot.lane.b32.xlu0 %v521, 8
    %v1153 = vpop.permute.xlu0 %1152
    %1154 = vrot.lane.b32.xlu0 %v522, 8
    %v1155 = vpop.permute.xlu0 %1154
    %1156 = vrot.lane.b32.xlu0 %v523, 8
    %v1157 = vpop.permute.xlu0 %1156
    %1158 = vrot.lane.b32.xlu0 %v524, 8
    %v1159 = vpop.permute.xlu0 %1158
    %1160 = vrot.lane.b32.xlu0 %v525, 8
    %v1161 = vpop.permute.xlu0 %1160
    %1162 = vrot.lane.b32.xlu0 %v526, 8
    %v1163 = vpop.permute.xlu0 %1162
    %1164 = vrot.lane.b32.xlu0 %v527, 8
    %v1165 = vpop.permute.xlu0 %1164
    %1166 = vrot.lane.b32.xlu0 %v528, 8
    %v1167 = vpop.permute.xlu0 %1166
    %1168 = vrot.lane.b32.xlu0 %v529, 8
    %v1169 = vpop.permute.xlu0 %1168
    %1170 = vrot.lane.b32.xlu0 %v530, 8
    %v1171 = vpop.permute.xlu0 %1170
    %1300 = vrot.lane.b32.xlu0 %v531, 16
    %v1301 = vpop.permute.xlu0 %1300
    %1302 = vrot.lane.b32.xlu0 %v532, 16
    %v1303 = vpop.permute.xlu0 %1302
    %1304 = vrot.lane.b32.xlu0 %v533, 16
    %v1305 = vpop.permute.xlu0 %1304
    %1306 = vrot.lane.b32.xlu0 %v534, 16
    %v1307 = vpop.permute.xlu0 %1306
    %1308 = vrot.lane.b32.xlu0 %v535, 16
    %v1309 = vpop.permute.xlu0 %1308
    %1310 = vrot.lane.b32.xlu0 %v536, 16
    %v1311 = vpop.permute.xlu0 %1310
    %1312 = vrot.lane.b32.xlu0 %v537, 16
    %v1313 = vpop.permute.xlu0 %1312
    %1314 = vrot.lane.b32.xlu0 %v538, 16
    %v1315 = vpop.permute.xlu0 %1314
    %1316 = vrot.lane.b32.xlu0 %v539, 16
    %v1317 = vpop.permute.xlu0 %1316
    %1318 = vrot.lane.b32.xlu0 %v540, 16
    %v1319 = vpop.permute.xlu0 %1318
    %1320 = vrot.lane.b32.xlu0 %v541, 16
    %v1321 = vpop.permute.xlu0 %1320
    %1322 = vrot.lane.b32.xlu0 %v542, 16
    %v1323 = vpop.permute.xlu0 %1322
    %1324 = vrot.lane.b32.xlu0 %v543, 16
    %v1325 = vpop.permute.xlu0 %1324
    %1326 = vrot.lane.b32.xlu0 %v544, 16
    %v1327 = vpop.permute.xlu0 %1326
    %1328 = vrot.lane.b32.xlu0 %v545, 16
    %v1329 = vpop.permute.xlu0 %1328
    %1330 = vrot.lane.b32.xlu0 %v546, 16
    %v1331 = vpop.permute.xlu0 %1330
    %1332 = vrot.lane.b32.xlu0 %v547, 16
    %v1333 = vpop.permute.xlu0 %1332
    %1334 = vrot.lane.b32.xlu0 %v548, 16
    %v1335 = vpop.permute.xlu0 %1334
    %1336 = vrot.lane.b32.xlu0 %v549, 16
    %v1337 = vpop.permute.xlu0 %1336
    %1338 = vrot.lane.b32.xlu0 %v550, 16
    %v1339 = vpop.permute.xlu0 %1338
    %1340 = vrot.lane.b32.xlu0 %v551, 16
    %v1341 = vpop.permute.xlu0 %1340
    %1342 = vrot.lane.b32.xlu0 %v552, 16
    %v1343 = vpop.permute.xlu0 %1342
    %1344 = vrot.lane.b32.xlu0 %v553, 16
    %v1345 = vpop.permute.xlu0 %1344
    %1346 = vrot.lane.b32.xlu0 %v554, 16
    %v1347 = vpop.permute.xlu0 %1346
    %1348 = vrot.lane.b32.xlu0 %v555, 16
    %v1349 = vpop.permute.xlu0 %1348
    %1350 = vrot.lane.b32.xlu0 %v556, 16
    %v1351 = vpop.permute.xlu0 %1350
    %1352 = vrot.lane.b32.xlu0 %v557, 16
    %v1353 = vpop.permute.xlu0 %1352
    %1354 = vrot.lane.b32.xlu0 %v558, 16
    %v1355 = vpop.permute.xlu0 %1354
    %1356 = vrot.lane.b32.xlu0 %v559, 16
    %v1357 = vpop.permute.xlu0 %1356
    %1358 = vrot.lane.b32.xlu0 %v560, 16
    %v1359 = vpop.permute.xlu0 %1358
    %1360 = vrot.lane.b32.xlu0 %v561, 16
    %v1361 = vpop.permute.xlu0 %1360
    %1362 = vrot.lane.b32.xlu0 %v562, 16
    %v1363 = vpop.permute.xlu0 %1362
    %1364 = vrot.lane.b32.xlu0 %v563, 16
    %v1365 = vpop.permute.xlu0 %1364
    %1366 = vrot.lane.b32.xlu0 %v564, 16
    %v1367 = vpop.permute.xlu0 %1366
    %1368 = vrot.lane.b32.xlu0 %v565, 16
    %v1369 = vpop.permute.xlu0 %1368
    %1370 = vrot.lane.b32.xlu0 %v566, 16
    %v1371 = vpop.permute.xlu0 %1370
    %1372 = vrot.lane.b32.xlu0 %v567, 16
    %v1373 = vpop.permute.xlu0 %1372
    %1374 = vrot.lane.b32.xlu0 %v568, 16
    %v1375 = vpop.permute.xlu0 %1374
    %1376 = vrot.lane.b32.xlu0 %v569, 16
    %v1377 = vpop.permute.xlu0 %1376
    %1378 = vrot.lane.b32.xlu0 %v570, 16
    %v1379 = vpop.permute.xlu0 %1378
    %1380 = vrot.lane.b32.xlu0 %v571, 16
    %v1381 = vpop.permute.xlu0 %1380
    %1382 = vrot.lane.b32.xlu0 %v572, 16
    %v1383 = vpop.permute.xlu0 %1382
    %1384 = vrot.lane.b32.xlu0 %v573, 16
    %v1385 = vpop.permute.xlu0 %1384
    %1386 = vrot.lane.b32.xlu0 %v574, 16
    %v1387 = vpop.permute.xlu0 %1386
    %1388 = vrot.lane.b32.xlu0 %v575, 16
    %v1389 = vpop.permute.xlu0 %1388
    %1390 = vrot.lane.b32.xlu0 %v576, 16
    %v1391 = vpop.permute.xlu0 %1390
    %1392 = vrot.lane.b32.xlu0 %v577, 16
    %v1393 = vpop.permute.xlu0 %1392
    %1394 = vrot.lane.b32.xlu0 %v578, 16
    %v1395 = vpop.permute.xlu0 %1394
    %1396 = vrot.lane.b32.xlu0 %v579, 16
    %v1397 = vpop.permute.xlu0 %1396
    %1398 = vrot.lane.b32.xlu0 %v580, 16
    %v1399 = vpop.permute.xlu0 %1398
    %1400 = vrot.lane.b32.xlu0 %v581, 16
    %v1401 = vpop.permute.xlu0 %1400
    %1402 = vrot.lane.b32.xlu0 %v582, 16
    %v1403 = vpop.permute.xlu0 %1402
    %1404 = vrot.lane.b32.xlu0 %v583, 16
    %v1405 = vpop.permute.xlu0 %1404
    %1406 = vrot.lane.b32.xlu0 %v584, 16
    %v1407 = vpop.permute.xlu0 %1406
    %1408 = vrot.lane.b32.xlu0 %v585, 16
    %v1409 = vpop.permute.xlu0 %1408
    %1410 = vrot.lane.b32.xlu0 %v586, 16
    %v1411 = vpop.permute.xlu0 %1410
    %1412 = vrot.lane.b32.xlu0 %v587, 16
    %v1413 = vpop.permute.xlu0 %1412
    %1414 = vrot.lane.b32.xlu0 %v588, 16
    %v1415 = vpop.permute.xlu0 %1414
    %1416 = vrot.lane.b32.xlu0 %v589, 16
    %v1417 = vpop.permute.xlu0 %1416
    %1418 = vrot.lane.b32.xlu0 %v590, 16
    %v1419 = vpop.permute.xlu0 %1418
    %1420 = vrot.lane.b32.xlu0 %v591, 16
    %v1421 = vpop.permute.xlu0 %1420
    %1422 = vrot.lane.b32.xlu0 %v592, 16
    %v1423 = vpop.permute.xlu0 %1422
    %1424 = vrot.lane.b32.xlu0 %v593, 16
    %v1425 = vpop.permute.xlu0 %1424
    %1426 = vrot.lane.b32.xlu0 %v594, 16
    %v1427 = vpop.permute.xlu0 %1426
    %1556 = vrot.lane.b32.xlu0 %v595, 24
    %v1557 = vpop.permute.xlu0 %1556
    %1558 = vrot.lane.b32.xlu0 %v596, 24
    %v1559 = vpop.permute.xlu0 %1558
    %1560 = vrot.lane.b32.xlu0 %v597, 24
    %v1561 = vpop.permute.xlu0 %1560
    %1562 = vrot.lane.b32.xlu0 %v598, 24
    %v1563 = vpop.permute.xlu0 %1562
    %1564 = vrot.lane.b32.xlu0 %v599, 24
    %v1565 = vpop.permute.xlu0 %1564
    %1566 = vrot.lane.b32.xlu0 %v600, 24
    %v1567 = vpop.permute.xlu0 %1566
    %1568 = vrot.lane.b32.xlu0 %v601, 24
    %v1569 = vpop.permute.xlu0 %1568
    %1570 = vrot.lane.b32.xlu0 %v602, 24
    %v1571 = vpop.permute.xlu0 %1570
    %1572 = vrot.lane.b32.xlu0 %v603, 24
    %v1573 = vpop.permute.xlu0 %1572
    %1574 = vrot.lane.b32.xlu0 %v604, 24
    %v1575 = vpop.permute.xlu0 %1574
    %1576 = vrot.lane.b32.xlu0 %v605, 24
    %v1577 = vpop.permute.xlu0 %1576
    %1578 = vrot.lane.b32.xlu0 %v606, 24
    %v1579 = vpop.permute.xlu0 %1578
    %1580 = vrot.lane.b32.xlu0 %v607, 24
    %v1581 = vpop.permute.xlu0 %1580
    %1582 = vrot.lane.b32.xlu0 %v608, 24
    %v1583 = vpop.permute.xlu0 %1582
    %1584 = vrot.lane.b32.xlu0 %v609, 24
    %v1585 = vpop.permute.xlu0 %1584
    %1586 = vrot.lane.b32.xlu0 %v610, 24
    %v1587 = vpop.permute.xlu0 %1586
    %1588 = vrot.lane.b32.xlu0 %v611, 24
    %v1589 = vpop.permute.xlu0 %1588
    %1590 = vrot.lane.b32.xlu0 %v612, 24
    %v1591 = vpop.permute.xlu0 %1590
    %1592 = vrot.lane.b32.xlu0 %v613, 24
    %v1593 = vpop.permute.xlu0 %1592
    %1594 = vrot.lane.b32.xlu0 %v614, 24
    %v1595 = vpop.permute.xlu0 %1594
    %1596 = vrot.lane.b32.xlu0 %v615, 24
    %v1597 = vpop.permute.xlu0 %1596
    %1598 = vrot.lane.b32.xlu0 %v616, 24
    %v1599 = vpop.permute.xlu0 %1598
    %1600 = vrot.lane.b32.xlu0 %v617, 24
    %v1601 = vpop.permute.xlu0 %1600
    %1602 = vrot.lane.b32.xlu0 %v618, 24
    %v1603 = vpop.permute.xlu0 %1602
    %1604 = vrot.lane.b32.xlu0 %v619, 24
    %v1605 = vpop.permute.xlu0 %1604
    %1606 = vrot.lane.b32.xlu0 %v620, 24
    %v1607 = vpop.permute.xlu0 %1606
    %1608 = vrot.lane.b32.xlu0 %v621, 24
    %v1609 = vpop.permute.xlu0 %1608
    %1610 = vrot.lane.b32.xlu0 %v622, 24
    %v1611 = vpop.permute.xlu0 %1610
    %1612 = vrot.lane.b32.xlu0 %v623, 24
    %v1613 = vpop.permute.xlu0 %1612
    %1614 = vrot.lane.b32.xlu0 %v624, 24
    %v1615 = vpop.permute.xlu0 %1614
    %1616 = vrot.lane.b32.xlu0 %v625, 24
    %v1617 = vpop.permute.xlu0 %1616
    %1618 = vrot.lane.b32.xlu0 %v626, 24
    %v1619 = vpop.permute.xlu0 %1618
    %1620 = vrot.lane.b32.xlu0 %v627, 24
    %v1621 = vpop.permute.xlu0 %1620
    %1622 = vrot.lane.b32.xlu0 %v628, 24
    %v1623 = vpop.permute.xlu0 %1622
    %1624 = vrot.lane.b32.xlu0 %v629, 24
    %v1625 = vpop.permute.xlu0 %1624
    %1626 = vrot.lane.b32.xlu0 %v630, 24
    %v1627 = vpop.permute.xlu0 %1626
    %1628 = vrot.lane.b32.xlu0 %v631, 24
    %v1629 = vpop.permute.xlu0 %1628
    %1630 = vrot.lane.b32.xlu0 %v632, 24
    %v1631 = vpop.permute.xlu0 %1630
    %1632 = vrot.lane.b32.xlu0 %v633, 24
    %v1633 = vpop.permute.xlu0 %1632
    %1634 = vrot.lane.b32.xlu0 %v634, 24
    %v1635 = vpop.permute.xlu0 %1634
    %1636 = vrot.lane.b32.xlu0 %v635, 24
    %v1637 = vpop.permute.xlu0 %1636
    %1638 = vrot.lane.b32.xlu0 %v636, 24
    %v1639 = vpop.permute.xlu0 %1638
    %1640 = vrot.lane.b32.xlu0 %v637, 24
    %v1641 = vpop.permute.xlu0 %1640
    %1642 = vrot.lane.b32.xlu0 %v638, 24
    %v1643 = vpop.permute.xlu0 %1642
    %1644 = vrot.lane.b32.xlu0 %v639, 24
    %v1645 = vpop.permute.xlu0 %1644
    %1646 = vrot.lane.b32.xlu0 %v640, 24
    %v1647 = vpop.permute.xlu0 %1646
    %1648 = vrot.lane.b32.xlu0 %v641, 24
    %v1649 = vpop.permute.xlu0 %1648
    %1650 = vrot.lane.b32.xlu0 %v642, 24
    %v1651 = vpop.permute.xlu0 %1650
    %1652 = vrot.lane.b32.xlu0 %v643, 24
    %v1653 = vpop.permute.xlu0 %1652
    %1654 = vrot.lane.b32.xlu0 %v644, 24
    %v1655 = vpop.permute.xlu0 %1654
    %1656 = vrot.lane.b32.xlu0 %v645, 24
    %v1657 = vpop.permute.xlu0 %1656
    %1658 = vrot.lane.b32.xlu0 %v646, 24
    %v1659 = vpop.permute.xlu0 %1658
    %1660 = vrot.lane.b32.xlu0 %v647, 24
    %v1661 = vpop.permute.xlu0 %1660
    %1662 = vrot.lane.b32.xlu0 %v648, 24
    %v1663 = vpop.permute.xlu0 %1662
    %1664 = vrot.lane.b32.xlu0 %v649, 24
    %v1665 = vpop.permute.xlu0 %1664
    %1666 = vrot.lane.b32.xlu0 %v650, 24
    %v1667 = vpop.permute.xlu0 %1666
    %1668 = vrot.lane.b32.xlu0 %v651, 24
    %v1669 = vpop.permute.xlu0 %1668
    %1670 = vrot.lane.b32.xlu0 %v652, 24
    %v1671 = vpop.permute.xlu0 %1670
    %1672 = vrot.lane.b32.xlu0 %v653, 24
    %v1673 = vpop.permute.xlu0 %1672
    %1674 = vrot.lane.b32.xlu0 %v654, 24
    %v1675 = vpop.permute.xlu0 %1674
    %1676 = vrot.lane.b32.xlu0 %v655, 24
    %v1677 = vpop.permute.xlu0 %1676
    %1678 = vrot.lane.b32.xlu0 %v656, 24
    %v1679 = vpop.permute.xlu0 %1678
    %1680 = vrot.lane.b32.xlu0 %v657, 24
    %v1681 = vpop.permute.xlu0 %1680
    %1682 = vrot.lane.b32.xlu0 %v658, 24
    %v1683 = vpop.permute.xlu0 %1682
    %1812 = vrot.lane.b32.xlu0 %v659, 32
    %v1813 = vpop.permute.xlu0 %1812
    %1814 = vrot.lane.b32.xlu0 %v660, 32
    %v1815 = vpop.permute.xlu0 %1814
    %1816 = vrot.lane.b32.xlu0 %v661, 32
    %v1817 = vpop.permute.xlu0 %1816
    %1818 = vrot.lane.b32.xlu0 %v662, 32
    %v1819 = vpop.permute.xlu0 %1818
    %1820 = vrot.lane.b32.xlu0 %v663, 32
    %v1821 = vpop.permute.xlu0 %1820
    %1822 = vrot.lane.b32.xlu0 %v664, 32
    %v1823 = vpop.permute.xlu0 %1822
    %1824 = vrot.lane.b32.xlu0 %v665, 32
    %v1825 = vpop.permute.xlu0 %1824
    %1826 = vrot.lane.b32.xlu0 %v666, 32
    %v1827 = vpop.permute.xlu0 %1826
    %1828 = vrot.lane.b32.xlu0 %v667, 32
    %v1829 = vpop.permute.xlu0 %1828
    %1830 = vrot.lane.b32.xlu0 %v668, 32
    %v1831 = vpop.permute.xlu0 %1830
    %1832 = vrot.lane.b32.xlu0 %v669, 32
    %v1833 = vpop.permute.xlu0 %1832
    %1834 = vrot.lane.b32.xlu0 %v670, 32
    %v1835 = vpop.permute.xlu0 %1834
    %1836 = vrot.lane.b32.xlu0 %v671, 32
    %v1837 = vpop.permute.xlu0 %1836
    %1838 = vrot.lane.b32.xlu0 %v672, 32
    %v1839 = vpop.permute.xlu0 %1838
    %1840 = vrot.lane.b32.xlu0 %v673, 32
    %v1841 = vpop.permute.xlu0 %1840
    %1842 = vrot.lane.b32.xlu0 %v674, 32
    %v1843 = vpop.permute.xlu0 %1842
    %1844 = vrot.lane.b32.xlu0 %v675, 32
    %v1845 = vpop.permute.xlu0 %1844
    %1846 = vrot.lane.b32.xlu0 %v676, 32
    %v1847 = vpop.permute.xlu0 %1846
    %1848 = vrot.lane.b32.xlu0 %v677, 32
    %v1849 = vpop.permute.xlu0 %1848
    %1850 = vrot.lane.b32.xlu0 %v678, 32
    %v1851 = vpop.permute.xlu0 %1850
    %1852 = vrot.lane.b32.xlu0 %v679, 32
    %v1853 = vpop.permute.xlu0 %1852
    %1854 = vrot.lane.b32.xlu0 %v680, 32
    %v1855 = vpop.permute.xlu0 %1854
    %1856 = vrot.lane.b32.xlu0 %v681, 32
    %v1857 = vpop.permute.xlu0 %1856
    %1858 = vrot.lane.b32.xlu0 %v682, 32
    %v1859 = vpop.permute.xlu0 %1858
    %1860 = vrot.lane.b32.xlu0 %v683, 32
    %v1861 = vpop.permute.xlu0 %1860
    %1862 = vrot.lane.b32.xlu0 %v684, 32
    %v1863 = vpop.permute.xlu0 %1862
    %1864 = vrot.lane.b32.xlu0 %v685, 32
    %v1865 = vpop.permute.xlu0 %1864
    %1866 = vrot.lane.b32.xlu0 %v686, 32
    %v1867 = vpop.permute.xlu0 %1866
    %1868 = vrot.lane.b32.xlu0 %v687, 32
    %v1869 = vpop.permute.xlu0 %1868
    %1870 = vrot.lane.b32.xlu0 %v688, 32
    %v1871 = vpop.permute.xlu0 %1870
    %1872 = vrot.lane.b32.xlu0 %v689, 32
    %v1873 = vpop.permute.xlu0 %1872
    %1874 = vrot.lane.b32.xlu0 %v690, 32
    %v1875 = vpop.permute.xlu0 %1874
    %1876 = vrot.lane.b32.xlu0 %v691, 32
    %v1877 = vpop.permute.xlu0 %1876
    %1878 = vrot.lane.b32.xlu0 %v692, 32
    %v1879 = vpop.permute.xlu0 %1878
    %1880 = vrot.lane.b32.xlu0 %v693, 32
    %v1881 = vpop.permute.xlu0 %1880
    %1882 = vrot.lane.b32.xlu0 %v694, 32
    %v1883 = vpop.permute.xlu0 %1882
    %1884 = vrot.lane.b32.xlu0 %v695, 32
    %v1885 = vpop.permute.xlu0 %1884
    %1886 = vrot.lane.b32.xlu0 %v696, 32
    %v1887 = vpop.permute.xlu0 %1886
    %1888 = vrot.lane.b32.xlu0 %v697, 32
    %v1889 = vpop.permute.xlu0 %1888
    %1890 = vrot.lane.b32.xlu0 %v698, 32
    %v1891 = vpop.permute.xlu0 %1890
    %1892 = vrot.lane.b32.xlu0 %v699, 32
    %v1893 = vpop.permute.xlu0 %1892
    %1894 = vrot.lane.b32.xlu0 %v700, 32
    %v1895 = vpop.permute.xlu0 %1894
    %1896 = vrot.lane.b32.xlu0 %v701, 32
    %v1897 = vpop.permute.xlu0 %1896
    %1898 = vrot.lane.b32.xlu0 %v702, 32
    %v1899 = vpop.permute.xlu0 %1898
    %1900 = vrot.lane.b32.xlu0 %v703, 32
    %v1901 = vpop.permute.xlu0 %1900
    %1902 = vrot.lane.b32.xlu0 %v704, 32
    %v1903 = vpop.permute.xlu0 %1902
    %1904 = vrot.lane.b32.xlu0 %v705, 32
    %v1905 = vpop.permute.xlu0 %1904
    %1906 = vrot.lane.b32.xlu0 %v706, 32
    %v1907 = vpop.permute.xlu0 %1906
    %1908 = vrot.lane.b32.xlu0 %v707, 32
    %v1909 = vpop.permute.xlu0 %1908
    %1910 = vrot.lane.b32.xlu0 %v708, 32
    %v1911 = vpop.permute.xlu0 %1910
    %1912 = vrot.lane.b32.xlu0 %v709, 32
    %v1913 = vpop.permute.xlu0 %1912
    %1914 = vrot.lane.b32.xlu0 %v710, 32
    %v1915 = vpop.permute.xlu0 %1914
    %1916 = vrot.lane.b32.xlu0 %v711, 32
    %v1917 = vpop.permute.xlu0 %1916
    %1918 = vrot.lane.b32.xlu0 %v712, 32
    %v1919 = vpop.permute.xlu0 %1918
    %1920 = vrot.lane.b32.xlu0 %v713, 32
    %v1921 = vpop.permute.xlu0 %1920
    %1922 = vrot.lane.b32.xlu0 %v714, 32
    %v1923 = vpop.permute.xlu0 %1922
    %1924 = vrot.lane.b32.xlu0 %v715, 32
    %v1925 = vpop.permute.xlu0 %1924
    %1926 = vrot.lane.b32.xlu0 %v716, 32
    %v1927 = vpop.permute.xlu0 %1926
    %1928 = vrot.lane.b32.xlu0 %v717, 32
    %v1929 = vpop.permute.xlu0 %1928
    %1930 = vrot.lane.b32.xlu0 %v718, 32
    %v1931 = vpop.permute.xlu0 %1930
    %1932 = vrot.lane.b32.xlu0 %v719, 32
    %v1933 = vpop.permute.xlu0 %1932
    %1934 = vrot.lane.b32.xlu0 %v720, 32
    %v1935 = vpop.permute.xlu0 %1934
    %1936 = vrot.lane.b32.xlu0 %v721, 32
    %v1937 = vpop.permute.xlu0 %1936
    %1938 = vrot.lane.b32.xlu0 %v722, 32
    %v1939 = vpop.permute.xlu0 %1938
    %2068 = vrot.lane.b32.xlu0 %v723, 40
    %v2069 = vpop.permute.xlu0 %2068
    %2070 = vrot.lane.b32.xlu0 %v724, 40
    %v2071 = vpop.permute.xlu0 %2070
    %2072 = vrot.lane.b32.xlu0 %v725, 40
    %v2073 = vpop.permute.xlu0 %2072
    %2074 = vrot.lane.b32.xlu0 %v726, 40
    %v2075 = vpop.permute.xlu0 %2074
    %2076 = vrot.lane.b32.xlu0 %v727, 40
    %v2077 = vpop.permute.xlu0 %2076
    %2078 = vrot.lane.b32.xlu0 %v728, 40
    %v2079 = vpop.permute.xlu0 %2078
    %2080 = vrot.lane.b32.xlu0 %v729, 40
    %v2081 = vpop.permute.xlu0 %2080
    %2082 = vrot.lane.b32.xlu0 %v730, 40
    %v2083 = vpop.permute.xlu0 %2082
    %2084 = vrot.lane.b32.xlu0 %v731, 40
    %v2085 = vpop.permute.xlu0 %2084
    %2086 = vrot.lane.b32.xlu0 %v732, 40
    %v2087 = vpop.permute.xlu0 %2086
    %2088 = vrot.lane.b32.xlu0 %v733, 40
    %v2089 = vpop.permute.xlu0 %2088
    %2090 = vrot.lane.b32.xlu0 %v734, 40
    %v2091 = vpop.permute.xlu0 %2090
    %2092 = vrot.lane.b32.xlu0 %v735, 40
    %v2093 = vpop.permute.xlu0 %2092
    %2094 = vrot.lane.b32.xlu0 %v736, 40
    %v2095 = vpop.permute.xlu0 %2094
    %2096 = vrot.lane.b32.xlu0 %v737, 40
    %v2097 = vpop.permute.xlu0 %2096
    %2098 = vrot.lane.b32.xlu0 %v738, 40
    %v2099 = vpop.permute.xlu0 %2098
    %2100 = vrot.lane.b32.xlu0 %v739, 40
    %v2101 = vpop.permute.xlu0 %2100
    %2102 = vrot.lane.b32.xlu0 %v740, 40
    %v2103 = vpop.permute.xlu0 %2102
    %2104 = vrot.lane.b32.xlu0 %v741, 40
    %v2105 = vpop.permute.xlu0 %2104
    %2106 = vrot.lane.b32.xlu0 %v742, 40
    %v2107 = vpop.permute.xlu0 %2106
    %2108 = vrot.lane.b32.xlu0 %v743, 40
    %v2109 = vpop.permute.xlu0 %2108
    %2110 = vrot.lane.b32.xlu0 %v744, 40
    %v2111 = vpop.permute.xlu0 %2110
    %2112 = vrot.lane.b32.xlu0 %v745, 40
    %v2113 = vpop.permute.xlu0 %2112
    %2114 = vrot.lane.b32.xlu0 %v746, 40
    %v2115 = vpop.permute.xlu0 %2114
    %2116 = vrot.lane.b32.xlu0 %v747, 40
    %v2117 = vpop.permute.xlu0 %2116
    %2118 = vrot.lane.b32.xlu0 %v748, 40
    %v2119 = vpop.permute.xlu0 %2118
    %2120 = vrot.lane.b32.xlu0 %v749, 40
    %v2121 = vpop.permute.xlu0 %2120
    %2122 = vrot.lane.b32.xlu0 %v750, 40
    %v2123 = vpop.permute.xlu0 %2122
    %2124 = vrot.lane.b32.xlu0 %v751, 40
    %v2125 = vpop.permute.xlu0 %2124
    %2126 = vrot.lane.b32.xlu0 %v752, 40
    %v2127 = vpop.permute.xlu0 %2126
    %2128 = vrot.lane.b32.xlu0 %v753, 40
    %v2129 = vpop.permute.xlu0 %2128
    %2130 = vrot.lane.b32.xlu0 %v754, 40
    %v2131 = vpop.permute.xlu0 %2130
    %2132 = vrot.lane.b32.xlu0 %v755, 40
    %v2133 = vpop.permute.xlu0 %2132
    %2134 = vrot.lane.b32.xlu0 %v756, 40
    %v2135 = vpop.permute.xlu0 %2134
    %2136 = vrot.lane.b32.xlu0 %v757, 40
    %v2137 = vpop.permute.xlu0 %2136
    %2138 = vrot.lane.b32.xlu0 %v758, 40
    %v2139 = vpop.permute.xlu0 %2138
    %2140 = vrot.lane.b32.xlu0 %v759, 40
    %v2141 = vpop.permute.xlu0 %2140
    %2142 = vrot.lane.b32.xlu0 %v760, 40
    %v2143 = vpop.permute.xlu0 %2142
    %2144 = vrot.lane.b32.xlu0 %v761, 40
    %v2145 = vpop.permute.xlu0 %2144
    %2146 = vrot.lane.b32.xlu0 %v762, 40
    %v2147 = vpop.permute.xlu0 %2146
    %2148 = vrot.lane.b32.xlu0 %v763, 40
    %v2149 = vpop.permute.xlu0 %2148
    %2150 = vrot.lane.b32.xlu0 %v764, 40
    %v2151 = vpop.permute.xlu0 %2150
    %2152 = vrot.lane.b32.xlu0 %v765, 40
    %v2153 = vpop.permute.xlu0 %2152
    %2154 = vrot.lane.b32.xlu0 %v766, 40
    %v2155 = vpop.permute.xlu0 %2154
    %2156 = vrot.lane.b32.xlu0 %v767, 40
    %v2157 = vpop.permute.xlu0 %2156
    %2158 = vrot.lane.b32.xlu0 %v768, 40
    %v2159 = vpop.permute.xlu0 %2158
    %2160 = vrot.lane.b32.xlu0 %v769, 40
    %v2161 = vpop.permute.xlu0 %2160
    %2162 = vrot.lane.b32.xlu0 %v770, 40
    %v2163 = vpop.permute.xlu0 %2162
    %2164 = vrot.lane.b32.xlu0 %v771, 40
    %v2165 = vpop.permute.xlu0 %2164
    %2166 = vrot.lane.b32.xlu0 %v772, 40
    %v2167 = vpop.permute.xlu0 %2166
    %2168 = vrot.lane.b32.xlu0 %v773, 40
    %v2169 = vpop.permute.xlu0 %2168
    %2170 = vrot.lane.b32.xlu0 %v774, 40
    %v2171 = vpop.permute.xlu0 %2170
    %2172 = vrot.lane.b32.xlu0 %v775, 40
    %v2173 = vpop.permute.xlu0 %2172
    %2174 = vrot.lane.b32.xlu0 %v776, 40
    %v2175 = vpop.permute.xlu0 %2174
    %2176 = vrot.lane.b32.xlu0 %v777, 40
    %v2177 = vpop.permute.xlu0 %2176
    %2178 = vrot.lane.b32.xlu0 %v778, 40
    %v2179 = vpop.permute.xlu0 %2178
    %2180 = vrot.lane.b32.xlu0 %v779, 40
    %v2181 = vpop.permute.xlu0 %2180
    %2182 = vrot.lane.b32.xlu0 %v780, 40
    %v2183 = vpop.permute.xlu0 %2182
    %2184 = vrot.lane.b32.xlu0 %v781, 40
    %v2185 = vpop.permute.xlu0 %2184
    %2186 = vrot.lane.b32.xlu0 %v782, 40
    %v2187 = vpop.permute.xlu0 %2186
    %2188 = vrot.lane.b32.xlu0 %v783, 40
    %v2189 = vpop.permute.xlu0 %2188
    %2190 = vrot.lane.b32.xlu0 %v784, 40
    %v2191 = vpop.permute.xlu0 %2190
    %2192 = vrot.lane.b32.xlu0 %v785, 40
    %v2193 = vpop.permute.xlu0 %2192
    %2194 = vrot.lane.b32.xlu0 %v786, 40
    %v2195 = vpop.permute.xlu0 %2194
    %2324 = vrot.lane.b32.xlu0 %v788, 48
    %v2325 = vpop.permute.xlu0 %2324
    %2326 = vrot.lane.b32.xlu0 %v789, 48
    %v2327 = vpop.permute.xlu0 %2326
    %2328 = vrot.lane.b32.xlu0 %v790, 48
    %v2329 = vpop.permute.xlu0 %2328
    %2330 = vrot.lane.b32.xlu0 %v791, 48
    %v2331 = vpop.permute.xlu0 %2330
    %2332 = vrot.lane.b32.xlu0 %v792, 48
    %v2333 = vpop.permute.xlu0 %2332
    %2334 = vrot.lane.b32.xlu0 %v793, 48
    %v2335 = vpop.permute.xlu0 %2334
    %2336 = vrot.lane.b32.xlu0 %v794, 48
    %v2337 = vpop.permute.xlu0 %2336
    %2338 = vrot.lane.b32.xlu0 %v795, 48
    %v2339 = vpop.permute.xlu0 %2338
    %2340 = vrot.lane.b32.xlu0 %v796, 48
    %v2341 = vpop.permute.xlu0 %2340
    %2342 = vrot.lane.b32.xlu0 %v797, 48
    %v2343 = vpop.permute.xlu0 %2342
    %2344 = vrot.lane.b32.xlu0 %v798, 48
    %v2345 = vpop.permute.xlu0 %2344
    %2346 = vrot.lane.b32.xlu0 %v799, 48
    %v2347 = vpop.permute.xlu0 %2346
    %2348 = vrot.lane.b32.xlu0 %v800, 48
    %v2349 = vpop.permute.xlu0 %2348
    %2350 = vrot.lane.b32.xlu0 %v801, 48
    %v2351 = vpop.permute.xlu0 %2350
    %2352 = vrot.lane.b32.xlu0 %v802, 48
    %v2353 = vpop.permute.xlu0 %2352
    %2354 = vrot.lane.b32.xlu0 %v803, 48
    %v2355 = vpop.permute.xlu0 %2354
    %2356 = vrot.lane.b32.xlu0 %v804, 48
    %v2357 = vpop.permute.xlu0 %2356
    %2358 = vrot.lane.b32.xlu0 %v805, 48
    %v2359 = vpop.permute.xlu0 %2358
    %2360 = vrot.lane.b32.xlu0 %v806, 48
    %v2361 = vpop.permute.xlu0 %2360
    %2362 = vrot.lane.b32.xlu0 %v807, 48
    %v2363 = vpop.permute.xlu0 %2362
    %2364 = vrot.lane.b32.xlu0 %v808, 48
    %v2365 = vpop.permute.xlu0 %2364
    %2366 = vrot.lane.b32.xlu0 %v809, 48
    %v2367 = vpop.permute.xlu0 %2366
    %2368 = vrot.lane.b32.xlu0 %v810, 48
    %v2369 = vpop.permute.xlu0 %2368
    %2370 = vrot.lane.b32.xlu0 %v811, 48
    %v2371 = vpop.permute.xlu0 %2370
    %2372 = vrot.lane.b32.xlu0 %v812, 48
    %v2373 = vpop.permute.xlu0 %2372
    %2374 = vrot.lane.b32.xlu0 %v813, 48
    %v2375 = vpop.permute.xlu0 %2374
    %2376 = vrot.lane.b32.xlu0 %v814, 48
    %v2377 = vpop.permute.xlu0 %2376
    %2378 = vrot.lane.b32.xlu0 %v815, 48
    %v2379 = vpop.permute.xlu0 %2378
    %2380 = vrot.lane.b32.xlu0 %v816, 48
    %v2381 = vpop.permute.xlu0 %2380
    %2382 = vrot.lane.b32.xlu0 %v817, 48
    %v2383 = vpop.permute.xlu0 %2382
    %2384 = vrot.lane.b32.xlu0 %v818, 48
    %v2385 = vpop.permute.xlu0 %2384
    %2386 = vrot.lane.b32.xlu0 %v819, 48
    %v2387 = vpop.permute.xlu0 %2386
    %2388 = vrot.lane.b32.xlu0 %v820, 48
    %v2389 = vpop.permute.xlu0 %2388
    %2390 = vrot.lane.b32.xlu0 %v821, 48
    %v2391 = vpop.permute.xlu0 %2390
    %2392 = vrot.lane.b32.xlu0 %v822, 48
    %v2393 = vpop.permute.xlu0 %2392
    %2394 = vrot.lane.b32.xlu0 %v823, 48
    %v2395 = vpop.permute.xlu0 %2394
    %2396 = vrot.lane.b32.xlu0 %v824, 48
    %v2397 = vpop.permute.xlu0 %2396
    %2398 = vrot.lane.b32.xlu0 %v825, 48
    %v2399 = vpop.permute.xlu0 %2398
    %2400 = vrot.lane.b32.xlu0 %v826, 48
    %v2401 = vpop.permute.xlu0 %2400
    %2402 = vrot.lane.b32.xlu0 %v827, 48
    %v2403 = vpop.permute.xlu0 %2402
    %2404 = vrot.lane.b32.xlu0 %v828, 48
    %v2405 = vpop.permute.xlu0 %2404
    %2406 = vrot.lane.b32.xlu0 %v829, 48
    %v2407 = vpop.permute.xlu0 %2406
    %2408 = vrot.lane.b32.xlu0 %v830, 48
    %v2409 = vpop.permute.xlu0 %2408
    %2410 = vrot.lane.b32.xlu0 %v831, 48
    %v2411 = vpop.permute.xlu0 %2410
    %2412 = vrot.lane.b32.xlu0 %v832, 48
    %v2413 = vpop.permute.xlu0 %2412
    %2414 = vrot.lane.b32.xlu0 %v833, 48
    %v2415 = vpop.permute.xlu0 %2414
    %2416 = vrot.lane.b32.xlu0 %v834, 48
    %v2417 = vpop.permute.xlu0 %2416
    %2418 = vrot.lane.b32.xlu0 %v835, 48
    %v2419 = vpop.permute.xlu0 %2418
    %2420 = vrot.lane.b32.xlu0 %v836, 48
    %v2421 = vpop.permute.xlu0 %2420
    %2422 = vrot.lane.b32.xlu0 %v837, 48
    %v2423 = vpop.permute.xlu0 %2422
    %2424 = vrot.lane.b32.xlu0 %v838, 48
    %v2425 = vpop.permute.xlu0 %2424
    %2426 = vrot.lane.b32.xlu0 %v839, 48
    %v2427 = vpop.permute.xlu0 %2426
    %2428 = vrot.lane.b32.xlu0 %v840, 48
    %v2429 = vpop.permute.xlu0 %2428
    %2430 = vrot.lane.b32.xlu0 %v841, 48
    %v2431 = vpop.permute.xlu0 %2430
    %2432 = vrot.lane.b32.xlu0 %v842, 48
    %v2433 = vpop.permute.xlu0 %2432
    %2434 = vrot.lane.b32.xlu0 %v843, 48
    %v2435 = vpop.permute.xlu0 %2434
    %2436 = vrot.lane.b32.xlu0 %v844, 48
    %v2437 = vpop.permute.xlu0 %2436
    %2438 = vrot.lane.b32.xlu0 %v845, 48
    %v2439 = vpop.permute.xlu0 %2438
    %2440 = vrot.lane.b32.xlu0 %v846, 48
    %v2441 = vpop.permute.xlu0 %2440
    %2442 = vrot.lane.b32.xlu0 %v847, 48
    %v2443 = vpop.permute.xlu0 %2442
    %2444 = vrot.lane.b32.xlu0 %v848, 48
    %v2445 = vpop.permute.xlu0 %2444
    %2446 = vrot.lane.b32.xlu0 %v849, 48
    %v2447 = vpop.permute.xlu0 %2446
    %2448 = vrot.lane.b32.xlu0 %v850, 48
    %v2449 = vpop.permute.xlu0 %2448
    %2450 = vrot.lane.b32.xlu0 %v851, 48
    %v2451 = vpop.permute.xlu0 %2450
    %2580 = vrot.lane.b32.xlu0 %v852, 56
    %v2581 = vpop.permute.xlu0 %2580
    %2582 = vrot.lane.b32.xlu0 %v853, 56
    %v2583 = vpop.permute.xlu0 %2582
    %2584 = vrot.lane.b32.xlu0 %v854, 56
    %v2585 = vpop.permute.xlu0 %2584
    %2586 = vrot.lane.b32.xlu0 %v855, 56
    %v2587 = vpop.permute.xlu0 %2586
    %2588 = vrot.lane.b32.xlu0 %v856, 56
    %v2589 = vpop.permute.xlu0 %2588
    %2590 = vrot.lane.b32.xlu0 %v857, 56
    %v2591 = vpop.permute.xlu0 %2590
    %2592 = vrot.lane.b32.xlu0 %v858, 56
    %v2593 = vpop.permute.xlu0 %2592
    %2594 = vrot.lane.b32.xlu0 %v859, 56
    %v2595 = vpop.permute.xlu0 %2594
    %2596 = vrot.lane.b32.xlu0 %v860, 56
    %v2597 = vpop.permute.xlu0 %2596
    %2598 = vrot.lane.b32.xlu0 %v861, 56
    %v2599 = vpop.permute.xlu0 %2598
    %2600 = vrot.lane.b32.xlu0 %v862, 56
    %v2601 = vpop.permute.xlu0 %2600
    %2602 = vrot.lane.b32.xlu0 %v863, 56
    %v2603 = vpop.permute.xlu0 %2602
    %2604 = vrot.lane.b32.xlu0 %v864, 56
    %v2605 = vpop.permute.xlu0 %2604
    %2606 = vrot.lane.b32.xlu0 %v865, 56
    %v2607 = vpop.permute.xlu0 %2606
    %2608 = vrot.lane.b32.xlu0 %v866, 56
    %v2609 = vpop.permute.xlu0 %2608
    %2610 = vrot.lane.b32.xlu0 %v867, 56
    %v2611 = vpop.permute.xlu0 %2610
    %2612 = vrot.lane.b32.xlu0 %v868, 56
    %v2613 = vpop.permute.xlu0 %2612
    %2614 = vrot.lane.b32.xlu0 %v869, 56
    %v2615 = vpop.permute.xlu0 %2614
    %2616 = vrot.lane.b32.xlu0 %v870, 56
    %v2617 = vpop.permute.xlu0 %2616
    %2618 = vrot.lane.b32.xlu0 %v871, 56
    %v2619 = vpop.permute.xlu0 %2618
    %2620 = vrot.lane.b32.xlu0 %v872, 56
    %v2621 = vpop.permute.xlu0 %2620
    %2622 = vrot.lane.b32.xlu0 %v873, 56
    %v2623 = vpop.permute.xlu0 %2622
    %2624 = vrot.lane.b32.xlu0 %v874, 56
    %v2625 = vpop.permute.xlu0 %2624
    %2626 = vrot.lane.b32.xlu0 %v875, 56
    %v2627 = vpop.permute.xlu0 %2626
    %2628 = vrot.lane.b32.xlu0 %v876, 56
    %v2629 = vpop.permute.xlu0 %2628
    %2630 = vrot.lane.b32.xlu0 %v877, 56
    %v2631 = vpop.permute.xlu0 %2630
    %2632 = vrot.lane.b32.xlu0 %v878, 56
    %v2633 = vpop.permute.xlu0 %2632
    %2634 = vrot.lane.b32.xlu0 %v879, 56
    %v2635 = vpop.permute.xlu0 %2634
    %2636 = vrot.lane.b32.xlu0 %v880, 56
    %v2637 = vpop.permute.xlu0 %2636
    %2638 = vrot.lane.b32.xlu0 %v881, 56
    %v2639 = vpop.permute.xlu0 %2638
    %2640 = vrot.lane.b32.xlu0 %v882, 56
    %v2641 = vpop.permute.xlu0 %2640
    %2642 = vrot.lane.b32.xlu0 %v883, 56
    %v2643 = vpop.permute.xlu0 %2642
    %2644 = vrot.lane.b32.xlu0 %v884, 56
    %v2645 = vpop.permute.xlu0 %2644
    %2646 = vrot.lane.b32.xlu0 %v885, 56
    %v2647 = vpop.permute.xlu0 %2646
    %2648 = vrot.lane.b32.xlu0 %v886, 56
    %v2649 = vpop.permute.xlu0 %2648
    %2650 = vrot.lane.b32.xlu0 %v887, 56
    %v2651 = vpop.permute.xlu0 %2650
    %2652 = vrot.lane.b32.xlu0 %v888, 56
    %v2653 = vpop.permute.xlu0 %2652
    %2654 = vrot.lane.b32.xlu0 %v889, 56
    %v2655 = vpop.permute.xlu0 %2654
    %2656 = vrot.lane.b32.xlu0 %v890, 56
    %v2657 = vpop.permute.xlu0 %2656
    %2658 = vrot.lane.b32.xlu0 %v891, 56
    %v2659 = vpop.permute.xlu0 %2658
    %2660 = vrot.lane.b32.xlu0 %v892, 56
    %v2661 = vpop.permute.xlu0 %2660
    %2662 = vrot.lane.b32.xlu0 %v893, 56
    %v2663 = vpop.permute.xlu0 %2662
    %2664 = vrot.lane.b32.xlu0 %v894, 56
    %v2665 = vpop.permute.xlu0 %2664
    %2666 = vrot.lane.b32.xlu0 %v895, 56
    %v2667 = vpop.permute.xlu0 %2666
    %2668 = vrot.lane.b32.xlu0 %v896, 56
    %v2669 = vpop.permute.xlu0 %2668
    %2670 = vrot.lane.b32.xlu0 %v897, 56
    %v2671 = vpop.permute.xlu0 %2670
    %2672 = vrot.lane.b32.xlu0 %v898, 56
    %v2673 = vpop.permute.xlu0 %2672
    %2674 = vrot.lane.b32.xlu0 %v899, 56
    %v2675 = vpop.permute.xlu0 %2674
    %2676 = vrot.lane.b32.xlu0 %v900, 56
    %v2677 = vpop.permute.xlu0 %2676
    %2678 = vrot.lane.b32.xlu0 %v901, 56
    %v2679 = vpop.permute.xlu0 %2678
    %2680 = vrot.lane.b32.xlu0 %v902, 56
    %v2681 = vpop.permute.xlu0 %2680
    %2682 = vrot.lane.b32.xlu0 %v903, 56
    %v2683 = vpop.permute.xlu0 %2682
    %2684 = vrot.lane.b32.xlu0 %v904, 56
    %v2685 = vpop.permute.xlu0 %2684
    %2686 = vrot.lane.b32.xlu0 %v905, 56
    %v2687 = vpop.permute.xlu0 %2686
    %2688 = vrot.lane.b32.xlu0 %v906, 56
    %v2689 = vpop.permute.xlu0 %2688
    %2690 = vrot.lane.b32.xlu0 %v907, 56
    %v2691 = vpop.permute.xlu0 %2690
    %2692 = vrot.lane.b32.xlu0 %v908, 56
    %v2693 = vpop.permute.xlu0 %2692
    %2694 = vrot.lane.b32.xlu0 %v909, 56
    %v2695 = vpop.permute.xlu0 %2694
    %2696 = vrot.lane.b32.xlu0 %v910, 56
    %v2697 = vpop.permute.xlu0 %2696
    %2698 = vrot.lane.b32.xlu0 %v911, 56
    %v2699 = vpop.permute.xlu0 %2698
    %2700 = vrot.lane.b32.xlu0 %v912, 56
    %v2701 = vpop.permute.xlu0 %2700
    %2702 = vrot.lane.b32.xlu0 %v913, 56
    %v2703 = vpop.permute.xlu0 %2702
    %2704 = vrot.lane.b32.xlu0 %v914, 56
    %v2705 = vpop.permute.xlu0 %2704
    %2706 = vrot.lane.b32.xlu0 %v915, 56
    %v2707 = vpop.permute.xlu0 %2706
    %2836 = vrot.lane.b32.xlu0 %v916, 64
    %v2837 = vpop.permute.xlu0 %2836
    %2838 = vrot.lane.b32.xlu0 %v917, 64
    %v2839 = vpop.permute.xlu0 %2838
    %2840 = vrot.lane.b32.xlu0 %v918, 64
    %v2841 = vpop.permute.xlu0 %2840
    %2842 = vrot.lane.b32.xlu0 %v919, 64
    %v2843 = vpop.permute.xlu0 %2842
    %2844 = vrot.lane.b32.xlu0 %v920, 64
    %v2845 = vpop.permute.xlu0 %2844
    %2846 = vrot.lane.b32.xlu0 %v921, 64
    %v2847 = vpop.permute.xlu0 %2846
    %2848 = vrot.lane.b32.xlu0 %v922, 64
    %v2849 = vpop.permute.xlu0 %2848
    %2850 = vrot.lane.b32.xlu0 %v923, 64
    %v2851 = vpop.permute.xlu0 %2850
    %2852 = vrot.lane.b32.xlu0 %v924, 64
    %v2853 = vpop.permute.xlu0 %2852
    %2854 = vrot.lane.b32.xlu0 %v925, 64
    %v2855 = vpop.permute.xlu0 %2854
    %2856 = vrot.lane.b32.xlu0 %v926, 64
    %v2857 = vpop.permute.xlu0 %2856
    %2858 = vrot.lane.b32.xlu0 %v927, 64
    %v2859 = vpop.permute.xlu0 %2858
    %2860 = vrot.lane.b32.xlu0 %v928, 64
    %v2861 = vpop.permute.xlu0 %2860
    %2862 = vrot.lane.b32.xlu0 %v929, 64
    %v2863 = vpop.permute.xlu0 %2862
    %2864 = vrot.lane.b32.xlu0 %v930, 64
    %v2865 = vpop.permute.xlu0 %2864
    %2866 = vrot.lane.b32.xlu0 %v931, 64
    %v2867 = vpop.permute.xlu0 %2866
    %2868 = vrot.lane.b32.xlu0 %v932, 64
    %v2869 = vpop.permute.xlu0 %2868
    %2870 = vrot.lane.b32.xlu0 %v933, 64
    %v2871 = vpop.permute.xlu0 %2870
    %2872 = vrot.lane.b32.xlu0 %v934, 64
    %v2873 = vpop.permute.xlu0 %2872
    %2874 = vrot.lane.b32.xlu0 %v935, 64
    %v2875 = vpop.permute.xlu0 %2874
    %2876 = vrot.lane.b32.xlu0 %v936, 64
    %v2877 = vpop.permute.xlu0 %2876
    %2878 = vrot.lane.b32.xlu0 %v937, 64
    %v2879 = vpop.permute.xlu0 %2878
    %2880 = vrot.lane.b32.xlu0 %v938, 64
    %v2881 = vpop.permute.xlu0 %2880
    %2882 = vrot.lane.b32.xlu0 %v939, 64
    %v2883 = vpop.permute.xlu0 %2882
    %2884 = vrot.lane.b32.xlu0 %v940, 64
    %v2885 = vpop.permute.xlu0 %2884
    %2886 = vrot.lane.b32.xlu0 %v941, 64
    %v2887 = vpop.permute.xlu0 %2886
    %2888 = vrot.lane.b32.xlu0 %v942, 64
    %v2889 = vpop.permute.xlu0 %2888
    %2890 = vrot.lane.b32.xlu0 %v943, 64
    %v2891 = vpop.permute.xlu0 %2890
    %2892 = vrot.lane.b32.xlu0 %v944, 64
    %v2893 = vpop.permute.xlu0 %2892
    %2894 = vrot.lane.b32.xlu0 %v945, 64
    %v2895 = vpop.permute.xlu0 %2894
    %2896 = vrot.lane.b32.xlu0 %v946, 64
    %v2897 = vpop.permute.xlu0 %2896
    %2898 = vrot.lane.b32.xlu0 %v947, 64
    %v2899 = vpop.permute.xlu0 %2898
    %2900 = vrot.lane.b32.xlu0 %v948, 64
    %v2901 = vpop.permute.xlu0 %2900
    %2902 = vrot.lane.b32.xlu0 %v949, 64
    %v2903 = vpop.permute.xlu0 %2902
    %2904 = vrot.lane.b32.xlu0 %v950, 64
    %v2905 = vpop.permute.xlu0 %2904
    %2906 = vrot.lane.b32.xlu0 %v951, 64
    %v2907 = vpop.permute.xlu0 %2906
    %2908 = vrot.lane.b32.xlu0 %v952, 64
    %v2909 = vpop.permute.xlu0 %2908
    %2910 = vrot.lane.b32.xlu0 %v953, 64
    %v2911 = vpop.permute.xlu0 %2910
    %2912 = vrot.lane.b32.xlu0 %v954, 64
    %v2913 = vpop.permute.xlu0 %2912
    %2914 = vrot.lane.b32.xlu0 %v955, 64
    %v2915 = vpop.permute.xlu0 %2914
    %2916 = vrot.lane.b32.xlu0 %v956, 64
    %v2917 = vpop.permute.xlu0 %2916
    %2918 = vrot.lane.b32.xlu0 %v957, 64
    %v2919 = vpop.permute.xlu0 %2918
    %2920 = vrot.lane.b32.xlu0 %v958, 64
    %v2921 = vpop.permute.xlu0 %2920
    %2922 = vrot.lane.b32.xlu0 %v959, 64
    %v2923 = vpop.permute.xlu0 %2922
    %2924 = vrot.lane.b32.xlu0 %v960, 64
    %v2925 = vpop.permute.xlu0 %2924
    %2926 = vrot.lane.b32.xlu0 %v961, 64
    %v2927 = vpop.permute.xlu0 %2926
    %2928 = vrot.lane.b32.xlu0 %v962, 64
    %v2929 = vpop.permute.xlu0 %2928
    %2930 = vrot.lane.b32.xlu0 %v963, 64
    %v2931 = vpop.permute.xlu0 %2930
    %2932 = vrot.lane.b32.xlu0 %v964, 64
    %v2933 = vpop.permute.xlu0 %2932
    %2934 = vrot.lane.b32.xlu0 %v965, 64
    %v2935 = vpop.permute.xlu0 %2934
    %2936 = vrot.lane.b32.xlu0 %v966, 64
    %v2937 = vpop.permute.xlu0 %2936
    %2938 = vrot.lane.b32.xlu0 %v967, 64
    %v2939 = vpop.permute.xlu0 %2938
    %2940 = vrot.lane.b32.xlu0 %v968, 64
    %v2941 = vpop.permute.xlu0 %2940
    %2942 = vrot.lane.b32.xlu0 %v969, 64
    %v2943 = vpop.permute.xlu0 %2942
    %2944 = vrot.lane.b32.xlu0 %v970, 64
    %v2945 = vpop.permute.xlu0 %2944
    %2946 = vrot.lane.b32.xlu0 %v971, 64
    %v2947 = vpop.permute.xlu0 %2946
    %2948 = vrot.lane.b32.xlu0 %v972, 64
    %v2949 = vpop.permute.xlu0 %2948
    %2950 = vrot.lane.b32.xlu0 %v973, 64
    %v2951 = vpop.permute.xlu0 %2950
    %2952 = vrot.lane.b32.xlu0 %v974, 64
    %v2953 = vpop.permute.xlu0 %2952
    %2954 = vrot.lane.b32.xlu0 %v975, 64
    %v2955 = vpop.permute.xlu0 %2954
    %2956 = vrot.lane.b32.xlu0 %v976, 64
    %v2957 = vpop.permute.xlu0 %2956
    %2958 = vrot.lane.b32.xlu0 %v977, 64
    %v2959 = vpop.permute.xlu0 %2958
    %2960 = vrot.lane.b32.xlu0 %v978, 64
    %v2961 = vpop.permute.xlu0 %2960
    %2962 = vrot.lane.b32.xlu0 %v979, 64
    %v2963 = vpop.permute.xlu0 %2962
    %v3028 = vsel %vm164, %v403, %v1045
    %v3029 = vsel %vm164, %v404, %v1047
    %v3030 = vsel %vm164, %v405, %v1049
    %v3031 = vsel %vm164, %v406, %v1051
    %v3032 = vsel %vm164, %v407, %v1053
    %v3033 = vsel %vm164, %v408, %v1055
    %v3034 = vsel %vm164, %v409, %v1057
    %v3035 = vsel %vm164, %v410, %v1059
    %v3036 = vsel %vm164, %v411, %v1061
    %v3037 = vsel %vm164, %v412, %v1063
    %v3038 = vsel %vm164, %v413, %v1065
    %v3039 = vsel %vm164, %v414, %v1067
    %v3040 = vsel %vm164, %v415, %v1069
    %v3041 = vsel %vm164, %v416, %v1071
    %v3042 = vsel %vm164, %v417, %v1073
    %v3043 = vsel %vm164, %v418, %v1075
    %v3044 = vsel %vm164, %v419, %v1077
    %v3045 = vsel %vm164, %v420, %v1079
    %v3046 = vsel %vm164, %v421, %v1081
    %v3047 = vsel %vm164, %v422, %v1083
    %v3048 = vsel %vm164, %v423, %v1085
    %v3049 = vsel %vm164, %v424, %v1087
    %v3050 = vsel %vm164, %v425, %v1089
    %v3051 = vsel %vm164, %v426, %v1091
    %v3052 = vsel %vm164, %v427, %v1093
    %v3053 = vsel %vm164, %v428, %v1095
    %v3054 = vsel %vm164, %v429, %v1097
    %v3055 = vsel %vm164, %v430, %v1099
    %v3056 = vsel %vm164, %v431, %v1101
    %v3057 = vsel %vm164, %v432, %v1103
    %v3058 = vsel %vm164, %v433, %v1105
    %v3059 = vsel %vm164, %v434, %v1107
    %v3060 = vsel %vm164, %v435, %v1109
    %v3061 = vsel %vm164, %v436, %v1111
    %v3062 = vsel %vm164, %v437, %v1113
    %v3063 = vsel %vm164, %v438, %v1115
    %v3064 = vsel %vm164, %v439, %v1117
    %v3065 = vsel %vm164, %v440, %v1119
    %v3066 = vsel %vm164, %v441, %v1121
    %v3067 = vsel %vm164, %v442, %v1123
    %v3068 = vsel %vm164, %v443, %v1125
    %v3069 = vsel %vm164, %v444, %v1127
    %v3070 = vsel %vm164, %v445, %v1129
    %v3071 = vsel %vm164, %v446, %v1131
    %v3072 = vsel %vm164, %v447, %v1133
    %v3073 = vsel %vm164, %v448, %v1135
    %v3074 = vsel %vm164, %v449, %v1137
    %v3075 = vsel %vm164, %v450, %v1139
    %v3076 = vsel %vm164, %v451, %v1141
    %v3077 = vsel %vm164, %v452, %v1143
    %v3078 = vsel %vm164, %v453, %v1145
    %v3079 = vsel %vm164, %v454, %v1147
    %v3080 = vsel %vm164, %v455, %v1149
    %v3081 = vsel %vm164, %v456, %v1151
    %v3082 = vsel %vm164, %v457, %v1153
    %v3083 = vsel %vm164, %v458, %v1155
    %v3084 = vsel %vm164, %v459, %v1157
    %v3085 = vsel %vm164, %v460, %v1159
    %v3086 = vsel %vm164, %v461, %v1161
    %v3087 = vsel %vm164, %v462, %v1163
    %v3088 = vsel %vm164, %v463, %v1165
    %v3089 = vsel %vm164, %v464, %v1167
    %v3090 = vsel %vm164, %v465, %v1169
    %v3091 = vsel %vm164, %v466, %v1171
    %vm3092 = vcmask 130048
    %v3093 = vsel %vm3092, %v3028, %v1301
    %v3094 = vsel %vm3092, %v3029, %v1303
    %v3095 = vsel %vm3092, %v3030, %v1305
    %v3096 = vsel %vm3092, %v3031, %v1307
    %v3097 = vsel %vm3092, %v3032, %v1309
    %v3098 = vsel %vm3092, %v3033, %v1311
    %v3099 = vsel %vm3092, %v3034, %v1313
    %v3100 = vsel %vm3092, %v3035, %v1315
    %v3101 = vsel %vm3092, %v3036, %v1317
    %v3102 = vsel %vm3092, %v3037, %v1319
    %v3103 = vsel %vm3092, %v3038, %v1321
    %v3104 = vsel %vm3092, %v3039, %v1323
    %v3105 = vsel %vm3092, %v3040, %v1325
    %v3106 = vsel %vm3092, %v3041, %v1327
    %v3107 = vsel %vm3092, %v3042, %v1329
    %v3108 = vsel %vm3092, %v3043, %v1331
    %v3109 = vsel %vm3092, %v3044, %v1333
    %v3110 = vsel %vm3092, %v3045, %v1335
    %v3111 = vsel %vm3092, %v3046, %v1337
    %v3112 = vsel %vm3092, %v3047, %v1339
    %v3113 = vsel %vm3092, %v3048, %v1341
    %v3114 = vsel %vm3092, %v3049, %v1343
    %v3115 = vsel %vm3092, %v3050, %v1345
    %v3116 = vsel %vm3092, %v3051, %v1347
    %v3117 = vsel %vm3092, %v3052, %v1349
    %v3118 = vsel %vm3092, %v3053, %v1351
    %v3119 = vsel %vm3092, %v3054, %v1353
    %v3120 = vsel %vm3092, %v3055, %v1355
    %v3121 = vsel %vm3092, %v3056, %v1357
    %v3122 = vsel %vm3092, %v3057, %v1359
    %v3123 = vsel %vm3092, %v3058, %v1361
    %v3124 = vsel %vm3092, %v3059, %v1363
    %v3125 = vsel %vm3092, %v3060, %v1365
    %v3126 = vsel %vm3092, %v3061, %v1367
    %v3127 = vsel %vm3092, %v3062, %v1369
    %v3128 = vsel %vm3092, %v3063, %v1371
    %v3129 = vsel %vm3092, %v3064, %v1373
    %v3130 = vsel %vm3092, %v3065, %v1375
    %v3131 = vsel %vm3092, %v3066, %v1377
    %v3132 = vsel %vm3092, %v3067, %v1379
    %v3133 = vsel %vm3092, %v3068, %v1381
    %v3134 = vsel %vm3092, %v3069, %v1383
    %v3135 = vsel %vm3092, %v3070, %v1385
    %v3136 = vsel %vm3092, %v3071, %v1387
    %v3137 = vsel %vm3092, %v3072, %v1389
    %v3138 = vsel %vm3092, %v3073, %v1391
    %v3139 = vsel %vm3092, %v3074, %v1393
    %v3140 = vsel %vm3092, %v3075, %v1395
    %v3141 = vsel %vm3092, %v3076, %v1397
    %v3142 = vsel %vm3092, %v3077, %v1399
    %v3143 = vsel %vm3092, %v3078, %v1401
    %v3144 = vsel %vm3092, %v3079, %v1403
    %v3145 = vsel %vm3092, %v3080, %v1405
    %v3146 = vsel %vm3092, %v3081, %v1407
    %v3147 = vsel %vm3092, %v3082, %v1409
    %v3148 = vsel %vm3092, %v3083, %v1411
    %v3149 = vsel %vm3092, %v3084, %v1413
    %v3150 = vsel %vm3092, %v3085, %v1415
    %v3151 = vsel %vm3092, %v3086, %v1417
    %v3152 = vsel %vm3092, %v3087, %v1419
    %v3153 = vsel %vm3092, %v3088, %v1421
    %v3154 = vsel %vm3092, %v3089, %v1423
    %v3155 = vsel %vm3092, %v3090, %v1425
    %v3156 = vsel %vm3092, %v3091, %v1427
    %vm3157 = vcmask 195584
    %v3158 = vsel %vm3157, %v3093, %v1557
    %v3159 = vsel %vm3157, %v3094, %v1559
    %v3160 = vsel %vm3157, %v3095, %v1561
    %v3161 = vsel %vm3157, %v3096, %v1563
    %v3162 = vsel %vm3157, %v3097, %v1565
    %v3163 = vsel %vm3157, %v3098, %v1567
    %v3164 = vsel %vm3157, %v3099, %v1569
    %v3165 = vsel %vm3157, %v3100, %v1571
    %v3166 = vsel %vm3157, %v3101, %v1573
    %v3167 = vsel %vm3157, %v3102, %v1575
    %v3168 = vsel %vm3157, %v3103, %v1577
    %v3169 = vsel %vm3157, %v3104, %v1579
    %v3170 = vsel %vm3157, %v3105, %v1581
    %v3171 = vsel %vm3157, %v3106, %v1583
    %v3172 = vsel %vm3157, %v3107, %v1585
    %v3173 = vsel %vm3157, %v3108, %v1587
    %v3174 = vsel %vm3157, %v3109, %v1589
    %v3175 = vsel %vm3157, %v3110, %v1591
    %v3176 = vsel %vm3157, %v3111, %v1593
    %v3177 = vsel %vm3157, %v3112, %v1595
    %v3178 = vsel %vm3157, %v3113, %v1597
    %v3179 = vsel %vm3157, %v3114, %v1599
    %v3180 = vsel %vm3157, %v3115, %v1601
    %v3181 = vsel %vm3157, %v3116, %v1603
    %v3182 = vsel %vm3157, %v3117, %v1605
    %v3183 = vsel %vm3157, %v3118, %v1607
    %v3184 = vsel %vm3157, %v3119, %v1609
    %v3185 = vsel %vm3157, %v3120, %v1611
    %v3186 = vsel %vm3157, %v3121, %v1613
    %v3187 = vsel %vm3157, %v3122, %v1615
    %v3188 = vsel %vm3157, %v3123, %v1617
    %v3189 = vsel %vm3157, %v3124, %v1619
    %v3190 = vsel %vm3157, %v3125, %v1621
    %v3191 = vsel %vm3157, %v3126, %v1623
    %v3192 = vsel %vm3157, %v3127, %v1625
    %v3193 = vsel %vm3157, %v3128, %v1627
    %v3194 = vsel %vm3157, %v3129, %v1629
    %v3195 = vsel %vm3157, %v3130, %v1631
    %v3196 = vsel %vm3157, %v3131, %v1633
    %v3197 = vsel %vm3157, %v3132, %v1635
    %v3198 = vsel %vm3157, %v3133, %v1637
    %v3199 = vsel %vm3157, %v3134, %v1639
    %v3200 = vsel %vm3157, %v3135, %v1641
    %v3201 = vsel %vm3157, %v3136, %v1643
    %v3202 = vsel %vm3157, %v3137, %v1645
    %v3203 = vsel %vm3157, %v3138, %v1647
    %v3204 = vsel %vm3157, %v3139, %v1649
    %v3205 = vsel %vm3157, %v3140, %v1651
    %v3206 = vsel %vm3157, %v3141, %v1653
    %v3207 = vsel %vm3157, %v3142, %v1655
    %v3208 = vsel %vm3157, %v3143, %v1657
    %v3209 = vsel %vm3157, %v3144, %v1659
    %v3210 = vsel %vm3157, %v3145, %v1661
    %v3211 = vsel %vm3157, %v3146, %v1663
    %v3212 = vsel %vm3157, %v3147, %v1665
    %v3213 = vsel %vm3157, %v3148, %v1667
    %v3214 = vsel %vm3157, %v3149, %v1669
    %v3215 = vsel %vm3157, %v3150, %v1671
    %v3216 = vsel %vm3157, %v3151, %v1673
    %v3217 = vsel %vm3157, %v3152, %v1675
    %v3218 = vsel %vm3157, %v3153, %v1677
    %v3219 = vsel %vm3157, %v3154, %v1679
    %v3220 = vsel %vm3157, %v3155, %v1681
    %v3221 = vsel %vm3157, %v3156, %v1683
    %vm3222 = vcmask 261120
    %v3223 = vsel %vm3222, %v3158, %v1813
    %v3224 = vsel %vm3222, %v3159, %v1815
    %v3225 = vsel %vm3222, %v3160, %v1817
    %v3226 = vsel %vm3222, %v3161, %v1819
    %v3227 = vsel %vm3222, %v3162, %v1821
    %v3228 = vsel %vm3222, %v3163, %v1823
    %v3229 = vsel %vm3222, %v3164, %v1825
    %v3230 = vsel %vm3222, %v3165, %v1827
    %v3231 = vsel %vm3222, %v3166, %v1829
    %v3232 = vsel %vm3222, %v3167, %v1831
    %v3233 = vsel %vm3222, %v3168, %v1833
    %v3234 = vsel %vm3222, %v3169, %v1835
    %v3235 = vsel %vm3222, %v3170, %v1837
    %v3236 = vsel %vm3222, %v3171, %v1839
    %v3237 = vsel %vm3222, %v3172, %v1841
    %v3238 = vsel %vm3222, %v3173, %v1843
    %v3239 = vsel %vm3222, %v3174, %v1845
    %v3240 = vsel %vm3222, %v3175, %v1847
    %v3241 = vsel %vm3222, %v3176, %v1849
    %v3242 = vsel %vm3222, %v3177, %v1851
    %v3243 = vsel %vm3222, %v3178, %v1853
    %v3244 = vsel %vm3222, %v3179, %v1855
    %v3245 = vsel %vm3222, %v3180, %v1857
    %v3246 = vsel %vm3222, %v3181, %v1859
    %v3247 = vsel %vm3222, %v3182, %v1861
    %v3248 = vsel %vm3222, %v3183, %v1863
    %v3249 = vsel %vm3222, %v3184, %v1865
    %v3250 = vsel %vm3222, %v3185, %v1867
    %v3251 = vsel %vm3222, %v3186, %v1869
    %v3252 = vsel %vm3222, %v3187, %v1871
    %v3253 = vsel %vm3222, %v3188, %v1873
    %v3254 = vsel %vm3222, %v3189, %v1875
    %v3255 = vsel %vm3222, %v3190, %v1877
    %v3256 = vsel %vm3222, %v3191, %v1879
    %v3257 = vsel %vm3222, %v3192, %v1881
    %v3258 = vsel %vm3222, %v3193, %v1883
    %v3259 = vsel %vm3222, %v3194, %v1885
    %v3260 = vsel %vm3222, %v3195, %v1887
    %v3261 = vsel %vm3222, %v3196, %v1889
    %v3262 = vsel %vm3222, %v3197, %v1891
    %v3263 = vsel %vm3222, %v3198, %v1893
    %v3264 = vsel %vm3222, %v3199, %v1895
    %v3265 = vsel %vm3222, %v3200, %v1897
    %v3266 = vsel %vm3222, %v3201, %v1899
    %v3267 = vsel %vm3222, %v3202, %v1901
    %v3268 = vsel %vm3222, %v3203, %v1903
    %v3269 = vsel %vm3222, %v3204, %v1905
    %v3270 = vsel %vm3222, %v3205, %v1907
    %v3271 = vsel %vm3222, %v3206, %v1909
    %v3272 = vsel %vm3222, %v3207, %v1911
    %v3273 = vsel %vm3222, %v3208, %v1913
    %v3274 = vsel %vm3222, %v3209, %v1915
    %v3275 = vsel %vm3222, %v3210, %v1917
    %v3276 = vsel %vm3222, %v3211, %v1919
    %v3277 = vsel %vm3222, %v3212, %v1921
    %v3278 = vsel %vm3222, %v3213, %v1923
    %v3279 = vsel %vm3222, %v3214, %v1925
    %v3280 = vsel %vm3222, %v3215, %v1927
    %v3281 = vsel %vm3222, %v3216, %v1929
    %v3282 = vsel %vm3222, %v3217, %v1931
    %v3283 = vsel %vm3222, %v3218, %v1933
    %v3284 = vsel %vm3222, %v3219, %v1935
    %v3285 = vsel %vm3222, %v3220, %v1937
    %v3286 = vsel %vm3222, %v3221, %v1939
    %vm3287 = vcmask 326656
    %v3288 = vsel %vm3287, %v3223, %v2069
    %v3289 = vsel %vm3287, %v3224, %v2071
    %v3290 = vsel %vm3287, %v3225, %v2073
    %v3291 = vsel %vm3287, %v3226, %v2075
    %v3292 = vsel %vm3287, %v3227, %v2077
    %v3293 = vsel %vm3287, %v3228, %v2079
    %v3294 = vsel %vm3287, %v3229, %v2081
    %v3295 = vsel %vm3287, %v3230, %v2083
    %v3296 = vsel %vm3287, %v3231, %v2085
    %v3297 = vsel %vm3287, %v3232, %v2087
    %v3298 = vsel %vm3287, %v3233, %v2089
    %v3299 = vsel %vm3287, %v3234, %v2091
    %v3300 = vsel %vm3287, %v3235, %v2093
    %v3301 = vsel %vm3287, %v3236, %v2095
    %v3302 = vsel %vm3287, %v3237, %v2097
    %v3303 = vsel %vm3287, %v3238, %v2099
    %v3304 = vsel %vm3287, %v3239, %v2101
    %v3305 = vsel %vm3287, %v3240, %v2103
    %v3306 = vsel %vm3287, %v3241, %v2105
    %v3307 = vsel %vm3287, %v3242, %v2107
    %v3308 = vsel %vm3287, %v3243, %v2109
    %v3309 = vsel %vm3287, %v3244, %v2111
    %v3310 = vsel %vm3287, %v3245, %v2113
    %v3311 = vsel %vm3287, %v3246, %v2115
    %v3312 = vsel %vm3287, %v3247, %v2117
    %v3313 = vsel %vm3287, %v3248, %v2119
    %v3314 = vsel %vm3287, %v3249, %v2121
    %v3315 = vsel %vm3287, %v3250, %v2123
    %v3316 = vsel %vm3287, %v3251, %v2125
    %v3317 = vsel %vm3287, %v3252, %v2127
    %v3318 = vsel %vm3287, %v3253, %v2129
    %v3319 = vsel %vm3287, %v3254, %v2131
    %v3320 = vsel %vm3287, %v3255, %v2133
    %v3321 = vsel %vm3287, %v3256, %v2135
    %v3322 = vsel %vm3287, %v3257, %v2137
    %v3323 = vsel %vm3287, %v3258, %v2139
    %v3324 = vsel %vm3287, %v3259, %v2141
    %v3325 = vsel %vm3287, %v3260, %v2143
    %v3326 = vsel %vm3287, %v3261, %v2145
    %v3327 = vsel %vm3287, %v3262, %v2147
    %v3328 = vsel %vm3287, %v3263, %v2149
    %v3329 = vsel %vm3287, %v3264, %v2151
    %v3330 = vsel %vm3287, %v3265, %v2153
    %v3331 = vsel %vm3287, %v3266, %v2155
    %v3332 = vsel %vm3287, %v3267, %v2157
    %v3333 = vsel %vm3287, %v3268, %v2159
    %v3334 = vsel %vm3287, %v3269, %v2161
    %v3335 = vsel %vm3287, %v3270, %v2163
    %v3336 = vsel %vm3287, %v3271, %v2165
    %v3337 = vsel %vm3287, %v3272, %v2167
    %v3338 = vsel %vm3287, %v3273, %v2169
    %v3339 = vsel %vm3287, %v3274, %v2171
    %v3340 = vsel %vm3287, %v3275, %v2173
    %v3341 = vsel %vm3287, %v3276, %v2175
    %v3342 = vsel %vm3287, %v3277, %v2177
    %v3343 = vsel %vm3287, %v3278, %v2179
    %v3344 = vsel %vm3287, %v3279, %v2181
    %v3345 = vsel %vm3287, %v3280, %v2183
    %v3346 = vsel %vm3287, %v3281, %v2185
    %v3347 = vsel %vm3287, %v3282, %v2187
    %v3348 = vsel %vm3287, %v3283, %v2189
    %v3349 = vsel %vm3287, %v3284, %v2191
    %v3350 = vsel %vm3287, %v3285, %v2193
    %v3351 = vsel %vm3287, %v3286, %v2195
    %vm3352 = vcmask 392192
    %v3353 = vsel %vm3352, %v3288, %v2325
    %v3354 = vsel %vm3352, %v3289, %v2327
    %v3355 = vsel %vm3352, %v3290, %v2329
    %v3356 = vsel %vm3352, %v3291, %v2331
    %v3357 = vsel %vm3352, %v3292, %v2333
    %v3358 = vsel %vm3352, %v3293, %v2335
    %v3359 = vsel %vm3352, %v3294, %v2337
    %v3360 = vsel %vm3352, %v3295, %v2339
    %v3361 = vsel %vm3352, %v3296, %v2341
    %v3362 = vsel %vm3352, %v3297, %v2343
    %v3363 = vsel %vm3352, %v3298, %v2345
    %v3364 = vsel %vm3352, %v3299, %v2347
    %v3365 = vsel %vm3352, %v3300, %v2349
    %v3366 = vsel %vm3352, %v3301, %v2351
    %v3367 = vsel %vm3352, %v3302, %v2353
    %v3368 = vsel %vm3352, %v3303, %v2355
    %v3369 = vsel %vm3352, %v3304, %v2357
    %v3370 = vsel %vm3352, %v3305, %v2359
    %v3371 = vsel %vm3352, %v3306, %v2361
    %v3372 = vsel %vm3352, %v3307, %v2363
    %v3373 = vsel %vm3352, %v3308, %v2365
    %v3374 = vsel %vm3352, %v3309, %v2367
    %v3375 = vsel %vm3352, %v3310, %v2369
    %v3376 = vsel %vm3352, %v3311, %v2371
    %v3377 = vsel %vm3352, %v3312, %v2373
    %v3378 = vsel %vm3352, %v3313, %v2375
    %v3379 = vsel %vm3352, %v3314, %v2377
    %v3380 = vsel %vm3352, %v3315, %v2379
    %v3381 = vsel %vm3352, %v3316, %v2381
    %v3382 = vsel %vm3352, %v3317, %v2383
    %v3383 = vsel %vm3352, %v3318, %v2385
    %v3384 = vsel %vm3352, %v3319, %v2387
    %v3385 = vsel %vm3352, %v3320, %v2389
    %v3386 = vsel %vm3352, %v3321, %v2391
    %v3387 = vsel %vm3352, %v3322, %v2393
    %v3388 = vsel %vm3352, %v3323, %v2395
    %v3389 = vsel %vm3352, %v3324, %v2397
    %v3390 = vsel %vm3352, %v3325, %v2399
    %v3391 = vsel %vm3352, %v3326, %v2401
    %v3392 = vsel %vm3352, %v3327, %v2403
    %v3393 = vsel %vm3352, %v3328, %v2405
    %v3394 = vsel %vm3352, %v3329, %v2407
    %v3395 = vsel %vm3352, %v3330, %v2409
    %v3396 = vsel %vm3352, %v3331, %v2411
    %v3397 = vsel %vm3352, %v3332, %v2413
    %v3398 = vsel %vm3352, %v3333, %v2415
    %v3399 = vsel %vm3352, %v3334, %v2417
    %v3400 = vsel %vm3352, %v3335, %v2419
    %v3401 = vsel %vm3352, %v3336, %v2421
    %v3402 = vsel %vm3352, %v3337, %v2423
    %v3403 = vsel %vm3352, %v3338, %v2425
    %v3404 = vsel %vm3352, %v3339, %v2427
    %v3405 = vsel %vm3352, %v3340, %v2429
    %v3406 = vsel %vm3352, %v3341, %v2431
    %v3407 = vsel %vm3352, %v3342, %v2433
    %v3408 = vsel %vm3352, %v3343, %v2435
    %v3409 = vsel %vm3352, %v3344, %v2437
    %v3410 = vsel %vm3352, %v3345, %v2439
    %v3411 = vsel %vm3352, %v3346, %v2441
    %v3412 = vsel %vm3352, %v3347, %v2443
    %v3413 = vsel %vm3352, %v3348, %v2445
    %v3414 = vsel %vm3352, %v3349, %v2447
    %v3415 = vsel %vm3352, %v3350, %v2449
    %v3416 = vsel %vm3352, %v3351, %v2451
    %vm3417 = vcmask 457728
    %v3418 = vsel %vm3417, %v3353, %v2581
    %v3419 = vsel %vm3417, %v3354, %v2583
    %v3420 = vsel %vm3417, %v3355, %v2585
    %v3421 = vsel %vm3417, %v3356, %v2587
    %v3422 = vsel %vm3417, %v3357, %v2589
    %v3423 = vsel %vm3417, %v3358, %v2591
    %v3424 = vsel %vm3417, %v3359, %v2593
    %v3425 = vsel %vm3417, %v3360, %v2595
    %v3426 = vsel %vm3417, %v3361, %v2597
    %v3427 = vsel %vm3417, %v3362, %v2599
    %v3428 = vsel %vm3417, %v3363, %v2601
    %v3429 = vsel %vm3417, %v3364, %v2603
    %v3430 = vsel %vm3417, %v3365, %v2605
    %v3431 = vsel %vm3417, %v3366, %v2607
    %v3432 = vsel %vm3417, %v3367, %v2609
    %v3433 = vsel %vm3417, %v3368, %v2611
    %v3434 = vsel %vm3417, %v3369, %v2613
    %v3435 = vsel %vm3417, %v3370, %v2615
    %v3436 = vsel %vm3417, %v3371, %v2617
    %v3437 = vsel %vm3417, %v3372, %v2619
    %v3438 = vsel %vm3417, %v3373, %v2621
    %v3439 = vsel %vm3417, %v3374, %v2623
    %v3440 = vsel %vm3417, %v3375, %v2625
    %v3441 = vsel %vm3417, %v3376, %v2627
    %v3442 = vsel %vm3417, %v3377, %v2629
    %v3443 = vsel %vm3417, %v3378, %v2631
    %v3444 = vsel %vm3417, %v3379, %v2633
    %v3445 = vsel %vm3417, %v3380, %v2635
    %v3446 = vsel %vm3417, %v3381, %v2637
    %v3447 = vsel %vm3417, %v3382, %v2639
    %v3448 = vsel %vm3417, %v3383, %v2641
    %v3449 = vsel %vm3417, %v3384, %v2643
    %v3450 = vsel %vm3417, %v3385, %v2645
    %v3451 = vsel %vm3417, %v3386, %v2647
    %v3452 = vsel %vm3417, %v3387, %v2649
    %v3453 = vsel %vm3417, %v3388, %v2651
    %v3454 = vsel %vm3417, %v3389, %v2653
    %v3455 = vsel %vm3417, %v3390, %v2655
    %v3456 = vsel %vm3417, %v3391, %v2657
    %v3457 = vsel %vm3417, %v3392, %v2659
    %v3458 = vsel %vm3417, %v3393, %v2661
    %v3459 = vsel %vm3417, %v3394, %v2663
    %v3460 = vsel %vm3417, %v3395, %v2665
    %v3461 = vsel %vm3417, %v3396, %v2667
    %v3462 = vsel %vm3417, %v3397, %v2669
    %v3463 = vsel %vm3417, %v3398, %v2671
    %v3464 = vsel %vm3417, %v3399, %v2673
    %v3465 = vsel %vm3417, %v3400, %v2675
    %v3466 = vsel %vm3417, %v3401, %v2677
    %v3467 = vsel %vm3417, %v3402, %v2679
    %v3468 = vsel %vm3417, %v3403, %v2681
    %v3469 = vsel %vm3417, %v3404, %v2683
    %v3470 = vsel %vm3417, %v3405, %v2685
    %v3471 = vsel %vm3417, %v3406, %v2687
    %v3472 = vsel %vm3417, %v3407, %v2689
    %v3473 = vsel %vm3417, %v3408, %v2691
    %v3474 = vsel %vm3417, %v3409, %v2693
    %v3475 = vsel %vm3417, %v3410, %v2695
    %v3476 = vsel %vm3417, %v3411, %v2697
    %v3477 = vsel %vm3417, %v3412, %v2699
    %v3478 = vsel %vm3417, %v3413, %v2701
    %v3479 = vsel %vm3417, %v3414, %v2703
    %v3480 = vsel %vm3417, %v3415, %v2705
    %v3481 = vsel %vm3417, %v3416, %v2707
    %vm3482 = vcmask 523264
    %v3483 = vsel %vm3482, %v3418, %v2837
    %v3484 = vsel %vm3482, %v3419, %v2839
    %v3485 = vsel %vm3482, %v3420, %v2841
    %v3486 = vsel %vm3482, %v3421, %v2843
    %v3487 = vsel %vm3482, %v3422, %v2845
    %v3488 = vsel %vm3482, %v3423, %v2847
    %v3489 = vsel %vm3482, %v3424, %v2849
    %v3490 = vsel %vm3482, %v3425, %v2851
    %v3491 = vsel %vm3482, %v3426, %v2853
    %v3492 = vsel %vm3482, %v3427, %v2855
    %v3493 = vsel %vm3482, %v3428, %v2857
    %v3494 = vsel %vm3482, %v3429, %v2859
    %v3495 = vsel %vm3482, %v3430, %v2861
    %v3496 = vsel %vm3482, %v3431, %v2863
    %v3497 = vsel %vm3482, %v3432, %v2865
    %v3498 = vsel %vm3482, %v3433, %v2867
    %v3499 = vsel %vm3482, %v3434, %v2869
    %v3500 = vsel %vm3482, %v3435, %v2871
    %v3501 = vsel %vm3482, %v3436, %v2873
    %v3502 = vsel %vm3482, %v3437, %v2875
    %v3503 = vsel %vm3482, %v3438, %v2877
    %v3504 = vsel %vm3482, %v3439, %v2879
    %v3505 = vsel %vm3482, %v3440, %v2881
    %v3506 = vsel %vm3482, %v3441, %v2883
    %v3507 = vsel %vm3482, %v3442, %v2885
    %v3508 = vsel %vm3482, %v3443, %v2887
    %v3509 = vsel %vm3482, %v3444, %v2889
    %v3510 = vsel %vm3482, %v3445, %v2891
    %v3511 = vsel %vm3482, %v3446, %v2893
    %v3512 = vsel %vm3482, %v3447, %v2895
    %v3513 = vsel %vm3482, %v3448, %v2897
    %v3514 = vsel %vm3482, %v3449, %v2899
    %v3515 = vsel %vm3482, %v3450, %v2901
    %v3516 = vsel %vm3482, %v3451, %v2903
    %v3517 = vsel %vm3482, %v3452, %v2905
    %v3518 = vsel %vm3482, %v3453, %v2907
    %v3519 = vsel %vm3482, %v3454, %v2909
    %v3520 = vsel %vm3482, %v3455, %v2911
    %v3521 = vsel %vm3482, %v3456, %v2913
    %v3522 = vsel %vm3482, %v3457, %v2915
    %v3523 = vsel %vm3482, %v3458, %v2917
    %v3524 = vsel %vm3482, %v3459, %v2919
    %v3525 = vsel %vm3482, %v3460, %v2921
    %v3526 = vsel %vm3482, %v3461, %v2923
    %v3527 = vsel %vm3482, %v3462, %v2925
    %v3528 = vsel %vm3482, %v3463, %v2927
    %v3529 = vsel %vm3482, %v3464, %v2929
    %v3530 = vsel %vm3482, %v3465, %v2931
    %v3531 = vsel %vm3482, %v3466, %v2933
    %v3532 = vsel %vm3482, %v3467, %v2935
    %v3533 = vsel %vm3482, %v3468, %v2937
    %v3534 = vsel %vm3482, %v3469, %v2939
    %v3535 = vsel %vm3482, %v3470, %v2941
    %v3536 = vsel %vm3482, %v3471, %v2943
    %v3537 = vsel %vm3482, %v3472, %v2945
    %v3538 = vsel %vm3482, %v3473, %v2947
    %v3539 = vsel %vm3482, %v3474, %v2949
    %v3540 = vsel %vm3482, %v3475, %v2951
    %v3541 = vsel %vm3482, %v3476, %v2953
    %v3542 = vsel %vm3482, %v3477, %v2955
    %v3543 = vsel %vm3482, %v3478, %v2957
    %v3544 = vsel %vm3482, %v3479, %v2959
    %v3545 = vsel %vm3482, %v3480, %v2961
    %v3546 = vsel %vm3482, %v3481, %v2963
    %v3547 = vld [vmem:[%s1] sm:$0xff]
    %v3548 = vld [vmem:[%s1 + $0x8] sm:$0xff]
    %v3549 = vld [vmem:[%s1 + $0x10] sm:$0xff]
    %v3550 = vld [vmem:[%s1 + $0x18] sm:$0xff]
    %v3551 = vld [vmem:[%s1 + $0x20] sm:$0xff]
    %v3552 = vld [vmem:[%s1 + $0x28] sm:$0xff]
    %v3553 = vld [vmem:[%s1 + $0x30] sm:$0xff]
    %v3554 = vld [vmem:[%s1 + $0x38] sm:$0xff]
    %v3555 = vld [vmem:[%s1 + $0x40] sm:$0xff]
    %vm3556 = vcmask 588800
    %v3558 = vsel %vm3556, %v3483, 0
    %v3561 = vsel %vm3556, %v3484, 0
    %v3564 = vsel %vm3556, %v3485, 0
    %v3567 = vsel %vm3556, %v3486, 0
    %v3570 = vsel %vm3556, %v3487, 0
    %v3573 = vsel %vm3556, %v3488, 0
    %v3576 = vsel %vm3556, %v3489, 0
    %v3579 = vsel %vm3556, %v3490, 0
    %v3582 = vsel %vm3556, %v3491, 0
    %v3585 = vsel %vm3556, %v3492, 0
    %v3588 = vsel %vm3556, %v3493, 0
    %v3591 = vsel %vm3556, %v3494, 0
    %v3594 = vsel %vm3556, %v3495, 0
    %v3597 = vsel %vm3556, %v3496, 0
    %v3600 = vsel %vm3556, %v3497, 0
    %v3603 = vsel %vm3556, %v3498, 0
    %v3606 = vsel %vm3556, %v3499, 0
    %v3609 = vsel %vm3556, %v3500, 0
    %v3612 = vsel %vm3556, %v3501, 0
    %v3615 = vsel %vm3556, %v3502, 0
    %v3618 = vsel %vm3556, %v3503, 0
    %v3621 = vsel %vm3556, %v3504, 0
    %v3624 = vsel %vm3556, %v3505, 0
    %v3627 = vsel %vm3556, %v3506, 0
    %v3630 = vsel %vm3556, %v3507, 0
    %v3633 = vsel %vm3556, %v3508, 0
    %v3636 = vsel %vm3556, %v3509, 0
    %v3639 = vsel %vm3556, %v3510, 0
    %v3642 = vsel %vm3556, %v3511, 0
    %v3645 = vsel %vm3556, %v3512, 0
    %v3648 = vsel %vm3556, %v3513, 0
    %v3651 = vsel %vm3556, %v3514, 0
    %v3654 = vsel %vm3556, %v3515, 0
    %v3657 = vsel %vm3556, %v3516, 0
    %v3660 = vsel %vm3556, %v3517, 0
    %v3663 = vsel %vm3556, %v3518, 0
    %v3666 = vsel %vm3556, %v3519, 0
    %v3669 = vsel %vm3556, %v3520, 0
    %v3672 = vsel %vm3556, %v3521, 0
    %v3675 = vsel %vm3556, %v3522, 0
    %v3678 = vsel %vm3556, %v3523, 0
    %v3681 = vsel %vm3556, %v3524, 0
    %v3684 = vsel %vm3556, %v3525, 0
    %v3687 = vsel %vm3556, %v3526, 0
    %v3690 = vsel %vm3556, %v3527, 0
    %v3693 = vsel %vm3556, %v3528, 0
    %v3696 = vsel %vm3556, %v3529, 0
    %v3699 = vsel %vm3556, %v3530, 0
    %v3702 = vsel %vm3556, %v3531, 0
    %v3705 = vsel %vm3556, %v3532, 0
    %v3708 = vsel %vm3556, %v3533, 0
    %v3711 = vsel %vm3556, %v3534, 0
    %v3714 = vsel %vm3556, %v3535, 0
    %v3717 = vsel %vm3556, %v3536, 0
    %v3720 = vsel %vm3556, %v3537, 0
    %v3723 = vsel %vm3556, %v3538, 0
    %v3726 = vsel %vm3556, %v3539, 0
    %v3729 = vsel %vm3556, %v3540, 0
    %v3732 = vsel %vm3556, %v3541, 0
    %v3735 = vsel %vm3556, %v3542, 0
    %v3738 = vsel %vm3556, %v3543, 0
    %v3741 = vsel %vm3556, %v3544, 0
    %v3744 = vsel %vm3556, %v3545, 0
    %v3747 = vsel %vm3556, %v3546, 0
    %3749 = vmatprep.subr.mxu0 0.0
    %3750 = vmatpush1.msra.mxu0 0.0
    %3751 = vmatprep.subr.mxu0 0.0
    %3752 = vmatpush1.msra.mxu0 0.0
    %3753 = vmatprep.subr.mxu0 0.0
    %3754 = vmatpush1.msra.mxu0 0.0
    %3755 = vmatprep.subr.mxu0 0.0
    %3756 = vmatpush1.msra.mxu0 0.0
    %3757 = vmatprep.subr.mxu0 0.0
    %3758 = vmatpush1.msra.mxu0 0.0
    %3759 = vmatprep.subr.mxu0 0.0
    %3760 = vmatpush1.msra.mxu0 0.0
    %3761 = vmatprep.subr.mxu0 0.0
    %3762 = vmatpush1.msra.mxu0 0.0
    %3763 = vmatprep.subr.mxu0 0.0
    %3764 = vmatpush1.msra.mxu0 %v3555
    %3765 = vmatprep.subr.mxu0 0.0
    %3766 = vmatpush1.msra.mxu0 %v3554
    %3767 = vmatprep.subr.mxu0 0.0
    %3768 = vmatpush1.msra.mxu0 %v3553
    %3769 = vmatprep.subr.mxu0 0.0
    %3770 = vmatpush1.msra.mxu0 %v3552
    %3771 = vmatprep.subr.mxu0 0.0
    %3772 = vmatpush1.msra.mxu0 %v3551
    %3773 = vmatprep.subr.mxu0 0.0
    %3774 = vmatpush1.msra.mxu0 %v3550
    %3775 = vmatprep.subr.mxu0 0.0
    %3776 = vmatpush1.msra.mxu0 %v3549
    %3777 = vmatprep.subr.mxu0 0.0
    %3778 = vmatpush1.msra.mxu0 %v3548
    %3779 = vmatprep.subr.mxu0 0.0
    %3780 = vmatpush1.msra.mxu0 %v3547
    %3781 = vmatprep.subr.mxu0 0.0
    %3782 = vmatpush2.msra.mxu0 0.0
    %3783 = vmatprep.subr.mxu0 0.0
    %3784 = vmatpush2.msra.mxu0 0.0
    %3785 = vmatprep.subr.mxu0 0.0
    %3786 = vmatpush2.msra.mxu0 0.0
    %3787 = vmatprep.subr.mxu0 0.0
    %3788 = vmatpush2.msra.mxu0 0.0
    %3789 = vmatprep.subr.mxu0 0.0
    %3790 = vmatpush2.msra.mxu0 0.0
    %3791 = vmatprep.subr.mxu0 0.0
    %3792 = vmatpush2.msra.mxu0 0.0
    %3793 = vmatprep.subr.mxu0 0.0
    %3794 = vmatpush2.msra.mxu0 0.0
    %3795 = vmatprep.subr.mxu0 0.0
    %3796 = vmatpush2.msra.mxu0 0.0
    %3797 = vmatprep.subr.mxu0 0.0
    %3798 = vmatpush2.msra.mxu0 0.0
    %3799 = vmatprep.subr.mxu0 0.0
    %3800 = vmatpush2.msra.mxu0 0.0
    %3801 = vmatprep.subr.mxu0 0.0
    %3802 = vmatpush2.msra.mxu0 0.0
    %3803 = vmatprep.subr.mxu0 0.0
    %3804 = vmatpush2.msra.mxu0 0.0
    %3805 = vmatprep.subr.mxu0 0.0
    %3806 = vmatpush2.msra.mxu0 0.0
    %3807 = vmatprep.subr.mxu0 0.0
    %3808 = vmatpush2.msra.mxu0 0.0
    %3809 = vmatprep.subr.mxu0 0.0
    %3810 = vmatpush2.msra.mxu0 0.0
    %3811 = vmatprep.subr.mxu0 0.0
    %3812 = vmatpush2.msra.mxu0 0.0
    %3813 = vmatprep.mubr.f32.mxu0 0.0
    %3814 = vmatmul.mubr.f32.gmra.mxu0 %v3558
    %v3815 = vpop.f32.mrf.mxu0
    %v3816 = vadd.f32 0.0, %v3815
    %v3817 = vpop.f32.mrf.mxu0
    %3818 = vmatprep.mubr.f32.mxu0 0.0
    %3819 = vmatmul.mubr.f32.gmra.mxu0 %v3561
    %v3820 = vpop.f32.mrf.mxu0
    %v3821 = vadd.f32 0.0, %v3820
    %v3822 = vpop.f32.mrf.mxu0
    %3823 = vmatprep.mubr.f32.mxu0 0.0
    %3824 = vmatmul.mubr.f32.gmra.mxu0 %v3564
    %v3825 = vpop.f32.mrf.mxu0
    %v3826 = vadd.f32 0.0, %v3825
    %v3827 = vpop.f32.mrf.mxu0
    %3828 = vmatprep.mubr.f32.mxu0 0.0
    %3829 = vmatmul.mubr.f32.gmra.mxu0 %v3567
    %v3830 = vpop.f32.mrf.mxu0
    %v3831 = vadd.f32 0.0, %v3830
    %v3832 = vpop.f32.mrf.mxu0
    %3833 = vmatprep.mubr.f32.mxu0 0.0
    %3834 = vmatmul.mubr.f32.gmra.mxu0 %v3570
    %v3835 = vpop.f32.mrf.mxu0
    %v3836 = vadd.f32 0.0, %v3835
    %v3837 = vpop.f32.mrf.mxu0
    %3838 = vmatprep.mubr.f32.mxu0 0.0
    %3839 = vmatmul.mubr.f32.gmra.mxu0 %v3573
    %v3840 = vpop.f32.mrf.mxu0
    %v3841 = vadd.f32 0.0, %v3840
    %v3842 = vpop.f32.mrf.mxu0
    %3843 = vmatprep.mubr.f32.mxu0 0.0
    %3844 = vmatmul.mubr.f32.gmra.mxu0 %v3576
    %v3845 = vpop.f32.mrf.mxu0
    %v3846 = vadd.f32 0.0, %v3845
    %v3847 = vpop.f32.mrf.mxu0
    %3848 = vmatprep.mubr.f32.mxu0 0.0
    %3849 = vmatmul.mubr.f32.gmra.mxu0 %v3579
    %v3850 = vpop.f32.mrf.mxu0
    %v3851 = vadd.f32 0.0, %v3850
    %v3852 = vpop.f32.mrf.mxu0
    %3853 = vmatprep.mubr.f32.mxu0 0.0
    %3854 = vmatmul.mubr.f32.gmra.mxu0 %v3582
    %v3855 = vpop.f32.mrf.mxu0
    %v3856 = vadd.f32 0.0, %v3855
    %v3857 = vpop.f32.mrf.mxu0
    %3858 = vmatprep.mubr.f32.mxu0 0.0
    %3859 = vmatmul.mubr.f32.gmra.mxu0 %v3585
    %v3860 = vpop.f32.mrf.mxu0
    %v3861 = vadd.f32 0.0, %v3860
    %v3862 = vpop.f32.mrf.mxu0
    %3863 = vmatprep.mubr.f32.mxu0 0.0
    %3864 = vmatmul.mubr.f32.gmra.mxu0 %v3588
    %v3865 = vpop.f32.mrf.mxu0
    %v3866 = vadd.f32 0.0, %v3865
    %v3867 = vpop.f32.mrf.mxu0
    %3868 = vmatprep.mubr.f32.mxu0 0.0
    %3869 = vmatmul.mubr.f32.gmra.mxu0 %v3591
    %v3870 = vpop.f32.mrf.mxu0
    %v3871 = vadd.f32 0.0, %v3870
    %v3872 = vpop.f32.mrf.mxu0
    %3873 = vmatprep.mubr.f32.mxu0 0.0
    %3874 = vmatmul.mubr.f32.gmra.mxu0 %v3594
    %v3875 = vpop.f32.mrf.mxu0
    %v3876 = vadd.f32 0.0, %v3875
    %v3877 = vpop.f32.mrf.mxu0
    %3878 = vmatprep.mubr.f32.mxu0 0.0
    %3879 = vmatmul.mubr.f32.gmra.mxu0 %v3597
    %v3880 = vpop.f32.mrf.mxu0
    %v3881 = vadd.f32 0.0, %v3880
    %v3882 = vpop.f32.mrf.mxu0
    %3883 = vmatprep.mubr.f32.mxu0 0.0
    %3884 = vmatmul.mubr.f32.gmra.mxu0 %v3600
    %v3885 = vpop.f32.mrf.mxu0
    %v3886 = vadd.f32 0.0, %v3885
    %v3887 = vpop.f32.mrf.mxu0
    %3888 = vmatprep.mubr.f32.mxu0 0.0
    %3889 = vmatmul.mubr.f32.gmra.mxu0 %v3603
    %v3890 = vpop.f32.mrf.mxu0
    %v3891 = vadd.f32 0.0, %v3890
    %v3892 = vpop.f32.mrf.mxu0
    %3893 = vmatprep.mubr.f32.mxu0 0.0
    %3894 = vmatmul.mubr.f32.gmra.mxu0 %v3606
    %v3895 = vpop.f32.mrf.mxu0
    %v3896 = vadd.f32 0.0, %v3895
    %v3897 = vpop.f32.mrf.mxu0
    %3898 = vmatprep.mubr.f32.mxu0 0.0
    %3899 = vmatmul.mubr.f32.gmra.mxu0 %v3609
    %v3900 = vpop.f32.mrf.mxu0
    %v3901 = vadd.f32 0.0, %v3900
    %v3902 = vpop.f32.mrf.mxu0
    %3903 = vmatprep.mubr.f32.mxu0 0.0
    %3904 = vmatmul.mubr.f32.gmra.mxu0 %v3612
    %v3905 = vpop.f32.mrf.mxu0
    %v3906 = vadd.f32 0.0, %v3905
    %v3907 = vpop.f32.mrf.mxu0
    %3908 = vmatprep.mubr.f32.mxu0 0.0
    %3909 = vmatmul.mubr.f32.gmra.mxu0 %v3615
    %v3910 = vpop.f32.mrf.mxu0
    %v3911 = vadd.f32 0.0, %v3910
    %v3912 = vpop.f32.mrf.mxu0
    %3913 = vmatprep.mubr.f32.mxu0 0.0
    %3914 = vmatmul.mubr.f32.gmra.mxu0 %v3618
    %v3915 = vpop.f32.mrf.mxu0
    %v3916 = vadd.f32 0.0, %v3915
    %v3917 = vpop.f32.mrf.mxu0
    %3918 = vmatprep.mubr.f32.mxu0 0.0
    %3919 = vmatmul.mubr.f32.gmra.mxu0 %v3621
    %v3920 = vpop.f32.mrf.mxu0
    %v3921 = vadd.f32 0.0, %v3920
    %v3922 = vpop.f32.mrf.mxu0
    %3923 = vmatprep.mubr.f32.mxu0 0.0
    %3924 = vmatmul.mubr.f32.gmra.mxu0 %v3624
    %v3925 = vpop.f32.mrf.mxu0
    %v3926 = vadd.f32 0.0, %v3925
    %v3927 = vpop.f32.mrf.mxu0
    %3928 = vmatprep.mubr.f32.mxu0 0.0
    %3929 = vmatmul.mubr.f32.gmra.mxu0 %v3627
    %v3930 = vpop.f32.mrf.mxu0
    %v3931 = vadd.f32 0.0, %v3930
    %v3932 = vpop.f32.mrf.mxu0
    %3933 = vmatprep.mubr.f32.mxu0 0.0
    %3934 = vmatmul.mubr.f32.gmra.mxu0 %v3630
    %v3935 = vpop.f32.mrf.mxu0
    %v3936 = vadd.f32 0.0, %v3935
    %v3937 = vpop.f32.mrf.mxu0
    %3938 = vmatprep.mubr.f32.mxu0 0.0
    %3939 = vmatmul.mubr.f32.gmra.mxu0 %v3633
    %v3940 = vpop.f32.mrf.mxu0
    %v3941 = vadd.f32 0.0, %v3940
    %v3942 = vpop.f32.mrf.mxu0
    %3943 = vmatprep.mubr.f32.mxu0 0.0
    %3944 = vmatmul.mubr.f32.gmra.mxu0 %v3636
    %v3945 = vpop.f32.mrf.mxu0
    %v3946 = vadd.f32 0.0, %v3945
    %v3947 = vpop.f32.mrf.mxu0
    %3948 = vmatprep.mubr.f32.mxu0 0.0
    %3949 = vmatmul.mubr.f32.gmra.mxu0 %v3639
    %v3950 = vpop.f32.mrf.mxu0
    %v3951 = vadd.f32 0.0, %v3950
    %v3952 = vpop.f32.mrf.mxu0
    %3953 = vmatprep.mubr.f32.mxu0 0.0
    %3954 = vmatmul.mubr.f32.gmra.mxu0 %v3642
    %v3955 = vpop.f32.mrf.mxu0
    %v3956 = vadd.f32 0.0, %v3955
    %v3957 = vpop.f32.mrf.mxu0
    %3958 = vmatprep.mubr.f32.mxu0 0.0
    %3959 = vmatmul.mubr.f32.gmra.mxu0 %v3645
    %v3960 = vpop.f32.mrf.mxu0
    %v3961 = vadd.f32 0.0, %v3960
    %v3962 = vpop.f32.mrf.mxu0
    %3963 = vmatprep.mubr.f32.mxu0 0.0
    %3964 = vmatmul.mubr.f32.gmra.mxu0 %v3648
    %v3965 = vpop.f32.mrf.mxu0
    %v3966 = vadd.f32 0.0, %v3965
    %v3967 = vpop.f32.mrf.mxu0
    %3968 = vmatprep.mubr.f32.mxu0 0.0
    %3969 = vmatmul.mubr.f32.gmra.mxu0 %v3651
    %v3970 = vpop.f32.mrf.mxu0
    %v3971 = vadd.f32 0.0, %v3970
    %v3972 = vpop.f32.mrf.mxu0
    %3973 = vmatprep.mubr.f32.mxu0 0.0
    %3974 = vmatmul.mubr.f32.gmra.mxu0 %v3654
    %v3975 = vpop.f32.mrf.mxu0
    %v3976 = vadd.f32 0.0, %v3975
    %v3977 = vpop.f32.mrf.mxu0
    %3978 = vmatprep.mubr.f32.mxu0 0.0
    %3979 = vmatmul.mubr.f32.gmra.mxu0 %v3657
    %v3980 = vpop.f32.mrf.mxu0
    %v3981 = vadd.f32 0.0, %v3980
    %v3982 = vpop.f32.mrf.mxu0
    %3983 = vmatprep.mubr.f32.mxu0 0.0
    %3984 = vmatmul.mubr.f32.gmra.mxu0 %v3660
    %v3985 = vpop.f32.mrf.mxu0
    %v3986 = vadd.f32 0.0, %v3985
    %v3987 = vpop.f32.mrf.mxu0
    %3988 = vmatprep.mubr.f32.mxu0 0.0
    %3989 = vmatmul.mubr.f32.gmra.mxu0 %v3663
    %v3990 = vpop.f32.mrf.mxu0
    %v3991 = vadd.f32 0.0, %v3990
    %v3992 = vpop.f32.mrf.mxu0
    %3993 = vmatprep.mubr.f32.mxu0 0.0
    %3994 = vmatmul.mubr.f32.gmra.mxu0 %v3666
    %v3995 = vpop.f32.mrf.mxu0
    %v3996 = vadd.f32 0.0, %v3995
    %v3997 = vpop.f32.mrf.mxu0
    %3998 = vmatprep.mubr.f32.mxu0 0.0
    %3999 = vmatmul.mubr.f32.gmra.mxu0 %v3669
    %v4000 = vpop.f32.mrf.mxu0
    %v4001 = vadd.f32 0.0, %v4000
    %v4002 = vpop.f32.mrf.mxu0
    %4003 = vmatprep.mubr.f32.mxu0 0.0
    %4004 = vmatmul.mubr.f32.gmra.mxu0 %v3672
    %v4005 = vpop.f32.mrf.mxu0
    %v4006 = vadd.f32 0.0, %v4005
    %v4007 = vpop.f32.mrf.mxu0
    %4008 = vmatprep.mubr.f32.mxu0 0.0
    %4009 = vmatmul.mubr.f32.gmra.mxu0 %v3675
    %v4010 = vpop.f32.mrf.mxu0
    %v4011 = vadd.f32 0.0, %v4010
    %v4012 = vpop.f32.mrf.mxu0
    %4013 = vmatprep.mubr.f32.mxu0 0.0
    %4014 = vmatmul.mubr.f32.gmra.mxu0 %v3678
    %v4015 = vpop.f32.mrf.mxu0
    %v4016 = vadd.f32 0.0, %v4015
    %v4017 = vpop.f32.mrf.mxu0
    %4018 = vmatprep.mubr.f32.mxu0 0.0
    %4019 = vmatmul.mubr.f32.gmra.mxu0 %v3681
    %v4020 = vpop.f32.mrf.mxu0
    %v4021 = vadd.f32 0.0, %v4020
    %v4022 = vpop.f32.mrf.mxu0
    %4023 = vmatprep.mubr.f32.mxu0 0.0
    %4024 = vmatmul.mubr.f32.gmra.mxu0 %v3684
    %v4025 = vpop.f32.mrf.mxu0
    %v4026 = vadd.f32 0.0, %v4025
    %v4027 = vpop.f32.mrf.mxu0
    %4028 = vmatprep.mubr.f32.mxu0 0.0
    %4029 = vmatmul.mubr.f32.gmra.mxu0 %v3687
    %v4030 = vpop.f32.mrf.mxu0
    %v4031 = vadd.f32 0.0, %v4030
    %v4032 = vpop.f32.mrf.mxu0
    %4033 = vmatprep.mubr.f32.mxu0 0.0
    %4034 = vmatmul.mubr.f32.gmra.mxu0 %v3690
    %v4035 = vpop.f32.mrf.mxu0
    %v4036 = vadd.f32 0.0, %v4035
    %v4037 = vpop.f32.mrf.mxu0
    %4038 = vmatprep.mubr.f32.mxu0 0.0
    %4039 = vmatmul.mubr.f32.gmra.mxu0 %v3693
    %v4040 = vpop.f32.mrf.mxu0
    %v4041 = vadd.f32 0.0, %v4040
    %v4042 = vpop.f32.mrf.mxu0
    %4043 = vmatprep.mubr.f32.mxu0 0.0
    %4044 = vmatmul.mubr.f32.gmra.mxu0 %v3696
    %v4045 = vpop.f32.mrf.mxu0
    %v4046 = vadd.f32 0.0, %v4045
    %v4047 = vpop.f32.mrf.mxu0
    %4048 = vmatprep.mubr.f32.mxu0 0.0
    %4049 = vmatmul.mubr.f32.gmra.mxu0 %v3699
    %v4050 = vpop.f32.mrf.mxu0
    %v4051 = vadd.f32 0.0, %v4050
    %v4052 = vpop.f32.mrf.mxu0
    %4053 = vmatprep.mubr.f32.mxu0 0.0
    %4054 = vmatmul.mubr.f32.gmra.mxu0 %v3702
    %v4055 = vpop.f32.mrf.mxu0
    %v4056 = vadd.f32 0.0, %v4055
    %v4057 = vpop.f32.mrf.mxu0
    %4058 = vmatprep.mubr.f32.mxu0 0.0
    %4059 = vmatmul.mubr.f32.gmra.mxu0 %v3705
    %v4060 = vpop.f32.mrf.mxu0
    %v4061 = vadd.f32 0.0, %v4060
    %v4062 = vpop.f32.mrf.mxu0
    %4063 = vmatprep.mubr.f32.mxu0 0.0
    %4064 = vmatmul.mubr.f32.gmra.mxu0 %v3708
    %v4065 = vpop.f32.mrf.mxu0
    %v4066 = vadd.f32 0.0, %v4065
    %v4067 = vpop.f32.mrf.mxu0
    %4068 = vmatprep.mubr.f32.mxu0 0.0
    %4069 = vmatmul.mubr.f32.gmra.mxu0 %v3711
    %v4070 = vpop.f32.mrf.mxu0
    %v4071 = vadd.f32 0.0, %v4070
    %v4072 = vpop.f32.mrf.mxu0
    %4073 = vmatprep.mubr.f32.mxu0 0.0
    %4074 = vmatmul.mubr.f32.gmra.mxu0 %v3714
    %v4075 = vpop.f32.mrf.mxu0
    %v4076 = vadd.f32 0.0, %v4075
    %v4077 = vpop.f32.mrf.mxu0
    %4078 = vmatprep.mubr.f32.mxu0 0.0
    %4079 = vmatmul.mubr.f32.gmra.mxu0 %v3717
    %v4080 = vpop.f32.mrf.mxu0
    %v4081 = vadd.f32 0.0, %v4080
    %v4082 = vpop.f32.mrf.mxu0
    %4083 = vmatprep.mubr.f32.mxu0 0.0
    %4084 = vmatmul.mubr.f32.gmra.mxu0 %v3720
    %v4085 = vpop.f32.mrf.mxu0
    %v4086 = vadd.f32 0.0, %v4085
    %v4087 = vpop.f32.mrf.mxu0
    %4088 = vmatprep.mubr.f32.mxu0 0.0
    %4089 = vmatmul.mubr.f32.gmra.mxu0 %v3723
    %v4090 = vpop.f32.mrf.mxu0
    %v4091 = vadd.f32 0.0, %v4090
    %v4092 = vpop.f32.mrf.mxu0
    %4093 = vmatprep.mubr.f32.mxu0 0.0
    %4094 = vmatmul.mubr.f32.gmra.mxu0 %v3726
    %v4095 = vpop.f32.mrf.mxu0
    %v4096 = vadd.f32 0.0, %v4095
    %v4097 = vpop.f32.mrf.mxu0
    %4098 = vmatprep.mubr.f32.mxu0 0.0
    %4099 = vmatmul.mubr.f32.gmra.mxu0 %v3729
    %v4100 = vpop.f32.mrf.mxu0
    %v4101 = vadd.f32 0.0, %v4100
    %v4102 = vpop.f32.mrf.mxu0
    %4103 = vmatprep.mubr.f32.mxu0 0.0
    %4104 = vmatmul.mubr.f32.gmra.mxu0 %v3732
    %v4105 = vpop.f32.mrf.mxu0
    %v4106 = vadd.f32 0.0, %v4105
    %v4107 = vpop.f32.mrf.mxu0
    %4108 = vmatprep.mubr.f32.mxu0 0.0
    %4109 = vmatmul.mubr.f32.gmra.mxu0 %v3735
    %v4110 = vpop.f32.mrf.mxu0
    %v4111 = vadd.f32 0.0, %v4110
    %v4112 = vpop.f32.mrf.mxu0
    %4113 = vmatprep.mubr.f32.mxu0 0.0
    %4114 = vmatmul.mubr.f32.gmra.mxu0 %v3738
    %v4115 = vpop.f32.mrf.mxu0
    %v4116 = vadd.f32 0.0, %v4115
    %v4117 = vpop.f32.mrf.mxu0
    %4118 = vmatprep.mubr.f32.mxu0 0.0
    %4119 = vmatmul.mubr.f32.gmra.mxu0 %v3741
    %v4120 = vpop.f32.mrf.mxu0
    %v4121 = vadd.f32 0.0, %v4120
    %v4122 = vpop.f32.mrf.mxu0
    %4123 = vmatprep.mubr.f32.mxu0 0.0
    %4124 = vmatmul.mubr.f32.gmra.mxu0 %v3744
    %v4125 = vpop.f32.mrf.mxu0
    %v4126 = vadd.f32 0.0, %v4125
    %v4127 = vpop.f32.mrf.mxu0
    %4128 = vmatprep.mubr.f32.mxu0 0.0
    %4129 = vmatmul.mubr.f32.gmra.mxu0 %v3747
    %v4130 = vpop.f32.mrf.mxu0
    %v4131 = vadd.f32 0.0, %v4130
    %v4132 = vpop.f32.mrf.mxu0
    %4133 = vdwg.mxu0
    %v4134 = vsel %vm3222, %v3816, 0.0
    %v4135 = vsel %vm3222, %v3821, 0.0
    %v4136 = vadd.f32 %v4134, %v4135
    %v4137 = vsel %vm3222, %v3826, 0.0
    %v4138 = vadd.f32 %v4136, %v4137
    %v4139 = vsel %vm3222, %v3831, 0.0
    %v4140 = vadd.f32 %v4138, %v4139
    %v4141 = vsel %vm3222, %v3836, 0.0
    %v4142 = vadd.f32 %v4140, %v4141
    %v4143 = vsel %vm3222, %v3841, 0.0
    %v4144 = vadd.f32 %v4142, %v4143
    %v4145 = vsel %vm3222, %v3846, 0.0
    %v4146 = vadd.f32 %v4144, %v4145
    %v4147 = vsel %vm3222, %v3851, 0.0
    %v4148 = vadd.f32 %v4146, %v4147
    %v4149 = vsel %vm3222, %v3856, 0.0
    %v4150 = vadd.f32 %v4148, %v4149
    %v4151 = vsel %vm3222, %v3861, 0.0
    %v4152 = vadd.f32 %v4150, %v4151
    %v4153 = vsel %vm3222, %v3866, 0.0
    %v4154 = vadd.f32 %v4152, %v4153
    %v4155 = vsel %vm3222, %v3871, 0.0
    %v4156 = vadd.f32 %v4154, %v4155
    %v4157 = vsel %vm3222, %v3876, 0.0
    %v4158 = vadd.f32 %v4156, %v4157
    %v4159 = vsel %vm3222, %v3881, 0.0
    %v4160 = vadd.f32 %v4158, %v4159
    %v4161 = vsel %vm3222, %v3886, 0.0
    %v4162 = vadd.f32 %v4160, %v4161
    %v4163 = vsel %vm3222, %v3891, 0.0
    %v4164 = vadd.f32 %v4162, %v4163
    %v4165 = vsel %vm3222, %v3896, 0.0
    %v4166 = vadd.f32 %v4164, %v4165
    %v4167 = vsel %vm3222, %v3901, 0.0
    %v4168 = vadd.f32 %v4166, %v4167
    %v4169 = vsel %vm3222, %v3906, 0.0
    %v4170 = vadd.f32 %v4168, %v4169
    %v4171 = vsel %vm3222, %v3911, 0.0
    %v4172 = vadd.f32 %v4170, %v4171
    %v4173 = vsel %vm3222, %v3916, 0.0
    %v4174 = vadd.f32 %v4172, %v4173
    %v4175 = vsel %vm3222, %v3921, 0.0
    %v4176 = vadd.f32 %v4174, %v4175
    %v4177 = vsel %vm3222, %v3926, 0.0
    %v4178 = vadd.f32 %v4176, %v4177
    %v4179 = vsel %vm3222, %v3931, 0.0
    %v4180 = vadd.f32 %v4178, %v4179
    %v4181 = vsel %vm3222, %v3936, 0.0
    %v4182 = vadd.f32 %v4180, %v4181
    %v4183 = vsel %vm3222, %v3941, 0.0
    %v4184 = vadd.f32 %v4182, %v4183
    %v4185 = vsel %vm3222, %v3946, 0.0
    %v4186 = vadd.f32 %v4184, %v4185
    %v4187 = vsel %vm3222, %v3951, 0.0
    %v4188 = vadd.f32 %v4186, %v4187
    %v4189 = vsel %vm3222, %v3956, 0.0
    %v4190 = vadd.f32 %v4188, %v4189
    %v4191 = vsel %vm3222, %v3961, 0.0
    %v4192 = vadd.f32 %v4190, %v4191
    %v4193 = vsel %vm3222, %v3966, 0.0
    %v4194 = vadd.f32 %v4192, %v4193
    %v4195 = vsel %vm3222, %v3971, 0.0
    %v4196 = vadd.f32 %v4194, %v4195
    %v4197 = vsel %vm3222, %v3976, 0.0
    %v4198 = vadd.f32 %v4196, %v4197
    %v4199 = vsel %vm3222, %v3981, 0.0
    %v4200 = vadd.f32 %v4198, %v4199
    %v4201 = vsel %vm3222, %v3986, 0.0
    %v4202 = vadd.f32 %v4200, %v4201
    %v4203 = vsel %vm3222, %v3991, 0.0
    %v4204 = vadd.f32 %v4202, %v4203
    %v4205 = vsel %vm3222, %v3996, 0.0
    %v4206 = vadd.f32 %v4204, %v4205
    %v4207 = vsel %vm3222, %v4001, 0.0
    %v4208 = vadd.f32 %v4206, %v4207
    %v4209 = vsel %vm3222, %v4006, 0.0
    %v4210 = vadd.f32 %v4208, %v4209
    %v4211 = vsel %vm3222, %v4011, 0.0
    %v4212 = vadd.f32 %v4210, %v4211
    %v4213 = vsel %vm3222, %v4016, 0.0
    %v4214 = vadd.f32 %v4212, %v4213
    %v4215 = vsel %vm3222, %v4021, 0.0
    %v4216 = vadd.f32 %v4214, %v4215
    %v4217 = vsel %vm3222, %v4026, 0.0
    %v4218 = vadd.f32 %v4216, %v4217
    %v4219 = vsel %vm3222, %v4031, 0.0
    %v4220 = vadd.f32 %v4218, %v4219
    %v4221 = vsel %vm3222, %v4036, 0.0
    %v4222 = vadd.f32 %v4220, %v4221
    %v4223 = vsel %vm3222, %v4041, 0.0
    %v4224 = vadd.f32 %v4222, %v4223
    %v4225 = vsel %vm3222, %v4046, 0.0
    %v4226 = vadd.f32 %v4224, %v4225
    %v4227 = vsel %vm3222, %v4051, 0.0
    %v4228 = vadd.f32 %v4226, %v4227
    %v4229 = vsel %vm3222, %v4056, 0.0
    %v4230 = vadd.f32 %v4228, %v4229
    %v4231 = vsel %vm3222, %v4061, 0.0
    %v4232 = vadd.f32 %v4230, %v4231
    %v4233 = vsel %vm3222, %v4066, 0.0
    %v4234 = vadd.f32 %v4232, %v4233
    %v4235 = vsel %vm3222, %v4071, 0.0
    %v4236 = vadd.f32 %v4234, %v4235
    %v4237 = vsel %vm3222, %v4076, 0.0
    %v4238 = vadd.f32 %v4236, %v4237
    %v4239 = vsel %vm3222, %v4081, 0.0
    %v4240 = vadd.f32 %v4238, %v4239
    %v4241 = vsel %vm3222, %v4086, 0.0
    %v4242 = vadd.f32 %v4240, %v4241
    %v4243 = vsel %vm3222, %v4091, 0.0
    %v4244 = vadd.f32 %v4242, %v4243
    %v4245 = vsel %vm3222, %v4096, 0.0
    %v4246 = vadd.f32 %v4244, %v4245
    %v4247 = vsel %vm3222, %v4101, 0.0
    %v4248 = vadd.f32 %v4246, %v4247
    %v4249 = vsel %vm3222, %v4106, 0.0
    %v4250 = vadd.f32 %v4248, %v4249
    %v4251 = vsel %vm3222, %v4111, 0.0
    %v4252 = vadd.f32 %v4250, %v4251
    %v4253 = vsel %vm3222, %v4116, 0.0
    %v4254 = vadd.f32 %v4252, %v4253
    %v4255 = vsel %vm3222, %v4121, 0.0
    %v4256 = vadd.f32 %v4254, %v4255
    %v4257 = vsel %vm3222, %v4126, 0.0
    %v4258 = vadd.f32 %v4256, %v4257
    %v4259 = vsel %vm3222, %v4131, 0.0
    %v4260 = vadd.f32 %v4258, %v4259
    %v4261 = vrot.slane %v4260, 4
    %v4262 = vadd.f32 %v4260, %v4261
    %v4263 = vrot.slane %v4262, 2
    %v4264 = vadd.f32 %v4262, %v4263
    %v4265 = vrot.slane %v4264, 1
    %v4266 = vadd.f32 %v4264, %v4265
    %v4267 = vrcp.pop 512.0
    %v4268 = vmul.f32 %v4266, %v4267
    %v4269 = vsub.f32 %v3816, %v4268
    %v4270 = vsub.f32 %v3821, %v4268
    %v4271 = vsub.f32 %v3826, %v4268
    %v4272 = vsub.f32 %v3831, %v4268
    %v4273 = vsub.f32 %v3836, %v4268
    %v4274 = vsub.f32 %v3841, %v4268
    %v4275 = vsub.f32 %v3846, %v4268
    %v4276 = vsub.f32 %v3851, %v4268
    %v4277 = vsub.f32 %v3856, %v4268
    %v4278 = vsub.f32 %v3861, %v4268
    %v4279 = vsub.f32 %v3866, %v4268
    %v4280 = vsub.f32 %v3871, %v4268
    %v4281 = vsub.f32 %v3876, %v4268
    %v4282 = vsub.f32 %v3881, %v4268
    %v4283 = vsub.f32 %v3886, %v4268
    %v4284 = vsub.f32 %v3891, %v4268
    %v4285 = vsub.f32 %v3896, %v4268
    %v4286 = vsub.f32 %v3901, %v4268
    %v4287 = vsub.f32 %v3906, %v4268
    %v4288 = vsub.f32 %v3911, %v4268
    %v4289 = vsub.f32 %v3916, %v4268
    %v4290 = vsub.f32 %v3921, %v4268
    %v4291 = vsub.f32 %v3926, %v4268
    %v4292 = vsub.f32 %v3931, %v4268
    %v4293 = vsub.f32 %v3936, %v4268
    %v4294 = vsub.f32 %v3941, %v4268
    %v4295 = vsub.f32 %v3946, %v4268
    %v4296 = vsub.f32 %v3951, %v4268
    %v4297 = vsub.f32 %v3956, %v4268
    %v4298 = vsub.f32 %v3961, %v4268
    %v4299 = vsub.f32 %v3966, %v4268
    %v4300 = vsub.f32 %v3971, %v4268
    %v4301 = vsub.f32 %v3976, %v4268
    %v4302 = vsub.f32 %v3981, %v4268
    %v4303 = vsub.f32 %v3986, %v4268
    %v4304 = vsub.f32 %v3991, %v4268
    %v4305 = vsub.f32 %v3996, %v4268
    %v4306 = vsub.f32 %v4001, %v4268
    %v4307 = vsub.f32 %v4006, %v4268
    %v4308 = vsub.f32 %v4011, %v4268
    %v4309 = vsub.f32 %v4016, %v4268
    %v4310 = vsub.f32 %v4021, %v4268
    %v4311 = vsub.f32 %v4026, %v4268
    %v4312 = vsub.f32 %v4031, %v4268
    %v4313 = vsub.f32 %v4036, %v4268
    %v4314 = vsub.f32 %v4041, %v4268
    %v4315 = vsub.f32 %v4046, %v4268
    %v4316 = vsub.f32 %v4051, %v4268
    %v4317 = vsub.f32 %v4056, %v4268
    %v4318 = vsub.f32 %v4061, %v4268
    %v4319 = vsub.f32 %v4066, %v4268
    %v4320 = vsub.f32 %v4071, %v4268
    %v4321 = vsub.f32 %v4076, %v4268
    %v4322 = vsub.f32 %v4081, %v4268
    %v4323 = vsub.f32 %v4086, %v4268
    %v4324 = vsub.f32 %v4091, %v4268
    %v4325 = vsub.f32 %v4096, %v4268
    %v4326 = vsub.f32 %v4101, %v4268
    %v4327 = vsub.f32 %v4106, %v4268
    %v4328 = vsub.f32 %v4111, %v4268
    %v4329 = vsub.f32 %v4116, %v4268
    %v4330 = vsub.f32 %v4121, %v4268
    %v4331 = vsub.f32 %v4126, %v4268
    %v4332 = vsub.f32 %v4131, %v4268
    %v4333 = vmul.f32 %v4269, %v4269
    %v4334 = vmul.f32 %v4270, %v4270
    %v4335 = vmul.f32 %v4271, %v4271
    %v4336 = vmul.f32 %v4272, %v4272
    %v4337 = vmul.f32 %v4273, %v4273
    %v4338 = vmul.f32 %v4274, %v4274
    %v4339 = vmul.f32 %v4275, %v4275
    %v4340 = vmul.f32 %v4276, %v4276
    %v4341 = vmul.f32 %v4277, %v4277
    %v4342 = vmul.f32 %v4278, %v4278
    %v4343 = vmul.f32 %v4279, %v4279
    %v4344 = vmul.f32 %v4280, %v4280
    %v4345 = vmul.f32 %v4281, %v4281
    %v4346 = vmul.f32 %v4282, %v4282
    %v4347 = vmul.f32 %v4283, %v4283
    %v4348 = vmul.f32 %v4284, %v4284
    %v4349 = vmul.f32 %v4285, %v4285
    %v4350 = vmul.f32 %v4286, %v4286
    %v4351 = vmul.f32 %v4287, %v4287
    %v4352 = vmul.f32 %v4288, %v4288
    %v4353 = vmul.f32 %v4289, %v4289
    %v4354 = vmul.f32 %v4290, %v4290
    %v4355 = vmul.f32 %v4291, %v4291
    %v4356 = vmul.f32 %v4292, %v4292
    %v4357 = vmul.f32 %v4293, %v4293
    %v4358 = vmul.f32 %v4294, %v4294
    %v4359 = vmul.f32 %v4295, %v4295
    %v4360 = vmul.f32 %v4296, %v4296
    %v4361 = vmul.f32 %v4297, %v4297
    %v4362 = vmul.f32 %v4298, %v4298
    %v4363 = vmul.f32 %v4299, %v4299
    %v4364 = vmul.f32 %v4300, %v4300
    %v4365 = vmul.f32 %v4301, %v4301
    %v4366 = vmul.f32 %v4302, %v4302
    %v4367 = vmul.f32 %v4303, %v4303
    %v4368 = vmul.f32 %v4304, %v4304
    %v4369 = vmul.f32 %v4305, %v4305
    %v4370 = vmul.f32 %v4306, %v4306
    %v4371 = vmul.f32 %v4307, %v4307
    %v4372 = vmul.f32 %v4308, %v4308
    %v4373 = vmul.f32 %v4309, %v4309
    %v4374 = vmul.f32 %v4310, %v4310
    %v4375 = vmul.f32 %v4311, %v4311
    %v4376 = vmul.f32 %v4312, %v4312
    %v4377 = vmul.f32 %v4313, %v4313
    %v4378 = vmul.f32 %v4314, %v4314
    %v4379 = vmul.f32 %v4315, %v4315
    %v4380 = vmul.f32 %v4316, %v4316
    %v4381 = vmul.f32 %v4317, %v4317
    %v4382 = vmul.f32 %v4318, %v4318
    %v4383 = vmul.f32 %v4319, %v4319
    %v4384 = vmul.f32 %v4320, %v4320
    %v4385 = vmul.f32 %v4321, %v4321
    %v4386 = vmul.f32 %v4322, %v4322
    %v4387 = vmul.f32 %v4323, %v4323
    %v4388 = vmul.f32 %v4324, %v4324
    %v4389 = vmul.f32 %v4325, %v4325
    %v4390 = vmul.f32 %v4326, %v4326
    %v4391 = vmul.f32 %v4327, %v4327
    %v4392 = vmul.f32 %v4328, %v4328
    %v4393 = vmul.f32 %v4329, %v4329
    %v4394 = vmul.f32 %v4330, %v4330
    %v4395 = vmul.f32 %v4331, %v4331
    %v4396 = vmul.f32 %v4332, %v4332
    %v4397 = vsel %vm3222, %v4333, 0.0
    %v4398 = vsel %vm3222, %v4334, 0.0
    %v4399 = vadd.f32 %v4397, %v4398
    %v4400 = vsel %vm3222, %v4335, 0.0
    %v4401 = vadd.f32 %v4399, %v4400
    %v4402 = vsel %vm3222, %v4336, 0.0
    %v4403 = vadd.f32 %v4401, %v4402
    %v4404 = vsel %vm3222, %v4337, 0.0
    %v4405 = vadd.f32 %v4403, %v4404
    %v4406 = vsel %vm3222, %v4338, 0.0
    %v4407 = vadd.f32 %v4405, %v4406
    %v4408 = vsel %vm3222, %v4339, 0.0
    %v4409 = vadd.f32 %v4407, %v4408
    %v4410 = vsel %vm3222, %v4340, 0.0
    %v4411 = vadd.f32 %v4409, %v4410
    %v4412 = vsel %vm3222, %v4341, 0.0
    %v4413 = vadd.f32 %v4411, %v4412
    %v4414 = vsel %vm3222, %v4342, 0.0
    %v4415 = vadd.f32 %v4413, %v4414
    %v4416 = vsel %vm3222, %v4343, 0.0
    %v4417 = vadd.f32 %v4415, %v4416
    %v4418 = vsel %vm3222, %v4344, 0.0
    %v4419 = vadd.f32 %v4417, %v4418
    %v4420 = vsel %vm3222, %v4345, 0.0
    %v4421 = vadd.f32 %v4419, %v4420
    %v4422 = vsel %vm3222, %v4346, 0.0
    %v4423 = vadd.f32 %v4421, %v4422
    %v4424 = vsel %vm3222, %v4347, 0.0
    %v4425 = vadd.f32 %v4423, %v4424
    %v4426 = vsel %vm3222, %v4348, 0.0
    %v4427 = vadd.f32 %v4425, %v4426
    %v4428 = vsel %vm3222, %v4349, 0.0
    %v4429 = vadd.f32 %v4427, %v4428
    %v4430 = vsel %vm3222, %v4350, 0.0
    %v4431 = vadd.f32 %v4429, %v4430
    %v4432 = vsel %vm3222, %v4351, 0.0
    %v4433 = vadd.f32 %v4431, %v4432
    %v4434 = vsel %vm3222, %v4352, 0.0
    %v4435 = vadd.f32 %v4433, %v4434
    %v4436 = vsel %vm3222, %v4353, 0.0
    %v4437 = vadd.f32 %v4435, %v4436
    %v4438 = vsel %vm3222, %v4354, 0.0
    %v4439 = vadd.f32 %v4437, %v4438
    %v4440 = vsel %vm3222, %v4355, 0.0
    %v4441 = vadd.f32 %v4439, %v4440
    %v4442 = vsel %vm3222, %v4356, 0.0
    %v4443 = vadd.f32 %v4441, %v4442
    %v4444 = vsel %vm3222, %v4357, 0.0
    %v4445 = vadd.f32 %v4443, %v4444
    %v4446 = vsel %vm3222, %v4358, 0.0
    %v4447 = vadd.f32 %v4445, %v4446
    %v4448 = vsel %vm3222, %v4359, 0.0
    %v4449 = vadd.f32 %v4447, %v4448
    %v4450 = vsel %vm3222, %v4360, 0.0
    %v4451 = vadd.f32 %v4449, %v4450
    %v4452 = vsel %vm3222, %v4361, 0.0
    %v4453 = vadd.f32 %v4451, %v4452
    %v4454 = vsel %vm3222, %v4362, 0.0
    %v4455 = vadd.f32 %v4453, %v4454
    %v4456 = vsel %vm3222, %v4363, 0.0
    %v4457 = vadd.f32 %v4455, %v4456
    %v4458 = vsel %vm3222, %v4364, 0.0
    %v4459 = vadd.f32 %v4457, %v4458
    %v4460 = vsel %vm3222, %v4365, 0.0
    %v4461 = vadd.f32 %v4459, %v4460
    %v4462 = vsel %vm3222, %v4366, 0.0
    %v4463 = vadd.f32 %v4461, %v4462
    %v4464 = vsel %vm3222, %v4367, 0.0
    %v4465 = vadd.f32 %v4463, %v4464
    %v4466 = vsel %vm3222, %v4368, 0.0
    %v4467 = vadd.f32 %v4465, %v4466
    %v4468 = vsel %vm3222, %v4369, 0.0
    %v4469 = vadd.f32 %v4467, %v4468
    %v4470 = vsel %vm3222, %v4370, 0.0
    %v4471 = vadd.f32 %v4469, %v4470
    %v4472 = vsel %vm3222, %v4371, 0.0
    %v4473 = vadd.f32 %v4471, %v4472
    %v4474 = vsel %vm3222, %v4372, 0.0
    %v4475 = vadd.f32 %v4473, %v4474
    %v4476 = vsel %vm3222, %v4373, 0.0
    %v4477 = vadd.f32 %v4475, %v4476
    %v4478 = vsel %vm3222, %v4374, 0.0
    %v4479 = vadd.f32 %v4477, %v4478
    %v4480 = vsel %vm3222, %v4375, 0.0
    %v4481 = vadd.f32 %v4479, %v4480
    %v4482 = vsel %vm3222, %v4376, 0.0
    %v4483 = vadd.f32 %v4481, %v4482
    %v4484 = vsel %vm3222, %v4377, 0.0
    %v4485 = vadd.f32 %v4483, %v4484
    %v4486 = vsel %vm3222, %v4378, 0.0
    %v4487 = vadd.f32 %v4485, %v4486
    %v4488 = vsel %vm3222, %v4379, 0.0
    %v4489 = vadd.f32 %v4487, %v4488
    %v4490 = vsel %vm3222, %v4380, 0.0
    %v4491 = vadd.f32 %v4489, %v4490
    %v4492 = vsel %vm3222, %v4381, 0.0
    %v4493 = vadd.f32 %v4491, %v4492
    %v4494 = vsel %vm3222, %v4382, 0.0
    %v4495 = vadd.f32 %v4493, %v4494
    %v4496 = vsel %vm3222, %v4383, 0.0
    %v4497 = vadd.f32 %v4495, %v4496
    %v4498 = vsel %vm3222, %v4384, 0.0
    %v4499 = vadd.f32 %v4497, %v4498
    %v4500 = vsel %vm3222, %v4385, 0.0
    %v4501 = vadd.f32 %v4499, %v4500
    %v4502 = vsel %vm3222, %v4386, 0.0
    %v4503 = vadd.f32 %v4501, %v4502
    %v4504 = vsel %vm3222, %v4387, 0.0
    %v4505 = vadd.f32 %v4503, %v4504
    %v4506 = vsel %vm3222, %v4388, 0.0
    %v4507 = vadd.f32 %v4505, %v4506
    %v4508 = vsel %vm3222, %v4389, 0.0
    %v4509 = vadd.f32 %v4507, %v4508
    %v4510 = vsel %vm3222, %v4390, 0.0
    %v4511 = vadd.f32 %v4509, %v4510
    %v4512 = vsel %vm3222, %v4391, 0.0
    %v4513 = vadd.f32 %v4511, %v4512
    %v4514 = vsel %vm3222, %v4392, 0.0
    %v4515 = vadd.f32 %v4513, %v4514
    %v4516 = vsel %vm3222, %v4393, 0.0
    %v4517 = vadd.f32 %v4515, %v4516
    %v4518 = vsel %vm3222, %v4394, 0.0
    %v4519 = vadd.f32 %v4517, %v4518
    %v4520 = vsel %vm3222, %v4395, 0.0
    %v4521 = vadd.f32 %v4519, %v4520
    %v4522 = vsel %vm3222, %v4396, 0.0
    %v4523 = vadd.f32 %v4521, %v4522
    %v4524 = vrot.slane %v4523, 4
    %v4525 = vadd.f32 %v4523, %v4524
    %v4526 = vrot.slane %v4525, 2
    %v4527 = vadd.f32 %v4525, %v4526
    %v4528 = vrot.slane %v4527, 1
    %v4529 = vadd.f32 %v4527, %v4528
    %v4530 = vmul.f32 %v4529, %v4267
    %v4531 = vld [vmem:[#allocation10] sm:$0x1]
    %v4532 = vadd.f32 %v4530, 1e-05
    %v4533 = vrsqrt.pop %v4532
    %v4534 = vmul.f32 %v4531, %v4533
    %v4535 = vld [vmem:[#allocation11] sm:$0x1]
    %v4536 = vmul.f32 %v4268, %v4534
    %v4537 = vsub.f32 %v4535, %v4536
    %v4539 = vlaneseq
    %v4540 = vshrl.u32 %v4539, 7
    %v4541 = vsub.s32 0, %v4540
    %v4542 = vrot.slane %v4534, %v4541
    %v4544 = vmul.f32 %v3816, %v4542
    %v4545 = vmul.f32 %v3821, %v4542
    %v4546 = vmul.f32 %v3826, %v4542
    %v4547 = vmul.f32 %v3831, %v4542
    %v4548 = vmul.f32 %v3836, %v4542
    %v4549 = vmul.f32 %v3841, %v4542
    %v4550 = vmul.f32 %v3846, %v4542
    %v4551 = vmul.f32 %v3851, %v4542
    %v4552 = vmul.f32 %v3856, %v4542
    %v4553 = vmul.f32 %v3861, %v4542
    %v4554 = vmul.f32 %v3866, %v4542
    %v4555 = vmul.f32 %v3871, %v4542
    %v4556 = vmul.f32 %v3876, %v4542
    %v4557 = vmul.f32 %v3881, %v4542
    %v4558 = vmul.f32 %v3886, %v4542
    %v4559 = vmul.f32 %v3891, %v4542
    %v4560 = vmul.f32 %v3896, %v4542
    %v4561 = vmul.f32 %v3901, %v4542
    %v4562 = vmul.f32 %v3906, %v4542
    %v4563 = vmul.f32 %v3911, %v4542
    %v4564 = vmul.f32 %v3916, %v4542
    %v4565 = vmul.f32 %v3921, %v4542
    %v4566 = vmul.f32 %v3926, %v4542
    %v4567 = vmul.f32 %v3931, %v4542
    %v4568 = vmul.f32 %v3936, %v4542
    %v4569 = vmul.f32 %v3941, %v4542
    %v4570 = vmul.f32 %v3946, %v4542
    %v4571 = vmul.f32 %v3951, %v4542
    %v4572 = vmul.f32 %v3956, %v4542
    %v4573 = vmul.f32 %v3961, %v4542
    %v4574 = vmul.f32 %v3966, %v4542
    %v4575 = vmul.f32 %v3971, %v4542
    %v4576 = vmul.f32 %v3976, %v4542
    %v4577 = vmul.f32 %v3981, %v4542
    %v4578 = vmul.f32 %v3986, %v4542
    %v4579 = vmul.f32 %v3991, %v4542
    %v4580 = vmul.f32 %v3996, %v4542
    %v4581 = vmul.f32 %v4001, %v4542
    %v4582 = vmul.f32 %v4006, %v4542
    %v4583 = vmul.f32 %v4011, %v4542
    %v4584 = vmul.f32 %v4016, %v4542
    %v4585 = vmul.f32 %v4021, %v4542
    %v4586 = vmul.f32 %v4026, %v4542
    %v4587 = vmul.f32 %v4031, %v4542
    %v4588 = vmul.f32 %v4036, %v4542
    %v4589 = vmul.f32 %v4041, %v4542
    %v4590 = vmul.f32 %v4046, %v4542
    %v4591 = vmul.f32 %v4051, %v4542
    %v4592 = vmul.f32 %v4056, %v4542
    %v4593 = vmul.f32 %v4061, %v4542
    %v4594 = vmul.f32 %v4066, %v4542
    %v4595 = vmul.f32 %v4071, %v4542
    %v4596 = vmul.f32 %v4076, %v4542
    %v4597 = vmul.f32 %v4081, %v4542
    %v4598 = vmul.f32 %v4086, %v4542
    %v4599 = vmul.f32 %v4091, %v4542
    %v4600 = vmul.f32 %v4096, %v4542
    %v4601 = vmul.f32 %v4101, %v4542
    %v4602 = vmul.f32 %v4106, %v4542
    %v4603 = vmul.f32 %v4111, %v4542
    %v4604 = vmul.f32 %v4116, %v4542
    %v4605 = vmul.f32 %v4121, %v4542
    %v4606 = vmul.f32 %v4126, %v4542
    %v4607 = vmul.f32 %v4131, %v4542
    %v4609 = vlaneseq
    %v4610 = vshrl.u32 %v4609, 7
    %v4611 = vsub.s32 0, %v4610
    %v4612 = vrot.slane %v4537, %v4611
    %v4614 = vadd.f32 %v4544, %v4612
    %v4615 = vadd.f32 %v4545, %v4612
    %v4616 = vadd.f32 %v4546, %v4612
    %v4617 = vadd.f32 %v4547, %v4612
    %v4618 = vadd.f32 %v4548, %v4612
    %v4619 = vadd.f32 %v4549, %v4612
    %v4620 = vadd.f32 %v4550, %v4612
    %v4621 = vadd.f32 %v4551, %v4612
    %v4622 = vadd.f32 %v4552, %v4612
    %v4623 = vadd.f32 %v4553, %v4612
    %v4624 = vadd.f32 %v4554, %v4612
    %v4625 = vadd.f32 %v4555, %v4612
    %v4626 = vadd.f32 %v4556, %v4612
    %v4627 = vadd.f32 %v4557, %v4612
    %v4628 = vadd.f32 %v4558, %v4612
    %v4629 = vadd.f32 %v4559, %v4612
    %v4630 = vadd.f32 %v4560, %v4612
    %v4631 = vadd.f32 %v4561, %v4612
    %v4632 = vadd.f32 %v4562, %v4612
    %v4633 = vadd.f32 %v4563, %v4612
    %v4634 = vadd.f32 %v4564, %v4612
    %v4635 = vadd.f32 %v4565, %v4612
    %v4636 = vadd.f32 %v4566, %v4612
    %v4637 = vadd.f32 %v4567, %v4612
    %v4638 = vadd.f32 %v4568, %v4612
    %v4639 = vadd.f32 %v4569, %v4612
    %v4640 = vadd.f32 %v4570, %v4612
    %v4641 = vadd.f32 %v4571, %v4612
    %v4642 = vadd.f32 %v4572, %v4612
    %v4643 = vadd.f32 %v4573, %v4612
    %v4644 = vadd.f32 %v4574, %v4612
    %v4645 = vadd.f32 %v4575, %v4612
    %v4646 = vadd.f32 %v4576, %v4612
    %v4647 = vadd.f32 %v4577, %v4612
    %v4648 = vadd.f32 %v4578, %v4612
    %v4649 = vadd.f32 %v4579, %v4612
    %v4650 = vadd.f32 %v4580, %v4612
    %v4651 = vadd.f32 %v4581, %v4612
    %v4652 = vadd.f32 %v4582, %v4612
    %v4653 = vadd.f32 %v4583, %v4612
    %v4654 = vadd.f32 %v4584, %v4612
    %v4655 = vadd.f32 %v4585, %v4612
    %v4656 = vadd.f32 %v4586, %v4612
    %v4657 = vadd.f32 %v4587, %v4612
    %v4658 = vadd.f32 %v4588, %v4612
    %v4659 = vadd.f32 %v4589, %v4612
    %v4660 = vadd.f32 %v4590, %v4612
    %v4661 = vadd.f32 %v4591, %v4612
    %v4662 = vadd.f32 %v4592, %v4612
    %v4663 = vadd.f32 %v4593, %v4612
    %v4664 = vadd.f32 %v4594, %v4612
    %v4665 = vadd.f32 %v4595, %v4612
    %v4666 = vadd.f32 %v4596, %v4612
    %v4667 = vadd.f32 %v4597, %v4612
    %v4668 = vadd.f32 %v4598, %v4612
    %v4669 = vadd.f32 %v4599, %v4612
    %v4670 = vadd.f32 %v4600, %v4612
    %v4671 = vadd.f32 %v4601, %v4612
    %v4672 = vadd.f32 %v4602, %v4612
    %v4673 = vadd.f32 %v4603, %v4612
    %v4674 = vadd.f32 %v4604, %v4612
    %v4675 = vadd.f32 %v4605, %v4612
    %v4676 = vadd.f32 %v4606, %v4612
    %v4677 = vadd.f32 %v4607, %v4612
    %v4678 = vmax.f32 %v4614, 0.0
    %v4679 = vmax.f32 %v4615, 0.0
    %v4680 = vmax.f32 %v4616, 0.0
    %v4681 = vmax.f32 %v4617, 0.0
    %v4682 = vmax.f32 %v4618, 0.0
    %v4683 = vmax.f32 %v4619, 0.0
    %v4684 = vmax.f32 %v4620, 0.0
    %v4685 = vmax.f32 %v4621, 0.0
    %v4686 = vmax.f32 %v4622, 0.0
    %v4687 = vmax.f32 %v4623, 0.0
    %v4688 = vmax.f32 %v4624, 0.0
    %v4689 = vmax.f32 %v4625, 0.0
    %v4690 = vmax.f32 %v4626, 0.0
    %v4691 = vmax.f32 %v4627, 0.0
    %v4692 = vmax.f32 %v4628, 0.0
    %v4693 = vmax.f32 %v4629, 0.0
    %v4694 = vmax.f32 %v4630, 0.0
    %v4695 = vmax.f32 %v4631, 0.0
    %v4696 = vmax.f32 %v4632, 0.0
    %v4697 = vmax.f32 %v4633, 0.0
    %v4698 = vmax.f32 %v4634, 0.0
    %v4699 = vmax.f32 %v4635, 0.0
    %v4700 = vmax.f32 %v4636, 0.0
    %v4701 = vmax.f32 %v4637, 0.0
    %v4702 = vmax.f32 %v4638, 0.0
    %v4703 = vmax.f32 %v4639, 0.0
    %v4704 = vmax.f32 %v4640, 0.0
    %v4705 = vmax.f32 %v4641, 0.0
    %v4706 = vmax.f32 %v4642, 0.0
    %v4707 = vmax.f32 %v4643, 0.0
    %v4708 = vmax.f32 %v4644, 0.0
    %v4709 = vmax.f32 %v4645, 0.0
    %v4710 = vmax.f32 %v4646, 0.0
    %v4711 = vmax.f32 %v4647, 0.0
    %v4712 = vmax.f32 %v4648, 0.0
    %v4713 = vmax.f32 %v4649, 0.0
    %v4714 = vmax.f32 %v4650, 0.0
    %v4715 = vmax.f32 %v4651, 0.0
    %v4716 = vmax.f32 %v4652, 0.0
    %v4717 = vmax.f32 %v4653, 0.0
    %v4718 = vmax.f32 %v4654, 0.0
    %v4719 = vmax.f32 %v4655, 0.0
    %v4720 = vmax.f32 %v4656, 0.0
    %v4721 = vmax.f32 %v4657, 0.0
    %v4722 = vmax.f32 %v4658, 0.0
    %v4723 = vmax.f32 %v4659, 0.0
    %v4724 = vmax.f32 %v4660, 0.0
    %v4725 = vmax.f32 %v4661, 0.0
    %v4726 = vmax.f32 %v4662, 0.0
    %v4727 = vmax.f32 %v4663, 0.0
    %v4728 = vmax.f32 %v4664, 0.0
    %v4729 = vmax.f32 %v4665, 0.0
    %v4730 = vmax.f32 %v4666, 0.0
    %v4731 = vmax.f32 %v4667, 0.0
    %v4732 = vmax.f32 %v4668, 0.0
    %v4733 = vmax.f32 %v4669, 0.0
    %v4734 = vmax.f32 %v4670, 0.0
    %v4735 = vmax.f32 %v4671, 0.0
    %v4736 = vmax.f32 %v4672, 0.0
    %v4737 = vmax.f32 %v4673, 0.0
    %v4738 = vmax.f32 %v4674, 0.0
    %v4739 = vmax.f32 %v4675, 0.0
    %v4740 = vmax.f32 %v4676, 0.0
    %v4741 = vmax.f32 %v4677, 0.0
    %v4806 = vcombine.high %v4678, %v4678
    %v4808 = vunpack.c.l.s4 1983009808
    %v4809 = vunpack.c.0.s8 %v4808
    %v4810 = vlaneseq
    %v4811 = vshrl.u32 %v4810, 7
    %v4812 = vsub.s32 %v4809, %v4811
    %v4813 = vrot.slane %v4678, %v4812
    %v4815 = vunpack.c.l.s4 1983009808
    %v4816 = vunpack.c.0.s8 %v4815
    %v4817 = vlaneseq
    %v4818 = vshrl.u32 %v4817, 7
    %v4819 = vsub.s32 %v4816, %v4818
    %v4820 = vrot.slane %v4806, %v4819
    %v4821 = vcombine.high %v4813, %v4813
    %v4822 = vcombine.high %v4820, %v4820
    %v4823 = vcombine.high %v4679, %v4679
    %v4825 = vunpack.c.l.s4 1983009808
    %v4826 = vunpack.c.0.s8 %v4825
    %v4827 = vlaneseq
    %v4828 = vshrl.u32 %v4827, 7
    %v4829 = vsub.s32 %v4826, %v4828
    %v4830 = vrot.slane %v4679, %v4829
    %v4832 = vunpack.c.l.s4 1983009808
    %v4833 = vunpack.c.0.s8 %v4832
    %v4834 = vlaneseq
    %v4835 = vshrl.u32 %v4834, 7
    %v4836 = vsub.s32 %v4833, %v4835
    %v4837 = vrot.slane %v4823, %v4836
    %v4838 = vcombine.high %v4830, %v4830
    %v4839 = vcombine.high %v4837, %v4837
    %v4840 = vcombine.high %v4680, %v4680
    %v4842 = vunpack.c.l.s4 1983009808
    %v4843 = vunpack.c.0.s8 %v4842
    %v4844 = vlaneseq
    %v4845 = vshrl.u32 %v4844, 7
    %v4846 = vsub.s32 %v4843, %v4845
    %v4847 = vrot.slane %v4680, %v4846
    %v4849 = vunpack.c.l.s4 1983009808
    %v4850 = vunpack.c.0.s8 %v4849
    %v4851 = vlaneseq
    %v4852 = vshrl.u32 %v4851, 7
    %v4853 = vsub.s32 %v4850, %v4852
    %v4854 = vrot.slane %v4840, %v4853
    %v4855 = vcombine.high %v4847, %v4847
    %v4856 = vcombine.high %v4854, %v4854
    %v4857 = vcombine.high %v4681, %v4681
    %v4859 = vunpack.c.l.s4 1983009808
    %v4860 = vunpack.c.0.s8 %v4859
    %v4861 = vlaneseq
    %v4862 = vshrl.u32 %v4861, 7
    %v4863 = vsub.s32 %v4860, %v4862
    %v4864 = vrot.slane %v4681, %v4863
    %v4866 = vunpack.c.l.s4 1983009808
    %v4867 = vunpack.c.0.s8 %v4866
    %v4868 = vlaneseq
    %v4869 = vshrl.u32 %v4868, 7
    %v4870 = vsub.s32 %v4867, %v4869
    %v4871 = vrot.slane %v4857, %v4870
    %v4872 = vcombine.high %v4864, %v4864
    %v4873 = vcombine.high %v4871, %v4871
    %v4874 = vcombine.high %v4682, %v4682
    %v4876 = vunpack.c.l.s4 1983009808
    %v4877 = vunpack.c.0.s8 %v4876
    %v4878 = vlaneseq
    %v4879 = vshrl.u32 %v4878, 7
    %v4880 = vsub.s32 %v4877, %v4879
    %v4881 = vrot.slane %v4682, %v4880
    %v4883 = vunpack.c.l.s4 1983009808
    %v4884 = vunpack.c.0.s8 %v4883
    %v4885 = vlaneseq
    %v4886 = vshrl.u32 %v4885, 7
    %v4887 = vsub.s32 %v4884, %v4886
    %v4888 = vrot.slane %v4874, %v4887
    %v4889 = vcombine.high %v4881, %v4881
    %v4890 = vcombine.high %v4888, %v4888
    %v4891 = vcombine.high %v4683, %v4683
    %v4893 = vunpack.c.l.s4 1983009808
    %v4894 = vunpack.c.0.s8 %v4893
    %v4895 = vlaneseq
    %v4896 = vshrl.u32 %v4895, 7
    %v4897 = vsub.s32 %v4894, %v4896
    %v4898 = vrot.slane %v4683, %v4897
    %v4900 = vunpack.c.l.s4 1983009808
    %v4901 = vunpack.c.0.s8 %v4900
    %v4902 = vlaneseq
    %v4903 = vshrl.u32 %v4902, 7
    %v4904 = vsub.s32 %v4901, %v4903
    %v4905 = vrot.slane %v4891, %v4904
    %v4906 = vcombine.high %v4898, %v4898
    %v4907 = vcombine.high %v4905, %v4905
    %v4908 = vcombine.high %v4684, %v4684
    %v4910 = vunpack.c.l.s4 1983009808
    %v4911 = vunpack.c.0.s8 %v4910
    %v4912 = vlaneseq
    %v4913 = vshrl.u32 %v4912, 7
    %v4914 = vsub.s32 %v4911, %v4913
    %v4915 = vrot.slane %v4684, %v4914
    %v4917 = vunpack.c.l.s4 1983009808
    %v4918 = vunpack.c.0.s8 %v4917
    %v4919 = vlaneseq
    %v4920 = vshrl.u32 %v4919, 7
    %v4921 = vsub.s32 %v4918, %v4920
    %v4922 = vrot.slane %v4908, %v4921
    %v4923 = vcombine.high %v4915, %v4915
    %v4924 = vcombine.high %v4922, %v4922
    %v4925 = vcombine.high %v4685, %v4685
    %v4927 = vunpack.c.l.s4 1983009808
    %v4928 = vunpack.c.0.s8 %v4927
    %v4929 = vlaneseq
    %v4930 = vshrl.u32 %v4929, 7
    %v4931 = vsub.s32 %v4928, %v4930
    %v4932 = vrot.slane %v4685, %v4931
    %v4934 = vunpack.c.l.s4 1983009808
    %v4935 = vunpack.c.0.s8 %v4934
    %v4936 = vlaneseq
    %v4937 = vshrl.u32 %v4936, 7
    %v4938 = vsub.s32 %v4935, %v4937
    %v4939 = vrot.slane %v4925, %v4938
    %v4940 = vcombine.high %v4932, %v4932
    %v4941 = vcombine.high %v4939, %v4939
    %v4942 = vcombine.high %v4686, %v4686
    %v4944 = vunpack.c.l.s4 1983009808
    %v4945 = vunpack.c.0.s8 %v4944
    %v4946 = vlaneseq
    %v4947 = vshrl.u32 %v4946, 7
    %v4948 = vsub.s32 %v4945, %v4947
    %v4949 = vrot.slane %v4686, %v4948
    %v4951 = vunpack.c.l.s4 1983009808
    %v4952 = vunpack.c.0.s8 %v4951
    %v4953 = vlaneseq
    %v4954 = vshrl.u32 %v4953, 7
    %v4955 = vsub.s32 %v4952, %v4954
    %v4956 = vrot.slane %v4942, %v4955
    %v4957 = vcombine.high %v4949, %v4949
    %v4958 = vcombine.high %v4956, %v4956
    %v4959 = vcombine.high %v4687, %v4687
    %v4961 = vunpack.c.l.s4 1983009808
    %v4962 = vunpack.c.0.s8 %v4961
    %v4963 = vlaneseq
    %v4964 = vshrl.u32 %v4963, 7
    %v4965 = vsub.s32 %v4962, %v4964
    %v4966 = vrot.slane %v4687, %v4965
    %v4968 = vunpack.c.l.s4 1983009808
    %v4969 = vunpack.c.0.s8 %v4968
    %v4970 = vlaneseq
    %v4971 = vshrl.u32 %v4970, 7
    %v4972 = vsub.s32 %v4969, %v4971
    %v4973 = vrot.slane %v4959, %v4972
    %v4974 = vcombine.high %v4966, %v4966
    %v4975 = vcombine.high %v4973, %v4973
    %v4976 = vcombine.high %v4688, %v4688
    %v4978 = vunpack.c.l.s4 1983009808
    %v4979 = vunpack.c.0.s8 %v4978
    %v4980 = vlaneseq
    %v4981 = vshrl.u32 %v4980, 7
    %v4982 = vsub.s32 %v4979, %v4981
    %v4983 = vrot.slane %v4688, %v4982
    %v4985 = vunpack.c.l.s4 1983009808
    %v4986 = vunpack.c.0.s8 %v4985
    %v4987 = vlaneseq
    %v4988 = vshrl.u32 %v4987, 7
    %v4989 = vsub.s32 %v4986, %v4988
    %v4990 = vrot.slane %v4976, %v4989
    %v4991 = vcombine.high %v4983, %v4983
    %v4992 = vcombine.high %v4990, %v4990
    %v4993 = vcombine.high %v4689, %v4689
    %v4995 = vunpack.c.l.s4 1983009808
    %v4996 = vunpack.c.0.s8 %v4995
    %v4997 = vlaneseq
    %v4998 = vshrl.u32 %v4997, 7
    %v4999 = vsub.s32 %v4996, %v4998
    %v5000 = vrot.slane %v4689, %v4999
    %v5002 = vunpack.c.l.s4 1983009808
    %v5003 = vunpack.c.0.s8 %v5002
    %v5004 = vlaneseq
    %v5005 = vshrl.u32 %v5004, 7
    %v5006 = vsub.s32 %v5003, %v5005
    %v5007 = vrot.slane %v4993, %v5006
    %v5008 = vcombine.high %v5000, %v5000
    %v5009 = vcombine.high %v5007, %v5007
    %v5010 = vcombine.high %v4690, %v4690
    %v5012 = vunpack.c.l.s4 1983009808
    %v5013 = vunpack.c.0.s8 %v5012
    %v5014 = vlaneseq
    %v5015 = vshrl.u32 %v5014, 7
    %v5016 = vsub.s32 %v5013, %v5015
    %v5017 = vrot.slane %v4690, %v5016
    %v5019 = vunpack.c.l.s4 1983009808
    %v5020 = vunpack.c.0.s8 %v5019
    %v5021 = vlaneseq
    %v5022 = vshrl.u32 %v5021, 7
    %v5023 = vsub.s32 %v5020, %v5022
    %v5024 = vrot.slane %v5010, %v5023
    %v5025 = vcombine.high %v5017, %v5017
    %v5026 = vcombine.high %v5024, %v5024
    %v5027 = vcombine.high %v4691, %v4691
    %v5029 = vunpack.c.l.s4 1983009808
    %v5030 = vunpack.c.0.s8 %v5029
    %v5031 = vlaneseq
    %v5032 = vshrl.u32 %v5031, 7
    %v5033 = vsub.s32 %v5030, %v5032
    %v5034 = vrot.slane %v4691, %v5033
    %v5036 = vunpack.c.l.s4 1983009808
    %v5037 = vunpack.c.0.s8 %v5036
    %v5038 = vlaneseq
    %v5039 = vshrl.u32 %v5038, 7
    %v5040 = vsub.s32 %v5037, %v5039
    %v5041 = vrot.slane %v5027, %v5040
    %v5042 = vcombine.high %v5034, %v5034
    %v5043 = vcombine.high %v5041, %v5041
    %v5044 = vcombine.high %v4692, %v4692
    %v5046 = vunpack.c.l.s4 1983009808
    %v5047 = vunpack.c.0.s8 %v5046
    %v5048 = vlaneseq
    %v5049 = vshrl.u32 %v5048, 7
    %v5050 = vsub.s32 %v5047, %v5049
    %v5051 = vrot.slane %v4692, %v5050
    %v5053 = vunpack.c.l.s4 1983009808
    %v5054 = vunpack.c.0.s8 %v5053
    %v5055 = vlaneseq
    %v5056 = vshrl.u32 %v5055, 7
    %v5057 = vsub.s32 %v5054, %v5056
    %v5058 = vrot.slane %v5044, %v5057
    %v5059 = vcombine.high %v5051, %v5051
    %v5060 = vcombine.high %v5058, %v5058
    %v5061 = vcombine.high %v4693, %v4693
    %v5063 = vunpack.c.l.s4 1983009808
    %v5064 = vunpack.c.0.s8 %v5063
    %v5065 = vlaneseq
    %v5066 = vshrl.u32 %v5065, 7
    %v5067 = vsub.s32 %v5064, %v5066
    %v5068 = vrot.slane %v4693, %v5067
    %v5070 = vunpack.c.l.s4 1983009808
    %v5071 = vunpack.c.0.s8 %v5070
    %v5072 = vlaneseq
    %v5073 = vshrl.u32 %v5072, 7
    %v5074 = vsub.s32 %v5071, %v5073
    %v5075 = vrot.slane %v5061, %v5074
    %v5076 = vcombine.high %v5068, %v5068
    %v5077 = vcombine.high %v5075, %v5075
    %v5078 = vcombine.high %v4694, %v4694
    %v5080 = vunpack.c.l.s4 1983009808
    %v5081 = vunpack.c.0.s8 %v5080
    %v5082 = vlaneseq
    %v5083 = vshrl.u32 %v5082, 7
    %v5084 = vsub.s32 %v5081, %v5083
    %v5085 = vrot.slane %v4694, %v5084
    %v5087 = vunpack.c.l.s4 1983009808
    %v5088 = vunpack.c.0.s8 %v5087
    %v5089 = vlaneseq
    %v5090 = vshrl.u32 %v5089, 7
    %v5091 = vsub.s32 %v5088, %v5090
    %v5092 = vrot.slane %v5078, %v5091
    %v5093 = vcombine.high %v5085, %v5085
    %v5094 = vcombine.high %v5092, %v5092
    %v5095 = vcombine.high %v4695, %v4695
    %v5097 = vunpack.c.l.s4 1983009808
    %v5098 = vunpack.c.0.s8 %v5097
    %v5099 = vlaneseq
    %v5100 = vshrl.u32 %v5099, 7
    %v5101 = vsub.s32 %v5098, %v5100
    %v5102 = vrot.slane %v4695, %v5101
    %v5104 = vunpack.c.l.s4 1983009808
    %v5105 = vunpack.c.0.s8 %v5104
    %v5106 = vlaneseq
    %v5107 = vshrl.u32 %v5106, 7
    %v5108 = vsub.s32 %v5105, %v5107
    %v5109 = vrot.slane %v5095, %v5108
    %v5110 = vcombine.high %v5102, %v5102
    %v5111 = vcombine.high %v5109, %v5109
    %v5112 = vcombine.high %v4696, %v4696
    %v5114 = vunpack.c.l.s4 1983009808
    %v5115 = vunpack.c.0.s8 %v5114
    %v5116 = vlaneseq
    %v5117 = vshrl.u32 %v5116, 7
    %v5118 = vsub.s32 %v5115, %v5117
    %v5119 = vrot.slane %v4696, %v5118
    %v5121 = vunpack.c.l.s4 1983009808
    %v5122 = vunpack.c.0.s8 %v5121
    %v5123 = vlaneseq
    %v5124 = vshrl.u32 %v5123, 7
    %v5125 = vsub.s32 %v5122, %v5124
    %v5126 = vrot.slane %v5112, %v5125
    %v5127 = vcombine.high %v5119, %v5119
    %v5128 = vcombine.high %v5126, %v5126
    %v5129 = vcombine.high %v4697, %v4697
    %v5131 = vunpack.c.l.s4 1983009808
    %v5132 = vunpack.c.0.s8 %v5131
    %v5133 = vlaneseq
    %v5134 = vshrl.u32 %v5133, 7
    %v5135 = vsub.s32 %v5132, %v5134
    %v5136 = vrot.slane %v4697, %v5135
    %v5138 = vunpack.c.l.s4 1983009808
    %v5139 = vunpack.c.0.s8 %v5138
    %v5140 = vlaneseq
    %v5141 = vshrl.u32 %v5140, 7
    %v5142 = vsub.s32 %v5139, %v5141
    %v5143 = vrot.slane %v5129, %v5142
    %v5144 = vcombine.high %v5136, %v5136
    %v5145 = vcombine.high %v5143, %v5143
    %v5146 = vcombine.high %v4698, %v4698
    %v5148 = vunpack.c.l.s4 1983009808
    %v5149 = vunpack.c.0.s8 %v5148
    %v5150 = vlaneseq
    %v5151 = vshrl.u32 %v5150, 7
    %v5152 = vsub.s32 %v5149, %v5151
    %v5153 = vrot.slane %v4698, %v5152
    %v5155 = vunpack.c.l.s4 1983009808
    %v5156 = vunpack.c.0.s8 %v5155
    %v5157 = vlaneseq
    %v5158 = vshrl.u32 %v5157, 7
    %v5159 = vsub.s32 %v5156, %v5158
    %v5160 = vrot.slane %v5146, %v5159
    %v5161 = vcombine.high %v5153, %v5153
    %v5162 = vcombine.high %v5160, %v5160
    %v5163 = vcombine.high %v4699, %v4699
    %v5165 = vunpack.c.l.s4 1983009808
    %v5166 = vunpack.c.0.s8 %v5165
    %v5167 = vlaneseq
    %v5168 = vshrl.u32 %v5167, 7
    %v5169 = vsub.s32 %v5166, %v5168
    %v5170 = vrot.slane %v4699, %v5169
    %v5172 = vunpack.c.l.s4 1983009808
    %v5173 = vunpack.c.0.s8 %v5172
    %v5174 = vlaneseq
    %v5175 = vshrl.u32 %v5174, 7
    %v5176 = vsub.s32 %v5173, %v5175
    %v5177 = vrot.slane %v5163, %v5176
    %v5178 = vcombine.high %v5170, %v5170
    %v5179 = vcombine.high %v5177, %v5177
    %v5180 = vcombine.high %v4700, %v4700
    %v5182 = vunpack.c.l.s4 1983009808
    %v5183 = vunpack.c.0.s8 %v5182
    %v5184 = vlaneseq
    %v5185 = vshrl.u32 %v5184, 7
    %v5186 = vsub.s32 %v5183, %v5185
    %v5187 = vrot.slane %v4700, %v5186
    %v5189 = vunpack.c.l.s4 1983009808
    %v5190 = vunpack.c.0.s8 %v5189
    %v5191 = vlaneseq
    %v5192 = vshrl.u32 %v5191, 7
    %v5193 = vsub.s32 %v5190, %v5192
    %v5194 = vrot.slane %v5180, %v5193
    %v5195 = vcombine.high %v5187, %v5187
    %v5196 = vcombine.high %v5194, %v5194
    %v5197 = vcombine.high %v4701, %v4701
    %v5199 = vunpack.c.l.s4 1983009808
    %v5200 = vunpack.c.0.s8 %v5199
    %v5201 = vlaneseq
    %v5202 = vshrl.u32 %v5201, 7
    %v5203 = vsub.s32 %v5200, %v5202
    %v5204 = vrot.slane %v4701, %v5203
    %v5206 = vunpack.c.l.s4 1983009808
    %v5207 = vunpack.c.0.s8 %v5206
    %v5208 = vlaneseq
    %v5209 = vshrl.u32 %v5208, 7
    %v5210 = vsub.s32 %v5207, %v5209
    %v5211 = vrot.slane %v5197, %v5210
    %v5212 = vcombine.high %v5204, %v5204
    %v5213 = vcombine.high %v5211, %v5211
    %v5214 = vcombine.high %v4702, %v4702
    %v5216 = vunpack.c.l.s4 1983009808
    %v5217 = vunpack.c.0.s8 %v5216
    %v5218 = vlaneseq
    %v5219 = vshrl.u32 %v5218, 7
    %v5220 = vsub.s32 %v5217, %v5219
    %v5221 = vrot.slane %v4702, %v5220
    %v5223 = vunpack.c.l.s4 1983009808
    %v5224 = vunpack.c.0.s8 %v5223
    %v5225 = vlaneseq
    %v5226 = vshrl.u32 %v5225, 7
    %v5227 = vsub.s32 %v5224, %v5226
    %v5228 = vrot.slane %v5214, %v5227
    %v5229 = vcombine.high %v5221, %v5221
    %v5230 = vcombine.high %v5228, %v5228
    %v5231 = vcombine.high %v4703, %v4703
    %v5233 = vunpack.c.l.s4 1983009808
    %v5234 = vunpack.c.0.s8 %v5233
    %v5235 = vlaneseq
    %v5236 = vshrl.u32 %v5235, 7
    %v5237 = vsub.s32 %v5234, %v5236
    %v5238 = vrot.slane %v4703, %v5237
    %v5240 = vunpack.c.l.s4 1983009808
    %v5241 = vunpack.c.0.s8 %v5240
    %v5242 = vlaneseq
    %v5243 = vshrl.u32 %v5242, 7
    %v5244 = vsub.s32 %v5241, %v5243
    %v5245 = vrot.slane %v5231, %v5244
    %v5246 = vcombine.high %v5238, %v5238
    %v5247 = vcombine.high %v5245, %v5245
    %v5248 = vcombine.high %v4704, %v4704
    %v5250 = vunpack.c.l.s4 1983009808
    %v5251 = vunpack.c.0.s8 %v5250
    %v5252 = vlaneseq
    %v5253 = vshrl.u32 %v5252, 7
    %v5254 = vsub.s32 %v5251, %v5253
    %v5255 = vrot.slane %v4704, %v5254
    %v5257 = vunpack.c.l.s4 1983009808
    %v5258 = vunpack.c.0.s8 %v5257
    %v5259 = vlaneseq
    %v5260 = vshrl.u32 %v5259, 7
    %v5261 = vsub.s32 %v5258, %v5260
    %v5262 = vrot.slane %v5248, %v5261
    %v5263 = vcombine.high %v5255, %v5255
    %v5264 = vcombine.high %v5262, %v5262
    %v5265 = vcombine.high %v4705, %v4705
    %v5267 = vunpack.c.l.s4 1983009808
    %v5268 = vunpack.c.0.s8 %v5267
    %v5269 = vlaneseq
    %v5270 = vshrl.u32 %v5269, 7
    %v5271 = vsub.s32 %v5268, %v5270
    %v5272 = vrot.slane %v4705, %v5271
    %v5274 = vunpack.c.l.s4 1983009808
    %v5275 = vunpack.c.0.s8 %v5274
    %v5276 = vlaneseq
    %v5277 = vshrl.u32 %v5276, 7
    %v5278 = vsub.s32 %v5275, %v5277
    %v5279 = vrot.slane %v5265, %v5278
    %v5280 = vcombine.high %v5272, %v5272
    %v5281 = vcombine.high %v5279, %v5279
    %v5282 = vcombine.high %v4706, %v4706
    %v5284 = vunpack.c.l.s4 1983009808
    %v5285 = vunpack.c.0.s8 %v5284
    %v5286 = vlaneseq
    %v5287 = vshrl.u32 %v5286, 7
    %v5288 = vsub.s32 %v5285, %v5287
    %v5289 = vrot.slane %v4706, %v5288
    %v5291 = vunpack.c.l.s4 1983009808
    %v5292 = vunpack.c.0.s8 %v5291
    %v5293 = vlaneseq
    %v5294 = vshrl.u32 %v5293, 7
    %v5295 = vsub.s32 %v5292, %v5294
    %v5296 = vrot.slane %v5282, %v5295
    %v5297 = vcombine.high %v5289, %v5289
    %v5298 = vcombine.high %v5296, %v5296
    %v5299 = vcombine.high %v4707, %v4707
    %v5301 = vunpack.c.l.s4 1983009808
    %v5302 = vunpack.c.0.s8 %v5301
    %v5303 = vlaneseq
    %v5304 = vshrl.u32 %v5303, 7
    %v5305 = vsub.s32 %v5302, %v5304
    %v5306 = vrot.slane %v4707, %v5305
    %v5308 = vunpack.c.l.s4 1983009808
    %v5309 = vunpack.c.0.s8 %v5308
    %v5310 = vlaneseq
    %v5311 = vshrl.u32 %v5310, 7
    %v5312 = vsub.s32 %v5309, %v5311
    %v5313 = vrot.slane %v5299, %v5312
    %v5314 = vcombine.high %v5306, %v5306
    %v5315 = vcombine.high %v5313, %v5313
    %v5316 = vcombine.high %v4708, %v4708
    %v5318 = vunpack.c.l.s4 1983009808
    %v5319 = vunpack.c.0.s8 %v5318
    %v5320 = vlaneseq
    %v5321 = vshrl.u32 %v5320, 7
    %v5322 = vsub.s32 %v5319, %v5321
    %v5323 = vrot.slane %v4708, %v5322
    %v5325 = vunpack.c.l.s4 1983009808
    %v5326 = vunpack.c.0.s8 %v5325
    %v5327 = vlaneseq
    %v5328 = vshrl.u32 %v5327, 7
    %v5329 = vsub.s32 %v5326, %v5328
    %v5330 = vrot.slane %v5316, %v5329
    %v5331 = vcombine.high %v5323, %v5323
    %v5332 = vcombine.high %v5330, %v5330
    %v5333 = vcombine.high %v4709, %v4709
    %v5335 = vunpack.c.l.s4 1983009808
    %v5336 = vunpack.c.0.s8 %v5335
    %v5337 = vlaneseq
    %v5338 = vshrl.u32 %v5337, 7
    %v5339 = vsub.s32 %v5336, %v5338
    %v5340 = vrot.slane %v4709, %v5339
    %v5342 = vunpack.c.l.s4 1983009808
    %v5343 = vunpack.c.0.s8 %v5342
    %v5344 = vlaneseq
    %v5345 = vshrl.u32 %v5344, 7
    %v5346 = vsub.s32 %v5343, %v5345
    %v5347 = vrot.slane %v5333, %v5346
    %v5348 = vcombine.high %v5340, %v5340
    %v5349 = vcombine.high %v5347, %v5347
    %v5350 = vcombine.high %v4710, %v4710
    %v5352 = vunpack.c.l.s4 1983009808
    %v5353 = vunpack.c.0.s8 %v5352
    %v5354 = vlaneseq
    %v5355 = vshrl.u32 %v5354, 7
    %v5356 = vsub.s32 %v5353, %v5355
    %v5357 = vrot.slane %v4710, %v5356
    %v5359 = vunpack.c.l.s4 1983009808
    %v5360 = vunpack.c.0.s8 %v5359
    %v5361 = vlaneseq
    %v5362 = vshrl.u32 %v5361, 7
    %v5363 = vsub.s32 %v5360, %v5362
    %v5364 = vrot.slane %v5350, %v5363
    %v5365 = vcombine.high %v5357, %v5357
    %v5366 = vcombine.high %v5364, %v5364
    %v5367 = vcombine.high %v4711, %v4711
    %v5369 = vunpack.c.l.s4 1983009808
    %v5370 = vunpack.c.0.s8 %v5369
    %v5371 = vlaneseq
    %v5372 = vshrl.u32 %v5371, 7
    %v5373 = vsub.s32 %v5370, %v5372
    %v5374 = vrot.slane %v4711, %v5373
    %v5376 = vunpack.c.l.s4 1983009808
    %v5377 = vunpack.c.0.s8 %v5376
    %v5378 = vlaneseq
    %v5379 = vshrl.u32 %v5378, 7
    %v5380 = vsub.s32 %v5377, %v5379
    %v5381 = vrot.slane %v5367, %v5380
    %v5382 = vcombine.high %v5374, %v5374
    %v5383 = vcombine.high %v5381, %v5381
    %v5384 = vcombine.high %v4712, %v4712
    %v5386 = vunpack.c.l.s4 1983009808
    %v5387 = vunpack.c.0.s8 %v5386
    %v5388 = vlaneseq
    %v5389 = vshrl.u32 %v5388, 7
    %v5390 = vsub.s32 %v5387, %v5389
    %v5391 = vrot.slane %v4712, %v5390
    %v5393 = vunpack.c.l.s4 1983009808
    %v5394 = vunpack.c.0.s8 %v5393
    %v5395 = vlaneseq
    %v5396 = vshrl.u32 %v5395, 7
    %v5397 = vsub.s32 %v5394, %v5396
    %v5398 = vrot.slane %v5384, %v5397
    %v5399 = vcombine.high %v5391, %v5391
    %v5400 = vcombine.high %v5398, %v5398
    %v5401 = vcombine.high %v4713, %v4713
    %v5403 = vunpack.c.l.s4 1983009808
    %v5404 = vunpack.c.0.s8 %v5403
    %v5405 = vlaneseq
    %v5406 = vshrl.u32 %v5405, 7
    %v5407 = vsub.s32 %v5404, %v5406
    %v5408 = vrot.slane %v4713, %v5407
    %v5410 = vunpack.c.l.s4 1983009808
    %v5411 = vunpack.c.0.s8 %v5410
    %v5412 = vlaneseq
    %v5413 = vshrl.u32 %v5412, 7
    %v5414 = vsub.s32 %v5411, %v5413
    %v5415 = vrot.slane %v5401, %v5414
    %v5416 = vcombine.high %v5408, %v5408
    %v5417 = vcombine.high %v5415, %v5415
    %v5418 = vcombine.high %v4714, %v4714
    %v5420 = vunpack.c.l.s4 1983009808
    %v5421 = vunpack.c.0.s8 %v5420
    %v5422 = vlaneseq
    %v5423 = vshrl.u32 %v5422, 7
    %v5424 = vsub.s32 %v5421, %v5423
    %v5425 = vrot.slane %v4714, %v5424
    %v5427 = vunpack.c.l.s4 1983009808
    %v5428 = vunpack.c.0.s8 %v5427
    %v5429 = vlaneseq
    %v5430 = vshrl.u32 %v5429, 7
    %v5431 = vsub.s32 %v5428, %v5430
    %v5432 = vrot.slane %v5418, %v5431
    %v5433 = vcombine.high %v5425, %v5425
    %v5434 = vcombine.high %v5432, %v5432
    %v5435 = vcombine.high %v4715, %v4715
    %v5437 = vunpack.c.l.s4 1983009808
    %v5438 = vunpack.c.0.s8 %v5437
    %v5439 = vlaneseq
    %v5440 = vshrl.u32 %v5439, 7
    %v5441 = vsub.s32 %v5438, %v5440
    %v5442 = vrot.slane %v4715, %v5441
    %v5444 = vunpack.c.l.s4 1983009808
    %v5445 = vunpack.c.0.s8 %v5444
    %v5446 = vlaneseq
    %v5447 = vshrl.u32 %v5446, 7
    %v5448 = vsub.s32 %v5445, %v5447
    %v5449 = vrot.slane %v5435, %v5448
    %v5450 = vcombine.high %v5442, %v5442
    %v5451 = vcombine.high %v5449, %v5449
    %v5452 = vcombine.high %v4716, %v4716
    %v5454 = vunpack.c.l.s4 1983009808
    %v5455 = vunpack.c.0.s8 %v5454
    %v5456 = vlaneseq
    %v5457 = vshrl.u32 %v5456, 7
    %v5458 = vsub.s32 %v5455, %v5457
    %v5459 = vrot.slane %v4716, %v5458
    %v5461 = vunpack.c.l.s4 1983009808
    %v5462 = vunpack.c.0.s8 %v5461
    %v5463 = vlaneseq
    %v5464 = vshrl.u32 %v5463, 7
    %v5465 = vsub.s32 %v5462, %v5464
    %v5466 = vrot.slane %v5452, %v5465
    %v5467 = vcombine.high %v5459, %v5459
    %v5468 = vcombine.high %v5466, %v5466
    %v5469 = vcombine.high %v4717, %v4717
    %v5471 = vunpack.c.l.s4 1983009808
    %v5472 = vunpack.c.0.s8 %v5471
    %v5473 = vlaneseq
    %v5474 = vshrl.u32 %v5473, 7
    %v5475 = vsub.s32 %v5472, %v5474
    %v5476 = vrot.slane %v4717, %v5475
    %v5478 = vunpack.c.l.s4 1983009808
    %v5479 = vunpack.c.0.s8 %v5478
    %v5480 = vlaneseq
    %v5481 = vshrl.u32 %v5480, 7
    %v5482 = vsub.s32 %v5479, %v5481
    %v5483 = vrot.slane %v5469, %v5482
    %v5484 = vcombine.high %v5476, %v5476
    %v5485 = vcombine.high %v5483, %v5483
    %v5486 = vcombine.high %v4718, %v4718
    %v5488 = vunpack.c.l.s4 1983009808
    %v5489 = vunpack.c.0.s8 %v5488
    %v5490 = vlaneseq
    %v5491 = vshrl.u32 %v5490, 7
    %v5492 = vsub.s32 %v5489, %v5491
    %v5493 = vrot.slane %v4718, %v5492
    %v5495 = vunpack.c.l.s4 1983009808
    %v5496 = vunpack.c.0.s8 %v5495
    %v5497 = vlaneseq
    %v5498 = vshrl.u32 %v5497, 7
    %v5499 = vsub.s32 %v5496, %v5498
    %v5500 = vrot.slane %v5486, %v5499
    %v5501 = vcombine.high %v5493, %v5493
    %v5502 = vcombine.high %v5500, %v5500
    %v5503 = vcombine.high %v4719, %v4719
    %v5505 = vunpack.c.l.s4 1983009808
    %v5506 = vunpack.c.0.s8 %v5505
    %v5507 = vlaneseq
    %v5508 = vshrl.u32 %v5507, 7
    %v5509 = vsub.s32 %v5506, %v5508
    %v5510 = vrot.slane %v4719, %v5509
    %v5512 = vunpack.c.l.s4 1983009808
    %v5513 = vunpack.c.0.s8 %v5512
    %v5514 = vlaneseq
    %v5515 = vshrl.u32 %v5514, 7
    %v5516 = vsub.s32 %v5513, %v5515
    %v5517 = vrot.slane %v5503, %v5516
    %v5518 = vcombine.high %v5510, %v5510
    %v5519 = vcombine.high %v5517, %v5517
    %v5520 = vcombine.high %v4720, %v4720
    %v5522 = vunpack.c.l.s4 1983009808
    %v5523 = vunpack.c.0.s8 %v5522
    %v5524 = vlaneseq
    %v5525 = vshrl.u32 %v5524, 7
    %v5526 = vsub.s32 %v5523, %v5525
    %v5527 = vrot.slane %v4720, %v5526
    %v5529 = vunpack.c.l.s4 1983009808
    %v5530 = vunpack.c.0.s8 %v5529
    %v5531 = vlaneseq
    %v5532 = vshrl.u32 %v5531, 7
    %v5533 = vsub.s32 %v5530, %v5532
    %v5534 = vrot.slane %v5520, %v5533
    %v5535 = vcombine.high %v5527, %v5527
    %v5536 = vcombine.high %v5534, %v5534
    %v5537 = vcombine.high %v4721, %v4721
    %v5539 = vunpack.c.l.s4 1983009808
    %v5540 = vunpack.c.0.s8 %v5539
    %v5541 = vlaneseq
    %v5542 = vshrl.u32 %v5541, 7
    %v5543 = vsub.s32 %v5540, %v5542
    %v5544 = vrot.slane %v4721, %v5543
    %v5546 = vunpack.c.l.s4 1983009808
    %v5547 = vunpack.c.0.s8 %v5546
    %v5548 = vlaneseq
    %v5549 = vshrl.u32 %v5548, 7
    %v5550 = vsub.s32 %v5547, %v5549
    %v5551 = vrot.slane %v5537, %v5550
    %v5552 = vcombine.high %v5544, %v5544
    %v5553 = vcombine.high %v5551, %v5551
    %v5554 = vcombine.high %v4722, %v4722
    %v5556 = vunpack.c.l.s4 1983009808
    %v5557 = vunpack.c.0.s8 %v5556
    %v5558 = vlaneseq
    %v5559 = vshrl.u32 %v5558, 7
    %v5560 = vsub.s32 %v5557, %v5559
    %v5561 = vrot.slane %v4722, %v5560
    %v5563 = vunpack.c.l.s4 1983009808
    %v5564 = vunpack.c.0.s8 %v5563
    %v5565 = vlaneseq
    %v5566 = vshrl.u32 %v5565, 7
    %v5567 = vsub.s32 %v5564, %v5566
    %v5568 = vrot.slane %v5554, %v5567
    %v5569 = vcombine.high %v5561, %v5561
    %v5570 = vcombine.high %v5568, %v5568
    %v5571 = vcombine.high %v4723, %v4723
    %v5573 = vunpack.c.l.s4 1983009808
    %v5574 = vunpack.c.0.s8 %v5573
    %v5575 = vlaneseq
    %v5576 = vshrl.u32 %v5575, 7
    %v5577 = vsub.s32 %v5574, %v5576
    %v5578 = vrot.slane %v4723, %v5577
    %v5580 = vunpack.c.l.s4 1983009808
    %v5581 = vunpack.c.0.s8 %v5580
    %v5582 = vlaneseq
    %v5583 = vshrl.u32 %v5582, 7
    %v5584 = vsub.s32 %v5581, %v5583
    %v5585 = vrot.slane %v5571, %v5584
    %v5586 = vcombine.high %v5578, %v5578
    %v5587 = vcombine.high %v5585, %v5585
    %v5588 = vcombine.high %v4724, %v4724
    %v5590 = vunpack.c.l.s4 1983009808
    %v5591 = vunpack.c.0.s8 %v5590
    %v5592 = vlaneseq
    %v5593 = vshrl.u32 %v5592, 7
    %v5594 = vsub.s32 %v5591, %v5593
    %v5595 = vrot.slane %v4724, %v5594
    %v5597 = vunpack.c.l.s4 1983009808
    %v5598 = vunpack.c.0.s8 %v5597
    %v5599 = vlaneseq
    %v5600 = vshrl.u32 %v5599, 7
    %v5601 = vsub.s32 %v5598, %v5600
    %v5602 = vrot.slane %v5588, %v5601
    %v5603 = vcombine.high %v5595, %v5595
    %v5604 = vcombine.high %v5602, %v5602
    %v5605 = vcombine.high %v4725, %v4725
    %v5607 = vunpack.c.l.s4 1983009808
    %v5608 = vunpack.c.0.s8 %v5607
    %v5609 = vlaneseq
    %v5610 = vshrl.u32 %v5609, 7
    %v5611 = vsub.s32 %v5608, %v5610
    %v5612 = vrot.slane %v4725, %v5611
    %v5614 = vunpack.c.l.s4 1983009808
    %v5615 = vunpack.c.0.s8 %v5614
    %v5616 = vlaneseq
    %v5617 = vshrl.u32 %v5616, 7
    %v5618 = vsub.s32 %v5615, %v5617
    %v5619 = vrot.slane %v5605, %v5618
    %v5620 = vcombine.high %v5612, %v5612
    %v5621 = vcombine.high %v5619, %v5619
    %v5622 = vcombine.high %v4726, %v4726
    %v5624 = vunpack.c.l.s4 1983009808
    %v5625 = vunpack.c.0.s8 %v5624
    %v5626 = vlaneseq
    %v5627 = vshrl.u32 %v5626, 7
    %v5628 = vsub.s32 %v5625, %v5627
    %v5629 = vrot.slane %v4726, %v5628
    %v5631 = vunpack.c.l.s4 1983009808
    %v5632 = vunpack.c.0.s8 %v5631
    %v5633 = vlaneseq
    %v5634 = vshrl.u32 %v5633, 7
    %v5635 = vsub.s32 %v5632, %v5634
    %v5636 = vrot.slane %v5622, %v5635
    %v5637 = vcombine.high %v5629, %v5629
    %v5638 = vcombine.high %v5636, %v5636
    %v5639 = vcombine.high %v4727, %v4727
    %v5641 = vunpack.c.l.s4 1983009808
    %v5642 = vunpack.c.0.s8 %v5641
    %v5643 = vlaneseq
    %v5644 = vshrl.u32 %v5643, 7
    %v5645 = vsub.s32 %v5642, %v5644
    %v5646 = vrot.slane %v4727, %v5645
    %v5648 = vunpack.c.l.s4 1983009808
    %v5649 = vunpack.c.0.s8 %v5648
    %v5650 = vlaneseq
    %v5651 = vshrl.u32 %v5650, 7
    %v5652 = vsub.s32 %v5649, %v5651
    %v5653 = vrot.slane %v5639, %v5652
    %v5654 = vcombine.high %v5646, %v5646
    %v5655 = vcombine.high %v5653, %v5653
    %v5656 = vcombine.high %v4728, %v4728
    %v5658 = vunpack.c.l.s4 1983009808
    %v5659 = vunpack.c.0.s8 %v5658
    %v5660 = vlaneseq
    %v5661 = vshrl.u32 %v5660, 7
    %v5662 = vsub.s32 %v5659, %v5661
    %v5663 = vrot.slane %v4728, %v5662
    %v5665 = vunpack.c.l.s4 1983009808
    %v5666 = vunpack.c.0.s8 %v5665
    %v5667 = vlaneseq
    %v5668 = vshrl.u32 %v5667, 7
    %v5669 = vsub.s32 %v5666, %v5668
    %v5670 = vrot.slane %v5656, %v5669
    %v5671 = vcombine.high %v5663, %v5663
    %v5672 = vcombine.high %v5670, %v5670
    %v5673 = vcombine.high %v4729, %v4729
    %v5675 = vunpack.c.l.s4 1983009808
    %v5676 = vunpack.c.0.s8 %v5675
    %v5677 = vlaneseq
    %v5678 = vshrl.u32 %v5677, 7
    %v5679 = vsub.s32 %v5676, %v5678
    %v5680 = vrot.slane %v4729, %v5679
    %v5682 = vunpack.c.l.s4 1983009808
    %v5683 = vunpack.c.0.s8 %v5682
    %v5684 = vlaneseq
    %v5685 = vshrl.u32 %v5684, 7
    %v5686 = vsub.s32 %v5683, %v5685
    %v5687 = vrot.slane %v5673, %v5686
    %v5688 = vcombine.high %v5680, %v5680
    %v5689 = vcombine.high %v5687, %v5687
    %v5690 = vcombine.high %v4730, %v4730
    %v5692 = vunpack.c.l.s4 1983009808
    %v5693 = vunpack.c.0.s8 %v5692
    %v5694 = vlaneseq
    %v5695 = vshrl.u32 %v5694, 7
    %v5696 = vsub.s32 %v5693, %v5695
    %v5697 = vrot.slane %v4730, %v5696
    %v5699 = vunpack.c.l.s4 1983009808
    %v5700 = vunpack.c.0.s8 %v5699
    %v5701 = vlaneseq
    %v5702 = vshrl.u32 %v5701, 7
    %v5703 = vsub.s32 %v5700, %v5702
    %v5704 = vrot.slane %v5690, %v5703
    %v5705 = vcombine.high %v5697, %v5697
    %v5706 = vcombine.high %v5704, %v5704
    %v5707 = vcombine.high %v4731, %v4731
    %v5709 = vunpack.c.l.s4 1983009808
    %v5710 = vunpack.c.0.s8 %v5709
    %v5711 = vlaneseq
    %v5712 = vshrl.u32 %v5711, 7
    %v5713 = vsub.s32 %v5710, %v5712
    %v5714 = vrot.slane %v4731, %v5713
    %v5716 = vunpack.c.l.s4 1983009808
    %v5717 = vunpack.c.0.s8 %v5716
    %v5718 = vlaneseq
    %v5719 = vshrl.u32 %v5718, 7
    %v5720 = vsub.s32 %v5717, %v5719
    %v5721 = vrot.slane %v5707, %v5720
    %v5722 = vcombine.high %v5714, %v5714
    %v5723 = vcombine.high %v5721, %v5721
    %v5724 = vcombine.high %v4732, %v4732
    %v5726 = vunpack.c.l.s4 1983009808
    %v5727 = vunpack.c.0.s8 %v5726
    %v5728 = vlaneseq
    %v5729 = vshrl.u32 %v5728, 7
    %v5730 = vsub.s32 %v5727, %v5729
    %v5731 = vrot.slane %v4732, %v5730
    %v5733 = vunpack.c.l.s4 1983009808
    %v5734 = vunpack.c.0.s8 %v5733
    %v5735 = vlaneseq
    %v5736 = vshrl.u32 %v5735, 7
    %v5737 = vsub.s32 %v5734, %v5736
    %v5738 = vrot.slane %v5724, %v5737
    %v5739 = vcombine.high %v5731, %v5731
    %v5740 = vcombine.high %v5738, %v5738
    %v5741 = vcombine.high %v4733, %v4733
    %v5743 = vunpack.c.l.s4 1983009808
    %v5744 = vunpack.c.0.s8 %v5743
    %v5745 = vlaneseq
    %v5746 = vshrl.u32 %v5745, 7
    %v5747 = vsub.s32 %v5744, %v5746
    %v5748 = vrot.slane %v4733, %v5747
    %v5750 = vunpack.c.l.s4 1983009808
    %v5751 = vunpack.c.0.s8 %v5750
    %v5752 = vlaneseq
    %v5753 = vshrl.u32 %v5752, 7
    %v5754 = vsub.s32 %v5751, %v5753
    %v5755 = vrot.slane %v5741, %v5754
    %v5756 = vcombine.high %v5748, %v5748
    %v5757 = vcombine.high %v5755, %v5755
    %v5758 = vcombine.high %v4734, %v4734
    %v5760 = vunpack.c.l.s4 1983009808
    %v5761 = vunpack.c.0.s8 %v5760
    %v5762 = vlaneseq
    %v5763 = vshrl.u32 %v5762, 7
    %v5764 = vsub.s32 %v5761, %v5763
    %v5765 = vrot.slane %v4734, %v5764
    %v5767 = vunpack.c.l.s4 1983009808
    %v5768 = vunpack.c.0.s8 %v5767
    %v5769 = vlaneseq
    %v5770 = vshrl.u32 %v5769, 7
    %v5771 = vsub.s32 %v5768, %v5770
    %v5772 = vrot.slane %v5758, %v5771
    %v5773 = vcombine.high %v5765, %v5765
    %v5774 = vcombine.high %v5772, %v5772
    %v5775 = vcombine.high %v4735, %v4735
    %v5777 = vunpack.c.l.s4 1983009808
    %v5778 = vunpack.c.0.s8 %v5777
    %v5779 = vlaneseq
    %v5780 = vshrl.u32 %v5779, 7
    %v5781 = vsub.s32 %v5778, %v5780
    %v5782 = vrot.slane %v4735, %v5781
    %v5784 = vunpack.c.l.s4 1983009808
    %v5785 = vunpack.c.0.s8 %v5784
    %v5786 = vlaneseq
    %v5787 = vshrl.u32 %v5786, 7
    %v5788 = vsub.s32 %v5785, %v5787
    %v5789 = vrot.slane %v5775, %v5788
    %v5790 = vcombine.high %v5782, %v5782
    %v5791 = vcombine.high %v5789, %v5789
    %v5792 = vcombine.high %v4736, %v4736
    %v5794 = vunpack.c.l.s4 1983009808
    %v5795 = vunpack.c.0.s8 %v5794
    %v5796 = vlaneseq
    %v5797 = vshrl.u32 %v5796, 7
    %v5798 = vsub.s32 %v5795, %v5797
    %v5799 = vrot.slane %v4736, %v5798
    %v5801 = vunpack.c.l.s4 1983009808
    %v5802 = vunpack.c.0.s8 %v5801
    %v5803 = vlaneseq
    %v5804 = vshrl.u32 %v5803, 7
    %v5805 = vsub.s32 %v5802, %v5804
    %v5806 = vrot.slane %v5792, %v5805
    %v5807 = vcombine.high %v5799, %v5799
    %v5808 = vcombine.high %v5806, %v5806
    %v5809 = vcombine.high %v4737, %v4737
    %v5811 = vunpack.c.l.s4 1983009808
    %v5812 = vunpack.c.0.s8 %v5811
    %v5813 = vlaneseq
    %v5814 = vshrl.u32 %v5813, 7
    %v5815 = vsub.s32 %v5812, %v5814
    %v5816 = vrot.slane %v4737, %v5815
    %v5818 = vunpack.c.l.s4 1983009808
    %v5819 = vunpack.c.0.s8 %v5818
    %v5820 = vlaneseq
    %v5821 = vshrl.u32 %v5820, 7
    %v5822 = vsub.s32 %v5819, %v5821
    %v5823 = vrot.slane %v5809, %v5822
    %v5824 = vcombine.high %v5816, %v5816
    %v5825 = vcombine.high %v5823, %v5823
    %v5826 = vcombine.high %v4738, %v4738
    %v5828 = vunpack.c.l.s4 1983009808
    %v5829 = vunpack.c.0.s8 %v5828
    %v5830 = vlaneseq
    %v5831 = vshrl.u32 %v5830, 7
    %v5832 = vsub.s32 %v5829, %v5831
    %v5833 = vrot.slane %v4738, %v5832
    %v5835 = vunpack.c.l.s4 1983009808
    %v5836 = vunpack.c.0.s8 %v5835
    %v5837 = vlaneseq
    %v5838 = vshrl.u32 %v5837, 7
    %v5839 = vsub.s32 %v5836, %v5838
    %v5840 = vrot.slane %v5826, %v5839
    %v5841 = vcombine.high %v5833, %v5833
    %v5842 = vcombine.high %v5840, %v5840
    %v5843 = vcombine.high %v4739, %v4739
    %v5845 = vunpack.c.l.s4 1983009808
    %v5846 = vunpack.c.0.s8 %v5845
    %v5847 = vlaneseq
    %v5848 = vshrl.u32 %v5847, 7
    %v5849 = vsub.s32 %v5846, %v5848
    %v5850 = vrot.slane %v4739, %v5849
    %v5852 = vunpack.c.l.s4 1983009808
    %v5853 = vunpack.c.0.s8 %v5852
    %v5854 = vlaneseq
    %v5855 = vshrl.u32 %v5854, 7
    %v5856 = vsub.s32 %v5853, %v5855
    %v5857 = vrot.slane %v5843, %v5856
    %v5858 = vcombine.high %v5850, %v5850
    %v5859 = vcombine.high %v5857, %v5857
    %v5860 = vcombine.high %v4740, %v4740
    %v5862 = vunpack.c.l.s4 1983009808
    %v5863 = vunpack.c.0.s8 %v5862
    %v5864 = vlaneseq
    %v5865 = vshrl.u32 %v5864, 7
    %v5866 = vsub.s32 %v5863, %v5865
    %v5867 = vrot.slane %v4740, %v5866
    %v5869 = vunpack.c.l.s4 1983009808
    %v5870 = vunpack.c.0.s8 %v5869
    %v5871 = vlaneseq
    %v5872 = vshrl.u32 %v5871, 7
    %v5873 = vsub.s32 %v5870, %v5872
    %v5874 = vrot.slane %v5860, %v5873
    %v5875 = vcombine.high %v5867, %v5867
    %v5876 = vcombine.high %v5874, %v5874
    %v5877 = vcombine.high %v4741, %v4741
    %v5879 = vunpack.c.l.s4 1983009808
    %v5880 = vunpack.c.0.s8 %v5879
    %v5881 = vlaneseq
    %v5882 = vshrl.u32 %v5881, 7
    %v5883 = vsub.s32 %v5880, %v5882
    %v5884 = vrot.slane %v4741, %v5883
    %v5886 = vunpack.c.l.s4 1983009808
    %v5887 = vunpack.c.0.s8 %v5886
    %v5888 = vlaneseq
    %v5889 = vshrl.u32 %v5888, 7
    %v5890 = vsub.s32 %v5887, %v5889
    %v5891 = vrot.slane %v5877, %v5890
    %v5892 = vcombine.high %v5884, %v5884
    %v5893 = vcombine.high %v5891, %v5891
    %v6150 = vrot.slane %v4813, 7
    %v6151 = vrot.slane %v6150, 2
    %v6152 = vrot.slane %v4821, 7
    %v6153 = vrot.slane %v6152, 2
    %v6154 = vrot.slane %v4820, 7
    %v6155 = vrot.slane %v6154, 2
    %v6156 = vrot.slane %v4822, 7
    %v6157 = vrot.slane %v6156, 2
    %v6158 = vrot.slane %v4830, 7
    %v6159 = vrot.slane %v6158, 2
    %v6160 = vrot.slane %v4838, 7
    %v6161 = vrot.slane %v6160, 2
    %v6162 = vrot.slane %v4837, 7
    %v6163 = vrot.slane %v6162, 2
    %v6164 = vrot.slane %v4839, 7
    %v6165 = vrot.slane %v6164, 2
    %v6166 = vrot.slane %v4881, 7
    %v6167 = vrot.slane %v6166, 2
    %v6168 = vrot.slane %v4889, 7
    %v6169 = vrot.slane %v6168, 2
    %v6170 = vrot.slane %v4888, 7
    %v6171 = vrot.slane %v6170, 2
    %v6172 = vrot.slane %v4890, 7
    %v6173 = vrot.slane %v6172, 2
    %v6174 = vrot.slane %v4898, 7
    %v6175 = vrot.slane %v6174, 2
    %v6176 = vrot.slane %v4906, 7
    %v6177 = vrot.slane %v6176, 2
    %v6178 = vrot.slane %v4905, 7
    %v6179 = vrot.slane %v6178, 2
    %v6180 = vrot.slane %v4907, 7
    %v6181 = vrot.slane %v6180, 2
    %v6182 = vrot.slane %v4949, 7
    %v6183 = vrot.slane %v6182, 2
    %v6184 = vrot.slane %v4957, 7
    %v6185 = vrot.slane %v6184, 2
    %v6186 = vrot.slane %v4956, 7
    %v6187 = vrot.slane %v6186, 2
    %v6188 = vrot.slane %v4958, 7
    %v6189 = vrot.slane %v6188, 2
    %v6190 = vrot.slane %v4966, 7
    %v6191 = vrot.slane %v6190, 2
    %v6192 = vrot.slane %v4974, 7
    %v6193 = vrot.slane %v6192, 2
    %v6194 = vrot.slane %v4973, 7
    %v6195 = vrot.slane %v6194, 2
    %v6196 = vrot.slane %v4975, 7
    %v6197 = vrot.slane %v6196, 2
    %v6198 = vrot.slane %v5017, 7
    %v6199 = vrot.slane %v6198, 2
    %v6200 = vrot.slane %v5025, 7
    %v6201 = vrot.slane %v6200, 2
    %v6202 = vrot.slane %v5024, 7
    %v6203 = vrot.slane %v6202, 2
    %v6204 = vrot.slane %v5026, 7
    %v6205 = vrot.slane %v6204, 2
    %v6206 = vrot.slane %v5034, 7
    %v6207 = vrot.slane %v6206, 2
    %v6208 = vrot.slane %v5042, 7
    %v6209 = vrot.slane %v6208, 2
    %v6210 = vrot.slane %v5041, 7
    %v6211 = vrot.slane %v6210, 2
    %v6212 = vrot.slane %v5043, 7
    %v6213 = vrot.slane %v6212, 2
    %v6214 = vrot.slane %v5085, 7
    %v6215 = vrot.slane %v6214, 2
    %v6216 = vrot.slane %v5093, 7
    %v6217 = vrot.slane %v6216, 2
    %v6218 = vrot.slane %v5092, 7
    %v6219 = vrot.slane %v6218, 2
    %v6220 = vrot.slane %v5094, 7
    %v6221 = vrot.slane %v6220, 2
    %v6222 = vrot.slane %v5102, 7
    %v6223 = vrot.slane %v6222, 2
    %v6224 = vrot.slane %v5110, 7
    %v6225 = vrot.slane %v6224, 2
    %v6226 = vrot.slane %v5109, 7
    %v6227 = vrot.slane %v6226, 2
    %v6228 = vrot.slane %v5111, 7
    %v6229 = vrot.slane %v6228, 2
    %v6230 = vrot.slane %v5153, 7
    %v6231 = vrot.slane %v6230, 2
    %v6232 = vrot.slane %v5161, 7
    %v6233 = vrot.slane %v6232, 2
    %v6234 = vrot.slane %v5160, 7
    %v6235 = vrot.slane %v6234, 2
    %v6236 = vrot.slane %v5162, 7
    %v6237 = vrot.slane %v6236, 2
    %v6238 = vrot.slane %v5170, 7
    %v6239 = vrot.slane %v6238, 2
    %v6240 = vrot.slane %v5178, 7
    %v6241 = vrot.slane %v6240, 2
    %v6242 = vrot.slane %v5177, 7
    %v6243 = vrot.slane %v6242, 2
    %v6244 = vrot.slane %v5179, 7
    %v6245 = vrot.slane %v6244, 2
    %v6246 = vrot.slane %v5221, 7
    %v6247 = vrot.slane %v6246, 2
    %v6248 = vrot.slane %v5229, 7
    %v6249 = vrot.slane %v6248, 2
    %v6250 = vrot.slane %v5228, 7
    %v6251 = vrot.slane %v6250, 2
    %v6252 = vrot.slane %v5230, 7
    %v6253 = vrot.slane %v6252, 2
    %v6254 = vrot.slane %v5238, 7
    %v6255 = vrot.slane %v6254, 2
    %v6256 = vrot.slane %v5246, 7
    %v6257 = vrot.slane %v6256, 2
    %v6258 = vrot.slane %v5245, 7
    %v6259 = vrot.slane %v6258, 2
    %v6260 = vrot.slane %v5247, 7
    %v6261 = vrot.slane %v6260, 2
    %v6262 = vrot.slane %v5289, 7
    %v6263 = vrot.slane %v6262, 2
    %v6264 = vrot.slane %v5297, 7
    %v6265 = vrot.slane %v6264, 2
    %v6266 = vrot.slane %v5296, 7
    %v6267 = vrot.slane %v6266, 2
    %v6268 = vrot.slane %v5298, 7
    %v6269 = vrot.slane %v6268, 2
    %v6270 = vrot.slane %v5306, 7
    %v6271 = vrot.slane %v6270, 2
    %v6272 = vrot.slane %v5314, 7
    %v6273 = vrot.slane %v6272, 2
    %v6274 = vrot.slane %v5313, 7
    %v6275 = vrot.slane %v6274, 2
    %v6276 = vrot.slane %v5315, 7
    %v6277 = vrot.slane %v6276, 2
    %v6278 = vrot.slane %v5357, 7
    %v6279 = vrot.slane %v6278, 2
    %v6280 = vrot.slane %v5365, 7
    %v6281 = vrot.slane %v6280, 2
    %v6282 = vrot.slane %v5364, 7
    %v6283 = vrot.slane %v6282, 2
    %v6284 = vrot.slane %v5366, 7
    %v6285 = vrot.slane %v6284, 2
    %v6286 = vrot.slane %v5374, 7
    %v6287 = vrot.slane %v6286, 2
    %v6288 = vrot.slane %v5382, 7
    %v6289 = vrot.slane %v6288, 2
    %v6290 = vrot.slane %v5381, 7
    %v6291 = vrot.slane %v6290, 2
    %v6292 = vrot.slane %v5383, 7
    %v6293 = vrot.slane %v6292, 2
    %v6294 = vrot.slane %v5425, 7
    %v6295 = vrot.slane %v6294, 2
    %v6296 = vrot.slane %v5433, 7
    %v6297 = vrot.slane %v6296, 2
    %v6298 = vrot.slane %v5432, 7
    %v6299 = vrot.slane %v6298, 2
    %v6300 = vrot.slane %v5434, 7
    %v6301 = vrot.slane %v6300, 2
    %v6302 = vrot.slane %v5442, 7
    %v6303 = vrot.slane %v6302, 2
    %v6304 = vrot.slane %v5450, 7
    %v6305 = vrot.slane %v6304, 2
    %v6306 = vrot.slane %v5449, 7
    %v6307 = vrot.slane %v6306, 2
    %v6308 = vrot.slane %v5451, 7
    %v6309 = vrot.slane %v6308, 2
    %v6310 = vrot.slane %v5493, 7
    %v6311 = vrot.slane %v6310, 2
    %v6312 = vrot.slane %v5501, 7
    %v6313 = vrot.slane %v6312, 2
    %v6314 = vrot.slane %v5500, 7
    %v6315 = vrot.slane %v6314, 2
    %v6316 = vrot.slane %v5502, 7
    %v6317 = vrot.slane %v6316, 2
    %v6318 = vrot.slane %v5510, 7
    %v6319 = vrot.slane %v6318, 2
    %v6320 = vrot.slane %v5518, 7
    %v6321 = vrot.slane %v6320, 2
    %v6322 = vrot.slane %v5517, 7
    %v6323 = vrot.slane %v6322, 2
    %v6324 = vrot.slane %v5519, 7
    %v6325 = vrot.slane %v6324, 2
    %v6326 = vrot.slane %v5561, 7
    %v6327 = vrot.slane %v6326, 2
    %v6328 = vrot.slane %v5569, 7
    %v6329 = vrot.slane %v6328, 2
    %v6330 = vrot.slane %v5568, 7
    %v6331 = vrot.slane %v6330, 2
    %v6332 = vrot.slane %v5570, 7
    %v6333 = vrot.slane %v6332, 2
    %v6334 = vrot.slane %v5578, 7
    %v6335 = vrot.slane %v6334, 2
    %v6336 = vrot.slane %v5586, 7
    %v6337 = vrot.slane %v6336, 2
    %v6338 = vrot.slane %v5585, 7
    %v6339 = vrot.slane %v6338, 2
    %v6340 = vrot.slane %v5587, 7
    %v6341 = vrot.slane %v6340, 2
    %v6342 = vrot.slane %v5629, 7
    %v6343 = vrot.slane %v6342, 2
    %v6344 = vrot.slane %v5637, 7
    %v6345 = vrot.slane %v6344, 2
    %v6346 = vrot.slane %v5636, 7
    %v6347 = vrot.slane %v6346, 2
    %v6348 = vrot.slane %v5638, 7
    %v6349 = vrot.slane %v6348, 2
    %v6350 = vrot.slane %v5646, 7
    %v6351 = vrot.slane %v6350, 2
    %v6352 = vrot.slane %v5654, 7
    %v6353 = vrot.slane %v6352, 2
    %v6354 = vrot.slane %v5653, 7
    %v6355 = vrot.slane %v6354, 2
    %v6356 = vrot.slane %v5655, 7
    %v6357 = vrot.slane %v6356, 2
    %v6358 = vrot.slane %v5697, 7
    %v6359 = vrot.slane %v6358, 2
    %v6360 = vrot.slane %v5705, 7
    %v6361 = vrot.slane %v6360, 2
    %v6362 = vrot.slane %v5704, 7
    %v6363 = vrot.slane %v6362, 2
    %v6364 = vrot.slane %v5706, 7
    %v6365 = vrot.slane %v6364, 2
    %v6366 = vrot.slane %v5714, 7
    %v6367 = vrot.slane %v6366, 2
    %v6368 = vrot.slane %v5722, 7
    %v6369 = vrot.slane %v6368, 2
    %v6370 = vrot.slane %v5721, 7
    %v6371 = vrot.slane %v6370, 2
    %v6372 = vrot.slane %v5723, 7
    %v6373 = vrot.slane %v6372, 2
    %v6374 = vrot.slane %v5765, 7
    %v6375 = vrot.slane %v6374, 2
    %v6376 = vrot.slane %v5773, 7
    %v6377 = vrot.slane %v6376, 2
    %v6378 = vrot.slane %v5772, 7
    %v6379 = vrot.slane %v6378, 2
    %v6380 = vrot.slane %v5774, 7
    %v6381 = vrot.slane %v6380, 2
    %v6382 = vrot.slane %v5782, 7
    %v6383 = vrot.slane %v6382, 2
    %v6384 = vrot.slane %v5790, 7
    %v6385 = vrot.slane %v6384, 2
    %v6386 = vrot.slane %v5789, 7
    %v6387 = vrot.slane %v6386, 2
    %v6388 = vrot.slane %v5791, 7
    %v6389 = vrot.slane %v6388, 2
    %v6390 = vrot.slane %v5833, 7
    %v6391 = vrot.slane %v6390, 2
    %v6392 = vrot.slane %v5841, 7
    %v6393 = vrot.slane %v6392, 2
    %v6394 = vrot.slane %v5840, 7
    %v6395 = vrot.slane %v6394, 2
    %v6396 = vrot.slane %v5842, 7
    %v6397 = vrot.slane %v6396, 2
    %v6398 = vrot.slane %v5850, 7
    %v6399 = vrot.slane %v6398, 2
    %v6400 = vrot.slane %v5858, 7
    %v6401 = vrot.slane %v6400, 2
    %v6402 = vrot.slane %v5857, 7
    %v6403 = vrot.slane %v6402, 2
    %v6404 = vrot.slane %v5859, 7
    %v6405 = vrot.slane %v6404, 2
    %v6534 = vmax.f32 %v4813, %v6151
    %v6535 = vmax.f32 %v4821, %v6153
    %v6536 = vmax.f32 %v4820, %v6155
    %v6537 = vmax.f32 %v4822, %v6157
    %v6538 = vmax.f32 %v4830, %v6159
    %v6539 = vmax.f32 %v4838, %v6161
    %v6540 = vmax.f32 %v4837, %v6163
    %v6541 = vmax.f32 %v4839, %v6165
    %v6542 = vmax.f32 %v4881, %v6167
    %v6543 = vmax.f32 %v4889, %v6169
    %v6544 = vmax.f32 %v4888, %v6171
    %v6545 = vmax.f32 %v4890, %v6173
    %v6546 = vmax.f32 %v4898, %v6175
    %v6547 = vmax.f32 %v4906, %v6177
    %v6548 = vmax.f32 %v4905, %v6179
    %v6549 = vmax.f32 %v4907, %v6181
    %v6550 = vmax.f32 %v4949, %v6183
    %v6551 = vmax.f32 %v4957, %v6185
    %v6552 = vmax.f32 %v4956, %v6187
    %v6553 = vmax.f32 %v4958, %v6189
    %v6554 = vmax.f32 %v4966, %v6191
    %v6555 = vmax.f32 %v4974, %v6193
    %v6556 = vmax.f32 %v4973, %v6195
    %v6557 = vmax.f32 %v4975, %v6197
    %v6558 = vmax.f32 %v5017, %v6199
    %v6559 = vmax.f32 %v5025, %v6201
    %v6560 = vmax.f32 %v5024, %v6203
    %v6561 = vmax.f32 %v5026, %v6205
    %v6562 = vmax.f32 %v5034, %v6207
    %v6563 = vmax.f32 %v5042, %v6209
    %v6564 = vmax.f32 %v5041, %v6211
    %v6565 = vmax.f32 %v5043, %v6213
    %v6566 = vmax.f32 %v5085, %v6215
    %v6567 = vmax.f32 %v5093, %v6217
    %v6568 = vmax.f32 %v5092, %v6219
    %v6569 = vmax.f32 %v5094, %v6221
    %v6570 = vmax.f32 %v5102, %v6223
    %v6571 = vmax.f32 %v5110, %v6225
    %v6572 = vmax.f32 %v5109, %v6227
    %v6573 = vmax.f32 %v5111, %v6229
    %v6574 = vmax.f32 %v5153, %v6231
    %v6575 = vmax.f32 %v5161, %v6233
    %v6576 = vmax.f32 %v5160, %v6235
    %v6577 = vmax.f32 %v5162, %v6237
    %v6578 = vmax.f32 %v5170, %v6239
    %v6579 = vmax.f32 %v5178, %v6241
    %v6580 = vmax.f32 %v5177, %v6243
    %v6581 = vmax.f32 %v5179, %v6245
    %v6582 = vmax.f32 %v5221, %v6247
    %v6583 = vmax.f32 %v5229, %v6249
    %v6584 = vmax.f32 %v5228, %v6251
    %v6585 = vmax.f32 %v5230, %v6253
    %v6586 = vmax.f32 %v5238, %v6255
    %v6587 = vmax.f32 %v5246, %v6257
    %v6588 = vmax.f32 %v5245, %v6259
    %v6589 = vmax.f32 %v5247, %v6261
    %v6590 = vmax.f32 %v5289, %v6263
    %v6591 = vmax.f32 %v5297, %v6265
    %v6592 = vmax.f32 %v5296, %v6267
    %v6593 = vmax.f32 %v5298, %v6269
    %v6594 = vmax.f32 %v5306, %v6271
    %v6595 = vmax.f32 %v5314, %v6273
    %v6596 = vmax.f32 %v5313, %v6275
    %v6597 = vmax.f32 %v5315, %v6277
    %v6598 = vmax.f32 %v5357, %v6279
    %v6599 = vmax.f32 %v5365, %v6281
    %v6600 = vmax.f32 %v5364, %v6283
    %v6601 = vmax.f32 %v5366, %v6285
    %v6602 = vmax.f32 %v5374, %v6287
    %v6603 = vmax.f32 %v5382, %v6289
    %v6604 = vmax.f32 %v5381, %v6291
    %v6605 = vmax.f32 %v5383, %v6293
    %v6606 = vmax.f32 %v5425, %v6295
    %v6607 = vmax.f32 %v5433, %v6297
    %v6608 = vmax.f32 %v5432, %v6299
    %v6609 = vmax.f32 %v5434, %v6301
    %v6610 = vmax.f32 %v5442, %v6303
    %v6611 = vmax.f32 %v5450, %v6305
    %v6612 = vmax.f32 %v5449, %v6307
    %v6613 = vmax.f32 %v5451, %v6309
    %v6614 = vmax.f32 %v5493, %v6311
    %v6615 = vmax.f32 %v5501, %v6313
    %v6616 = vmax.f32 %v5500, %v6315
    %v6617 = vmax.f32 %v5502, %v6317
    %v6618 = vmax.f32 %v5510, %v6319
    %v6619 = vmax.f32 %v5518, %v6321
    %v6620 = vmax.f32 %v5517, %v6323
    %v6621 = vmax.f32 %v5519, %v6325
    %v6622 = vmax.f32 %v5561, %v6327
    %v6623 = vmax.f32 %v5569, %v6329
    %v6624 = vmax.f32 %v5568, %v6331
    %v6625 = vmax.f32 %v5570, %v6333
    %v6626 = vmax.f32 %v5578, %v6335
    %v6627 = vmax.f32 %v5586, %v6337
    %v6628 = vmax.f32 %v5585, %v6339
    %v6629 = vmax.f32 %v5587, %v6341
    %v6630 = vmax.f32 %v5629, %v6343
    %v6631 = vmax.f32 %v5637, %v6345
    %v6632 = vmax.f32 %v5636, %v6347
    %v6633 = vmax.f32 %v5638, %v6349
    %v6634 = vmax.f32 %v5646, %v6351
    %v6635 = vmax.f32 %v5654, %v6353
    %v6636 = vmax.f32 %v5653, %v6355
    %v6637 = vmax.f32 %v5655, %v6357
    %v6638 = vmax.f32 %v5697, %v6359
    %v6639 = vmax.f32 %v5705, %v6361
    %v6640 = vmax.f32 %v5704, %v6363
    %v6641 = vmax.f32 %v5706, %v6365
    %v6642 = vmax.f32 %v5714, %v6367
    %v6643 = vmax.f32 %v5722, %v6369
    %v6644 = vmax.f32 %v5721, %v6371
    %v6645 = vmax.f32 %v5723, %v6373
    %v6646 = vmax.f32 %v5765, %v6375
    %v6647 = vmax.f32 %v5773, %v6377
    %v6648 = vmax.f32 %v5772, %v6379
    %v6649 = vmax.f32 %v5774, %v6381
    %v6650 = vmax.f32 %v5782, %v6383
    %v6651 = vmax.f32 %v5790, %v6385
    %v6652 = vmax.f32 %v5789, %v6387
    %v6653 = vmax.f32 %v5791, %v6389
    %v6654 = vmax.f32 %v5833, %v6391
    %v6655 = vmax.f32 %v5841, %v6393
    %v6656 = vmax.f32 %v5840, %v6395
    %v6657 = vmax.f32 %v5842, %v6397
    %v6658 = vmax.f32 %v5850, %v6399
    %v6659 = vmax.f32 %v5858, %v6401
    %v6660 = vmax.f32 %v5857, %v6403
    %v6661 = vmax.f32 %v5859, %v6405
    %v6662 = vrot.slane %v4847, 7
    %v6663 = vrot.slane %v6662, 2
    %v6664 = vrot.slane %v4855, 7
    %v6665 = vrot.slane %v6664, 2
    %v6666 = vrot.slane %v4854, 7
    %v6667 = vrot.slane %v6666, 2
    %v6668 = vrot.slane %v4856, 7
    %v6669 = vrot.slane %v6668, 2
    %v6670 = vrot.slane %v4864, 7
    %v6671 = vrot.slane %v6670, 2
    %v6672 = vrot.slane %v4872, 7
    %v6673 = vrot.slane %v6672, 2
    %v6674 = vrot.slane %v4871, 7
    %v6675 = vrot.slane %v6674, 2
    %v6676 = vrot.slane %v4873, 7
    %v6677 = vrot.slane %v6676, 2
    %v6678 = vrot.slane %v4915, 7
    %v6679 = vrot.slane %v6678, 2
    %v6680 = vrot.slane %v4923, 7
    %v6681 = vrot.slane %v6680, 2
    %v6682 = vrot.slane %v4922, 7
    %v6683 = vrot.slane %v6682, 2
    %v6684 = vrot.slane %v4924, 7
    %v6685 = vrot.slane %v6684, 2
    %v6686 = vrot.slane %v4932, 7
    %v6687 = vrot.slane %v6686, 2
    %v6688 = vrot.slane %v4940, 7
    %v6689 = vrot.slane %v6688, 2
    %v6690 = vrot.slane %v4939, 7
    %v6691 = vrot.slane %v6690, 2
    %v6692 = vrot.slane %v4941, 7
    %v6693 = vrot.slane %v6692, 2
    %v6694 = vrot.slane %v4983, 7
    %v6695 = vrot.slane %v6694, 2
    %v6696 = vrot.slane %v4991, 7
    %v6697 = vrot.slane %v6696, 2
    %v6698 = vrot.slane %v4990, 7
    %v6699 = vrot.slane %v6698, 2
    %v6700 = vrot.slane %v4992, 7
    %v6701 = vrot.slane %v6700, 2
    %v6702 = vrot.slane %v5000, 7
    %v6703 = vrot.slane %v6702, 2
    %v6704 = vrot.slane %v5008, 7
    %v6705 = vrot.slane %v6704, 2
    %v6706 = vrot.slane %v5007, 7
    %v6707 = vrot.slane %v6706, 2
    %v6708 = vrot.slane %v5009, 7
    %v6709 = vrot.slane %v6708, 2
    %v6710 = vrot.slane %v5051, 7
    %v6711 = vrot.slane %v6710, 2
    %v6712 = vrot.slane %v5059, 7
    %v6713 = vrot.slane %v6712, 2
    %v6714 = vrot.slane %v5058, 7
    %v6715 = vrot.slane %v6714, 2
    %v6716 = vrot.slane %v5060, 7
    %v6717 = vrot.slane %v6716, 2
    %v6718 = vrot.slane %v5068, 7
    %v6719 = vrot.slane %v6718, 2
    %v6720 = vrot.slane %v5076, 7
    %v6721 = vrot.slane %v6720, 2
    %v6722 = vrot.slane %v5075, 7
    %v6723 = vrot.slane %v6722, 2
    %v6724 = vrot.slane %v5077, 7
    %v6725 = vrot.slane %v6724, 2
    %v6726 = vrot.slane %v5119, 7
    %v6727 = vrot.slane %v6726, 2
    %v6728 = vrot.slane %v5127, 7
    %v6729 = vrot.slane %v6728, 2
    %v6730 = vrot.slane %v5126, 7
    %v6731 = vrot.slane %v6730, 2
    %v6732 = vrot.slane %v5128, 7
    %v6733 = vrot.slane %v6732, 2
    %v6734 = vrot.slane %v5136, 7
    %v6735 = vrot.slane %v6734, 2
    %v6736 = vrot.slane %v5144, 7
    %v6737 = vrot.slane %v6736, 2
    %v6738 = vrot.slane %v5143, 7
    %v6739 = vrot.slane %v6738, 2
    %v6740 = vrot.slane %v5145, 7
    %v6741 = vrot.slane %v6740, 2
    %v6742 = vrot.slane %v5187, 7
    %v6743 = vrot.slane %v6742, 2
    %v6744 = vrot.slane %v5195, 7
    %v6745 = vrot.slane %v6744, 2
    %v6746 = vrot.slane %v5194, 7
    %v6747 = vrot.slane %v6746, 2
    %v6748 = vrot.slane %v5196, 7
    %v6749 = vrot.slane %v6748, 2
    %v6750 = vrot.slane %v5204, 7
    %v6751 = vrot.slane %v6750, 2
    %v6752 = vrot.slane %v5212, 7
    %v6753 = vrot.slane %v6752, 2
    %v6754 = vrot.slane %v5211, 7
    %v6755 = vrot.slane %v6754, 2
    %v6756 = vrot.slane %v5213, 7
    %v6757 = vrot.slane %v6756, 2
    %v6758 = vrot.slane %v5255, 7
    %v6759 = vrot.slane %v6758, 2
    %v6760 = vrot.slane %v5263, 7
    %v6761 = vrot.slane %v6760, 2
    %v6762 = vrot.slane %v5262, 7
    %v6763 = vrot.slane %v6762, 2
    %v6764 = vrot.slane %v5264, 7
    %v6765 = vrot.slane %v6764, 2
    %v6766 = vrot.slane %v5272, 7
    %v6767 = vrot.slane %v6766, 2
    %v6768 = vrot.slane %v5280, 7
    %v6769 = vrot.slane %v6768, 2
    %v6770 = vrot.slane %v5279, 7
    %v6771 = vrot.slane %v6770, 2
    %v6772 = vrot.slane %v5281, 7
    %v6773 = vrot.slane %v6772, 2
    %v6774 = vrot.slane %v5323, 7
    %v6775 = vrot.slane %v6774, 2
    %v6776 = vrot.slane %v5331, 7
    %v6777 = vrot.slane %v6776, 2
    %v6778 = vrot.slane %v5330, 7
    %v6779 = vrot.slane %v6778, 2
    %v6780 = vrot.slane %v5332, 7
    %v6781 = vrot.slane %v6780, 2
    %v6782 = vrot.slane %v5340, 7
    %v6783 = vrot.slane %v6782, 2
    %v6784 = vrot.slane %v5348, 7
    %v6785 = vrot.slane %v6784, 2
    %v6786 = vrot.slane %v5347, 7
    %v6787 = vrot.slane %v6786, 2
    %v6788 = vrot.slane %v5349, 7
    %v6789 = vrot.slane %v6788, 2
    %v6790 = vrot.slane %v5391, 7
    %v6791 = vrot.slane %v6790, 2
    %v6792 = vrot.slane %v5399, 7
    %v6793 = vrot.slane %v6792, 2
    %v6794 = vrot.slane %v5398, 7
    %v6795 = vrot.slane %v6794, 2
    %v6796 = vrot.slane %v5400, 7
    %v6797 = vrot.slane %v6796, 2
    %v6798 = vrot.slane %v5408, 7
    %v6799 = vrot.slane %v6798, 2
    %v6800 = vrot.slane %v5416, 7
    %v6801 = vrot.slane %v6800, 2
    %v6802 = vrot.slane %v5415, 7
    %v6803 = vrot.slane %v6802, 2
    %v6804 = vrot.slane %v5417, 7
    %v6805 = vrot.slane %v6804, 2
    %v6806 = vrot.slane %v5459, 7
    %v6807 = vrot.slane %v6806, 2
    %v6808 = vrot.slane %v5467, 7
    %v6809 = vrot.slane %v6808, 2
    %v6810 = vrot.slane %v5466, 7
    %v6811 = vrot.slane %v6810, 2
    %v6812 = vrot.slane %v5468, 7
    %v6813 = vrot.slane %v6812, 2
    %v6814 = vrot.slane %v5476, 7
    %v6815 = vrot.slane %v6814, 2
    %v6816 = vrot.slane %v5484, 7
    %v6817 = vrot.slane %v6816, 2
    %v6818 = vrot.slane %v5483, 7
    %v6819 = vrot.slane %v6818, 2
    %v6820 = vrot.slane %v5485, 7
    %v6821 = vrot.slane %v6820, 2
    %v6822 = vrot.slane %v5527, 7
    %v6823 = vrot.slane %v6822, 2
    %v6824 = vrot.slane %v5535, 7
    %v6825 = vrot.slane %v6824, 2
    %v6826 = vrot.slane %v5534, 7
    %v6827 = vrot.slane %v6826, 2
    %v6828 = vrot.slane %v5536, 7
    %v6829 = vrot.slane %v6828, 2
    %v6830 = vrot.slane %v5544, 7
    %v6831 = vrot.slane %v6830, 2
    %v6832 = vrot.slane %v5552, 7
    %v6833 = vrot.slane %v6832, 2
    %v6834 = vrot.slane %v5551, 7
    %v6835 = vrot.slane %v6834, 2
    %v6836 = vrot.slane %v5553, 7
    %v6837 = vrot.slane %v6836, 2
    %v6838 = vrot.slane %v5595, 7
    %v6839 = vrot.slane %v6838, 2
    %v6840 = vrot.slane %v5603, 7
    %v6841 = vrot.slane %v6840, 2
    %v6842 = vrot.slane %v5602, 7
    %v6843 = vrot.slane %v6842, 2
    %v6844 = vrot.slane %v5604, 7
    %v6845 = vrot.slane %v6844, 2
    %v6846 = vrot.slane %v5612, 7
    %v6847 = vrot.slane %v6846, 2
    %v6848 = vrot.slane %v5620, 7
    %v6849 = vrot.slane %v6848, 2
    %v6850 = vrot.slane %v5619, 7
    %v6851 = vrot.slane %v6850, 2
    %v6852 = vrot.slane %v5621, 7
    %v6853 = vrot.slane %v6852, 2
    %v6854 = vrot.slane %v5663, 7
    %v6855 = vrot.slane %v6854, 2
    %v6856 = vrot.slane %v5671, 7
    %v6857 = vrot.slane %v6856, 2
    %v6858 = vrot.slane %v5670, 7
    %v6859 = vrot.slane %v6858, 2
    %v6860 = vrot.slane %v5672, 7
    %v6861 = vrot.slane %v6860, 2
    %v6862 = vrot.slane %v5680, 7
    %v6863 = vrot.slane %v6862, 2
    %v6864 = vrot.slane %v5688, 7
    %v6865 = vrot.slane %v6864, 2
    %v6866 = vrot.slane %v5687, 7
    %v6867 = vrot.slane %v6866, 2
    %v6868 = vrot.slane %v5689, 7
    %v6869 = vrot.slane %v6868, 2
    %v6870 = vrot.slane %v5731, 7
    %v6871 = vrot.slane %v6870, 2
    %v6872 = vrot.slane %v5739, 7
    %v6873 = vrot.slane %v6872, 2
    %v6874 = vrot.slane %v5738, 7
    %v6875 = vrot.slane %v6874, 2
    %v6876 = vrot.slane %v5740, 7
    %v6877 = vrot.slane %v6876, 2
    %v6878 = vrot.slane %v5748, 7
    %v6879 = vrot.slane %v6878, 2
    %v6880 = vrot.slane %v5756, 7
    %v6881 = vrot.slane %v6880, 2
    %v6882 = vrot.slane %v5755, 7
    %v6883 = vrot.slane %v6882, 2
    %v6884 = vrot.slane %v5757, 7
    %v6885 = vrot.slane %v6884, 2
    %v6886 = vrot.slane %v5799, 7
    %v6887 = vrot.slane %v6886, 2
    %v6888 = vrot.slane %v5807, 7
    %v6889 = vrot.slane %v6888, 2
    %v6890 = vrot.slane %v5806, 7
    %v6891 = vrot.slane %v6890, 2
    %v6892 = vrot.slane %v5808, 7
    %v6893 = vrot.slane %v6892, 2
    %v6894 = vrot.slane %v5816, 7
    %v6895 = vrot.slane %v6894, 2
    %v6896 = vrot.slane %v5824, 7
    %v6897 = vrot.slane %v6896, 2
    %v6898 = vrot.slane %v5823, 7
    %v6899 = vrot.slane %v6898, 2
    %v6900 = vrot.slane %v5825, 7
    %v6901 = vrot.slane %v6900, 2
    %v6902 = vrot.slane %v5867, 7
    %v6903 = vrot.slane %v6902, 2
    %v6904 = vrot.slane %v5875, 7
    %v6905 = vrot.slane %v6904, 2
    %v6906 = vrot.slane %v5874, 7
    %v6907 = vrot.slane %v6906, 2
    %v6908 = vrot.slane %v5876, 7
    %v6909 = vrot.slane %v6908, 2
    %v6910 = vrot.slane %v5884, 7
    %v6911 = vrot.slane %v6910, 2
    %v6912 = vrot.slane %v5892, 7
    %v6913 = vrot.slane %v6912, 2
    %v6914 = vrot.slane %v5891, 7
    %v6915 = vrot.slane %v6914, 2
    %v6916 = vrot.slane %v5893, 7
    %v6917 = vrot.slane %v6916, 2
    %v7046 = vmax.f32 %v4847, %v6663
    %v7047 = vmax.f32 %v4855, %v6665
    %v7048 = vmax.f32 %v4854, %v6667
    %v7049 = vmax.f32 %v4856, %v6669
    %v7050 = vmax.f32 %v4864, %v6671
    %v7051 = vmax.f32 %v4872, %v6673
    %v7052 = vmax.f32 %v4871, %v6675
    %v7053 = vmax.f32 %v4873, %v6677
    %v7054 = vmax.f32 %v4915, %v6679
    %v7055 = vmax.f32 %v4923, %v6681
    %v7056 = vmax.f32 %v4922, %v6683
    %v7057 = vmax.f32 %v4924, %v6685
    %v7058 = vmax.f32 %v4932, %v6687
    %v7059 = vmax.f32 %v4940, %v6689
    %v7060 = vmax.f32 %v4939, %v6691
    %v7061 = vmax.f32 %v4941, %v6693
    %v7062 = vmax.f32 %v4983, %v6695
    %v7063 = vmax.f32 %v4991, %v6697
    %v7064 = vmax.f32 %v4990, %v6699
    %v7065 = vmax.f32 %v4992, %v6701
    %v7066 = vmax.f32 %v5000, %v6703
    %v7067 = vmax.f32 %v5008, %v6705
    %v7068 = vmax.f32 %v5007, %v6707
    %v7069 = vmax.f32 %v5009, %v6709
    %v7070 = vmax.f32 %v5051, %v6711
    %v7071 = vmax.f32 %v5059, %v6713
    %v7072 = vmax.f32 %v5058, %v6715
    %v7073 = vmax.f32 %v5060, %v6717
    %v7074 = vmax.f32 %v5068, %v6719
    %v7075 = vmax.f32 %v5076, %v6721
    %v7076 = vmax.f32 %v5075, %v6723
    %v7077 = vmax.f32 %v5077, %v6725
    %v7078 = vmax.f32 %v5119, %v6727
    %v7079 = vmax.f32 %v5127, %v6729
    %v7080 = vmax.f32 %v5126, %v6731
    %v7081 = vmax.f32 %v5128, %v6733
    %v7082 = vmax.f32 %v5136, %v6735
    %v7083 = vmax.f32 %v5144, %v6737
    %v7084 = vmax.f32 %v5143, %v6739
    %v7085 = vmax.f32 %v5145, %v6741
    %v7086 = vmax.f32 %v5187, %v6743
    %v7087 = vmax.f32 %v5195, %v6745
    %v7088 = vmax.f32 %v5194, %v6747
    %v7089 = vmax.f32 %v5196, %v6749
    %v7090 = vmax.f32 %v5204, %v6751
    %v7091 = vmax.f32 %v5212, %v6753
    %v7092 = vmax.f32 %v5211, %v6755
    %v7093 = vmax.f32 %v5213, %v6757
    %v7094 = vmax.f32 %v5255, %v6759
    %v7095 = vmax.f32 %v5263, %v6761
    %v7096 = vmax.f32 %v5262, %v6763
    %v7097 = vmax.f32 %v5264, %v6765
    %v7098 = vmax.f32 %v5272, %v6767
    %v7099 = vmax.f32 %v5280, %v6769
    %v7100 = vmax.f32 %v5279, %v6771
    %v7101 = vmax.f32 %v5281, %v6773
    %v7102 = vmax.f32 %v5323, %v6775
    %v7103 = vmax.f32 %v5331, %v6777
    %v7104 = vmax.f32 %v5330, %v6779
    %v7105 = vmax.f32 %v5332, %v6781
    %v7106 = vmax.f32 %v5340, %v6783
    %v7107 = vmax.f32 %v5348, %v6785
    %v7108 = vmax.f32 %v5347, %v6787
    %v7109 = vmax.f32 %v5349, %v6789
    %v7110 = vmax.f32 %v5391, %v6791
    %v7111 = vmax.f32 %v5399, %v6793
    %v7112 = vmax.f32 %v5398, %v6795
    %v7113 = vmax.f32 %v5400, %v6797
    %v7114 = vmax.f32 %v5408, %v6799
    %v7115 = vmax.f32 %v5416, %v6801
    %v7116 = vmax.f32 %v5415, %v6803
    %v7117 = vmax.f32 %v5417, %v6805
    %v7118 = vmax.f32 %v5459, %v6807
    %v7119 = vmax.f32 %v5467, %v6809
    %v7120 = vmax.f32 %v5466, %v6811
    %v7121 = vmax.f32 %v5468, %v6813
    %v7122 = vmax.f32 %v5476, %v6815
    %v7123 = vmax.f32 %v5484, %v6817
    %v7124 = vmax.f32 %v5483, %v6819
    %v7125 = vmax.f32 %v5485, %v6821
    %v7126 = vmax.f32 %v5527, %v6823
    %v7127 = vmax.f32 %v5535, %v6825
    %v7128 = vmax.f32 %v5534, %v6827
    %v7129 = vmax.f32 %v5536, %v6829
    %v7130 = vmax.f32 %v5544, %v6831
    %v7131 = vmax.f32 %v5552, %v6833
    %v7132 = vmax.f32 %v5551, %v6835
    %v7133 = vmax.f32 %v5553, %v6837
    %v7134 = vmax.f32 %v5595, %v6839
    %v7135 = vmax.f32 %v5603, %v6841
    %v7136 = vmax.f32 %v5602, %v6843
    %v7137 = vmax.f32 %v5604, %v6845
    %v7138 = vmax.f32 %v5612, %v6847
    %v7139 = vmax.f32 %v5620, %v6849
    %v7140 = vmax.f32 %v5619, %v6851
    %v7141 = vmax.f32 %v5621, %v6853
    %v7142 = vmax.f32 %v5663, %v6855
    %v7143 = vmax.f32 %v5671, %v6857
    %v7144 = vmax.f32 %v5670, %v6859
    %v7145 = vmax.f32 %v5672, %v6861
    %v7146 = vmax.f32 %v5680, %v6863
    %v7147 = vmax.f32 %v5688, %v6865
    %v7148 = vmax.f32 %v5687, %v6867
    %v7149 = vmax.f32 %v5689, %v6869
    %v7150 = vmax.f32 %v5731, %v6871
    %v7151 = vmax.f32 %v5739, %v6873
    %v7152 = vmax.f32 %v5738, %v6875
    %v7153 = vmax.f32 %v5740, %v6877
    %v7154 = vmax.f32 %v5748, %v6879
    %v7155 = vmax.f32 %v5756, %v6881
    %v7156 = vmax.f32 %v5755, %v6883
    %v7157 = vmax.f32 %v5757, %v6885
    %v7158 = vmax.f32 %v5799, %v6887
    %v7159 = vmax.f32 %v5807, %v6889
    %v7160 = vmax.f32 %v5806, %v6891
    %v7161 = vmax.f32 %v5808, %v6893
    %v7162 = vmax.f32 %v5816, %v6895
    %v7163 = vmax.f32 %v5824, %v6897
    %v7164 = vmax.f32 %v5823, %v6899
    %v7165 = vmax.f32 %v5825, %v6901
    %v7166 = vmax.f32 %v5867, %v6903
    %v7167 = vmax.f32 %v5875, %v6905
    %v7168 = vmax.f32 %v5874, %v6907
    %v7169 = vmax.f32 %v5876, %v6909
    %v7170 = vmax.f32 %v5884, %v6911
    %v7171 = vmax.f32 %v5892, %v6913
    %v7172 = vmax.f32 %v5891, %v6915
    %v7173 = vmax.f32 %v5893, %v6917
    %v7174 = vmax.f32 %v6534, %v7046
    %v7175 = vmax.f32 %v6535, %v7047
    %v7176 = vmax.f32 %v6536, %v7048
    %v7177 = vmax.f32 %v6537, %v7049
    %v7178 = vmax.f32 %v6538, %v7050
    %v7179 = vmax.f32 %v6539, %v7051
    %v7180 = vmax.f32 %v6540, %v7052
    %v7181 = vmax.f32 %v6541, %v7053
    %v7182 = vmax.f32 %v6542, %v7054
    %v7183 = vmax.f32 %v6543, %v7055
    %v7184 = vmax.f32 %v6544, %v7056
    %v7185 = vmax.f32 %v6545, %v7057
    %v7186 = vmax.f32 %v6546, %v7058
    %v7187 = vmax.f32 %v6547, %v7059
    %v7188 = vmax.f32 %v6548, %v7060
    %v7189 = vmax.f32 %v6549, %v7061
    %v7190 = vmax.f32 %v6550, %v7062
    %v7191 = vmax.f32 %v6551, %v7063
    %v7192 = vmax.f32 %v6552, %v7064
    %v7193 = vmax.f32 %v6553, %v7065
    %v7194 = vmax.f32 %v6554, %v7066
    %v7195 = vmax.f32 %v6555, %v7067
    %v7196 = vmax.f32 %v6556, %v7068
    %v7197 = vmax.f32 %v6557, %v7069
    %v7198 = vmax.f32 %v6558, %v7070
    %v7199 = vmax.f32 %v6559, %v7071
    %v7200 = vmax.f32 %v6560, %v7072
    %v7201 = vmax.f32 %v6561, %v7073
    %v7202 = vmax.f32 %v6562, %v7074
    %v7203 = vmax.f32 %v6563, %v7075
    %v7204 = vmax.f32 %v6564, %v7076
    %v7205 = vmax.f32 %v6565, %v7077
    %v7206 = vmax.f32 %v6566, %v7078
    %v7207 = vmax.f32 %v6567, %v7079
    %v7208 = vmax.f32 %v6568, %v7080
    %v7209 = vmax.f32 %v6569, %v7081
    %v7210 = vmax.f32 %v6570, %v7082
    %v7211 = vmax.f32 %v6571, %v7083
    %v7212 = vmax.f32 %v6572, %v7084
    %v7213 = vmax.f32 %v6573, %v7085
    %v7214 = vmax.f32 %v6574, %v7086
    %v7215 = vmax.f32 %v6575, %v7087
    %v7216 = vmax.f32 %v6576, %v7088
    %v7217 = vmax.f32 %v6577, %v7089
    %v7218 = vmax.f32 %v6578, %v7090
    %v7219 = vmax.f32 %v6579, %v7091
    %v7220 = vmax.f32 %v6580, %v7092
    %v7221 = vmax.f32 %v6581, %v7093
    %v7222 = vmax.f32 %v6582, %v7094
    %v7223 = vmax.f32 %v6583, %v7095
    %v7224 = vmax.f32 %v6584, %v7096
    %v7225 = vmax.f32 %v6585, %v7097
    %v7226 = vmax.f32 %v6586, %v7098
    %v7227 = vmax.f32 %v6587, %v7099
    %v7228 = vmax.f32 %v6588, %v7100
    %v7229 = vmax.f32 %v6589, %v7101
    %v7230 = vmax.f32 %v6590, %v7102
    %v7231 = vmax.f32 %v6591, %v7103
    %v7232 = vmax.f32 %v6592, %v7104
    %v7233 = vmax.f32 %v6593, %v7105
    %v7234 = vmax.f32 %v6594, %v7106
    %v7235 = vmax.f32 %v6595, %v7107
    %v7236 = vmax.f32 %v6596, %v7108
    %v7237 = vmax.f32 %v6597, %v7109
    %v7238 = vmax.f32 %v6598, %v7110
    %v7239 = vmax.f32 %v6599, %v7111
    %v7240 = vmax.f32 %v6600, %v7112
    %v7241 = vmax.f32 %v6601, %v7113
    %v7242 = vmax.f32 %v6602, %v7114
    %v7243 = vmax.f32 %v6603, %v7115
    %v7244 = vmax.f32 %v6604, %v7116
    %v7245 = vmax.f32 %v6605, %v7117
    %v7246 = vmax.f32 %v6606, %v7118
    %v7247 = vmax.f32 %v6607, %v7119
    %v7248 = vmax.f32 %v6608, %v7120
    %v7249 = vmax.f32 %v6609, %v7121
    %v7250 = vmax.f32 %v6610, %v7122
    %v7251 = vmax.f32 %v6611, %v7123
    %v7252 = vmax.f32 %v6612, %v7124
    %v7253 = vmax.f32 %v6613, %v7125
    %v7254 = vmax.f32 %v6614, %v7126
    %v7255 = vmax.f32 %v6615, %v7127
    %v7256 = vmax.f32 %v6616, %v7128
    %v7257 = vmax.f32 %v6617, %v7129
    %v7258 = vmax.f32 %v6618, %v7130
    %v7259 = vmax.f32 %v6619, %v7131
    %v7260 = vmax.f32 %v6620, %v7132
    %v7261 = vmax.f32 %v6621, %v7133
    %v7262 = vmax.f32 %v6622, %v7134
    %v7263 = vmax.f32 %v6623, %v7135
    %v7264 = vmax.f32 %v6624, %v7136
    %v7265 = vmax.f32 %v6625, %v7137
    %v7266 = vmax.f32 %v6626, %v7138
    %v7267 = vmax.f32 %v6627, %v7139
    %v7268 = vmax.f32 %v6628, %v7140
    %v7269 = vmax.f32 %v6629, %v7141
    %v7270 = vmax.f32 %v6630, %v7142
    %v7271 = vmax.f32 %v6631, %v7143
    %v7272 = vmax.f32 %v6632, %v7144
    %v7273 = vmax.f32 %v6633, %v7145
    %v7274 = vmax.f32 %v6634, %v7146
    %v7275 = vmax.f32 %v6635, %v7147
    %v7276 = vmax.f32 %v6636, %v7148
    %v7277 = vmax.f32 %v6637, %v7149
    %v7278 = vmax.f32 %v6638, %v7150
    %v7279 = vmax.f32 %v6639, %v7151
    %v7280 = vmax.f32 %v6640, %v7152
    %v7281 = vmax.f32 %v6641, %v7153
    %v7282 = vmax.f32 %v6642, %v7154
    %v7283 = vmax.f32 %v6643, %v7155
    %v7284 = vmax.f32 %v6644, %v7156
    %v7285 = vmax.f32 %v6645, %v7157
    %v7286 = vmax.f32 %v6646, %v7158
    %v7287 = vmax.f32 %v6647, %v7159
    %v7288 = vmax.f32 %v6648, %v7160
    %v7289 = vmax.f32 %v6649, %v7161
    %v7290 = vmax.f32 %v6650, %v7162
    %v7291 = vmax.f32 %v6651, %v7163
    %v7292 = vmax.f32 %v6652, %v7164
    %v7293 = vmax.f32 %v6653, %v7165
    %v7294 = vmax.f32 %v6654, %v7166
    %v7295 = vmax.f32 %v6655, %v7167
    %v7296 = vmax.f32 %v6656, %v7168
    %v7297 = vmax.f32 %v6657, %v7169
    %v7298 = vmax.f32 %v6658, %v7170
    %v7299 = vmax.f32 %v6659, %v7171
    %v7300 = vmax.f32 %v6660, %v7172
    %v7301 = vmax.f32 %v6661, %v7173
    %7302 = vst.msk [vmem:[#allocation3] sm:$0xff] %vm3222, 0.0
    %vm7303 = vcmask 254976
    %7304 = vst.msk [vmem:[#allocation3 + $0x8] sm:$0x3] %vm7303, 0.0
    %7305 = vst.msk [vmem:[#allocation3 + $0x10] sm:$0xff] %vm3222, 0.0
    %7306 = vst.msk [vmem:[#allocation3 + $0x18] sm:$0x3] %vm7303, 0.0
    %7307 = vst.msk [vmem:[#allocation3 + $0x20] sm:$0xff] %vm3222, 0.0
    %7308 = vst.msk [vmem:[#allocation3 + $0x28] sm:$0x3] %vm7303, 0.0
    %7309 = vst.msk [vmem:[#allocation3 + $0x30] sm:$0xff] %vm3222, 0.0
    %7310 = vst.msk [vmem:[#allocation3 + $0x38] sm:$0x3] %vm7303, 0.0
    %7311 = vst.msk [vmem:[#allocation3 + $0x40] sm:$0xff] %vm3222, 0.0
    %7312 = vst.msk [vmem:[#allocation3 + $0x48] sm:$0x3] %vm7303, 0.0
    %7313 = vst.msk [vmem:[#allocation3 + $0x50] sm:$0xff] %vm3222, 0.0
    %7314 = vst.msk [vmem:[#allocation3 + $0x58] sm:$0x3] %vm7303, 0.0
    %7315 = vst.msk [vmem:[#allocation3 + $0x60] sm:$0xff] %vm3222, 0.0
    %7316 = vst.msk [vmem:[#allocation3 + $0x68] sm:$0x3] %vm7303, 0.0
    %7317 = vst.msk [vmem:[#allocation3 + $0x70] sm:$0xff] %vm3222, 0.0
    %7318 = vst.msk [vmem:[#allocation3 + $0x78] sm:$0x3] %vm7303, 0.0
    %7319 = vst.msk [vmem:[#allocation3 + $0x80] sm:$0xff] %vm3222, 0.0
    %7320 = vst.msk [vmem:[#allocation3 + $0x88] sm:$0x3] %vm7303, 0.0
    %7321 = vst.msk [vmem:[#allocation3 + $0x90] sm:$0xff] %vm3222, 0.0
    %7322 = vst.msk [vmem:[#allocation3 + $0x98] sm:$0x3] %vm7303, 0.0
    %7323 = vst.msk [vmem:[#allocation3 + $0xa0] sm:$0xff] %vm3222, 0.0
    %7324 = vst.msk [vmem:[#allocation3 + $0xa8] sm:$0x3] %vm7303, 0.0
    %7325 = vst.msk [vmem:[#allocation3 + $0xb0] sm:$0xff] %vm3222, 0.0
    %7326 = vst.msk [vmem:[#allocation3 + $0xb8] sm:$0x3] %vm7303, 0.0
    %7327 = vst.msk [vmem:[#allocation3 + $0xc0] sm:$0xff] %vm3222, 0.0
    %7328 = vst.msk [vmem:[#allocation3 + $0xc8] sm:$0x3] %vm7303, 0.0
    %7329 = vst.msk [vmem:[#allocation3 + $0xd0] sm:$0xff] %vm3222, 0.0
    %7330 = vst.msk [vmem:[#allocation3 + $0xd8] sm:$0x3] %vm7303, 0.0
    %7331 = vst.msk [vmem:[#allocation3 + $0xe0] sm:$0xff] %vm3222, 0.0
    %7332 = vst.msk [vmem:[#allocation3 + $0xe8] sm:$0x3] %vm7303, 0.0
    %7333 = vst.msk [vmem:[#allocation3 + $0xf0] sm:$0xff] %vm3222, 0.0
    %7334 = vst.msk [vmem:[#allocation3 + $0xf8] sm:$0x3] %vm7303, 0.0
    %7335 = vst.msk [vmem:[#allocation3 + $0x100] sm:$0xff] %vm3222, 0.0
    %7336 = vst.msk [vmem:[#allocation3 + $0x108] sm:$0x3] %vm7303, 0.0
    %7337 = vst.msk [vmem:[#allocation3 + $0x110] sm:$0xff] %vm3222, 0.0
    %7338 = vst.msk [vmem:[#allocation3 + $0x118] sm:$0x3] %vm7303, 0.0
    %7339 = vst.msk [vmem:[#allocation3 + $0x120] sm:$0xff] %vm3222, 0.0
    %7340 = vst.msk [vmem:[#allocation3 + $0x128] sm:$0x3] %vm7303, 0.0
    %7341 = vst.msk [vmem:[#allocation3 + $0x130] sm:$0xff] %vm3222, 0.0
    %7342 = vst.msk [vmem:[#allocation3 + $0x138] sm:$0x3] %vm7303, 0.0
    %v7471 = vlaneseq
    %v7472 = vshrl.u32 %v7471, 7
    %v7473 = vsub.s32 0, %v7472
    %v7474 = vrot.slane %v7174, %v7473
    %v7475 = vlaneseq
    %v7476 = vshrl.u32 %v7475, 7
    %v7477 = vsub.s32 0, %v7476
    %v7478 = vrot.slane %v7175, %v7477
    %v7479 = vlaneseq
    %v7480 = vshrl.u32 %v7479, 7
    %v7481 = vsub.s32 0, %v7480
    %v7482 = vrot.slane %v7176, %v7481
    %v7483 = vlaneseq
    %v7484 = vshrl.u32 %v7483, 7
    %v7485 = vsub.s32 0, %v7484
    %v7486 = vrot.slane %v7177, %v7485
    %v7487 = vlaneseq
    %v7488 = vshrl.u32 %v7487, 7
    %v7489 = vsub.s32 0, %v7488
    %v7490 = vrot.slane %v7178, %v7489
    %v7491 = vlaneseq
    %v7492 = vshrl.u32 %v7491, 7
    %v7493 = vsub.s32 0, %v7492
    %v7494 = vrot.slane %v7179, %v7493
    %v7495 = vlaneseq
    %v7496 = vshrl.u32 %v7495, 7
    %v7497 = vsub.s32 0, %v7496
    %v7498 = vrot.slane %v7180, %v7497
    %v7499 = vlaneseq
    %v7500 = vshrl.u32 %v7499, 7
    %v7501 = vsub.s32 0, %v7500
    %v7502 = vrot.slane %v7181, %v7501
    %v7503 = vlaneseq
    %v7504 = vshrl.u32 %v7503, 7
    %v7505 = vsub.s32 0, %v7504
    %v7506 = vrot.slane %v7182, %v7505
    %v7507 = vlaneseq
    %v7508 = vshrl.u32 %v7507, 7
    %v7509 = vsub.s32 0, %v7508
    %v7510 = vrot.slane %v7183, %v7509
    %v7511 = vlaneseq
    %v7512 = vshrl.u32 %v7511, 7
    %v7513 = vsub.s32 0, %v7512
    %v7514 = vrot.slane %v7184, %v7513
    %v7515 = vlaneseq
    %v7516 = vshrl.u32 %v7515, 7
    %v7517 = vsub.s32 0, %v7516
    %v7518 = vrot.slane %v7185, %v7517
    %v7519 = vlaneseq
    %v7520 = vshrl.u32 %v7519, 7
    %v7521 = vsub.s32 0, %v7520
    %v7522 = vrot.slane %v7186, %v7521
    %v7523 = vlaneseq
    %v7524 = vshrl.u32 %v7523, 7
    %v7525 = vsub.s32 0, %v7524
    %v7526 = vrot.slane %v7187, %v7525
    %v7527 = vlaneseq
    %v7528 = vshrl.u32 %v7527, 7
    %v7529 = vsub.s32 0, %v7528
    %v7530 = vrot.slane %v7188, %v7529
    %v7531 = vlaneseq
    %v7532 = vshrl.u32 %v7531, 7
    %v7533 = vsub.s32 0, %v7532
    %v7534 = vrot.slane %v7189, %v7533
    %v7535 = vlaneseq
    %v7536 = vshrl.u32 %v7535, 7
    %v7537 = vsub.s32 0, %v7536
    %v7538 = vrot.slane %v7190, %v7537
    %v7539 = vlaneseq
    %v7540 = vshrl.u32 %v7539, 7
    %v7541 = vsub.s32 0, %v7540
    %v7542 = vrot.slane %v7191, %v7541
    %v7543 = vlaneseq
    %v7544 = vshrl.u32 %v7543, 7
    %v7545 = vsub.s32 0, %v7544
    %v7546 = vrot.slane %v7192, %v7545
    %v7547 = vlaneseq
    %v7548 = vshrl.u32 %v7547, 7
    %v7549 = vsub.s32 0, %v7548
    %v7550 = vrot.slane %v7193, %v7549
    %v7551 = vlaneseq
    %v7552 = vshrl.u32 %v7551, 7
    %v7553 = vsub.s32 0, %v7552
    %v7554 = vrot.slane %v7194, %v7553
    %v7555 = vlaneseq
    %v7556 = vshrl.u32 %v7555, 7
    %v7557 = vsub.s32 0, %v7556
    %v7558 = vrot.slane %v7195, %v7557
    %v7559 = vlaneseq
    %v7560 = vshrl.u32 %v7559, 7
    %v7561 = vsub.s32 0, %v7560
    %v7562 = vrot.slane %v7196, %v7561
    %v7563 = vlaneseq
    %v7564 = vshrl.u32 %v7563, 7
    %v7565 = vsub.s32 0, %v7564
    %v7566 = vrot.slane %v7197, %v7565
    %v7567 = vlaneseq
    %v7568 = vshrl.u32 %v7567, 7
    %v7569 = vsub.s32 0, %v7568
    %v7570 = vrot.slane %v7198, %v7569
    %v7571 = vlaneseq
    %v7572 = vshrl.u32 %v7571, 7
    %v7573 = vsub.s32 0, %v7572
    %v7574 = vrot.slane %v7199, %v7573
    %v7575 = vlaneseq
    %v7576 = vshrl.u32 %v7575, 7
    %v7577 = vsub.s32 0, %v7576
    %v7578 = vrot.slane %v7200, %v7577
    %v7579 = vlaneseq
    %v7580 = vshrl.u32 %v7579, 7
    %v7581 = vsub.s32 0, %v7580
    %v7582 = vrot.slane %v7201, %v7581
    %v7583 = vlaneseq
    %v7584 = vshrl.u32 %v7583, 7
    %v7585 = vsub.s32 0, %v7584
    %v7586 = vrot.slane %v7202, %v7585
    %v7587 = vlaneseq
    %v7588 = vshrl.u32 %v7587, 7
    %v7589 = vsub.s32 0, %v7588
    %v7590 = vrot.slane %v7203, %v7589
    %v7591 = vlaneseq
    %v7592 = vshrl.u32 %v7591, 7
    %v7593 = vsub.s32 0, %v7592
    %v7594 = vrot.slane %v7204, %v7593
    %v7595 = vlaneseq
    %v7596 = vshrl.u32 %v7595, 7
    %v7597 = vsub.s32 0, %v7596
    %v7598 = vrot.slane %v7205, %v7597
    %v7599 = vlaneseq
    %v7600 = vshrl.u32 %v7599, 7
    %v7601 = vsub.s32 0, %v7600
    %v7602 = vrot.slane %v7206, %v7601
    %v7603 = vlaneseq
    %v7604 = vshrl.u32 %v7603, 7
    %v7605 = vsub.s32 0, %v7604
    %v7606 = vrot.slane %v7207, %v7605
    %v7607 = vlaneseq
    %v7608 = vshrl.u32 %v7607, 7
    %v7609 = vsub.s32 0, %v7608
    %v7610 = vrot.slane %v7208, %v7609
    %v7611 = vlaneseq
    %v7612 = vshrl.u32 %v7611, 7
    %v7613 = vsub.s32 0, %v7612
    %v7614 = vrot.slane %v7209, %v7613
    %v7615 = vlaneseq
    %v7616 = vshrl.u32 %v7615, 7
    %v7617 = vsub.s32 0, %v7616
    %v7618 = vrot.slane %v7210, %v7617
    %v7619 = vlaneseq
    %v7620 = vshrl.u32 %v7619, 7
    %v7621 = vsub.s32 0, %v7620
    %v7622 = vrot.slane %v7211, %v7621
    %v7623 = vlaneseq
    %v7624 = vshrl.u32 %v7623, 7
    %v7625 = vsub.s32 0, %v7624
    %v7626 = vrot.slane %v7212, %v7625
    %v7627 = vlaneseq
    %v7628 = vshrl.u32 %v7627, 7
    %v7629 = vsub.s32 0, %v7628
    %v7630 = vrot.slane %v7213, %v7629
    %v7631 = vlaneseq
    %v7632 = vshrl.u32 %v7631, 7
    %v7633 = vsub.s32 0, %v7632
    %v7634 = vrot.slane %v7214, %v7633
    %v7635 = vlaneseq
    %v7636 = vshrl.u32 %v7635, 7
    %v7637 = vsub.s32 0, %v7636
    %v7638 = vrot.slane %v7215, %v7637
    %v7639 = vlaneseq
    %v7640 = vshrl.u32 %v7639, 7
    %v7641 = vsub.s32 0, %v7640
    %v7642 = vrot.slane %v7216, %v7641
    %v7643 = vlaneseq
    %v7644 = vshrl.u32 %v7643, 7
    %v7645 = vsub.s32 0, %v7644
    %v7646 = vrot.slane %v7217, %v7645
    %v7647 = vlaneseq
    %v7648 = vshrl.u32 %v7647, 7
    %v7649 = vsub.s32 0, %v7648
    %v7650 = vrot.slane %v7218, %v7649
    %v7651 = vlaneseq
    %v7652 = vshrl.u32 %v7651, 7
    %v7653 = vsub.s32 0, %v7652
    %v7654 = vrot.slane %v7219, %v7653
    %v7655 = vlaneseq
    %v7656 = vshrl.u32 %v7655, 7
    %v7657 = vsub.s32 0, %v7656
    %v7658 = vrot.slane %v7220, %v7657
    %v7659 = vlaneseq
    %v7660 = vshrl.u32 %v7659, 7
    %v7661 = vsub.s32 0, %v7660
    %v7662 = vrot.slane %v7221, %v7661
    %v7663 = vlaneseq
    %v7664 = vshrl.u32 %v7663, 7
    %v7665 = vsub.s32 0, %v7664
    %v7666 = vrot.slane %v7222, %v7665
    %v7667 = vlaneseq
    %v7668 = vshrl.u32 %v7667, 7
    %v7669 = vsub.s32 0, %v7668
    %v7670 = vrot.slane %v7223, %v7669
    %v7671 = vlaneseq
    %v7672 = vshrl.u32 %v7671, 7
    %v7673 = vsub.s32 0, %v7672
    %v7674 = vrot.slane %v7224, %v7673
    %v7675 = vlaneseq
    %v7676 = vshrl.u32 %v7675, 7
    %v7677 = vsub.s32 0, %v7676
    %v7678 = vrot.slane %v7225, %v7677
    %v7679 = vlaneseq
    %v7680 = vshrl.u32 %v7679, 7
    %v7681 = vsub.s32 0, %v7680
    %v7682 = vrot.slane %v7226, %v7681
    %v7683 = vlaneseq
    %v7684 = vshrl.u32 %v7683, 7
    %v7685 = vsub.s32 0, %v7684
    %v7686 = vrot.slane %v7227, %v7685
    %v7687 = vlaneseq
    %v7688 = vshrl.u32 %v7687, 7
    %v7689 = vsub.s32 0, %v7688
    %v7690 = vrot.slane %v7228, %v7689
    %v7691 = vlaneseq
    %v7692 = vshrl.u32 %v7691, 7
    %v7693 = vsub.s32 0, %v7692
    %v7694 = vrot.slane %v7229, %v7693
    %v7695 = vlaneseq
    %v7696 = vshrl.u32 %v7695, 7
    %v7697 = vsub.s32 0, %v7696
    %v7698 = vrot.slane %v7230, %v7697
    %v7699 = vlaneseq
    %v7700 = vshrl.u32 %v7699, 7
    %v7701 = vsub.s32 0, %v7700
    %v7702 = vrot.slane %v7231, %v7701
    %v7703 = vlaneseq
    %v7704 = vshrl.u32 %v7703, 7
    %v7705 = vsub.s32 0, %v7704
    %v7706 = vrot.slane %v7232, %v7705
    %v7707 = vlaneseq
    %v7708 = vshrl.u32 %v7707, 7
    %v7709 = vsub.s32 0, %v7708
    %v7710 = vrot.slane %v7233, %v7709
    %v7711 = vlaneseq
    %v7712 = vshrl.u32 %v7711, 7
    %v7713 = vsub.s32 0, %v7712
    %v7714 = vrot.slane %v7234, %v7713
    %v7715 = vlaneseq
    %v7716 = vshrl.u32 %v7715, 7
    %v7717 = vsub.s32 0, %v7716
    %v7718 = vrot.slane %v7235, %v7717
    %v7719 = vlaneseq
    %v7720 = vshrl.u32 %v7719, 7
    %v7721 = vsub.s32 0, %v7720
    %v7722 = vrot.slane %v7236, %v7721
    %v7723 = vlaneseq
    %v7724 = vshrl.u32 %v7723, 7
    %v7725 = vsub.s32 0, %v7724
    %v7726 = vrot.slane %v7237, %v7725
    %v7727 = vlaneseq
    %v7728 = vshrl.u32 %v7727, 7
    %v7729 = vsub.s32 0, %v7728
    %v7730 = vrot.slane %v7238, %v7729
    %v7731 = vlaneseq
    %v7732 = vshrl.u32 %v7731, 7
    %v7733 = vsub.s32 0, %v7732
    %v7734 = vrot.slane %v7239, %v7733
    %v7735 = vlaneseq
    %v7736 = vshrl.u32 %v7735, 7
    %v7737 = vsub.s32 0, %v7736
    %v7738 = vrot.slane %v7240, %v7737
    %v7739 = vlaneseq
    %v7740 = vshrl.u32 %v7739, 7
    %v7741 = vsub.s32 0, %v7740
    %v7742 = vrot.slane %v7241, %v7741
    %v7743 = vlaneseq
    %v7744 = vshrl.u32 %v7743, 7
    %v7745 = vsub.s32 0, %v7744
    %v7746 = vrot.slane %v7242, %v7745
    %v7747 = vlaneseq
    %v7748 = vshrl.u32 %v7747, 7
    %v7749 = vsub.s32 0, %v7748
    %v7750 = vrot.slane %v7243, %v7749
    %v7751 = vlaneseq
    %v7752 = vshrl.u32 %v7751, 7
    %v7753 = vsub.s32 0, %v7752
    %v7754 = vrot.slane %v7244, %v7753
    %v7755 = vlaneseq
    %v7756 = vshrl.u32 %v7755, 7
    %v7757 = vsub.s32 0, %v7756
    %v7758 = vrot.slane %v7245, %v7757
    %v7759 = vlaneseq
    %v7760 = vshrl.u32 %v7759, 7
    %v7761 = vsub.s32 0, %v7760
    %v7762 = vrot.slane %v7246, %v7761
    %v7763 = vlaneseq
    %v7764 = vshrl.u32 %v7763, 7
    %v7765 = vsub.s32 0, %v7764
    %v7766 = vrot.slane %v7247, %v7765
    %v7767 = vlaneseq
    %v7768 = vshrl.u32 %v7767, 7
    %v7769 = vsub.s32 0, %v7768
    %v7770 = vrot.slane %v7248, %v7769
    %v7771 = vlaneseq
    %v7772 = vshrl.u32 %v7771, 7
    %v7773 = vsub.s32 0, %v7772
    %v7774 = vrot.slane %v7249, %v7773
    %v7775 = vlaneseq
    %v7776 = vshrl.u32 %v7775, 7
    %v7777 = vsub.s32 0, %v7776
    %v7778 = vrot.slane %v7250, %v7777
    %v7779 = vlaneseq
    %v7780 = vshrl.u32 %v7779, 7
    %v7781 = vsub.s32 0, %v7780
    %v7782 = vrot.slane %v7251, %v7781
    %v7783 = vlaneseq
    %v7784 = vshrl.u32 %v7783, 7
    %v7785 = vsub.s32 0, %v7784
    %v7786 = vrot.slane %v7252, %v7785
    %v7787 = vlaneseq
    %v7788 = vshrl.u32 %v7787, 7
    %v7789 = vsub.s32 0, %v7788
    %v7790 = vrot.slane %v7253, %v7789
    %v7791 = vlaneseq
    %v7792 = vshrl.u32 %v7791, 7
    %v7793 = vsub.s32 0, %v7792
    %v7794 = vrot.slane %v7254, %v7793
    %v7795 = vlaneseq
    %v7796 = vshrl.u32 %v7795, 7
    %v7797 = vsub.s32 0, %v7796
    %v7798 = vrot.slane %v7255, %v7797
    %v7799 = vlaneseq
    %v7800 = vshrl.u32 %v7799, 7
    %v7801 = vsub.s32 0, %v7800
    %v7802 = vrot.slane %v7256, %v7801
    %v7803 = vlaneseq
    %v7804 = vshrl.u32 %v7803, 7
    %v7805 = vsub.s32 0, %v7804
    %v7806 = vrot.slane %v7257, %v7805
    %v7807 = vlaneseq
    %v7808 = vshrl.u32 %v7807, 7
    %v7809 = vsub.s32 0, %v7808
    %v7810 = vrot.slane %v7258, %v7809
    %v7811 = vlaneseq
    %v7812 = vshrl.u32 %v7811, 7
    %v7813 = vsub.s32 0, %v7812
    %v7814 = vrot.slane %v7259, %v7813
    %v7815 = vlaneseq
    %v7816 = vshrl.u32 %v7815, 7
    %v7817 = vsub.s32 0, %v7816
    %v7818 = vrot.slane %v7260, %v7817
    %v7819 = vlaneseq
    %v7820 = vshrl.u32 %v7819, 7
    %v7821 = vsub.s32 0, %v7820
    %v7822 = vrot.slane %v7261, %v7821
    %v7823 = vlaneseq
    %v7824 = vshrl.u32 %v7823, 7
    %v7825 = vsub.s32 0, %v7824
    %v7826 = vrot.slane %v7262, %v7825
    %v7827 = vlaneseq
    %v7828 = vshrl.u32 %v7827, 7
    %v7829 = vsub.s32 0, %v7828
    %v7830 = vrot.slane %v7263, %v7829
    %v7831 = vlaneseq
    %v7832 = vshrl.u32 %v7831, 7
    %v7833 = vsub.s32 0, %v7832
    %v7834 = vrot.slane %v7264, %v7833
    %v7835 = vlaneseq
    %v7836 = vshrl.u32 %v7835, 7
    %v7837 = vsub.s32 0, %v7836
    %v7838 = vrot.slane %v7265, %v7837
    %v7839 = vlaneseq
    %v7840 = vshrl.u32 %v7839, 7
    %v7841 = vsub.s32 0, %v7840
    %v7842 = vrot.slane %v7266, %v7841
    %v7843 = vlaneseq
    %v7844 = vshrl.u32 %v7843, 7
    %v7845 = vsub.s32 0, %v7844
    %v7846 = vrot.slane %v7267, %v7845
    %v7847 = vlaneseq
    %v7848 = vshrl.u32 %v7847, 7
    %v7849 = vsub.s32 0, %v7848
    %v7850 = vrot.slane %v7268, %v7849
    %v7851 = vlaneseq
    %v7852 = vshrl.u32 %v7851, 7
    %v7853 = vsub.s32 0, %v7852
    %v7854 = vrot.slane %v7269, %v7853
    %v7855 = vlaneseq
    %v7856 = vshrl.u32 %v7855, 7
    %v7857 = vsub.s32 0, %v7856
    %v7858 = vrot.slane %v7270, %v7857
    %v7859 = vlaneseq
    %v7860 = vshrl.u32 %v7859, 7
    %v7861 = vsub.s32 0, %v7860
    %v7862 = vrot.slane %v7271, %v7861
    %v7863 = vlaneseq
    %v7864 = vshrl.u32 %v7863, 7
    %v7865 = vsub.s32 0, %v7864
    %v7866 = vrot.slane %v7272, %v7865
    %v7867 = vlaneseq
    %v7868 = vshrl.u32 %v7867, 7
    %v7869 = vsub.s32 0, %v7868
    %v7870 = vrot.slane %v7273, %v7869
    %v7871 = vlaneseq
    %v7872 = vshrl.u32 %v7871, 7
    %v7873 = vsub.s32 0, %v7872
    %v7874 = vrot.slane %v7274, %v7873
    %v7875 = vlaneseq
    %v7876 = vshrl.u32 %v7875, 7
    %v7877 = vsub.s32 0, %v7876
    %v7878 = vrot.slane %v7275, %v7877
    %v7879 = vlaneseq
    %v7880 = vshrl.u32 %v7879, 7
    %v7881 = vsub.s32 0, %v7880
    %v7882 = vrot.slane %v7276, %v7881
    %v7883 = vlaneseq
    %v7884 = vshrl.u32 %v7883, 7
    %v7885 = vsub.s32 0, %v7884
    %v7886 = vrot.slane %v7277, %v7885
    %v7887 = vlaneseq
    %v7888 = vshrl.u32 %v7887, 7
    %v7889 = vsub.s32 0, %v7888
    %v7890 = vrot.slane %v7278, %v7889
    %v7891 = vlaneseq
    %v7892 = vshrl.u32 %v7891, 7
    %v7893 = vsub.s32 0, %v7892
    %v7894 = vrot.slane %v7279, %v7893
    %v7895 = vlaneseq
    %v7896 = vshrl.u32 %v7895, 7
    %v7897 = vsub.s32 0, %v7896
    %v7898 = vrot.slane %v7280, %v7897
    %v7899 = vlaneseq
    %v7900 = vshrl.u32 %v7899, 7
    %v7901 = vsub.s32 0, %v7900
    %v7902 = vrot.slane %v7281, %v7901
    %v7903 = vlaneseq
    %v7904 = vshrl.u32 %v7903, 7
    %v7905 = vsub.s32 0, %v7904
    %v7906 = vrot.slane %v7282, %v7905
    %v7907 = vlaneseq
    %v7908 = vshrl.u32 %v7907, 7
    %v7909 = vsub.s32 0, %v7908
    %v7910 = vrot.slane %v7283, %v7909
    %v7911 = vlaneseq
    %v7912 = vshrl.u32 %v7911, 7
    %v7913 = vsub.s32 0, %v7912
    %v7914 = vrot.slane %v7284, %v7913
    %v7915 = vlaneseq
    %v7916 = vshrl.u32 %v7915, 7
    %v7917 = vsub.s32 0, %v7916
    %v7918 = vrot.slane %v7285, %v7917
    %v7919 = vlaneseq
    %v7920 = vshrl.u32 %v7919, 7
    %v7921 = vsub.s32 0, %v7920
    %v7922 = vrot.slane %v7286, %v7921
    %v7923 = vlaneseq
    %v7924 = vshrl.u32 %v7923, 7
    %v7925 = vsub.s32 0, %v7924
    %v7926 = vrot.slane %v7287, %v7925
    %v7927 = vlaneseq
    %v7928 = vshrl.u32 %v7927, 7
    %v7929 = vsub.s32 0, %v7928
    %v7930 = vrot.slane %v7288, %v7929
    %v7931 = vlaneseq
    %v7932 = vshrl.u32 %v7931, 7
    %v7933 = vsub.s32 0, %v7932
    %v7934 = vrot.slane %v7289, %v7933
    %v7935 = vlaneseq
    %v7936 = vshrl.u32 %v7935, 7
    %v7937 = vsub.s32 0, %v7936
    %v7938 = vrot.slane %v7290, %v7937
    %v7939 = vlaneseq
    %v7940 = vshrl.u32 %v7939, 7
    %v7941 = vsub.s32 0, %v7940
    %v7942 = vrot.slane %v7291, %v7941
    %v7943 = vlaneseq
    %v7944 = vshrl.u32 %v7943, 7
    %v7945 = vsub.s32 0, %v7944
    %v7946 = vrot.slane %v7292, %v7945
    %v7947 = vlaneseq
    %v7948 = vshrl.u32 %v7947, 7
    %v7949 = vsub.s32 0, %v7948
    %v7950 = vrot.slane %v7293, %v7949
    %v7951 = vlaneseq
    %v7952 = vshrl.u32 %v7951, 7
    %v7953 = vsub.s32 0, %v7952
    %v7954 = vrot.slane %v7294, %v7953
    %v7955 = vlaneseq
    %v7956 = vshrl.u32 %v7955, 7
    %v7957 = vsub.s32 0, %v7956
    %v7958 = vrot.slane %v7295, %v7957
    %v7959 = vlaneseq
    %v7960 = vshrl.u32 %v7959, 7
    %v7961 = vsub.s32 0, %v7960
    %v7962 = vrot.slane %v7296, %v7961
    %v7963 = vlaneseq
    %v7964 = vshrl.u32 %v7963, 7
    %v7965 = vsub.s32 0, %v7964
    %v7966 = vrot.slane %v7297, %v7965
    %v7967 = vlaneseq
    %v7968 = vshrl.u32 %v7967, 7
    %v7969 = vsub.s32 0, %v7968
    %v7970 = vrot.slane %v7298, %v7969
    %v7971 = vlaneseq
    %v7972 = vshrl.u32 %v7971, 7
    %v7973 = vsub.s32 0, %v7972
    %v7974 = vrot.slane %v7299, %v7973
    %v7975 = vlaneseq
    %v7976 = vshrl.u32 %v7975, 7
    %v7977 = vsub.s32 0, %v7976
    %v7978 = vrot.slane %v7300, %v7977
    %v7979 = vlaneseq
    %v7980 = vshrl.u32 %v7979, 7
    %v7981 = vsub.s32 0, %v7980
    %v7982 = vrot.slane %v7301, %v7981
    %vm7983 = vcmask 1041409
    %v7984 = vsel %vm7983, %v7478, %v7474
    %vm7985 = vcmask 1042434
    %v7986 = vsel %vm7985, %v7482, %v7984
    %vm7987 = vcmask 1043459
    %v7988 = vsel %vm7987, %v7486, %v7986
    %vm7989 = vcmask 1044484
    %v7990 = vsel %vm7989, %v7490, %v7988
    %vm7991 = vcmask 1045509
    %v7992 = vsel %vm7991, %v7494, %v7990
    %vm7993 = vcmask 1046534
    %v7994 = vsel %vm7993, %v7498, %v7992
    %vm7995 = vcmask 1047559
    %v7996 = vsel %vm7995, %v7502, %v7994
    %v7997 = vsel %vm7983, %v7510, %v7506
    %v7998 = vsel %vm7985, %v7514, %v7997
    %v7999 = vsel %vm7987, %v7518, %v7998
    %v8000 = vsel %vm7989, %v7522, %v7999
    %v8001 = vsel %vm7991, %v7526, %v8000
    %v8002 = vsel %vm7993, %v7530, %v8001
    %v8003 = vsel %vm7995, %v7534, %v8002
    %v8004 = vsel %vm7983, %v7542, %v7538
    %v8005 = vsel %vm7985, %v7546, %v8004
    %v8006 = vsel %vm7987, %v7550, %v8005
    %v8007 = vsel %vm7989, %v7554, %v8006
    %v8008 = vsel %vm7991, %v7558, %v8007
    %v8009 = vsel %vm7993, %v7562, %v8008
    %v8010 = vsel %vm7995, %v7566, %v8009
    %v8011 = vsel %vm7983, %v7574, %v7570
    %v8012 = vsel %vm7985, %v7578, %v8011
    %v8013 = vsel %vm7987, %v7582, %v8012
    %v8014 = vsel %vm7989, %v7586, %v8013
    %v8015 = vsel %vm7991, %v7590, %v8014
    %v8016 = vsel %vm7993, %v7594, %v8015
    %v8017 = vsel %vm7995, %v7598, %v8016
    %v8018 = vsel %vm7983, %v7606, %v7602
    %v8019 = vsel %vm7985, %v7610, %v8018
    %v8020 = vsel %vm7987, %v7614, %v8019
    %v8021 = vsel %vm7989, %v7618, %v8020
    %v8022 = vsel %vm7991, %v7622, %v8021
    %v8023 = vsel %vm7993, %v7626, %v8022
    %v8024 = vsel %vm7995, %v7630, %v8023
    %v8025 = vsel %vm7983, %v7638, %v7634
    %v8026 = vsel %vm7985, %v7642, %v8025
    %v8027 = vsel %vm7987, %v7646, %v8026
    %v8028 = vsel %vm7989, %v7650, %v8027
    %v8029 = vsel %vm7991, %v7654, %v8028
    %v8030 = vsel %vm7993, %v7658, %v8029
    %v8031 = vsel %vm7995, %v7662, %v8030
    %v8032 = vsel %vm7983, %v7670, %v7666
    %v8033 = vsel %vm7985, %v7674, %v8032
    %v8034 = vsel %vm7987, %v7678, %v8033
    %v8035 = vsel %vm7989, %v7682, %v8034
    %v8036 = vsel %vm7991, %v7686, %v8035
    %v8037 = vsel %vm7993, %v7690, %v8036
    %v8038 = vsel %vm7995, %v7694, %v8037
    %v8039 = vsel %vm7983, %v7702, %v7698
    %v8040 = vsel %vm7985, %v7706, %v8039
    %v8041 = vsel %vm7987, %v7710, %v8040
    %v8042 = vsel %vm7989, %v7714, %v8041
    %v8043 = vsel %vm7991, %v7718, %v8042
    %v8044 = vsel %vm7993, %v7722, %v8043
    %v8045 = vsel %vm7995, %v7726, %v8044
    %v8046 = vsel %vm7983, %v7734, %v7730
    %v8047 = vsel %vm7985, %v7738, %v8046
    %v8048 = vsel %vm7987, %v7742, %v8047
    %v8049 = vsel %vm7989, %v7746, %v8048
    %v8050 = vsel %vm7991, %v7750, %v8049
    %v8051 = vsel %vm7993, %v7754, %v8050
    %v8052 = vsel %vm7995, %v7758, %v8051
    %v8053 = vsel %vm7983, %v7766, %v7762
    %v8054 = vsel %vm7985, %v7770, %v8053
    %v8055 = vsel %vm7987, %v7774, %v8054
    %v8056 = vsel %vm7989, %v7778, %v8055
    %v8057 = vsel %vm7991, %v7782, %v8056
    %v8058 = vsel %vm7993, %v7786, %v8057
    %v8059 = vsel %vm7995, %v7790, %v8058
    %v8060 = vsel %vm7983, %v7798, %v7794
    %v8061 = vsel %vm7985, %v7802, %v8060
    %v8062 = vsel %vm7987, %v7806, %v8061
    %v8063 = vsel %vm7989, %v7810, %v8062
    %v8064 = vsel %vm7991, %v7814, %v8063
    %v8065 = vsel %vm7993, %v7818, %v8064
    %v8066 = vsel %vm7995, %v7822, %v8065
    %v8067 = vsel %vm7983, %v7830, %v7826
    %v8068 = vsel %vm7985, %v7834, %v8067
    %v8069 = vsel %vm7987, %v7838, %v8068
    %v8070 = vsel %vm7989, %v7842, %v8069
    %v8071 = vsel %vm7991, %v7846, %v8070
    %v8072 = vsel %vm7993, %v7850, %v8071
    %v8073 = vsel %vm7995, %v7854, %v8072
    %v8074 = vsel %vm7983, %v7862, %v7858
    %v8075 = vsel %vm7985, %v7866, %v8074
    %v8076 = vsel %vm7987, %v7870, %v8075
    %v8077 = vsel %vm7989, %v7874, %v8076
    %v8078 = vsel %vm7991, %v7878, %v8077
    %v8079 = vsel %vm7993, %v7882, %v8078
    %v8080 = vsel %vm7995, %v7886, %v8079
    %v8081 = vsel %vm7983, %v7894, %v7890
    %v8082 = vsel %vm7985, %v7898, %v8081
    %v8083 = vsel %vm7987, %v7902, %v8082
    %v8084 = vsel %vm7989, %v7906, %v8083
    %v8085 = vsel %vm7991, %v7910, %v8084
    %v8086 = vsel %vm7993, %v7914, %v8085
    %v8087 = vsel %vm7995, %v7918, %v8086
    %v8088 = vsel %vm7983, %v7926, %v7922
    %v8089 = vsel %vm7985, %v7930, %v8088
    %v8090 = vsel %vm7987, %v7934, %v8089
    %v8091 = vsel %vm7989, %v7938, %v8090
    %v8092 = vsel %vm7991, %v7942, %v8091
    %v8093 = vsel %vm7993, %v7946, %v8092
    %v8094 = vsel %vm7995, %v7950, %v8093
    %v8095 = vsel %vm7983, %v7958, %v7954
    %v8096 = vsel %vm7985, %v7962, %v8095
    %v8097 = vsel %vm7987, %v7966, %v8096
    %v8098 = vsel %vm7989, %v7970, %v8097
    %v8099 = vsel %vm7991, %v7974, %v8098
    %v8100 = vsel %vm7993, %v7978, %v8099
    %v8101 = vsel %vm7995, %v7982, %v8100
    %s8118 = scalar_lea.vmem [#allocation3], 16
    %8119 = vst.msk [vmem:[%s8118 + $0x1] sm:$0xff] %vm3222, %v7996
    %8120 = vst.msk [vmem:[%s8118 + $0x11] sm:$0xff] %vm3222, %v8003
    %8121 = vst.msk [vmem:[%s8118 + $0x21] sm:$0xff] %vm3222, %v8010
    %8122 = vst.msk [vmem:[%s8118 + $0x31] sm:$0xff] %vm3222, %v8017
    %8123 = vst.msk [vmem:[%s8118 + $0x41] sm:$0xff] %vm3222, %v8024
    %8124 = vst.msk [vmem:[%s8118 + $0x51] sm:$0xff] %vm3222, %v8031
    %8125 = vst.msk [vmem:[%s8118 + $0x61] sm:$0xff] %vm3222, %v8038
    %8126 = vst.msk [vmem:[%s8118 + $0x71] sm:$0xff] %vm3222, %v8045
    %8127 = vst.msk [vmem:[%s8118 + $0xa1] sm:$0xff] %vm3222, %v8052
    %8128 = vst.msk [vmem:[%s8118 + $0xb1] sm:$0xff] %vm3222, %v8059
    %8129 = vst.msk [vmem:[%s8118 + $0xc1] sm:$0xff] %vm3222, %v8066
    %8130 = vst.msk [vmem:[%s8118 + $0xd1] sm:$0xff] %vm3222, %v8073
    %8131 = vst.msk [vmem:[%s8118 + $0xe1] sm:$0xff] %vm3222, %v8080
    %8132 = vst.msk [vmem:[%s8118 + $0xf1] sm:$0xff] %vm3222, %v8087
    %8133 = vst.msk [vmem:[%s8118 + $0x101] sm:$0xff] %vm3222, %v8094
    %8134 = vst.msk [vmem:[%s8118 + $0x111] sm:$0xff] %vm3222, %v8101
    %v8135 = vld [vmem:[#allocation3] sm:$0xff]
    %v8136 = vld [vmem:[#allocation3 + $0x10] sm:$0xff]
    %v8137 = vld [vmem:[#allocation3 + $0x20] sm:$0xff]
    %v8138 = vld [vmem:[#allocation3 + $0x30] sm:$0xff]
    %v8139 = vld [vmem:[#allocation3 + $0x40] sm:$0xff]
    %v8140 = vld [vmem:[#allocation3 + $0x50] sm:$0xff]
    %v8141 = vld [vmem:[#allocation3 + $0x60] sm:$0xff]
    %v8142 = vld [vmem:[#allocation3 + $0x70] sm:$0xff]
    %v8143 = vld [vmem:[#allocation3 + $0xa0] sm:$0xff]
    %v8144 = vld [vmem:[#allocation3 + $0xb0] sm:$0xff]
    %v8145 = vld [vmem:[#allocation3 + $0xc0] sm:$0xff]
    %v8146 = vld [vmem:[#allocation3 + $0xd0] sm:$0xff]
    %v8147 = vld [vmem:[#allocation3 + $0xe0] sm:$0xff]
    %v8148 = vld [vmem:[#allocation3 + $0xf0] sm:$0xff]
    %v8149 = vld [vmem:[#allocation3 + $0x100] sm:$0xff]
    %v8150 = vld [vmem:[#allocation3 + $0x110] sm:$0xff]
    %v8151 = vld [vmem:[#allocation3 + $0x1] sm:$0xff]
    %v8152 = vld [vmem:[#allocation3 + $0x11] sm:$0xff]
    %v8153 = vld [vmem:[#allocation3 + $0x21] sm:$0xff]
    %v8154 = vld [vmem:[#allocation3 + $0x31] sm:$0xff]
    %v8155 = vld [vmem:[#allocation3 + $0x41] sm:$0xff]
    %v8156 = vld [vmem:[#allocation3 + $0x51] sm:$0xff]
    %v8157 = vld [vmem:[#allocation3 + $0x61] sm:$0xff]
    %v8158 = vld [vmem:[#allocation3 + $0x71] sm:$0xff]
    %v8159 = vld [vmem:[#allocation3 + $0xa1] sm:$0xff]
    %v8160 = vld [vmem:[#allocation3 + $0xb1] sm:$0xff]
    %v8161 = vld [vmem:[#allocation3 + $0xc1] sm:$0xff]
    %v8162 = vld [vmem:[#allocation3 + $0xd1] sm:$0xff]
    %v8163 = vld [vmem:[#allocation3 + $0xe1] sm:$0xff]
    %v8164 = vld [vmem:[#allocation3 + $0xf1] sm:$0xff]
    %v8165 = vld [vmem:[#allocation3 + $0x101] sm:$0xff]
    %v8166 = vld [vmem:[#allocation3 + $0x111] sm:$0xff]
    %v8167 = vld [vmem:[#allocation3 + $0x2] sm:$0xff]
    %v8168 = vld [vmem:[#allocation3 + $0x12] sm:$0xff]
    %v8169 = vld [vmem:[#allocation3 + $0x22] sm:$0xff]
    %v8170 = vld [vmem:[#allocation3 + $0x32] sm:$0xff]
    %v8171 = vld [vmem:[#allocation3 + $0x42] sm:$0xff]
    %v8172 = vld [vmem:[#allocation3 + $0x52] sm:$0xff]
    %v8173 = vld [vmem:[#allocation3 + $0x62] sm:$0xff]
    %v8174 = vld [vmem:[#allocation3 + $0x72] sm:$0xff]
    %v8175 = vld [vmem:[#allocation3 + $0xa2] sm:$0xff]
    %v8176 = vld [vmem:[#allocation3 + $0xb2] sm:$0xff]
    %v8177 = vld [vmem:[#allocation3 + $0xc2] sm:$0xff]
    %v8178 = vld [vmem:[#allocation3 + $0xd2] sm:$0xff]
    %v8179 = vld [vmem:[#allocation3 + $0xe2] sm:$0xff]
    %v8180 = vld [vmem:[#allocation3 + $0xf2] sm:$0xff]
    %v8181 = vld [vmem:[#allocation3 + $0x102] sm:$0xff]
    %v8182 = vld [vmem:[#allocation3 + $0x112] sm:$0xff]
    %v8183 = vld [vmem:[%s8118] sm:$0xff]
    %v8184 = vld [vmem:[%s8118 + $0x10] sm:$0xff]
    %v8185 = vld [vmem:[%s8118 + $0x20] sm:$0xff]
    %v8186 = vld [vmem:[%s8118 + $0x30] sm:$0xff]
    %v8187 = vld [vmem:[%s8118 + $0x40] sm:$0xff]
    %v8188 = vld [vmem:[%s8118 + $0x50] sm:$0xff]
    %v8189 = vld [vmem:[%s8118 + $0x60] sm:$0xff]
    %v8190 = vld [vmem:[%s8118 + $0x70] sm:$0xff]
    %v8191 = vld [vmem:[%s8118 + $0xa0] sm:$0xff]
    %v8192 = vld [vmem:[%s8118 + $0xb0] sm:$0xff]
    %v8193 = vld [vmem:[%s8118 + $0xc0] sm:$0xff]
    %v8194 = vld [vmem:[%s8118 + $0xd0] sm:$0xff]
    %v8195 = vld [vmem:[%s8118 + $0xe0] sm:$0xff]
    %v8196 = vld [vmem:[%s8118 + $0xf0] sm:$0xff]
    %v8197 = vld [vmem:[%s8118 + $0x100] sm:$0xff]
    %v8198 = vld [vmem:[%s8118 + $0x110] sm:$0xff]
    %v8199 = vld [vmem:[%s8118 + $0x1] sm:$0xff]
    %v8200 = vld [vmem:[%s8118 + $0x11] sm:$0xff]
    %v8201 = vld [vmem:[%s8118 + $0x21] sm:$0xff]
    %v8202 = vld [vmem:[%s8118 + $0x31] sm:$0xff]
    %v8203 = vld [vmem:[%s8118 + $0x41] sm:$0xff]
    %v8204 = vld [vmem:[%s8118 + $0x51] sm:$0xff]
    %v8205 = vld [vmem:[%s8118 + $0x61] sm:$0xff]
    %v8206 = vld [vmem:[%s8118 + $0x71] sm:$0xff]
    %v8207 = vld [vmem:[%s8118 + $0xa1] sm:$0xff]
    %v8208 = vld [vmem:[%s8118 + $0xb1] sm:$0xff]
    %v8209 = vld [vmem:[%s8118 + $0xc1] sm:$0xff]
    %v8210 = vld [vmem:[%s8118 + $0xd1] sm:$0xff]
    %v8211 = vld [vmem:[%s8118 + $0xe1] sm:$0xff]
    %v8212 = vld [vmem:[%s8118 + $0xf1] sm:$0xff]
    %v8213 = vld [vmem:[%s8118 + $0x101] sm:$0xff]
    %v8214 = vld [vmem:[%s8118 + $0x111] sm:$0xff]
    %v8215 = vld [vmem:[%s8118 + $0x2] sm:$0xff]
    %v8216 = vld [vmem:[%s8118 + $0x12] sm:$0xff]
    %v8217 = vld [vmem:[%s8118 + $0x22] sm:$0xff]
    %v8218 = vld [vmem:[%s8118 + $0x32] sm:$0xff]
    %v8219 = vld [vmem:[%s8118 + $0x42] sm:$0xff]
    %v8220 = vld [vmem:[%s8118 + $0x52] sm:$0xff]
    %v8221 = vld [vmem:[%s8118 + $0x62] sm:$0xff]
    %v8222 = vld [vmem:[%s8118 + $0x72] sm:$0xff]
    %v8223 = vld [vmem:[%s8118 + $0xa2] sm:$0xff]
    %v8224 = vld [vmem:[%s8118 + $0xb2] sm:$0xff]
    %v8225 = vld [vmem:[%s8118 + $0xc2] sm:$0xff]
    %v8226 = vld [vmem:[%s8118 + $0xd2] sm:$0xff]
    %v8227 = vld [vmem:[%s8118 + $0xe2] sm:$0xff]
    %v8228 = vld [vmem:[%s8118 + $0xf2] sm:$0xff]
    %v8229 = vld [vmem:[%s8118 + $0x102] sm:$0xff]
    %v8230 = vld [vmem:[%s8118 + $0x112] sm:$0xff]
    %s8231 = scalar_lea.vmem [#allocation3], 32
    %v8232 = vld [vmem:[%s8231] sm:$0xff]
    %v8233 = vld [vmem:[%s8231 + $0x10] sm:$0xff]
    %v8234 = vld [vmem:[%s8231 + $0x20] sm:$0xff]
    %v8235 = vld [vmem:[%s8231 + $0x30] sm:$0xff]
    %v8236 = vld [vmem:[%s8231 + $0x40] sm:$0xff]
    %v8237 = vld [vmem:[%s8231 + $0x50] sm:$0xff]
    %v8238 = vld [vmem:[%s8231 + $0x60] sm:$0xff]
    %v8239 = vld [vmem:[%s8231 + $0x70] sm:$0xff]
    %v8240 = vld [vmem:[%s8231 + $0xa0] sm:$0xff]
    %v8241 = vld [vmem:[%s8231 + $0xb0] sm:$0xff]
    %v8242 = vld [vmem:[%s8231 + $0xc0] sm:$0xff]
    %v8243 = vld [vmem:[%s8231 + $0xd0] sm:$0xff]
    %v8244 = vld [vmem:[%s8231 + $0xe0] sm:$0xff]
    %v8245 = vld [vmem:[%s8231 + $0xf0] sm:$0xff]
    %v8246 = vld [vmem:[%s8231 + $0x100] sm:$0xff]
    %v8247 = vld [vmem:[%s8231 + $0x110] sm:$0xff]
    %v8248 = vld [vmem:[%s8231 + $0x1] sm:$0xff]
    %v8249 = vld [vmem:[%s8231 + $0x11] sm:$0xff]
    %v8250 = vld [vmem:[%s8231 + $0x21] sm:$0xff]
    %v8251 = vld [vmem:[%s8231 + $0x31] sm:$0xff]
    %v8252 = vld [vmem:[%s8231 + $0x41] sm:$0xff]
    %v8253 = vld [vmem:[%s8231 + $0x51] sm:$0xff]
    %v8254 = vld [vmem:[%s8231 + $0x61] sm:$0xff]
    %v8255 = vld [vmem:[%s8231 + $0x71] sm:$0xff]
    %v8256 = vld [vmem:[%s8231 + $0xa1] sm:$0xff]
    %v8257 = vld [vmem:[%s8231 + $0xb1] sm:$0xff]
    %v8258 = vld [vmem:[%s8231 + $0xc1] sm:$0xff]
    %v8259 = vld [vmem:[%s8231 + $0xd1] sm:$0xff]
    %v8260 = vld [vmem:[%s8231 + $0xe1] sm:$0xff]
    %v8261 = vld [vmem:[%s8231 + $0xf1] sm:$0xff]
    %v8262 = vld [vmem:[%s8231 + $0x101] sm:$0xff]
    %v8263 = vld [vmem:[%s8231 + $0x111] sm:$0xff]
    %v8264 = vld [vmem:[%s8231 + $0x2] sm:$0xff]
    %v8265 = vld [vmem:[%s8231 + $0x12] sm:$0xff]
    %v8266 = vld [vmem:[%s8231 + $0x22] sm:$0xff]
    %v8267 = vld [vmem:[%s8231 + $0x32] sm:$0xff]
    %v8268 = vld [vmem:[%s8231 + $0x42] sm:$0xff]
    %v8269 = vld [vmem:[%s8231 + $0x52] sm:$0xff]
    %v8270 = vld [vmem:[%s8231 + $0x62] sm:$0xff]
    %v8271 = vld [vmem:[%s8231 + $0x72] sm:$0xff]
    %v8272 = vld [vmem:[%s8231 + $0xa2] sm:$0xff]
    %v8273 = vld [vmem:[%s8231 + $0xb2] sm:$0xff]
    %v8274 = vld [vmem:[%s8231 + $0xc2] sm:$0xff]
    %v8275 = vld [vmem:[%s8231 + $0xd2] sm:$0xff]
    %v8276 = vld [vmem:[%s8231 + $0xe2] sm:$0xff]
    %v8277 = vld [vmem:[%s8231 + $0xf2] sm:$0xff]
    %v8278 = vld [vmem:[%s8231 + $0x102] sm:$0xff]
    %v8279 = vld [vmem:[%s8231 + $0x112] sm:$0xff]
    %8296 = vrot.lane.b32.xlu0 %v8151, 32
    %v8297 = vpop.permute.xlu0 %8296
    %8298 = vrot.lane.b32.xlu0 %v8152, 32
    %v8299 = vpop.permute.xlu0 %8298
    %8300 = vrot.lane.b32.xlu0 %v8153, 32
    %v8301 = vpop.permute.xlu0 %8300
    %8302 = vrot.lane.b32.xlu0 %v8154, 32
    %v8303 = vpop.permute.xlu0 %8302
    %8304 = vrot.lane.b32.xlu0 %v8155, 32
    %v8305 = vpop.permute.xlu0 %8304
    %8306 = vrot.lane.b32.xlu0 %v8156, 32
    %v8307 = vpop.permute.xlu0 %8306
    %8308 = vrot.lane.b32.xlu0 %v8157, 32
    %v8309 = vpop.permute.xlu0 %8308
    %8310 = vrot.lane.b32.xlu0 %v8158, 32
    %v8311 = vpop.permute.xlu0 %8310
    %8312 = vrot.lane.b32.xlu0 %v8159, 32
    %v8313 = vpop.permute.xlu0 %8312
    %8314 = vrot.lane.b32.xlu0 %v8160, 32
    %v8315 = vpop.permute.xlu0 %8314
    %8316 = vrot.lane.b32.xlu0 %v8161, 32
    %v8317 = vpop.permute.xlu0 %8316
    %8318 = vrot.lane.b32.xlu0 %v8162, 32
    %v8319 = vpop.permute.xlu0 %8318
    %8320 = vrot.lane.b32.xlu0 %v8163, 32
    %v8321 = vpop.permute.xlu0 %8320
    %8322 = vrot.lane.b32.xlu0 %v8164, 32
    %v8323 = vpop.permute.xlu0 %8322
    %8324 = vrot.lane.b32.xlu0 %v8165, 32
    %v8325 = vpop.permute.xlu0 %8324
    %8326 = vrot.lane.b32.xlu0 %v8166, 32
    %v8327 = vpop.permute.xlu0 %8326
    %8360 = vrot.lane.b32.xlu0 %v8167, 64
    %v8361 = vpop.permute.xlu0 %8360
    %8362 = vrot.lane.b32.xlu0 %v8168, 64
    %v8363 = vpop.permute.xlu0 %8362
    %8364 = vrot.lane.b32.xlu0 %v8169, 64
    %v8365 = vpop.permute.xlu0 %8364
    %8366 = vrot.lane.b32.xlu0 %v8170, 64
    %v8367 = vpop.permute.xlu0 %8366
    %8368 = vrot.lane.b32.xlu0 %v8171, 64
    %v8369 = vpop.permute.xlu0 %8368
    %8370 = vrot.lane.b32.xlu0 %v8172, 64
    %v8371 = vpop.permute.xlu0 %8370
    %8372 = vrot.lane.b32.xlu0 %v8173, 64
    %v8373 = vpop.permute.xlu0 %8372
    %8374 = vrot.lane.b32.xlu0 %v8174, 64
    %v8375 = vpop.permute.xlu0 %8374
    %8376 = vrot.lane.b32.xlu0 %v8175, 64
    %v8377 = vpop.permute.xlu0 %8376
    %8378 = vrot.lane.b32.xlu0 %v8176, 64
    %v8379 = vpop.permute.xlu0 %8378
    %8380 = vrot.lane.b32.xlu0 %v8177, 64
    %v8381 = vpop.permute.xlu0 %8380
    %8382 = vrot.lane.b32.xlu0 %v8178, 64
    %v8383 = vpop.permute.xlu0 %8382
    %8384 = vrot.lane.b32.xlu0 %v8179, 64
    %v8385 = vpop.permute.xlu0 %8384
    %8386 = vrot.lane.b32.xlu0 %v8180, 64
    %v8387 = vpop.permute.xlu0 %8386
    %8388 = vrot.lane.b32.xlu0 %v8181, 64
    %v8389 = vpop.permute.xlu0 %8388
    %8390 = vrot.lane.b32.xlu0 %v8182, 64
    %v8391 = vpop.permute.xlu0 %8390
    %8424 = vrot.lane.b32.xlu0 %v8183, 96
    %v8425 = vpop.permute.xlu0 %8424
    %8426 = vrot.lane.b32.xlu0 %v8184, 96
    %v8427 = vpop.permute.xlu0 %8426
    %8428 = vrot.lane.b32.xlu0 %v8185, 96
    %v8429 = vpop.permute.xlu0 %8428
    %8430 = vrot.lane.b32.xlu0 %v8186, 96
    %v8431 = vpop.permute.xlu0 %8430
    %8432 = vrot.lane.b32.xlu0 %v8187, 96
    %v8433 = vpop.permute.xlu0 %8432
    %8434 = vrot.lane.b32.xlu0 %v8188, 96
    %v8435 = vpop.permute.xlu0 %8434
    %8436 = vrot.lane.b32.xlu0 %v8189, 96
    %v8437 = vpop.permute.xlu0 %8436
    %8438 = vrot.lane.b32.xlu0 %v8190, 96
    %v8439 = vpop.permute.xlu0 %8438
    %8440 = vrot.lane.b32.xlu0 %v8191, 96
    %v8441 = vpop.permute.xlu0 %8440
    %8442 = vrot.lane.b32.xlu0 %v8192, 96
    %v8443 = vpop.permute.xlu0 %8442
    %8444 = vrot.lane.b32.xlu0 %v8193, 96
    %v8445 = vpop.permute.xlu0 %8444
    %8446 = vrot.lane.b32.xlu0 %v8194, 96
    %v8447 = vpop.permute.xlu0 %8446
    %8448 = vrot.lane.b32.xlu0 %v8195, 96
    %v8449 = vpop.permute.xlu0 %8448
    %8450 = vrot.lane.b32.xlu0 %v8196, 96
    %v8451 = vpop.permute.xlu0 %8450
    %8452 = vrot.lane.b32.xlu0 %v8197, 96
    %v8453 = vpop.permute.xlu0 %8452
    %8454 = vrot.lane.b32.xlu0 %v8198, 96
    %v8455 = vpop.permute.xlu0 %8454
    %8488 = vrot.lane.b32.xlu0 %v8215, 32
    %v8489 = vpop.permute.xlu0 %8488
    %8490 = vrot.lane.b32.xlu0 %v8216, 32
    %v8491 = vpop.permute.xlu0 %8490
    %8492 = vrot.lane.b32.xlu0 %v8217, 32
    %v8493 = vpop.permute.xlu0 %8492
    %8494 = vrot.lane.b32.xlu0 %v8218, 32
    %v8495 = vpop.permute.xlu0 %8494
    %8496 = vrot.lane.b32.xlu0 %v8219, 32
    %v8497 = vpop.permute.xlu0 %8496
    %8498 = vrot.lane.b32.xlu0 %v8220, 32
    %v8499 = vpop.permute.xlu0 %8498
    %8500 = vrot.lane.b32.xlu0 %v8221, 32
    %v8501 = vpop.permute.xlu0 %8500
    %8502 = vrot.lane.b32.xlu0 %v8222, 32
    %v8503 = vpop.permute.xlu0 %8502
    %8504 = vrot.lane.b32.xlu0 %v8223, 32
    %v8505 = vpop.permute.xlu0 %8504
    %8506 = vrot.lane.b32.xlu0 %v8224, 32
    %v8507 = vpop.permute.xlu0 %8506
    %8508 = vrot.lane.b32.xlu0 %v8225, 32
    %v8509 = vpop.permute.xlu0 %8508
    %8510 = vrot.lane.b32.xlu0 %v8226, 32
    %v8511 = vpop.permute.xlu0 %8510
    %8512 = vrot.lane.b32.xlu0 %v8227, 32
    %v8513 = vpop.permute.xlu0 %8512
    %8514 = vrot.lane.b32.xlu0 %v8228, 32
    %v8515 = vpop.permute.xlu0 %8514
    %8516 = vrot.lane.b32.xlu0 %v8229, 32
    %v8517 = vpop.permute.xlu0 %8516
    %8518 = vrot.lane.b32.xlu0 %v8230, 32
    %v8519 = vpop.permute.xlu0 %8518
    %8552 = vrot.lane.b32.xlu0 %v8232, 64
    %v8553 = vpop.permute.xlu0 %8552
    %8554 = vrot.lane.b32.xlu0 %v8233, 64
    %v8555 = vpop.permute.xlu0 %8554
    %8556 = vrot.lane.b32.xlu0 %v8234, 64
    %v8557 = vpop.permute.xlu0 %8556
    %8558 = vrot.lane.b32.xlu0 %v8235, 64
    %v8559 = vpop.permute.xlu0 %8558
    %8560 = vrot.lane.b32.xlu0 %v8236, 64
    %v8561 = vpop.permute.xlu0 %8560
    %8562 = vrot.lane.b32.xlu0 %v8237, 64
    %v8563 = vpop.permute.xlu0 %8562
    %8564 = vrot.lane.b32.xlu0 %v8238, 64
    %v8565 = vpop.permute.xlu0 %8564
    %8566 = vrot.lane.b32.xlu0 %v8239, 64
    %v8567 = vpop.permute.xlu0 %8566
    %8568 = vrot.lane.b32.xlu0 %v8240, 64
    %v8569 = vpop.permute.xlu0 %8568
    %8570 = vrot.lane.b32.xlu0 %v8241, 64
    %v8571 = vpop.permute.xlu0 %8570
    %8572 = vrot.lane.b32.xlu0 %v8242, 64
    %v8573 = vpop.permute.xlu0 %8572
    %8574 = vrot.lane.b32.xlu0 %v8243, 64
    %v8575 = vpop.permute.xlu0 %8574
    %8576 = vrot.lane.b32.xlu0 %v8244, 64
    %v8577 = vpop.permute.xlu0 %8576
    %8578 = vrot.lane.b32.xlu0 %v8245, 64
    %v8579 = vpop.permute.xlu0 %8578
    %8580 = vrot.lane.b32.xlu0 %v8246, 64
    %v8581 = vpop.permute.xlu0 %8580
    %8582 = vrot.lane.b32.xlu0 %v8247, 64
    %v8583 = vpop.permute.xlu0 %8582
    %8616 = vrot.lane.b32.xlu0 %v8248, 96
    %v8617 = vpop.permute.xlu0 %8616
    %8618 = vrot.lane.b32.xlu0 %v8249, 96
    %v8619 = vpop.permute.xlu0 %8618
    %8620 = vrot.lane.b32.xlu0 %v8250, 96
    %v8621 = vpop.permute.xlu0 %8620
    %8622 = vrot.lane.b32.xlu0 %v8251, 96
    %v8623 = vpop.permute.xlu0 %8622
    %8624 = vrot.lane.b32.xlu0 %v8252, 96
    %v8625 = vpop.permute.xlu0 %8624
    %8626 = vrot.lane.b32.xlu0 %v8253, 96
    %v8627 = vpop.permute.xlu0 %8626
    %8628 = vrot.lane.b32.xlu0 %v8254, 96
    %v8629 = vpop.permute.xlu0 %8628
    %8630 = vrot.lane.b32.xlu0 %v8255, 96
    %v8631 = vpop.permute.xlu0 %8630
    %8632 = vrot.lane.b32.xlu0 %v8256, 96
    %v8633 = vpop.permute.xlu0 %8632
    %8634 = vrot.lane.b32.xlu0 %v8257, 96
    %v8635 = vpop.permute.xlu0 %8634
    %8636 = vrot.lane.b32.xlu0 %v8258, 96
    %v8637 = vpop.permute.xlu0 %8636
    %8638 = vrot.lane.b32.xlu0 %v8259, 96
    %v8639 = vpop.permute.xlu0 %8638
    %8640 = vrot.lane.b32.xlu0 %v8260, 96
    %v8641 = vpop.permute.xlu0 %8640
    %8642 = vrot.lane.b32.xlu0 %v8261, 96
    %v8643 = vpop.permute.xlu0 %8642
    %8644 = vrot.lane.b32.xlu0 %v8262, 96
    %v8645 = vpop.permute.xlu0 %8644
    %8646 = vrot.lane.b32.xlu0 %v8263, 96
    %v8647 = vpop.permute.xlu0 %8646
    %v8664 = vsel %vm3222, %v8135, %v8297
    %v8665 = vsel %vm3222, %v8136, %v8299
    %v8666 = vsel %vm3222, %v8137, %v8301
    %v8667 = vsel %vm3222, %v8138, %v8303
    %v8668 = vsel %vm3222, %v8139, %v8305
    %v8669 = vsel %vm3222, %v8140, %v8307
    %v8670 = vsel %vm3222, %v8141, %v8309
    %v8671 = vsel %vm3222, %v8142, %v8311
    %v8672 = vsel %vm3222, %v8143, %v8313
    %v8673 = vsel %vm3222, %v8144, %v8315
    %v8674 = vsel %vm3222, %v8145, %v8317
    %v8675 = vsel %vm3222, %v8146, %v8319
    %v8676 = vsel %vm3222, %v8147, %v8321
    %v8677 = vsel %vm3222, %v8148, %v8323
    %v8678 = vsel %vm3222, %v8149, %v8325
    %v8679 = vsel %vm3222, %v8150, %v8327
    %v8680 = vsel %vm3482, %v8664, %v8361
    %v8681 = vsel %vm3482, %v8665, %v8363
    %v8682 = vsel %vm3482, %v8666, %v8365
    %v8683 = vsel %vm3482, %v8667, %v8367
    %v8684 = vsel %vm3482, %v8668, %v8369
    %v8685 = vsel %vm3482, %v8669, %v8371
    %v8686 = vsel %vm3482, %v8670, %v8373
    %v8687 = vsel %vm3482, %v8671, %v8375
    %v8688 = vsel %vm3482, %v8672, %v8377
    %v8689 = vsel %vm3482, %v8673, %v8379
    %v8690 = vsel %vm3482, %v8674, %v8381
    %v8691 = vsel %vm3482, %v8675, %v8383
    %v8692 = vsel %vm3482, %v8676, %v8385
    %v8693 = vsel %vm3482, %v8677, %v8387
    %v8694 = vsel %vm3482, %v8678, %v8389
    %v8695 = vsel %vm3482, %v8679, %v8391
    %vm8696 = vcmask 785408
    %v8697 = vsel %vm8696, %v8680, %v8425
    %v8698 = vsel %vm8696, %v8681, %v8427
    %v8699 = vsel %vm8696, %v8682, %v8429
    %v8700 = vsel %vm8696, %v8683, %v8431
    %v8701 = vsel %vm8696, %v8684, %v8433
    %v8702 = vsel %vm8696, %v8685, %v8435
    %v8703 = vsel %vm8696, %v8686, %v8437
    %v8704 = vsel %vm8696, %v8687, %v8439
    %v8705 = vsel %vm8696, %v8688, %v8441
    %v8706 = vsel %vm8696, %v8689, %v8443
    %v8707 = vsel %vm8696, %v8690, %v8445
    %v8708 = vsel %vm8696, %v8691, %v8447
    %v8709 = vsel %vm8696, %v8692, %v8449
    %v8710 = vsel %vm8696, %v8693, %v8451
    %v8711 = vsel %vm8696, %v8694, %v8453
    %v8712 = vsel %vm8696, %v8695, %v8455
    %v8713 = vsel %vm3222, %v8199, %v8489
    %v8714 = vsel %vm3222, %v8200, %v8491
    %v8715 = vsel %vm3222, %v8201, %v8493
    %v8716 = vsel %vm3222, %v8202, %v8495
    %v8717 = vsel %vm3222, %v8203, %v8497
    %v8718 = vsel %vm3222, %v8204, %v8499
    %v8719 = vsel %vm3222, %v8205, %v8501
    %v8720 = vsel %vm3222, %v8206, %v8503
    %v8721 = vsel %vm3222, %v8207, %v8505
    %v8722 = vsel %vm3222, %v8208, %v8507
    %v8723 = vsel %vm3222, %v8209, %v8509
    %v8724 = vsel %vm3222, %v8210, %v8511
    %v8725 = vsel %vm3222, %v8211, %v8513
    %v8726 = vsel %vm3222, %v8212, %v8515
    %v8727 = vsel %vm3222, %v8213, %v8517
    %v8728 = vsel %vm3222, %v8214, %v8519
    %v8729 = vsel %vm3482, %v8713, %v8553
    %v8730 = vsel %vm3482, %v8714, %v8555
    %v8731 = vsel %vm3482, %v8715, %v8557
    %v8732 = vsel %vm3482, %v8716, %v8559
    %v8733 = vsel %vm3482, %v8717, %v8561
    %v8734 = vsel %vm3482, %v8718, %v8563
    %v8735 = vsel %vm3482, %v8719, %v8565
    %v8736 = vsel %vm3482, %v8720, %v8567
    %v8737 = vsel %vm3482, %v8721, %v8569
    %v8738 = vsel %vm3482, %v8722, %v8571
    %v8739 = vsel %vm3482, %v8723, %v8573
    %v8740 = vsel %vm3482, %v8724, %v8575
    %v8741 = vsel %vm3482, %v8725, %v8577
    %v8742 = vsel %vm3482, %v8726, %v8579
    %v8743 = vsel %vm3482, %v8727, %v8581
    %v8744 = vsel %vm3482, %v8728, %v8583
    %v8745 = vsel %vm8696, %v8729, %v8617
    %v8746 = vsel %vm8696, %v8730, %v8619
    %v8747 = vsel %vm8696, %v8731, %v8621
    %v8748 = vsel %vm8696, %v8732, %v8623
    %v8749 = vsel %vm8696, %v8733, %v8625
    %v8750 = vsel %vm8696, %v8734, %v8627
    %v8751 = vsel %vm8696, %v8735, %v8629
    %v8752 = vsel %vm8696, %v8736, %v8631
    %v8753 = vsel %vm8696, %v8737, %v8633
    %v8754 = vsel %vm8696, %v8738, %v8635
    %v8755 = vsel %vm8696, %v8739, %v8637
    %v8756 = vsel %vm8696, %v8740, %v8639
    %v8757 = vsel %vm8696, %v8741, %v8641
    %v8758 = vsel %vm8696, %v8742, %v8643
    %v8759 = vsel %vm8696, %v8743, %v8645
    %v8760 = vsel %vm8696, %v8744, %v8647
    %v8761 = vld [vmem:[#allocation6] sm:$0xff]
    %v8762 = vld [vmem:[#allocation6 + $0x8] sm:$0xff]
    %v8763 = vld [vmem:[#allocation6 + $0x10] sm:$0xff]
    %v8764 = vld [vmem:[#allocation6 + $0x18] sm:$0xff]
    %v8765 = vld [vmem:[#allocation6 + $0x20] sm:$0xff]
    %v8766 = vld [vmem:[#allocation6 + $0x28] sm:$0xff]
    %v8767 = vld [vmem:[#allocation6 + $0x30] sm:$0xff]
    %v8768 = vld [vmem:[#allocation6 + $0x38] sm:$0xff]
    %v8769 = vld [vmem:[#allocation6 + $0x40] sm:$0xff]
    %v8770 = vld [vmem:[#allocation6 + $0x48] sm:$0xff]
    %v8771 = vld [vmem:[#allocation6 + $0x50] sm:$0xff]
    %v8772 = vld [vmem:[#allocation6 + $0x58] sm:$0xff]
    %v8773 = vld [vmem:[#allocation6 + $0x60] sm:$0xff]
    %v8774 = vld [vmem:[#allocation6 + $0x68] sm:$0xff]
    %v8775 = vld [vmem:[#allocation6 + $0x70] sm:$0xff]
    %v8776 = vld [vmem:[#allocation6 + $0x78] sm:$0xff]
    %v8777 = vld [vmem:[#allocation6 + $0x80] sm:$0xff]
    %v8778 = vld [vmem:[#allocation6 + $0x88] sm:$0xff]
    %v8779 = vld [vmem:[#allocation6 + $0x90] sm:$0xff]
    %v8780 = vld [vmem:[#allocation6 + $0x98] sm:$0xff]
    %v8781 = vld [vmem:[#allocation6 + $0xa0] sm:$0xff]
    %v8782 = vld [vmem:[#allocation6 + $0xa8] sm:$0xff]
    %v8783 = vld [vmem:[#allocation6 + $0xb0] sm:$0xff]
    %v8784 = vld [vmem:[#allocation6 + $0xb8] sm:$0xff]
    %v8785 = vld [vmem:[#allocation6 + $0xc0] sm:$0xff]
    %v8786 = vld [vmem:[#allocation6 + $0xc8] sm:$0xff]
    %v8787 = vld [vmem:[#allocation6 + $0xd0] sm:$0xff]
    %v8788 = vld [vmem:[#allocation6 + $0xd8] sm:$0xff]
    %v8789 = vld [vmem:[#allocation6 + $0xe0] sm:$0xff]
    %v8790 = vld [vmem:[#allocation6 + $0xe8] sm:$0xff]
    %v8791 = vld [vmem:[#allocation6 + $0xf0] sm:$0xff]
    %v8792 = vld [vmem:[#allocation6 + $0xf8] sm:$0xff]
    %v8793 = vld [vmem:[#allocation6 + $0x100] sm:$0xff]
    %v8794 = vld [vmem:[#allocation6 + $0x108] sm:$0xff]
    %v8795 = vld [vmem:[#allocation6 + $0x110] sm:$0xff]
    %v8796 = vld [vmem:[#allocation6 + $0x118] sm:$0xff]
    %v8798 = vsel %vm3222, %v8264, 0
    %v8801 = vsel %vm3222, %v8265, 0
    %v8804 = vsel %vm3222, %v8266, 0
    %v8807 = vsel %vm3222, %v8267, 0
    %v8810 = vsel %vm3222, %v8268, 0
    %v8813 = vsel %vm3222, %v8269, 0
    %v8816 = vsel %vm3222, %v8270, 0
    %v8819 = vsel %vm3222, %v8271, 0
    %v8822 = vsel %vm3222, %v8272, 0
    %v8825 = vsel %vm3222, %v8273, 0
    %v8828 = vsel %vm3222, %v8274, 0
    %v8831 = vsel %vm3222, %v8275, 0
    %v8834 = vsel %vm3222, %v8276, 0
    %v8837 = vsel %vm3222, %v8277, 0
    %v8840 = vsel %vm3222, %v8278, 0
    %v8843 = vsel %vm3222, %v8279, 0
    %8845 = vmatprep.subr.mxu0 0.0
    %8846 = vmatpush1.msra.mxu0 %v8776
    %8847 = vmatprep.subr.mxu0 0.0
    %8848 = vmatpush1.msra.mxu0 %v8775
    %8849 = vmatprep.subr.mxu0 0.0
    %8850 = vmatpush1.msra.mxu0 %v8774
    %8851 = vmatprep.subr.mxu0 0.0
    %8852 = vmatpush1.msra.mxu0 %v8773
    %8853 = vmatprep.subr.mxu0 0.0
    %8854 = vmatpush1.msra.mxu0 %v8772
    %8855 = vmatprep.subr.mxu0 0.0
    %8856 = vmatpush1.msra.mxu0 %v8771
    %8857 = vmatprep.subr.mxu0 0.0
    %8858 = vmatpush1.msra.mxu0 %v8770
    %8859 = vmatprep.subr.mxu0 0.0
    %8860 = vmatpush1.msra.mxu0 %v8769
    %8861 = vmatprep.subr.mxu0 0.0
    %8862 = vmatpush1.msra.mxu0 %v8768
    %8863 = vmatprep.subr.mxu0 0.0
    %8864 = vmatpush1.msra.mxu0 %v8767
    %8865 = vmatprep.subr.mxu0 0.0
    %8866 = vmatpush1.msra.mxu0 %v8766
    %8867 = vmatprep.subr.mxu0 0.0
    %8868 = vmatpush1.msra.mxu0 %v8765
    %8869 = vmatprep.subr.mxu0 0.0
    %8870 = vmatpush1.msra.mxu0 %v8764
    %8871 = vmatprep.subr.mxu0 0.0
    %8872 = vmatpush1.msra.mxu0 %v8763
    %8873 = vmatprep.subr.mxu0 0.0
    %8874 = vmatpush1.msra.mxu0 %v8762
    %8875 = vmatprep.subr.mxu0 0.0
    %8876 = vmatpush1.msra.mxu0 %v8761
    %8877 = vmatprep.subr.mxu0 0.0
    %8878 = vmatpush2.msra.mxu0 %v8792
    %8879 = vmatprep.subr.mxu0 0.0
    %8880 = vmatpush2.msra.mxu0 %v8791
    %8881 = vmatprep.subr.mxu0 0.0
    %8882 = vmatpush2.msra.mxu0 %v8790
    %8883 = vmatprep.subr.mxu0 0.0
    %8884 = vmatpush2.msra.mxu0 %v8789
    %8885 = vmatprep.subr.mxu0 0.0
    %8886 = vmatpush2.msra.mxu0 %v8788
    %8887 = vmatprep.subr.mxu0 0.0
    %8888 = vmatpush2.msra.mxu0 %v8787
    %8889 = vmatprep.subr.mxu0 0.0
    %8890 = vmatpush2.msra.mxu0 %v8786
    %8891 = vmatprep.subr.mxu0 0.0
    %8892 = vmatpush2.msra.mxu0 %v8785
    %8893 = vmatprep.subr.mxu0 0.0
    %8894 = vmatpush2.msra.mxu0 %v8784
    %8895 = vmatprep.subr.mxu0 0.0
    %8896 = vmatpush2.msra.mxu0 %v8783
    %8897 = vmatprep.subr.mxu0 0.0
    %8898 = vmatpush2.msra.mxu0 %v8782
    %8899 = vmatprep.subr.mxu0 0.0
    %8900 = vmatpush2.msra.mxu0 %v8781
    %8901 = vmatprep.subr.mxu0 0.0
    %8902 = vmatpush2.msra.mxu0 %v8780
    %8903 = vmatprep.subr.mxu0 0.0
    %8904 = vmatpush2.msra.mxu0 %v8779
    %8905 = vmatprep.subr.mxu0 0.0
    %8906 = vmatpush2.msra.mxu0 %v8778
    %8907 = vmatprep.subr.mxu0 0.0
    %8908 = vmatpush2.msra.mxu0 %v8777
    %8909 = vmatprep.mubr.f32.mxu0 %v8745
    %8910 = vmatmul.mubr.f32.gmra.mxu0 %v8697
    %v8911 = vpop.f32.mrf.mxu0
    %v8912 = vadd.f32 0.0, %v8911
    %v8913 = vpop.f32.mrf.mxu0
    %8914 = vmatprep.mubr.f32.mxu0 %v8746
    %8915 = vmatmul.mubr.f32.gmra.mxu0 %v8698
    %v8916 = vpop.f32.mrf.mxu0
    %v8917 = vadd.f32 0.0, %v8916
    %v8918 = vpop.f32.mrf.mxu0
    %8919 = vmatprep.mubr.f32.mxu0 %v8747
    %8920 = vmatmul.mubr.f32.gmra.mxu0 %v8699
    %v8921 = vpop.f32.mrf.mxu0
    %v8922 = vadd.f32 0.0, %v8921
    %v8923 = vpop.f32.mrf.mxu0
    %8924 = vmatprep.mubr.f32.mxu0 %v8748
    %8925 = vmatmul.mubr.f32.gmra.mxu0 %v8700
    %v8926 = vpop.f32.mrf.mxu0
    %v8927 = vadd.f32 0.0, %v8926
    %v8928 = vpop.f32.mrf.mxu0
    %8929 = vmatprep.mubr.f32.mxu0 %v8749
    %8930 = vmatmul.mubr.f32.gmra.mxu0 %v8701
    %v8931 = vpop.f32.mrf.mxu0
    %v8932 = vadd.f32 0.0, %v8931
    %v8933 = vpop.f32.mrf.mxu0
    %8934 = vmatprep.mubr.f32.mxu0 %v8750
    %8935 = vmatmul.mubr.f32.gmra.mxu0 %v8702
    %v8936 = vpop.f32.mrf.mxu0
    %v8937 = vadd.f32 0.0, %v8936
    %v8938 = vpop.f32.mrf.mxu0
    %8939 = vmatprep.mubr.f32.mxu0 %v8751
    %8940 = vmatmul.mubr.f32.gmra.mxu0 %v8703
    %v8941 = vpop.f32.mrf.mxu0
    %v8942 = vadd.f32 0.0, %v8941
    %v8943 = vpop.f32.mrf.mxu0
    %8944 = vmatprep.mubr.f32.mxu0 %v8752
    %8945 = vmatmul.mubr.f32.gmra.mxu0 %v8704
    %v8946 = vpop.f32.mrf.mxu0
    %v8947 = vadd.f32 0.0, %v8946
    %v8948 = vpop.f32.mrf.mxu0
    %8949 = vmatprep.mubr.f32.mxu0 %v8753
    %8950 = vmatmul.mubr.f32.gmra.mxu0 %v8705
    %v8951 = vpop.f32.mrf.mxu0
    %v8952 = vadd.f32 0.0, %v8951
    %v8953 = vpop.f32.mrf.mxu0
    %8954 = vmatprep.mubr.f32.mxu0 %v8754
    %8955 = vmatmul.mubr.f32.gmra.mxu0 %v8706
    %v8956 = vpop.f32.mrf.mxu0
    %v8957 = vadd.f32 0.0, %v8956
    %v8958 = vpop.f32.mrf.mxu0
    %8959 = vmatprep.mubr.f32.mxu0 %v8755
    %8960 = vmatmul.mubr.f32.gmra.mxu0 %v8707
    %v8961 = vpop.f32.mrf.mxu0
    %v8962 = vadd.f32 0.0, %v8961
    %v8963 = vpop.f32.mrf.mxu0
    %8964 = vmatprep.mubr.f32.mxu0 %v8756
    %8965 = vmatmul.mubr.f32.gmra.mxu0 %v8708
    %v8966 = vpop.f32.mrf.mxu0
    %v8967 = vadd.f32 0.0, %v8966
    %v8968 = vpop.f32.mrf.mxu0
    %8969 = vmatprep.mubr.f32.mxu0 %v8757
    %8970 = vmatmul.mubr.f32.gmra.mxu0 %v8709
    %v8971 = vpop.f32.mrf.mxu0
    %v8972 = vadd.f32 0.0, %v8971
    %v8973 = vpop.f32.mrf.mxu0
    %8974 = vmatprep.mubr.f32.mxu0 %v8758
    %8975 = vmatmul.mubr.f32.gmra.mxu0 %v8710
    %v8976 = vpop.f32.mrf.mxu0
    %v8977 = vadd.f32 0.0, %v8976
    %v8978 = vpop.f32.mrf.mxu0
    %8979 = vmatprep.mubr.f32.mxu0 %v8759
    %8980 = vmatmul.mubr.f32.gmra.mxu0 %v8711
    %v8981 = vpop.f32.mrf.mxu0
    %v8982 = vadd.f32 0.0, %v8981
    %v8983 = vpop.f32.mrf.mxu0
    %8984 = vmatprep.mubr.f32.mxu0 %v8760
    %8985 = vmatmul.mubr.f32.gmra.mxu0 %v8712
    %v8986 = vpop.f32.mrf.mxu0
    %v8987 = vadd.f32 0.0, %v8986
    %v8988 = vpop.f32.mrf.mxu0
    %8989 = vdwg.mxu0
    %8990 = vmatprep.subr.mxu0 0.0
    %8991 = vmatpush1.msra.mxu0 0.0
    %8992 = vmatprep.subr.mxu0 0.0
    %8993 = vmatpush1.msra.mxu0 0.0
    %8994 = vmatprep.subr.mxu0 0.0
    %8995 = vmatpush1.msra.mxu0 0.0
    %8996 = vmatprep.subr.mxu0 0.0
    %8997 = vmatpush1.msra.mxu0 0.0
    %8998 = vmatprep.subr.mxu0 0.0
    %8999 = vmatpush1.msra.mxu0 0.0
    %9000 = vmatprep.subr.mxu0 0.0
    %9001 = vmatpush1.msra.mxu0 0.0
    %9002 = vmatprep.subr.mxu0 0.0
    %9003 = vmatpush1.msra.mxu0 0.0
    %9004 = vmatprep.subr.mxu0 0.0
    %9005 = vmatpush1.msra.mxu0 0.0
    %9006 = vmatprep.subr.mxu0 0.0
    %9007 = vmatpush1.msra.mxu0 0.0
    %9008 = vmatprep.subr.mxu0 0.0
    %9009 = vmatpush1.msra.mxu0 0.0
    %9010 = vmatprep.subr.mxu0 0.0
    %9011 = vmatpush1.msra.mxu0 0.0
    %9012 = vmatprep.subr.mxu0 0.0
    %9013 = vmatpush1.msra.mxu0 0.0
    %9014 = vmatprep.subr.mxu0 0.0
    %9015 = vmatpush1.msra.mxu0 %v8796
    %9016 = vmatprep.subr.mxu0 0.0
    %9017 = vmatpush1.msra.mxu0 %v8795
    %9018 = vmatprep.subr.mxu0 0.0
    %9019 = vmatpush1.msra.mxu0 %v8794
    %9020 = vmatprep.subr.mxu0 0.0
    %9021 = vmatpush1.msra.mxu0 %v8793
    %9022 = vmatprep.subr.mxu0 0.0
    %9023 = vmatpush2.msra.mxu0 0.0
    %9024 = vmatprep.subr.mxu0 0.0
    %9025 = vmatpush2.msra.mxu0 0.0
    %9026 = vmatprep.subr.mxu0 0.0
    %9027 = vmatpush2.msra.mxu0 0.0
    %9028 = vmatprep.subr.mxu0 0.0
    %9029 = vmatpush2.msra.mxu0 0.0
    %9030 = vmatprep.subr.mxu0 0.0
    %9031 = vmatpush2.msra.mxu0 0.0
    %9032 = vmatprep.subr.mxu0 0.0
    %9033 = vmatpush2.msra.mxu0 0.0
    %9034 = vmatprep.subr.mxu0 0.0
    %9035 = vmatpush2.msra.mxu0 0.0
    %9036 = vmatprep.subr.mxu0 0.0
    %9037 = vmatpush2.msra.mxu0 0.0
    %9038 = vmatprep.subr.mxu0 0.0
    %9039 = vmatpush2.msra.mxu0 0.0
    %9040 = vmatprep.subr.mxu0 0.0
    %9041 = vmatpush2.msra.mxu0 0.0
    %9042 = vmatprep.subr.mxu0 0.0
    %9043 = vmatpush2.msra.mxu0 0.0
    %9044 = vmatprep.subr.mxu0 0.0
    %9045 = vmatpush2.msra.mxu0 0.0
    %9046 = vmatprep.subr.mxu0 0.0
    %9047 = vmatpush2.msra.mxu0 0.0
    %9048 = vmatprep.subr.mxu0 0.0
    %9049 = vmatpush2.msra.mxu0 0.0
    %9050 = vmatprep.subr.mxu0 0.0
    %9051 = vmatpush2.msra.mxu0 0.0
    %9052 = vmatprep.subr.mxu0 0.0
    %9053 = vmatpush2.msra.mxu0 0.0
    %9054 = vmatprep.mubr.f32.mxu0 0.0
    %9055 = vmatmul.mubr.f32.gmra.mxu0 %v8798
    %v9056 = vpop.f32.mrf.mxu0
    %v9057 = vadd.f32 %v8912, %v9056
    %v9058 = vpop.f32.mrf.mxu0
    %9059 = vmatprep.mubr.f32.mxu0 0.0
    %9060 = vmatmul.mubr.f32.gmra.mxu0 %v8801
    %v9061 = vpop.f32.mrf.mxu0
    %v9062 = vadd.f32 %v8917, %v9061
    %v9063 = vpop.f32.mrf.mxu0
    %9064 = vmatprep.mubr.f32.mxu0 0.0
    %9065 = vmatmul.mubr.f32.gmra.mxu0 %v8804
    %v9066 = vpop.f32.mrf.mxu0
    %v9067 = vadd.f32 %v8922, %v9066
    %v9068 = vpop.f32.mrf.mxu0
    %9069 = vmatprep.mubr.f32.mxu0 0.0
    %9070 = vmatmul.mubr.f32.gmra.mxu0 %v8807
    %v9071 = vpop.f32.mrf.mxu0
    %v9072 = vadd.f32 %v8927, %v9071
    %v9073 = vpop.f32.mrf.mxu0
    %9074 = vmatprep.mubr.f32.mxu0 0.0
    %9075 = vmatmul.mubr.f32.gmra.mxu0 %v8810
    %v9076 = vpop.f32.mrf.mxu0
    %v9077 = vadd.f32 %v8932, %v9076
    %v9078 = vpop.f32.mrf.mxu0
    %9079 = vmatprep.mubr.f32.mxu0 0.0
    %9080 = vmatmul.mubr.f32.gmra.mxu0 %v8813
    %v9081 = vpop.f32.mrf.mxu0
    %v9082 = vadd.f32 %v8937, %v9081
    %v9083 = vpop.f32.mrf.mxu0
    %9084 = vmatprep.mubr.f32.mxu0 0.0
    %9085 = vmatmul.mubr.f32.gmra.mxu0 %v8816
    %v9086 = vpop.f32.mrf.mxu0
    %v9087 = vadd.f32 %v8942, %v9086
    %v9088 = vpop.f32.mrf.mxu0
    %9089 = vmatprep.mubr.f32.mxu0 0.0
    %9090 = vmatmul.mubr.f32.gmra.mxu0 %v8819
    %v9091 = vpop.f32.mrf.mxu0
    %v9092 = vadd.f32 %v8947, %v9091
    %v9093 = vpop.f32.mrf.mxu0
    %9094 = vmatprep.mubr.f32.mxu0 0.0
    %9095 = vmatmul.mubr.f32.gmra.mxu0 %v8822
    %v9096 = vpop.f32.mrf.mxu0
    %v9097 = vadd.f32 %v8952, %v9096
    %v9098 = vpop.f32.mrf.mxu0
    %9099 = vmatprep.mubr.f32.mxu0 0.0
    %9100 = vmatmul.mubr.f32.gmra.mxu0 %v8825
    %v9101 = vpop.f32.mrf.mxu0
    %v9102 = vadd.f32 %v8957, %v9101
    %v9103 = vpop.f32.mrf.mxu0
    %9104 = vmatprep.mubr.f32.mxu0 0.0
    %9105 = vmatmul.mubr.f32.gmra.mxu0 %v8828
    %v9106 = vpop.f32.mrf.mxu0
    %v9107 = vadd.f32 %v8962, %v9106
    %v9108 = vpop.f32.mrf.mxu0
    %9109 = vmatprep.mubr.f32.mxu0 0.0
    %9110 = vmatmul.mubr.f32.gmra.mxu0 %v8831
    %v9111 = vpop.f32.mrf.mxu0
    %v9112 = vadd.f32 %v8967, %v9111
    %v9113 = vpop.f32.mrf.mxu0
    %9114 = vmatprep.mubr.f32.mxu0 0.0
    %9115 = vmatmul.mubr.f32.gmra.mxu0 %v8834
    %v9116 = vpop.f32.mrf.mxu0
    %v9117 = vadd.f32 %v8972, %v9116
    %v9118 = vpop.f32.mrf.mxu0
    %9119 = vmatprep.mubr.f32.mxu0 0.0
    %9120 = vmatmul.mubr.f32.gmra.mxu0 %v8837
    %v9121 = vpop.f32.mrf.mxu0
    %v9122 = vadd.f32 %v8977, %v9121
    %v9123 = vpop.f32.mrf.mxu0
    %9124 = vmatprep.mubr.f32.mxu0 0.0
    %9125 = vmatmul.mubr.f32.gmra.mxu0 %v8840
    %v9126 = vpop.f32.mrf.mxu0
    %v9127 = vadd.f32 %v8982, %v9126
    %v9128 = vpop.f32.mrf.mxu0
    %9129 = vmatprep.mubr.f32.mxu0 0.0
    %9130 = vmatmul.mubr.f32.gmra.mxu0 %v8843
    %v9131 = vpop.f32.mrf.mxu0
    %v9132 = vadd.f32 %v8987, %v9131
    %v9133 = vpop.f32.mrf.mxu0
    %9134 = vdwg.mxu0
    %v9135 = vsel %vm3482, %v9057, 0.0
    %v9136 = vsel %vm3482, %v9062, 0.0
    %v9137 = vadd.f32 %v9135, %v9136
    %v9138 = vsel %vm3482, %v9067, 0.0
    %v9139 = vadd.f32 %v9137, %v9138
    %v9140 = vsel %vm3482, %v9072, 0.0
    %v9141 = vadd.f32 %v9139, %v9140
    %v9142 = vsel %vm3482, %v9077, 0.0
    %v9143 = vadd.f32 %v9141, %v9142
    %v9144 = vsel %vm3482, %v9082, 0.0
    %v9145 = vadd.f32 %v9143, %v9144
    %v9146 = vsel %vm3482, %v9087, 0.0
    %v9147 = vadd.f32 %v9145, %v9146
    %v9148 = vsel %vm3482, %v9092, 0.0
    %v9149 = vadd.f32 %v9147, %v9148
    %v9150 = vsel %vm3482, %v9097, 0.0
    %v9151 = vadd.f32 %v9149, %v9150
    %v9152 = vsel %vm3482, %v9102, 0.0
    %v9153 = vadd.f32 %v9151, %v9152
    %v9154 = vsel %vm3482, %v9107, 0.0
    %v9155 = vadd.f32 %v9153, %v9154
    %v9156 = vsel %vm3482, %v9112, 0.0
    %v9157 = vadd.f32 %v9155, %v9156
    %v9158 = vsel %vm3482, %v9117, 0.0
    %v9159 = vadd.f32 %v9157, %v9158
    %v9160 = vsel %vm3482, %v9122, 0.0
    %v9161 = vadd.f32 %v9159, %v9160
    %v9162 = vsel %vm3482, %v9127, 0.0
    %v9163 = vadd.f32 %v9161, %v9162
    %v9164 = vsel %vm3482, %v9132, 0.0
    %v9165 = vadd.f32 %v9163, %v9164
    %v9166 = vrot.slane %v9165, 4
    %v9167 = vadd.f32 %v9165, %v9166
    %v9168 = vrot.slane %v9167, 2
    %v9169 = vadd.f32 %v9167, %v9168
    %v9170 = vrot.slane %v9169, 1
    %v9171 = vadd.f32 %v9169, %v9170
    %v9172 = vrcp.pop 128.0
    %v9173 = vmul.f32 %v9171, %v9172
    %v9174 = vsub.f32 %v9057, %v9173
    %v9175 = vsub.f32 %v9062, %v9173
    %v9176 = vsub.f32 %v9067, %v9173
    %v9177 = vsub.f32 %v9072, %v9173
    %v9178 = vsub.f32 %v9077, %v9173
    %v9179 = vsub.f32 %v9082, %v9173
    %v9180 = vsub.f32 %v9087, %v9173
    %v9181 = vsub.f32 %v9092, %v9173
    %v9182 = vsub.f32 %v9097, %v9173
    %v9183 = vsub.f32 %v9102, %v9173
    %v9184 = vsub.f32 %v9107, %v9173
    %v9185 = vsub.f32 %v9112, %v9173
    %v9186 = vsub.f32 %v9117, %v9173
    %v9187 = vsub.f32 %v9122, %v9173
    %v9188 = vsub.f32 %v9127, %v9173
    %v9189 = vsub.f32 %v9132, %v9173
    %v9190 = vmul.f32 %v9174, %v9174
    %v9191 = vmul.f32 %v9175, %v9175
    %v9192 = vmul.f32 %v9176, %v9176
    %v9193 = vmul.f32 %v9177, %v9177
    %v9194 = vmul.f32 %v9178, %v9178
    %v9195 = vmul.f32 %v9179, %v9179
    %v9196 = vmul.f32 %v9180, %v9180
    %v9197 = vmul.f32 %v9181, %v9181
    %v9198 = vmul.f32 %v9182, %v9182
    %v9199 = vmul.f32 %v9183, %v9183
    %v9200 = vmul.f32 %v9184, %v9184
    %v9201 = vmul.f32 %v9185, %v9185
    %v9202 = vmul.f32 %v9186, %v9186
    %v9203 = vmul.f32 %v9187, %v9187
    %v9204 = vmul.f32 %v9188, %v9188
    %v9205 = vmul.f32 %v9189, %v9189
    %v9206 = vsel %vm3482, %v9190, 0.0
    %v9207 = vsel %vm3482, %v9191, 0.0
    %v9208 = vadd.f32 %v9206, %v9207
    %v9209 = vsel %vm3482, %v9192, 0.0
    %v9210 = vadd.f32 %v9208, %v9209
    %v9211 = vsel %vm3482, %v9193, 0.0
    %v9212 = vadd.f32 %v9210, %v9211
    %v9213 = vsel %vm3482, %v9194, 0.0
    %v9214 = vadd.f32 %v9212, %v9213
    %v9215 = vsel %vm3482, %v9195, 0.0
    %v9216 = vadd.f32 %v9214, %v9215
    %v9217 = vsel %vm3482, %v9196, 0.0
    %v9218 = vadd.f32 %v9216, %v9217
    %v9219 = vsel %vm3482, %v9197, 0.0
    %v9220 = vadd.f32 %v9218, %v9219
    %v9221 = vsel %vm3482, %v9198, 0.0
    %v9222 = vadd.f32 %v9220, %v9221
    %v9223 = vsel %vm3482, %v9199, 0.0
    %v9224 = vadd.f32 %v9222, %v9223
    %v9225 = vsel %vm3482, %v9200, 0.0
    %v9226 = vadd.f32 %v9224, %v9225
    %v9227 = vsel %vm3482, %v9201, 0.0
    %v9228 = vadd.f32 %v9226, %v9227
    %v9229 = vsel %vm3482, %v9202, 0.0
    %v9230 = vadd.f32 %v9228, %v9229
    %v9231 = vsel %vm3482, %v9203, 0.0
    %v9232 = vadd.f32 %v9230, %v9231
    %v9233 = vsel %vm3482, %v9204, 0.0
    %v9234 = vadd.f32 %v9232, %v9233
    %v9235 = vsel %vm3482, %v9205, 0.0
    %v9236 = vadd.f32 %v9234, %v9235
    %v9237 = vrot.slane %v9236, 4
    %v9238 = vadd.f32 %v9236, %v9237
    %v9239 = vrot.slane %v9238, 2
    %v9240 = vadd.f32 %v9238, %v9239
    %v9241 = vrot.slane %v9240, 1
    %v9242 = vadd.f32 %v9240, %v9241
    %v9243 = vmul.f32 %v9242, %v9172
    %v9244 = vld [vmem:[#allocation13] sm:$0x1]
    %v9245 = vadd.f32 %v9243, 1e-05
    %v9246 = vrsqrt.pop %v9245
    %v9247 = vmul.f32 %v9244, %v9246
    %v9248 = vld [vmem:[#allocation14] sm:$0x1]
    %v9249 = vmul.f32 %v9173, %v9247
    %v9250 = vsub.f32 %v9248, %v9249
    %v9252 = vlaneseq
    %v9253 = vshrl.u32 %v9252, 7
    %v9254 = vsub.s32 0, %v9253
    %v9255 = vrot.slane %v9247, %v9254
    %v9257 = vmul.f32 %v9057, %v9255
    %v9258 = vmul.f32 %v9062, %v9255
    %v9259 = vmul.f32 %v9067, %v9255
    %v9260 = vmul.f32 %v9072, %v9255
    %v9261 = vmul.f32 %v9077, %v9255
    %v9262 = vmul.f32 %v9082, %v9255
    %v9263 = vmul.f32 %v9087, %v9255
    %v9264 = vmul.f32 %v9092, %v9255
    %v9265 = vmul.f32 %v9097, %v9255
    %v9266 = vmul.f32 %v9102, %v9255
    %v9267 = vmul.f32 %v9107, %v9255
    %v9268 = vmul.f32 %v9112, %v9255
    %v9269 = vmul.f32 %v9117, %v9255
    %v9270 = vmul.f32 %v9122, %v9255
    %v9271 = vmul.f32 %v9127, %v9255
    %v9272 = vmul.f32 %v9132, %v9255
    %v9274 = vlaneseq
    %v9275 = vshrl.u32 %v9274, 7
    %v9276 = vsub.s32 0, %v9275
    %v9277 = vrot.slane %v9250, %v9276
    %v9279 = vadd.f32 %v9257, %v9277
    %v9280 = vadd.f32 %v9258, %v9277
    %v9281 = vadd.f32 %v9259, %v9277
    %v9282 = vadd.f32 %v9260, %v9277
    %v9283 = vadd.f32 %v9261, %v9277
    %v9284 = vadd.f32 %v9262, %v9277
    %v9285 = vadd.f32 %v9263, %v9277
    %v9286 = vadd.f32 %v9264, %v9277
    %v9287 = vadd.f32 %v9265, %v9277
    %v9288 = vadd.f32 %v9266, %v9277
    %v9289 = vadd.f32 %v9267, %v9277
    %v9290 = vadd.f32 %v9268, %v9277
    %v9291 = vadd.f32 %v9269, %v9277
    %v9292 = vadd.f32 %v9270, %v9277
    %v9293 = vadd.f32 %v9271, %v9277
    %v9294 = vadd.f32 %v9272, %v9277
    %v9295 = vmax.f32 %v9279, 0.0
    %v9296 = vmax.f32 %v9280, 0.0
    %v9297 = vmax.f32 %v9281, 0.0
    %v9298 = vmax.f32 %v9282, 0.0
    %v9299 = vmax.f32 %v9283, 0.0
    %v9300 = vmax.f32 %v9284, 0.0
    %v9301 = vmax.f32 %v9285, 0.0
    %v9302 = vmax.f32 %v9286, 0.0
    %v9303 = vmax.f32 %v9287, 0.0
    %v9304 = vmax.f32 %v9288, 0.0
    %v9305 = vmax.f32 %v9289, 0.0
    %v9306 = vmax.f32 %v9290, 0.0
    %v9307 = vmax.f32 %v9291, 0.0
    %v9308 = vmax.f32 %v9292, 0.0
    %v9309 = vmax.f32 %v9293, 0.0
    %v9310 = vmax.f32 %v9294, 0.0
    %v9327 = vcombine.high %v9295, %v9295
    %v9329 = vunpack.c.l.s4 1983009808
    %v9330 = vunpack.c.0.s8 %v9329
    %v9331 = vlaneseq
    %v9332 = vshrl.u32 %v9331, 7
    %v9333 = vsub.s32 %v9330, %v9332
    %v9334 = vrot.slane %v9295, %v9333
    %v9336 = vunpack.c.l.s4 1983009808
    %v9337 = vunpack.c.0.s8 %v9336
    %v9338 = vlaneseq
    %v9339 = vshrl.u32 %v9338, 7
    %v9340 = vsub.s32 %v9337, %v9339
    %v9341 = vrot.slane %v9327, %v9340
    %v9342 = vcombine.high %v9334, %v9334
    %v9343 = vcombine.high %v9341, %v9341
    %v9344 = vcombine.high %v9296, %v9296
    %v9346 = vunpack.c.l.s4 1983009808
    %v9347 = vunpack.c.0.s8 %v9346
    %v9348 = vlaneseq
    %v9349 = vshrl.u32 %v9348, 7
    %v9350 = vsub.s32 %v9347, %v9349
    %v9351 = vrot.slane %v9296, %v9350
    %v9353 = vunpack.c.l.s4 1983009808
    %v9354 = vunpack.c.0.s8 %v9353
    %v9355 = vlaneseq
    %v9356 = vshrl.u32 %v9355, 7
    %v9357 = vsub.s32 %v9354, %v9356
    %v9358 = vrot.slane %v9344, %v9357
    %v9359 = vcombine.high %v9351, %v9351
    %v9360 = vcombine.high %v9358, %v9358
    %v9361 = vcombine.high %v9297, %v9297
    %v9363 = vunpack.c.l.s4 1983009808
    %v9364 = vunpack.c.0.s8 %v9363
    %v9365 = vlaneseq
    %v9366 = vshrl.u32 %v9365, 7
    %v9367 = vsub.s32 %v9364, %v9366
    %v9368 = vrot.slane %v9297, %v9367
    %v9370 = vunpack.c.l.s4 1983009808
    %v9371 = vunpack.c.0.s8 %v9370
    %v9372 = vlaneseq
    %v9373 = vshrl.u32 %v9372, 7
    %v9374 = vsub.s32 %v9371, %v9373
    %v9375 = vrot.slane %v9361, %v9374
    %v9376 = vcombine.high %v9368, %v9368
    %v9377 = vcombine.high %v9375, %v9375
    %v9378 = vcombine.high %v9298, %v9298
    %v9380 = vunpack.c.l.s4 1983009808
    %v9381 = vunpack.c.0.s8 %v9380
    %v9382 = vlaneseq
    %v9383 = vshrl.u32 %v9382, 7
    %v9384 = vsub.s32 %v9381, %v9383
    %v9385 = vrot.slane %v9298, %v9384
    %v9387 = vunpack.c.l.s4 1983009808
    %v9388 = vunpack.c.0.s8 %v9387
    %v9389 = vlaneseq
    %v9390 = vshrl.u32 %v9389, 7
    %v9391 = vsub.s32 %v9388, %v9390
    %v9392 = vrot.slane %v9378, %v9391
    %v9393 = vcombine.high %v9385, %v9385
    %v9394 = vcombine.high %v9392, %v9392
    %v9395 = vcombine.high %v9299, %v9299
    %v9397 = vunpack.c.l.s4 1983009808
    %v9398 = vunpack.c.0.s8 %v9397
    %v9399 = vlaneseq
    %v9400 = vshrl.u32 %v9399, 7
    %v9401 = vsub.s32 %v9398, %v9400
    %v9402 = vrot.slane %v9299, %v9401
    %v9404 = vunpack.c.l.s4 1983009808
    %v9405 = vunpack.c.0.s8 %v9404
    %v9406 = vlaneseq
    %v9407 = vshrl.u32 %v9406, 7
    %v9408 = vsub.s32 %v9405, %v9407
    %v9409 = vrot.slane %v9395, %v9408
    %v9410 = vcombine.high %v9402, %v9402
    %v9411 = vcombine.high %v9409, %v9409
    %v9412 = vcombine.high %v9300, %v9300
    %v9414 = vunpack.c.l.s4 1983009808
    %v9415 = vunpack.c.0.s8 %v9414
    %v9416 = vlaneseq
    %v9417 = vshrl.u32 %v9416, 7
    %v9418 = vsub.s32 %v9415, %v9417
    %v9419 = vrot.slane %v9300, %v9418
    %v9421 = vunpack.c.l.s4 1983009808
    %v9422 = vunpack.c.0.s8 %v9421
    %v9423 = vlaneseq
    %v9424 = vshrl.u32 %v9423, 7
    %v9425 = vsub.s32 %v9422, %v9424
    %v9426 = vrot.slane %v9412, %v9425
    %v9427 = vcombine.high %v9419, %v9419
    %v9428 = vcombine.high %v9426, %v9426
    %v9429 = vcombine.high %v9301, %v9301
    %v9431 = vunpack.c.l.s4 1983009808
    %v9432 = vunpack.c.0.s8 %v9431
    %v9433 = vlaneseq
    %v9434 = vshrl.u32 %v9433, 7
    %v9435 = vsub.s32 %v9432, %v9434
    %v9436 = vrot.slane %v9301, %v9435
    %v9438 = vunpack.c.l.s4 1983009808
    %v9439 = vunpack.c.0.s8 %v9438
    %v9440 = vlaneseq
    %v9441 = vshrl.u32 %v9440, 7
    %v9442 = vsub.s32 %v9439, %v9441
    %v9443 = vrot.slane %v9429, %v9442
    %v9444 = vcombine.high %v9436, %v9436
    %v9445 = vcombine.high %v9443, %v9443
    %v9446 = vcombine.high %v9302, %v9302
    %v9448 = vunpack.c.l.s4 1983009808
    %v9449 = vunpack.c.0.s8 %v9448
    %v9450 = vlaneseq
    %v9451 = vshrl.u32 %v9450, 7
    %v9452 = vsub.s32 %v9449, %v9451
    %v9453 = vrot.slane %v9302, %v9452
    %v9455 = vunpack.c.l.s4 1983009808
    %v9456 = vunpack.c.0.s8 %v9455
    %v9457 = vlaneseq
    %v9458 = vshrl.u32 %v9457, 7
    %v9459 = vsub.s32 %v9456, %v9458
    %v9460 = vrot.slane %v9446, %v9459
    %v9461 = vcombine.high %v9453, %v9453
    %v9462 = vcombine.high %v9460, %v9460
    %v9463 = vcombine.high %v9303, %v9303
    %v9465 = vunpack.c.l.s4 1983009808
    %v9466 = vunpack.c.0.s8 %v9465
    %v9467 = vlaneseq
    %v9468 = vshrl.u32 %v9467, 7
    %v9469 = vsub.s32 %v9466, %v9468
    %v9470 = vrot.slane %v9303, %v9469
    %v9472 = vunpack.c.l.s4 1983009808
    %v9473 = vunpack.c.0.s8 %v9472
    %v9474 = vlaneseq
    %v9475 = vshrl.u32 %v9474, 7
    %v9476 = vsub.s32 %v9473, %v9475
    %v9477 = vrot.slane %v9463, %v9476
    %v9478 = vcombine.high %v9470, %v9470
    %v9479 = vcombine.high %v9477, %v9477
    %v9480 = vcombine.high %v9304, %v9304
    %v9482 = vunpack.c.l.s4 1983009808
    %v9483 = vunpack.c.0.s8 %v9482
    %v9484 = vlaneseq
    %v9485 = vshrl.u32 %v9484, 7
    %v9486 = vsub.s32 %v9483, %v9485
    %v9487 = vrot.slane %v9304, %v9486
    %v9489 = vunpack.c.l.s4 1983009808
    %v9490 = vunpack.c.0.s8 %v9489
    %v9491 = vlaneseq
    %v9492 = vshrl.u32 %v9491, 7
    %v9493 = vsub.s32 %v9490, %v9492
    %v9494 = vrot.slane %v9480, %v9493
    %v9495 = vcombine.high %v9487, %v9487
    %v9496 = vcombine.high %v9494, %v9494
    %v9497 = vcombine.high %v9305, %v9305
    %v9499 = vunpack.c.l.s4 1983009808
    %v9500 = vunpack.c.0.s8 %v9499
    %v9501 = vlaneseq
    %v9502 = vshrl.u32 %v9501, 7
    %v9503 = vsub.s32 %v9500, %v9502
    %v9504 = vrot.slane %v9305, %v9503
    %v9506 = vunpack.c.l.s4 1983009808
    %v9507 = vunpack.c.0.s8 %v9506
    %v9508 = vlaneseq
    %v9509 = vshrl.u32 %v9508, 7
    %v9510 = vsub.s32 %v9507, %v9509
    %v9511 = vrot.slane %v9497, %v9510
    %v9512 = vcombine.high %v9504, %v9504
    %v9513 = vcombine.high %v9511, %v9511
    %v9514 = vcombine.high %v9306, %v9306
    %v9516 = vunpack.c.l.s4 1983009808
    %v9517 = vunpack.c.0.s8 %v9516
    %v9518 = vlaneseq
    %v9519 = vshrl.u32 %v9518, 7
    %v9520 = vsub.s32 %v9517, %v9519
    %v9521 = vrot.slane %v9306, %v9520
    %v9523 = vunpack.c.l.s4 1983009808
    %v9524 = vunpack.c.0.s8 %v9523
    %v9525 = vlaneseq
    %v9526 = vshrl.u32 %v9525, 7
    %v9527 = vsub.s32 %v9524, %v9526
    %v9528 = vrot.slane %v9514, %v9527
    %v9529 = vcombine.high %v9521, %v9521
    %v9530 = vcombine.high %v9528, %v9528
    %v9531 = vcombine.high %v9307, %v9307
    %v9533 = vunpack.c.l.s4 1983009808
    %v9534 = vunpack.c.0.s8 %v9533
    %v9535 = vlaneseq
    %v9536 = vshrl.u32 %v9535, 7
    %v9537 = vsub.s32 %v9534, %v9536
    %v9538 = vrot.slane %v9307, %v9537
    %v9540 = vunpack.c.l.s4 1983009808
    %v9541 = vunpack.c.0.s8 %v9540
    %v9542 = vlaneseq
    %v9543 = vshrl.u32 %v9542, 7
    %v9544 = vsub.s32 %v9541, %v9543
    %v9545 = vrot.slane %v9531, %v9544
    %v9546 = vcombine.high %v9538, %v9538
    %v9547 = vcombine.high %v9545, %v9545
    %v9548 = vcombine.high %v9308, %v9308
    %v9550 = vunpack.c.l.s4 1983009808
    %v9551 = vunpack.c.0.s8 %v9550
    %v9552 = vlaneseq
    %v9553 = vshrl.u32 %v9552, 7
    %v9554 = vsub.s32 %v9551, %v9553
    %v9555 = vrot.slane %v9308, %v9554
    %v9557 = vunpack.c.l.s4 1983009808
    %v9558 = vunpack.c.0.s8 %v9557
    %v9559 = vlaneseq
    %v9560 = vshrl.u32 %v9559, 7
    %v9561 = vsub.s32 %v9558, %v9560
    %v9562 = vrot.slane %v9548, %v9561
    %v9563 = vcombine.high %v9555, %v9555
    %v9564 = vcombine.high %v9562, %v9562
    %v9565 = vcombine.high %v9309, %v9309
    %v9567 = vunpack.c.l.s4 1983009808
    %v9568 = vunpack.c.0.s8 %v9567
    %v9569 = vlaneseq
    %v9570 = vshrl.u32 %v9569, 7
    %v9571 = vsub.s32 %v9568, %v9570
    %v9572 = vrot.slane %v9309, %v9571
    %v9574 = vunpack.c.l.s4 1983009808
    %v9575 = vunpack.c.0.s8 %v9574
    %v9576 = vlaneseq
    %v9577 = vshrl.u32 %v9576, 7
    %v9578 = vsub.s32 %v9575, %v9577
    %v9579 = vrot.slane %v9565, %v9578
    %v9580 = vcombine.high %v9572, %v9572
    %v9581 = vcombine.high %v9579, %v9579
    %v9582 = vcombine.high %v9310, %v9310
    %v9584 = vunpack.c.l.s4 1983009808
    %v9585 = vunpack.c.0.s8 %v9584
    %v9586 = vlaneseq
    %v9587 = vshrl.u32 %v9586, 7
    %v9588 = vsub.s32 %v9585, %v9587
    %v9589 = vrot.slane %v9310, %v9588
    %v9591 = vunpack.c.l.s4 1983009808
    %v9592 = vunpack.c.0.s8 %v9591
    %v9593 = vlaneseq
    %v9594 = vshrl.u32 %v9593, 7
    %v9595 = vsub.s32 %v9592, %v9594
    %v9596 = vrot.slane %v9582, %v9595
    %v9597 = vcombine.high %v9589, %v9589
    %v9598 = vcombine.high %v9596, %v9596
    %v9663 = vrot.slane %v9334, 7
    %v9664 = vrot.slane %v9663, 2
    %v9665 = vrot.slane %v9342, 7
    %v9666 = vrot.slane %v9665, 2
    %v9667 = vrot.slane %v9341, 7
    %v9668 = vrot.slane %v9667, 2
    %v9669 = vrot.slane %v9343, 7
    %v9670 = vrot.slane %v9669, 2
    %v9671 = vrot.slane %v9368, 7
    %v9672 = vrot.slane %v9671, 2
    %v9673 = vrot.slane %v9376, 7
    %v9674 = vrot.slane %v9673, 2
    %v9675 = vrot.slane %v9375, 7
    %v9676 = vrot.slane %v9675, 2
    %v9677 = vrot.slane %v9377, 7
    %v9678 = vrot.slane %v9677, 2
    %v9679 = vrot.slane %v9402, 7
    %v9680 = vrot.slane %v9679, 2
    %v9681 = vrot.slane %v9410, 7
    %v9682 = vrot.slane %v9681, 2
    %v9683 = vrot.slane %v9409, 7
    %v9684 = vrot.slane %v9683, 2
    %v9685 = vrot.slane %v9411, 7
    %v9686 = vrot.slane %v9685, 2
    %v9687 = vrot.slane %v9436, 7
    %v9688 = vrot.slane %v9687, 2
    %v9689 = vrot.slane %v9444, 7
    %v9690 = vrot.slane %v9689, 2
    %v9691 = vrot.slane %v9443, 7
    %v9692 = vrot.slane %v9691, 2
    %v9693 = vrot.slane %v9445, 7
    %v9694 = vrot.slane %v9693, 2
    %v9695 = vrot.slane %v9470, 7
    %v9696 = vrot.slane %v9695, 2
    %v9697 = vrot.slane %v9478, 7
    %v9698 = vrot.slane %v9697, 2
    %v9699 = vrot.slane %v9477, 7
    %v9700 = vrot.slane %v9699, 2
    %v9701 = vrot.slane %v9479, 7
    %v9702 = vrot.slane %v9701, 2
    %v9703 = vrot.slane %v9504, 7
    %v9704 = vrot.slane %v9703, 2
    %v9705 = vrot.slane %v9512, 7
    %v9706 = vrot.slane %v9705, 2
    %v9707 = vrot.slane %v9511, 7
    %v9708 = vrot.slane %v9707, 2
    %v9709 = vrot.slane %v9513, 7
    %v9710 = vrot.slane %v9709, 2
    %v9711 = vrot.slane %v9538, 7
    %v9712 = vrot.slane %v9711, 2
    %v9713 = vrot.slane %v9546, 7
    %v9714 = vrot.slane %v9713, 2
    %v9715 = vrot.slane %v9545, 7
    %v9716 = vrot.slane %v9715, 2
    %v9717 = vrot.slane %v9547, 7
    %v9718 = vrot.slane %v9717, 2
    %v9719 = vrot.slane %v9572, 7
    %v9720 = vrot.slane %v9719, 2
    %v9721 = vrot.slane %v9580, 7
    %v9722 = vrot.slane %v9721, 2
    %v9723 = vrot.slane %v9579, 7
    %v9724 = vrot.slane %v9723, 2
    %v9725 = vrot.slane %v9581, 7
    %v9726 = vrot.slane %v9725, 2
    %v9759 = vmax.f32 %v9334, %v9664
    %v9760 = vmax.f32 %v9342, %v9666
    %v9761 = vmax.f32 %v9341, %v9668
    %v9762 = vmax.f32 %v9343, %v9670
    %v9763 = vmax.f32 %v9368, %v9672
    %v9764 = vmax.f32 %v9376, %v9674
    %v9765 = vmax.f32 %v9375, %v9676
    %v9766 = vmax.f32 %v9377, %v9678
    %v9767 = vmax.f32 %v9402, %v9680
    %v9768 = vmax.f32 %v9410, %v9682
    %v9769 = vmax.f32 %v9409, %v9684
    %v9770 = vmax.f32 %v9411, %v9686
    %v9771 = vmax.f32 %v9436, %v9688
    %v9772 = vmax.f32 %v9444, %v9690
    %v9773 = vmax.f32 %v9443, %v9692
    %v9774 = vmax.f32 %v9445, %v9694
    %v9775 = vmax.f32 %v9470, %v9696
    %v9776 = vmax.f32 %v9478, %v9698
    %v9777 = vmax.f32 %v9477, %v9700
    %v9778 = vmax.f32 %v9479, %v9702
    %v9779 = vmax.f32 %v9504, %v9704
    %v9780 = vmax.f32 %v9512, %v9706
    %v9781 = vmax.f32 %v9511, %v9708
    %v9782 = vmax.f32 %v9513, %v9710
    %v9783 = vmax.f32 %v9538, %v9712
    %v9784 = vmax.f32 %v9546, %v9714
    %v9785 = vmax.f32 %v9545, %v9716
    %v9786 = vmax.f32 %v9547, %v9718
    %v9787 = vmax.f32 %v9572, %v9720
    %v9788 = vmax.f32 %v9580, %v9722
    %v9789 = vmax.f32 %v9579, %v9724
    %v9790 = vmax.f32 %v9581, %v9726
    %v9791 = vrot.slane %v9351, 7
    %v9792 = vrot.slane %v9791, 2
    %v9793 = vrot.slane %v9359, 7
    %v9794 = vrot.slane %v9793, 2
    %v9795 = vrot.slane %v9358, 7
    %v9796 = vrot.slane %v9795, 2
    %v9797 = vrot.slane %v9360, 7
    %v9798 = vrot.slane %v9797, 2
    %v9799 = vrot.slane %v9385, 7
    %v9800 = vrot.slane %v9799, 2
    %v9801 = vrot.slane %v9393, 7
    %v9802 = vrot.slane %v9801, 2
    %v9803 = vrot.slane %v9392, 7
    %v9804 = vrot.slane %v9803, 2
    %v9805 = vrot.slane %v9394, 7
    %v9806 = vrot.slane %v9805, 2
    %v9807 = vrot.slane %v9419, 7
    %v9808 = vrot.slane %v9807, 2
    %v9809 = vrot.slane %v9427, 7
    %v9810 = vrot.slane %v9809, 2
    %v9811 = vrot.slane %v9426, 7
    %v9812 = vrot.slane %v9811, 2
    %v9813 = vrot.slane %v9428, 7
    %v9814 = vrot.slane %v9813, 2
    %v9815 = vrot.slane %v9453, 7
    %v9816 = vrot.slane %v9815, 2
    %v9817 = vrot.slane %v9461, 7
    %v9818 = vrot.slane %v9817, 2
    %v9819 = vrot.slane %v9460, 7
    %v9820 = vrot.slane %v9819, 2
    %v9821 = vrot.slane %v9462, 7
    %v9822 = vrot.slane %v9821, 2
    %v9823 = vrot.slane %v9487, 7
    %v9824 = vrot.slane %v9823, 2
    %v9825 = vrot.slane %v9495, 7
    %v9826 = vrot.slane %v9825, 2
    %v9827 = vrot.slane %v9494, 7
    %v9828 = vrot.slane %v9827, 2
    %v9829 = vrot.slane %v9496, 7
    %v9830 = vrot.slane %v9829, 2
    %v9831 = vrot.slane %v9521, 7
    %v9832 = vrot.slane %v9831, 2
    %v9833 = vrot.slane %v9529, 7
    %v9834 = vrot.slane %v9833, 2
    %v9835 = vrot.slane %v9528, 7
    %v9836 = vrot.slane %v9835, 2
    %v9837 = vrot.slane %v9530, 7
    %v9838 = vrot.slane %v9837, 2
    %v9839 = vrot.slane %v9555, 7
    %v9840 = vrot.slane %v9839, 2
    %v9841 = vrot.slane %v9563, 7
    %v9842 = vrot.slane %v9841, 2
    %v9843 = vrot.slane %v9562, 7
    %v9844 = vrot.slane %v9843, 2
    %v9845 = vrot.slane %v9564, 7
    %v9846 = vrot.slane %v9845, 2
    %v9847 = vrot.slane %v9589, 7
    %v9848 = vrot.slane %v9847, 2
    %v9849 = vrot.slane %v9597, 7
    %v9850 = vrot.slane %v9849, 2
    %v9851 = vrot.slane %v9596, 7
    %v9852 = vrot.slane %v9851, 2
    %v9853 = vrot.slane %v9598, 7
    %v9854 = vrot.slane %v9853, 2
    %v9887 = vmax.f32 %v9351, %v9792
    %v9888 = vmax.f32 %v9359, %v9794
    %v9889 = vmax.f32 %v9358, %v9796
    %v9890 = vmax.f32 %v9360, %v9798
    %v9891 = vmax.f32 %v9385, %v9800
    %v9892 = vmax.f32 %v9393, %v9802
    %v9893 = vmax.f32 %v9392, %v9804
    %v9894 = vmax.f32 %v9394, %v9806
    %v9895 = vmax.f32 %v9419, %v9808
    %v9896 = vmax.f32 %v9427, %v9810
    %v9897 = vmax.f32 %v9426, %v9812
    %v9898 = vmax.f32 %v9428, %v9814
    %v9899 = vmax.f32 %v9453, %v9816
    %v9900 = vmax.f32 %v9461, %v9818
    %v9901 = vmax.f32 %v9460, %v9820
    %v9902 = vmax.f32 %v9462, %v9822
    %v9903 = vmax.f32 %v9487, %v9824
    %v9904 = vmax.f32 %v9495, %v9826
    %v9905 = vmax.f32 %v9494, %v9828
    %v9906 = vmax.f32 %v9496, %v9830
    %v9907 = vmax.f32 %v9521, %v9832
    %v9908 = vmax.f32 %v9529, %v9834
    %v9909 = vmax.f32 %v9528, %v9836
    %v9910 = vmax.f32 %v9530, %v9838
    %v9911 = vmax.f32 %v9555, %v9840
    %v9912 = vmax.f32 %v9563, %v9842
    %v9913 = vmax.f32 %v9562, %v9844
    %v9914 = vmax.f32 %v9564, %v9846
    %v9915 = vmax.f32 %v9589, %v9848
    %v9916 = vmax.f32 %v9597, %v9850
    %v9917 = vmax.f32 %v9596, %v9852
    %v9918 = vmax.f32 %v9598, %v9854
    %v9919 = vmax.f32 %v9759, %v9887
    %v9920 = vmax.f32 %v9760, %v9888
    %v9921 = vmax.f32 %v9761, %v9889
    %v9922 = vmax.f32 %v9762, %v9890
    %v9923 = vmax.f32 %v9763, %v9891
    %v9924 = vmax.f32 %v9764, %v9892
    %v9925 = vmax.f32 %v9765, %v9893
    %v9926 = vmax.f32 %v9766, %v9894
    %v9927 = vmax.f32 %v9767, %v9895
    %v9928 = vmax.f32 %v9768, %v9896
    %v9929 = vmax.f32 %v9769, %v9897
    %v9930 = vmax.f32 %v9770, %v9898
    %v9931 = vmax.f32 %v9771, %v9899
    %v9932 = vmax.f32 %v9772, %v9900
    %v9933 = vmax.f32 %v9773, %v9901
    %v9934 = vmax.f32 %v9774, %v9902
    %v9935 = vmax.f32 %v9775, %v9903
    %v9936 = vmax.f32 %v9776, %v9904
    %v9937 = vmax.f32 %v9777, %v9905
    %v9938 = vmax.f32 %v9778, %v9906
    %v9939 = vmax.f32 %v9779, %v9907
    %v9940 = vmax.f32 %v9780, %v9908
    %v9941 = vmax.f32 %v9781, %v9909
    %v9942 = vmax.f32 %v9782, %v9910
    %v9943 = vmax.f32 %v9783, %v9911
    %v9944 = vmax.f32 %v9784, %v9912
    %v9945 = vmax.f32 %v9785, %v9913
    %v9946 = vmax.f32 %v9786, %v9914
    %v9947 = vmax.f32 %v9787, %v9915
    %v9948 = vmax.f32 %v9788, %v9916
    %v9949 = vmax.f32 %v9789, %v9917
    %v9950 = vmax.f32 %v9790, %v9918
    %vm9951 = vcmask 521216
    %9952 = vst.msk [vmem:[#allocation4] sm:$0x3f] %vm9951, 0.0
    %9953 = vst.msk [vmem:[#allocation4 + $0x8] sm:$0x3f] %vm9951, 0.0
    %9954 = vst.msk [vmem:[#allocation4 + $0x10] sm:$0x3f] %vm9951, 0.0
    %9955 = vst.msk [vmem:[#allocation4 + $0x18] sm:$0x3f] %vm9951, 0.0
    %9956 = vst.msk [vmem:[#allocation4 + $0x20] sm:$0x3f] %vm9951, 0.0
    %9957 = vst.msk [vmem:[#allocation4 + $0x28] sm:$0x3f] %vm9951, 0.0
    %9958 = vst.msk [vmem:[#allocation4 + $0x30] sm:$0x3f] %vm9951, 0.0
    %9959 = vst.msk [vmem:[#allocation4 + $0x38] sm:$0x3f] %vm9951, 0.0
    %9960 = vst.msk [vmem:[#allocation4 + $0x40] sm:$0x3f] %vm9951, 0.0
    %9961 = vst.msk [vmem:[#allocation4 + $0x48] sm:$0x3f] %vm9951, 0.0
    %9962 = vst.msk [vmem:[#allocation4 + $0x50] sm:$0x3f] %vm9951, 0.0
    %9963 = vst.msk [vmem:[#allocation4 + $0x58] sm:$0x3f] %vm9951, 0.0
    %v9996 = vlaneseq
    %v9997 = vshrl.u32 %v9996, 7
    %v9998 = vsub.s32 0, %v9997
    %v9999 = vrot.slane %v9919, %v9998
    %v10000 = vlaneseq
    %v10001 = vshrl.u32 %v10000, 7
    %v10002 = vsub.s32 0, %v10001
    %v10003 = vrot.slane %v9920, %v10002
    %v10004 = vlaneseq
    %v10005 = vshrl.u32 %v10004, 7
    %v10006 = vsub.s32 0, %v10005
    %v10007 = vrot.slane %v9921, %v10006
    %v10008 = vlaneseq
    %v10009 = vshrl.u32 %v10008, 7
    %v10010 = vsub.s32 0, %v10009
    %v10011 = vrot.slane %v9922, %v10010
    %v10012 = vlaneseq
    %v10013 = vshrl.u32 %v10012, 7
    %v10014 = vsub.s32 0, %v10013
    %v10015 = vrot.slane %v9923, %v10014
    %v10016 = vlaneseq
    %v10017 = vshrl.u32 %v10016, 7
    %v10018 = vsub.s32 0, %v10017
    %v10019 = vrot.slane %v9924, %v10018
    %v10020 = vlaneseq
    %v10021 = vshrl.u32 %v10020, 7
    %v10022 = vsub.s32 0, %v10021
    %v10023 = vrot.slane %v9925, %v10022
    %v10024 = vlaneseq
    %v10025 = vshrl.u32 %v10024, 7
    %v10026 = vsub.s32 0, %v10025
    %v10027 = vrot.slane %v9926, %v10026
    %v10028 = vlaneseq
    %v10029 = vshrl.u32 %v10028, 7
    %v10030 = vsub.s32 0, %v10029
    %v10031 = vrot.slane %v9927, %v10030
    %v10032 = vlaneseq
    %v10033 = vshrl.u32 %v10032, 7
    %v10034 = vsub.s32 0, %v10033
    %v10035 = vrot.slane %v9928, %v10034
    %v10036 = vlaneseq
    %v10037 = vshrl.u32 %v10036, 7
    %v10038 = vsub.s32 0, %v10037
    %v10039 = vrot.slane %v9929, %v10038
    %v10040 = vlaneseq
    %v10041 = vshrl.u32 %v10040, 7
    %v10042 = vsub.s32 0, %v10041
    %v10043 = vrot.slane %v9930, %v10042
    %v10044 = vlaneseq
    %v10045 = vshrl.u32 %v10044, 7
    %v10046 = vsub.s32 0, %v10045
    %v10047 = vrot.slane %v9931, %v10046
    %v10048 = vlaneseq
    %v10049 = vshrl.u32 %v10048, 7
    %v10050 = vsub.s32 0, %v10049
    %v10051 = vrot.slane %v9932, %v10050
    %v10052 = vlaneseq
    %v10053 = vshrl.u32 %v10052, 7
    %v10054 = vsub.s32 0, %v10053
    %v10055 = vrot.slane %v9933, %v10054
    %v10056 = vlaneseq
    %v10057 = vshrl.u32 %v10056, 7
    %v10058 = vsub.s32 0, %v10057
    %v10059 = vrot.slane %v9934, %v10058
    %v10060 = vlaneseq
    %v10061 = vshrl.u32 %v10060, 7
    %v10062 = vsub.s32 0, %v10061
    %v10063 = vrot.slane %v9935, %v10062
    %v10064 = vlaneseq
    %v10065 = vshrl.u32 %v10064, 7
    %v10066 = vsub.s32 0, %v10065
    %v10067 = vrot.slane %v9936, %v10066
    %v10068 = vlaneseq
    %v10069 = vshrl.u32 %v10068, 7
    %v10070 = vsub.s32 0, %v10069
    %v10071 = vrot.slane %v9937, %v10070
    %v10072 = vlaneseq
    %v10073 = vshrl.u32 %v10072, 7
    %v10074 = vsub.s32 0, %v10073
    %v10075 = vrot.slane %v9938, %v10074
    %v10076 = vlaneseq
    %v10077 = vshrl.u32 %v10076, 7
    %v10078 = vsub.s32 0, %v10077
    %v10079 = vrot.slane %v9939, %v10078
    %v10080 = vlaneseq
    %v10081 = vshrl.u32 %v10080, 7
    %v10082 = vsub.s32 0, %v10081
    %v10083 = vrot.slane %v9940, %v10082
    %v10084 = vlaneseq
    %v10085 = vshrl.u32 %v10084, 7
    %v10086 = vsub.s32 0, %v10085
    %v10087 = vrot.slane %v9941, %v10086
    %v10088 = vlaneseq
    %v10089 = vshrl.u32 %v10088, 7
    %v10090 = vsub.s32 0, %v10089
    %v10091 = vrot.slane %v9942, %v10090
    %v10092 = vlaneseq
    %v10093 = vshrl.u32 %v10092, 7
    %v10094 = vsub.s32 0, %v10093
    %v10095 = vrot.slane %v9943, %v10094
    %v10096 = vlaneseq
    %v10097 = vshrl.u32 %v10096, 7
    %v10098 = vsub.s32 0, %v10097
    %v10099 = vrot.slane %v9944, %v10098
    %v10100 = vlaneseq
    %v10101 = vshrl.u32 %v10100, 7
    %v10102 = vsub.s32 0, %v10101
    %v10103 = vrot.slane %v9945, %v10102
    %v10104 = vlaneseq
    %v10105 = vshrl.u32 %v10104, 7
    %v10106 = vsub.s32 0, %v10105
    %v10107 = vrot.slane %v9946, %v10106
    %v10108 = vlaneseq
    %v10109 = vshrl.u32 %v10108, 7
    %v10110 = vsub.s32 0, %v10109
    %v10111 = vrot.slane %v9947, %v10110
    %v10112 = vlaneseq
    %v10113 = vshrl.u32 %v10112, 7
    %v10114 = vsub.s32 0, %v10113
    %v10115 = vrot.slane %v9948, %v10114
    %v10116 = vlaneseq
    %v10117 = vshrl.u32 %v10116, 7
    %v10118 = vsub.s32 0, %v10117
    %v10119 = vrot.slane %v9949, %v10118
    %v10120 = vlaneseq
    %v10121 = vshrl.u32 %v10120, 7
    %v10122 = vsub.s32 0, %v10121
    %v10123 = vrot.slane %v9950, %v10122
    %v10124 = vsel %vm7983, %v10003, %v9999
    %v10125 = vsel %vm7985, %v10007, %v10124
    %v10126 = vsel %vm7987, %v10011, %v10125
    %v10127 = vsel %vm7983, %v10019, %v10015
    %v10128 = vsel %vm7985, %v10023, %v10127
    %v10129 = vsel %vm7987, %v10027, %v10128
    %v10130 = vsel %vm7983, %v10035, %v10031
    %v10131 = vsel %vm7985, %v10039, %v10130
    %v10132 = vsel %vm7987, %v10043, %v10131
    %v10133 = vsel %vm7983, %v10051, %v10047
    %v10134 = vsel %vm7985, %v10055, %v10133
    %v10135 = vsel %vm7987, %v10059, %v10134
    %v10136 = vsel %vm7983, %v10067, %v10063
    %v10137 = vsel %vm7985, %v10071, %v10136
    %v10138 = vsel %vm7987, %v10075, %v10137
    %v10139 = vsel %vm7983, %v10083, %v10079
    %v10140 = vsel %vm7985, %v10087, %v10139
    %v10141 = vsel %vm7987, %v10091, %v10140
    %v10142 = vsel %vm7983, %v10099, %v10095
    %v10143 = vsel %vm7985, %v10103, %v10142
    %v10144 = vsel %vm7987, %v10107, %v10143
    %v10145 = vsel %vm7983, %v10115, %v10111
    %v10146 = vsel %vm7985, %v10119, %v10145
    %v10147 = vsel %vm7987, %v10123, %v10146
    %s10156 = scalar_lea.vmem [#allocation4], 8
    %vm10157 = vcmask 519168
    %10158 = vst.msk [vmem:[%s10156 + $0x1] sm:$0xf] %vm10157, %v10126
    %10159 = vst.msk [vmem:[%s10156 + $0x9] sm:$0xf] %vm10157, %v10129
    %10160 = vst.msk [vmem:[%s10156 + $0x11] sm:$0xf] %vm10157, %v10132
    %10161 = vst.msk [vmem:[%s10156 + $0x19] sm:$0xf] %vm10157, %v10135
    %10162 = vst.msk [vmem:[%s10156 + $0x31] sm:$0xf] %vm10157, %v10138
    %10163 = vst.msk [vmem:[%s10156 + $0x39] sm:$0xf] %vm10157, %v10141
    %10164 = vst.msk [vmem:[%s10156 + $0x41] sm:$0xf] %vm10157, %v10144
    %10165 = vst.msk [vmem:[%s10156 + $0x49] sm:$0xf] %vm10157, %v10147
    %v10166 = vld [vmem:[#allocation4] sm:$0xf]
    %v10167 = vld [vmem:[#allocation4 + $0x8] sm:$0xf]
    %v10168 = vld [vmem:[#allocation4 + $0x10] sm:$0xf]
    %v10169 = vld [vmem:[#allocation4 + $0x18] sm:$0xf]
    %v10170 = vld [vmem:[#allocation4 + $0x30] sm:$0xf]
    %v10171 = vld [vmem:[#allocation4 + $0x38] sm:$0xf]
    %v10172 = vld [vmem:[#allocation4 + $0x40] sm:$0xf]
    %v10173 = vld [vmem:[#allocation4 + $0x48] sm:$0xf]
    %v10174 = vld [vmem:[#allocation4 + $0x1] sm:$0xf]
    %v10175 = vld [vmem:[#allocation4 + $0x9] sm:$0xf]
    %v10176 = vld [vmem:[#allocation4 + $0x11] sm:$0xf]
    %v10177 = vld [vmem:[#allocation4 + $0x19] sm:$0xf]
    %v10178 = vld [vmem:[#allocation4 + $0x31] sm:$0xf]
    %v10179 = vld [vmem:[#allocation4 + $0x39] sm:$0xf]
    %v10180 = vld [vmem:[#allocation4 + $0x41] sm:$0xf]
    %v10181 = vld [vmem:[#allocation4 + $0x49] sm:$0xf]
    %v10182 = vld [vmem:[#allocation4 + $0x2] sm:$0xf]
    %v10183 = vld [vmem:[#allocation4 + $0xa] sm:$0xf]
    %v10184 = vld [vmem:[#allocation4 + $0x12] sm:$0xf]
    %v10185 = vld [vmem:[#allocation4 + $0x1a] sm:$0xf]
    %v10186 = vld [vmem:[#allocation4 + $0x32] sm:$0xf]
    %v10187 = vld [vmem:[#allocation4 + $0x3a] sm:$0xf]
    %v10188 = vld [vmem:[#allocation4 + $0x42] sm:$0xf]
    %v10189 = vld [vmem:[#allocation4 + $0x4a] sm:$0xf]
    %v10190 = vld [vmem:[%s10156] sm:$0xf]
    %v10191 = vld [vmem:[%s10156 + $0x8] sm:$0xf]
    %v10192 = vld [vmem:[%s10156 + $0x10] sm:$0xf]
    %v10193 = vld [vmem:[%s10156 + $0x18] sm:$0xf]
    %v10194 = vld [vmem:[%s10156 + $0x30] sm:$0xf]
    %v10195 = vld [vmem:[%s10156 + $0x38] sm:$0xf]
    %v10196 = vld [vmem:[%s10156 + $0x40] sm:$0xf]
    %v10197 = vld [vmem:[%s10156 + $0x48] sm:$0xf]
    %v10198 = vld [vmem:[%s10156 + $0x1] sm:$0xf]
    %v10199 = vld [vmem:[%s10156 + $0x9] sm:$0xf]
    %v10200 = vld [vmem:[%s10156 + $0x11] sm:$0xf]
    %v10201 = vld [vmem:[%s10156 + $0x19] sm:$0xf]
    %v10202 = vld [vmem:[%s10156 + $0x31] sm:$0xf]
    %v10203 = vld [vmem:[%s10156 + $0x39] sm:$0xf]
    %v10204 = vld [vmem:[%s10156 + $0x41] sm:$0xf]
    %v10205 = vld [vmem:[%s10156 + $0x49] sm:$0xf]
    %v10206 = vld [vmem:[%s10156 + $0x2] sm:$0xf]
    %v10207 = vld [vmem:[%s10156 + $0xa] sm:$0xf]
    %v10208 = vld [vmem:[%s10156 + $0x12] sm:$0xf]
    %v10209 = vld [vmem:[%s10156 + $0x1a] sm:$0xf]
    %v10210 = vld [vmem:[%s10156 + $0x32] sm:$0xf]
    %v10211 = vld [vmem:[%s10156 + $0x3a] sm:$0xf]
    %v10212 = vld [vmem:[%s10156 + $0x42] sm:$0xf]
    %v10213 = vld [vmem:[%s10156 + $0x4a] sm:$0xf]
    %s10214 = scalar_lea.vmem [#allocation4], 16
    %v10215 = vld [vmem:[%s10214] sm:$0xf]
    %v10216 = vld [vmem:[%s10214 + $0x8] sm:$0xf]
    %v10217 = vld [vmem:[%s10214 + $0x10] sm:$0xf]
    %v10218 = vld [vmem:[%s10214 + $0x18] sm:$0xf]
    %v10219 = vld [vmem:[%s10214 + $0x30] sm:$0xf]
    %v10220 = vld [vmem:[%s10214 + $0x38] sm:$0xf]
    %v10221 = vld [vmem:[%s10214 + $0x40] sm:$0xf]
    %v10222 = vld [vmem:[%s10214 + $0x48] sm:$0xf]
    %v10223 = vld [vmem:[%s10214 + $0x1] sm:$0xf]
    %v10224 = vld [vmem:[%s10214 + $0x9] sm:$0xf]
    %v10225 = vld [vmem:[%s10214 + $0x11] sm:$0xf]
    %v10226 = vld [vmem:[%s10214 + $0x19] sm:$0xf]
    %v10227 = vld [vmem:[%s10214 + $0x31] sm:$0xf]
    %v10228 = vld [vmem:[%s10214 + $0x39] sm:$0xf]
    %v10229 = vld [vmem:[%s10214 + $0x41] sm:$0xf]
    %v10230 = vld [vmem:[%s10214 + $0x49] sm:$0xf]
    %v10231 = vld [vmem:[%s10214 + $0x2] sm:$0xf]
    %v10232 = vld [vmem:[%s10214 + $0xa] sm:$0xf]
    %v10233 = vld [vmem:[%s10214 + $0x12] sm:$0xf]
    %v10234 = vld [vmem:[%s10214 + $0x1a] sm:$0xf]
    %v10235 = vld [vmem:[%s10214 + $0x32] sm:$0xf]
    %v10236 = vld [vmem:[%s10214 + $0x3a] sm:$0xf]
    %v10237 = vld [vmem:[%s10214 + $0x42] sm:$0xf]
    %v10238 = vld [vmem:[%s10214 + $0x4a] sm:$0xf]
    %10247 = vrot.lane.b32.xlu0 %v10174, 64
    %v10248 = vpop.permute.xlu0 %10247
    %10249 = vrot.lane.b32.xlu0 %v10175, 64
    %v10250 = vpop.permute.xlu0 %10249
    %10251 = vrot.lane.b32.xlu0 %v10176, 64
    %v10252 = vpop.permute.xlu0 %10251
    %10253 = vrot.lane.b32.xlu0 %v10177, 64
    %v10254 = vpop.permute.xlu0 %10253
    %10255 = vrot.lane.b32.xlu0 %v10178, 64
    %v10256 = vpop.permute.xlu0 %10255
    %10257 = vrot.lane.b32.xlu0 %v10179, 64
    %v10258 = vpop.permute.xlu0 %10257
    %10259 = vrot.lane.b32.xlu0 %v10180, 64
    %v10260 = vpop.permute.xlu0 %10259
    %10261 = vrot.lane.b32.xlu0 %v10181, 64
    %v10262 = vpop.permute.xlu0 %10261
    %10279 = vrot.lane.b32.xlu0 %v10190, 64
    %v10280 = vpop.permute.xlu0 %10279
    %10281 = vrot.lane.b32.xlu0 %v10191, 64
    %v10282 = vpop.permute.xlu0 %10281
    %10283 = vrot.lane.b32.xlu0 %v10192, 64
    %v10284 = vpop.permute.xlu0 %10283
    %10285 = vrot.lane.b32.xlu0 %v10193, 64
    %v10286 = vpop.permute.xlu0 %10285
    %10287 = vrot.lane.b32.xlu0 %v10194, 64
    %v10288 = vpop.permute.xlu0 %10287
    %10289 = vrot.lane.b32.xlu0 %v10195, 64
    %v10290 = vpop.permute.xlu0 %10289
    %10291 = vrot.lane.b32.xlu0 %v10196, 64
    %v10292 = vpop.permute.xlu0 %10291
    %10293 = vrot.lane.b32.xlu0 %v10197, 64
    %v10294 = vpop.permute.xlu0 %10293
    %10311 = vrot.lane.b32.xlu0 %v10206, 64
    %v10312 = vpop.permute.xlu0 %10311
    %10313 = vrot.lane.b32.xlu0 %v10207, 64
    %v10314 = vpop.permute.xlu0 %10313
    %10315 = vrot.lane.b32.xlu0 %v10208, 64
    %v10316 = vpop.permute.xlu0 %10315
    %10317 = vrot.lane.b32.xlu0 %v10209, 64
    %v10318 = vpop.permute.xlu0 %10317
    %10319 = vrot.lane.b32.xlu0 %v10210, 64
    %v10320 = vpop.permute.xlu0 %10319
    %10321 = vrot.lane.b32.xlu0 %v10211, 64
    %v10322 = vpop.permute.xlu0 %10321
    %10323 = vrot.lane.b32.xlu0 %v10212, 64
    %v10324 = vpop.permute.xlu0 %10323
    %10325 = vrot.lane.b32.xlu0 %v10213, 64
    %v10326 = vpop.permute.xlu0 %10325
    %10343 = vrot.lane.b32.xlu0 %v10223, 64
    %v10344 = vpop.permute.xlu0 %10343
    %10345 = vrot.lane.b32.xlu0 %v10224, 64
    %v10346 = vpop.permute.xlu0 %10345
    %10347 = vrot.lane.b32.xlu0 %v10225, 64
    %v10348 = vpop.permute.xlu0 %10347
    %10349 = vrot.lane.b32.xlu0 %v10226, 64
    %v10350 = vpop.permute.xlu0 %10349
    %10351 = vrot.lane.b32.xlu0 %v10227, 64
    %v10352 = vpop.permute.xlu0 %10351
    %10353 = vrot.lane.b32.xlu0 %v10228, 64
    %v10354 = vpop.permute.xlu0 %10353
    %10355 = vrot.lane.b32.xlu0 %v10229, 64
    %v10356 = vpop.permute.xlu0 %10355
    %10357 = vrot.lane.b32.xlu0 %v10230, 64
    %v10358 = vpop.permute.xlu0 %10357
    %v10367 = vsel %vm3482, %v10166, %v10248
    %v10368 = vsel %vm3482, %v10167, %v10250
    %v10369 = vsel %vm3482, %v10168, %v10252
    %v10370 = vsel %vm3482, %v10169, %v10254
    %v10371 = vsel %vm3482, %v10170, %v10256
    %v10372 = vsel %vm3482, %v10171, %v10258
    %v10373 = vsel %vm3482, %v10172, %v10260
    %v10374 = vsel %vm3482, %v10173, %v10262
    %v10375 = vsel %vm3482, %v10182, %v10280
    %v10376 = vsel %vm3482, %v10183, %v10282
    %v10377 = vsel %vm3482, %v10184, %v10284
    %v10378 = vsel %vm3482, %v10185, %v10286
    %v10379 = vsel %vm3482, %v10186, %v10288
    %v10380 = vsel %vm3482, %v10187, %v10290
    %v10381 = vsel %vm3482, %v10188, %v10292
    %v10382 = vsel %vm3482, %v10189, %v10294
    %v10383 = vsel %vm3482, %v10198, %v10312
    %v10384 = vsel %vm3482, %v10199, %v10314
    %v10385 = vsel %vm3482, %v10200, %v10316
    %v10386 = vsel %vm3482, %v10201, %v10318
    %v10387 = vsel %vm3482, %v10202, %v10320
    %v10388 = vsel %vm3482, %v10203, %v10322
    %v10389 = vsel %vm3482, %v10204, %v10324
    %v10390 = vsel %vm3482, %v10205, %v10326
    %v10391 = vsel %vm3482, %v10215, %v10344
    %v10392 = vsel %vm3482, %v10216, %v10346
    %v10393 = vsel %vm3482, %v10217, %v10348
    %v10394 = vsel %vm3482, %v10218, %v10350
    %v10395 = vsel %vm3482, %v10219, %v10352
    %v10396 = vsel %vm3482, %v10220, %v10354
    %v10397 = vsel %vm3482, %v10221, %v10356
    %v10398 = vsel %vm3482, %v10222, %v10358
    %v10439 = vcombine.low %v10367, %v10375
    %v10440 = vcombine.low %v10383, %v10391
    %v10441 = vcombine.low %v10368, %v10376
    %v10442 = vcombine.low %v10384, %v10392
    %v10443 = vcombine.low %v10369, %v10377
    %v10444 = vcombine.low %v10385, %v10393
    %v10445 = vcombine.low %v10370, %v10378
    %v10446 = vcombine.low %v10386, %v10394
    %v10447 = vcombine.low %v10371, %v10379
    %v10448 = vcombine.low %v10387, %v10395
    %v10449 = vcombine.low %v10372, %v10380
    %v10450 = vcombine.low %v10388, %v10396
    %v10451 = vcombine.low %v10373, %v10381
    %v10452 = vcombine.low %v10389, %v10397
    %v10453 = vcombine.low %v10374, %v10382
    %v10454 = vcombine.low %v10390, %v10398
    %v10455 = vld [vmem:[%s3] sm:$0xff]
    %v10456 = vld [vmem:[%s3 + $0x8] sm:$0xff]
    %v10457 = vld [vmem:[%s3 + $0x10] sm:$0xff]
    %v10458 = vld [vmem:[%s3 + $0x18] sm:$0xff]
    %v10459 = vld [vmem:[%s3 + $0x20] sm:$0xff]
    %v10460 = vld [vmem:[%s3 + $0x28] sm:$0xff]
    %v10461 = vld [vmem:[%s3 + $0x30] sm:$0xff]
    %v10462 = vld [vmem:[%s3 + $0x38] sm:$0xff]
    %v10463 = vld [vmem:[%s3 + $0x40] sm:$0xff]
    %v10464 = vld [vmem:[%s3 + $0x48] sm:$0xff]
    %v10465 = vld [vmem:[%s3 + $0x50] sm:$0xff]
    %v10466 = vld [vmem:[%s3 + $0x58] sm:$0xff]
    %v10467 = vld [vmem:[%s3 + $0x60] sm:$0xff]
    %v10468 = vld [vmem:[%s3 + $0x68] sm:$0xff]
    %v10469 = vld [vmem:[%s3 + $0x70] sm:$0xff]
    %v10470 = vld [vmem:[%s3 + $0x78] sm:$0xff]
    %v10471 = vld [vmem:[%s3 + $0x80] sm:$0xff]
    %v10472 = vld [vmem:[%s3 + $0x88] sm:$0xff]
    %v10473 = vld [vmem:[%s3 + $0x90] sm:$0xff]
    %v10474 = vld [vmem:[%s3 + $0x98] sm:$0xff]
    %v10475 = vld [vmem:[%s3 + $0xa0] sm:$0xff]
    %v10476 = vld [vmem:[%s3 + $0xa8] sm:$0xff]
    %v10477 = vld [vmem:[%s3 + $0xb0] sm:$0xff]
    %v10478 = vld [vmem:[%s3 + $0xb8] sm:$0xff]
    %v10479 = vld [vmem:[%s3 + $0xc0] sm:$0xff]
    %v10480 = vld [vmem:[%s3 + $0xc8] sm:$0xff]
    %v10481 = vld [vmem:[%s3 + $0xd0] sm:$0xff]
    %v10482 = vld [vmem:[%s3 + $0xd8] sm:$0xff]
    %v10483 = vld [vmem:[%s3 + $0xe0] sm:$0xff]
    %v10484 = vld [vmem:[%s3 + $0xe8] sm:$0xff]
    %v10485 = vld [vmem:[%s3 + $0xf0] sm:$0xff]
    %v10486 = vld [vmem:[%s3 + $0xf8] sm:$0xff]
    %v10487 = vld [vmem:[%s3 + $0x100] sm:$0xff]
    %v10488 = vld [vmem:[%s3 + $0x108] sm:$0xff]
    %v10489 = vld [vmem:[%s3 + $0x110] sm:$0xff]
    %v10490 = vld [vmem:[%s3 + $0x118] sm:$0xff]
    %v10491 = vld [vmem:[%s3 + $0x120] sm:$0xff]
    %v10492 = vld [vmem:[%s3 + $0x128] sm:$0xff]
    %v10493 = vld [vmem:[%s3 + $0x130] sm:$0xff]
    %v10494 = vld [vmem:[%s3 + $0x138] sm:$0xff]
    %v10495 = vld [vmem:[%s3 + $0x140] sm:$0xff]
    %v10496 = vld [vmem:[%s3 + $0x148] sm:$0xff]
    %v10497 = vld [vmem:[%s3 + $0x150] sm:$0xff]
    %v10498 = vld [vmem:[%s3 + $0x158] sm:$0xff]
    %v10499 = vld [vmem:[%s3 + $0x160] sm:$0xff]
    %v10500 = vld [vmem:[%s3 + $0x168] sm:$0xff]
    %v10501 = vld [vmem:[%s3 + $0x170] sm:$0xff]
    %v10502 = vld [vmem:[%s3 + $0x178] sm:$0xff]
    %v10503 = vld [vmem:[%s3 + $0x180] sm:$0xff]
    %v10504 = vld [vmem:[%s3 + $0x188] sm:$0xff]
    %v10505 = vld [vmem:[%s3 + $0x190] sm:$0xff]
    %v10506 = vld [vmem:[%s3 + $0x198] sm:$0xff]
    %v10507 = vld [vmem:[%s3 + $0x1a0] sm:$0xff]
    %v10508 = vld [vmem:[%s3 + $0x1a8] sm:$0xff]
    %v10509 = vld [vmem:[%s3 + $0x1b0] sm:$0xff]
    %v10510 = vld [vmem:[%s3 + $0x1b8] sm:$0xff]
    %v10511 = vld [vmem:[%s3 + $0x1c0] sm:$0xff]
    %v10512 = vld [vmem:[%s3 + $0x1c8] sm:$0xff]
    %v10513 = vld [vmem:[%s3 + $0x1d0] sm:$0xff]
    %v10514 = vld [vmem:[%s3 + $0x1d8] sm:$0xff]
    %v10515 = vld [vmem:[%s3 + $0x1e0] sm:$0xff]
    %v10516 = vld [vmem:[%s3 + $0x1e8] sm:$0xff]
    %v10517 = vld [vmem:[%s3 + $0x1f0] sm:$0xff]
    %v10518 = vld [vmem:[%s3 + $0x1f8] sm:$0xff]
    %v10519 = vld [vmem:[%s3 + $0x200] sm:$0xff]
    %v10520 = vld [vmem:[%s3 + $0x208] sm:$0xff]
    %v10521 = vld [vmem:[%s3 + $0x210] sm:$0xff]
    %v10522 = vld [vmem:[%s3 + $0x218] sm:$0xff]
    %v10523 = vld [vmem:[%s3 + $0x220] sm:$0xff]
    %v10524 = vld [vmem:[%s3 + $0x228] sm:$0xff]
    %v10525 = vld [vmem:[%s3 + $0x230] sm:$0xff]
    %v10526 = vld [vmem:[%s3 + $0x238] sm:$0xff]
    %v10527 = vcombine.low %v10439, %v10441
    %v10528 = vcombine.high %v10439, %v10441
    %v10529 = vcombine.low %v10440, %v10442
    %v10530 = vcombine.high %v10440, %v10442
    %v10531 = vcombine.low %v10231, %v10232
    %v10532 = vcombine.low %v10443, %v10445
    %v10533 = vcombine.high %v10443, %v10445
    %v10534 = vcombine.low %v10444, %v10446
    %v10535 = vcombine.high %v10444, %v10446
    %v10536 = vcombine.low %v10233, %v10234
    %v10537 = vcombine.low %v10447, %v10449
    %v10538 = vcombine.high %v10447, %v10449
    %v10539 = vcombine.low %v10448, %v10450
    %v10540 = vcombine.high %v10448, %v10450
    %v10541 = vcombine.low %v10235, %v10236
    %v10542 = vcombine.low %v10451, %v10453
    %v10543 = vcombine.high %v10451, %v10453
    %v10544 = vcombine.low %v10452, %v10454
    %v10545 = vcombine.high %v10452, %v10454
    %v10546 = vcombine.low %v10237, %v10238
    %v10563 = vsel %vm3482, %v10531, 0
    %v10565 = vsel %vm3482, %v10536, 0
    %v10567 = vsel %vm3482, %v10541, 0
    %v10569 = vsel %vm3482, %v10546, 0
    %10571 = vmatprep.subr.mxu0 0.0
    %10572 = vmatpush1.msra.mxu0 %v10470
    %10573 = vmatprep.subr.mxu0 0.0
    %10574 = vmatpush1.msra.mxu0 %v10469
    %10575 = vmatprep.subr.mxu0 0.0
    %10576 = vmatpush1.msra.mxu0 %v10468
    %10577 = vmatprep.subr.mxu0 0.0
    %10578 = vmatpush1.msra.mxu0 %v10467
    %10579 = vmatprep.subr.mxu0 0.0
    %10580 = vmatpush1.msra.mxu0 %v10466
    %10581 = vmatprep.subr.mxu0 0.0
    %10582 = vmatpush1.msra.mxu0 %v10465
    %10583 = vmatprep.subr.mxu0 0.0
    %10584 = vmatpush1.msra.mxu0 %v10464
    %10585 = vmatprep.subr.mxu0 0.0
    %10586 = vmatpush1.msra.mxu0 %v10463
    %10587 = vmatprep.subr.mxu0 0.0
    %10588 = vmatpush1.msra.mxu0 %v10462
    %10589 = vmatprep.subr.mxu0 0.0
    %10590 = vmatpush1.msra.mxu0 %v10461
    %10591 = vmatprep.subr.mxu0 0.0
    %10592 = vmatpush1.msra.mxu0 %v10460
    %10593 = vmatprep.subr.mxu0 0.0
    %10594 = vmatpush1.msra.mxu0 %v10459
    %10595 = vmatprep.subr.mxu0 0.0
    %10596 = vmatpush1.msra.mxu0 %v10458
    %10597 = vmatprep.subr.mxu0 0.0
    %10598 = vmatpush1.msra.mxu0 %v10457
    %10599 = vmatprep.subr.mxu0 0.0
    %10600 = vmatpush1.msra.mxu0 %v10456
    %10601 = vmatprep.subr.mxu0 0.0
    %10602 = vmatpush1.msra.mxu0 %v10455
    %10603 = vmatprep.subr.mxu0 0.0
    %10604 = vmatpush2.msra.mxu0 %v10486
    %10605 = vmatprep.subr.mxu0 0.0
    %10606 = vmatpush2.msra.mxu0 %v10485
    %10607 = vmatprep.subr.mxu0 0.0
    %10608 = vmatpush2.msra.mxu0 %v10484
    %10609 = vmatprep.subr.mxu0 0.0
    %10610 = vmatpush2.msra.mxu0 %v10483
    %10611 = vmatprep.subr.mxu0 0.0
    %10612 = vmatpush2.msra.mxu0 %v10482
    %10613 = vmatprep.subr.mxu0 0.0
    %10614 = vmatpush2.msra.mxu0 %v10481
    %10615 = vmatprep.subr.mxu0 0.0
    %10616 = vmatpush2.msra.mxu0 %v10480
    %10617 = vmatprep.subr.mxu0 0.0
    %10618 = vmatpush2.msra.mxu0 %v10479
    %10619 = vmatprep.subr.mxu0 0.0
    %10620 = vmatpush2.msra.mxu0 %v10478
    %10621 = vmatprep.subr.mxu0 0.0
    %10622 = vmatpush2.msra.mxu0 %v10477
    %10623 = vmatprep.subr.mxu0 0.0
    %10624 = vmatpush2.msra.mxu0 %v10476
    %10625 = vmatprep.subr.mxu0 0.0
    %10626 = vmatpush2.msra.mxu0 %v10475
    %10627 = vmatprep.subr.mxu0 0.0
    %10628 = vmatpush2.msra.mxu0 %v10474
    %10629 = vmatprep.subr.mxu0 0.0
    %10630 = vmatpush2.msra.mxu0 %v10473
    %10631 = vmatprep.subr.mxu0 0.0
    %10632 = vmatpush2.msra.mxu0 %v10472
    %10633 = vmatprep.subr.mxu0 0.0
    %10634 = vmatpush2.msra.mxu0 %v10471
    %10635 = vmatprep.mubr.f32.mxu0 %v10528
    %10636 = vmatmul.mubr.f32.gmra.mxu0 %v10527
    %v10637 = vpop.f32.mrf.mxu0
    %v10638 = vadd.f32 0.0, %v10637
    %v10639 = vpop.f32.mrf.mxu0
    %10640 = vmatprep.mubr.f32.mxu0 %v10533
    %10641 = vmatmul.mubr.f32.gmra.mxu0 %v10532
    %v10642 = vpop.f32.mrf.mxu0
    %v10643 = vadd.f32 0.0, %v10642
    %v10644 = vpop.f32.mrf.mxu0
    %10645 = vmatprep.mubr.f32.mxu0 %v10538
    %10646 = vmatmul.mubr.f32.gmra.mxu0 %v10537
    %v10647 = vpop.f32.mrf.mxu0
    %v10648 = vadd.f32 0.0, %v10647
    %v10649 = vpop.f32.mrf.mxu0
    %10650 = vmatprep.mubr.f32.mxu0 %v10543
    %10651 = vmatmul.mubr.f32.gmra.mxu0 %v10542
    %v10652 = vpop.f32.mrf.mxu0
    %v10653 = vadd.f32 0.0, %v10652
    %v10654 = vpop.f32.mrf.mxu0
    %10655 = vdwg.mxu0
    %10656 = vmatprep.subr.mxu0 0.0
    %10657 = vmatpush1.msra.mxu0 %v10502
    %10658 = vmatprep.subr.mxu0 0.0
    %10659 = vmatpush1.msra.mxu0 %v10501
    %10660 = vmatprep.subr.mxu0 0.0
    %10661 = vmatpush1.msra.mxu0 %v10500
    %10662 = vmatprep.subr.mxu0 0.0
    %10663 = vmatpush1.msra.mxu0 %v10499
    %10664 = vmatprep.subr.mxu0 0.0
    %10665 = vmatpush1.msra.mxu0 %v10498
    %10666 = vmatprep.subr.mxu0 0.0
    %10667 = vmatpush1.msra.mxu0 %v10497
    %10668 = vmatprep.subr.mxu0 0.0
    %10669 = vmatpush1.msra.mxu0 %v10496
    %10670 = vmatprep.subr.mxu0 0.0
    %10671 = vmatpush1.msra.mxu0 %v10495
    %10672 = vmatprep.subr.mxu0 0.0
    %10673 = vmatpush1.msra.mxu0 %v10494
    %10674 = vmatprep.subr.mxu0 0.0
    %10675 = vmatpush1.msra.mxu0 %v10493
    %10676 = vmatprep.subr.mxu0 0.0
    %10677 = vmatpush1.msra.mxu0 %v10492
    %10678 = vmatprep.subr.mxu0 0.0
    %10679 = vmatpush1.msra.mxu0 %v10491
    %10680 = vmatprep.subr.mxu0 0.0
    %10681 = vmatpush1.msra.mxu0 %v10490
    %10682 = vmatprep.subr.mxu0 0.0
    %10683 = vmatpush1.msra.mxu0 %v10489
    %10684 = vmatprep.subr.mxu0 0.0
    %10685 = vmatpush1.msra.mxu0 %v10488
    %10686 = vmatprep.subr.mxu0 0.0
    %10687 = vmatpush1.msra.mxu0 %v10487
    %10688 = vmatprep.subr.mxu0 0.0
    %10689 = vmatpush2.msra.mxu0 %v10518
    %10690 = vmatprep.subr.mxu0 0.0
    %10691 = vmatpush2.msra.mxu0 %v10517
    %10692 = vmatprep.subr.mxu0 0.0
    %10693 = vmatpush2.msra.mxu0 %v10516
    %10694 = vmatprep.subr.mxu0 0.0
    %10695 = vmatpush2.msra.mxu0 %v10515
    %10696 = vmatprep.subr.mxu0 0.0
    %10697 = vmatpush2.msra.mxu0 %v10514
    %10698 = vmatprep.subr.mxu0 0.0
    %10699 = vmatpush2.msra.mxu0 %v10513
    %10700 = vmatprep.subr.mxu0 0.0
    %10701 = vmatpush2.msra.mxu0 %v10512
    %10702 = vmatprep.subr.mxu0 0.0
    %10703 = vmatpush2.msra.mxu0 %v10511
    %10704 = vmatprep.subr.mxu0 0.0
    %10705 = vmatpush2.msra.mxu0 %v10510
    %10706 = vmatprep.subr.mxu0 0.0
    %10707 = vmatpush2.msra.mxu0 %v10509
    %10708 = vmatprep.subr.mxu0 0.0
    %10709 = vmatpush2.msra.mxu0 %v10508
    %10710 = vmatprep.subr.mxu0 0.0
    %10711 = vmatpush2.msra.mxu0 %v10507
    %10712 = vmatprep.subr.mxu0 0.0
    %10713 = vmatpush2.msra.mxu0 %v10506
    %10714 = vmatprep.subr.mxu0 0.0
    %10715 = vmatpush2.msra.mxu0 %v10505
    %10716 = vmatprep.subr.mxu0 0.0
    %10717 = vmatpush2.msra.mxu0 %v10504
    %10718 = vmatprep.subr.mxu0 0.0
    %10719 = vmatpush2.msra.mxu0 %v10503
    %10720 = vmatprep.mubr.f32.mxu0 %v10530
    %10721 = vmatmul.mubr.f32.gmra.mxu0 %v10529
    %v10722 = vpop.f32.mrf.mxu0
    %v10723 = vadd.f32 %v10638, %v10722
    %v10724 = vpop.f32.mrf.mxu0
    %10725 = vmatprep.mubr.f32.mxu0 %v10535
    %10726 = vmatmul.mubr.f32.gmra.mxu0 %v10534
    %v10727 = vpop.f32.mrf.mxu0
    %v10728 = vadd.f32 %v10643, %v10727
    %v10729 = vpop.f32.mrf.mxu0
    %10730 = vmatprep.mubr.f32.mxu0 %v10540
    %10731 = vmatmul.mubr.f32.gmra.mxu0 %v10539
    %v10732 = vpop.f32.mrf.mxu0
    %v10733 = vadd.f32 %v10648, %v10732
    %v10734 = vpop.f32.mrf.mxu0
    %10735 = vmatprep.mubr.f32.mxu0 %v10545
    %10736 = vmatmul.mubr.f32.gmra.mxu0 %v10544
    %v10737 = vpop.f32.mrf.mxu0
    %v10738 = vadd.f32 %v10653, %v10737
    %v10739 = vpop.f32.mrf.mxu0
    %10740 = vdwg.mxu0
    %10741 = vmatprep.subr.mxu0 0.0
    %10742 = vmatpush1.msra.mxu0 0.0
    %10743 = vmatprep.subr.mxu0 0.0
    %10744 = vmatpush1.msra.mxu0 0.0
    %10745 = vmatprep.subr.mxu0 0.0
    %10746 = vmatpush1.msra.mxu0 0.0
    %10747 = vmatprep.subr.mxu0 0.0
    %10748 = vmatpush1.msra.mxu0 0.0
    %10749 = vmatprep.subr.mxu0 0.0
    %10750 = vmatpush1.msra.mxu0 0.0
    %10751 = vmatprep.subr.mxu0 0.0
    %10752 = vmatpush1.msra.mxu0 0.0
    %10753 = vmatprep.subr.mxu0 0.0
    %10754 = vmatpush1.msra.mxu0 0.0
    %10755 = vmatprep.subr.mxu0 0.0
    %10756 = vmatpush1.msra.mxu0 0.0
    %10757 = vmatprep.subr.mxu0 0.0
    %10758 = vmatpush1.msra.mxu0 %v10526
    %10759 = vmatprep.subr.mxu0 0.0
    %10760 = vmatpush1.msra.mxu0 %v10525
    %10761 = vmatprep.subr.mxu0 0.0
    %10762 = vmatpush1.msra.mxu0 %v10524
    %10763 = vmatprep.subr.mxu0 0.0
    %10764 = vmatpush1.msra.mxu0 %v10523
    %10765 = vmatprep.subr.mxu0 0.0
    %10766 = vmatpush1.msra.mxu0 %v10522
    %10767 = vmatprep.subr.mxu0 0.0
    %10768 = vmatpush1.msra.mxu0 %v10521
    %10769 = vmatprep.subr.mxu0 0.0
    %10770 = vmatpush1.msra.mxu0 %v10520
    %10771 = vmatprep.subr.mxu0 0.0
    %10772 = vmatpush1.msra.mxu0 %v10519
    %10773 = vmatprep.subr.mxu0 0.0
    %10774 = vmatpush2.msra.mxu0 0.0
    %10775 = vmatprep.subr.mxu0 0.0
    %10776 = vmatpush2.msra.mxu0 0.0
    %10777 = vmatprep.subr.mxu0 0.0
    %10778 = vmatpush2.msra.mxu0 0.0
    %10779 = vmatprep.subr.mxu0 0.0
    %10780 = vmatpush2.msra.mxu0 0.0
    %10781 = vmatprep.subr.mxu0 0.0
    %10782 = vmatpush2.msra.mxu0 0.0
    %10783 = vmatprep.subr.mxu0 0.0
    %10784 = vmatpush2.msra.mxu0 0.0
    %10785 = vmatprep.subr.mxu0 0.0
    %10786 = vmatpush2.msra.mxu0 0.0
    %10787 = vmatprep.subr.mxu0 0.0
    %10788 = vmatpush2.msra.mxu0 0.0
    %10789 = vmatprep.subr.mxu0 0.0
    %10790 = vmatpush2.msra.mxu0 0.0
    %10791 = vmatprep.subr.mxu0 0.0
    %10792 = vmatpush2.msra.mxu0 0.0
    %10793 = vmatprep.subr.mxu0 0.0
    %10794 = vmatpush2.msra.mxu0 0.0
    %10795 = vmatprep.subr.mxu0 0.0
    %10796 = vmatpush2.msra.mxu0 0.0
    %10797 = vmatprep.subr.mxu0 0.0
    %10798 = vmatpush2.msra.mxu0 0.0
    %10799 = vmatprep.subr.mxu0 0.0
    %10800 = vmatpush2.msra.mxu0 0.0
    %10801 = vmatprep.subr.mxu0 0.0
    %10802 = vmatpush2.msra.mxu0 0.0
    %10803 = vmatprep.subr.mxu0 0.0
    %10804 = vmatpush2.msra.mxu0 0.0
    %10805 = vmatprep.mubr.f32.mxu0 0.0
    %10806 = vmatmul.mubr.f32.gmra.mxu0 %v10563
    %v10807 = vpop.f32.mrf.mxu0
    %v10808 = vadd.f32 %v10723, %v10807
    %v10809 = vpop.f32.mrf.mxu0
    %10810 = vmatprep.mubr.f32.mxu0 0.0
    %10811 = vmatmul.mubr.f32.gmra.mxu0 %v10565
    %v10812 = vpop.f32.mrf.mxu0
    %v10813 = vadd.f32 %v10728, %v10812
    %v10814 = vpop.f32.mrf.mxu0
    %10815 = vmatprep.mubr.f32.mxu0 0.0
    %10816 = vmatmul.mubr.f32.gmra.mxu0 %v10567
    %v10817 = vpop.f32.mrf.mxu0
    %v10818 = vadd.f32 %v10733, %v10817
    %v10819 = vpop.f32.mrf.mxu0
    %10820 = vmatprep.mubr.f32.mxu0 0.0
    %10821 = vmatmul.mubr.f32.gmra.mxu0 %v10569
    %v10822 = vpop.f32.mrf.mxu0
    %v10823 = vadd.f32 %v10738, %v10822
    %v10824 = vpop.f32.mrf.mxu0
    %10825 = vdwg.mxu0
    %v10826 = vadd.f32 %v10808, %v10813
    %v10827 = vadd.f32 %v10826, %v10818
    %v10828 = vadd.f32 %v10827, %v10823
    %v10829 = vrot.slane %v10828, 4
    %v10830 = vadd.f32 %v10828, %v10829
    %v10831 = vrot.slane %v10830, 2
    %v10832 = vadd.f32 %v10830, %v10831
    %v10833 = vrot.slane %v10832, 1
    %v10834 = vadd.f32 %v10832, %v10833
    %v10835 = vrcp.pop 32.0
    %v10836 = vmul.f32 %v10834, %v10835
    %v10837 = vsub.f32 %v10808, %v10836
    %v10838 = vsub.f32 %v10813, %v10836
    %v10839 = vsub.f32 %v10818, %v10836
    %v10840 = vsub.f32 %v10823, %v10836
    %v10841 = vmul.f32 %v10837, %v10837
    %v10842 = vmul.f32 %v10838, %v10838
    %v10843 = vmul.f32 %v10839, %v10839
    %v10844 = vmul.f32 %v10840, %v10840
    %v10845 = vadd.f32 %v10841, %v10842
    %v10846 = vadd.f32 %v10845, %v10843
    %v10847 = vadd.f32 %v10846, %v10844
    %v10848 = vrot.slane %v10847, 4
    %v10849 = vadd.f32 %v10847, %v10848
    %v10850 = vrot.slane %v10849, 2
    %v10851 = vadd.f32 %v10849, %v10850
    %v10852 = vrot.slane %v10851, 1
    %v10853 = vadd.f32 %v10851, %v10852
    %v10854 = vmul.f32 %v10853, %v10835
    %v10855 = vld [vmem:[#allocation16] sm:$0x1]
    %v10856 = vadd.f32 %v10854, 1e-05
    %v10857 = vrsqrt.pop %v10856
    %v10858 = vmul.f32 %v10855, %v10857
    %v10859 = vld [vmem:[#allocation17] sm:$0x1]
    %v10860 = vmul.f32 %v10836, %v10858
    %v10861 = vsub.f32 %v10859, %v10860
    %v10863 = vlaneseq
    %v10864 = vshrl.u32 %v10863, 7
    %v10865 = vsub.s32 0, %v10864
    %v10866 = vrot.slane %v10858, %v10865
    %v10868 = vmul.f32 %v10808, %v10866
    %v10869 = vmul.f32 %v10813, %v10866
    %v10870 = vmul.f32 %v10818, %v10866
    %v10871 = vmul.f32 %v10823, %v10866
    %v10873 = vlaneseq
    %v10874 = vshrl.u32 %v10873, 7
    %v10875 = vsub.s32 0, %v10874
    %v10876 = vrot.slane %v10861, %v10875
    %v10878 = vadd.f32 %v10868, %v10876
    %v10879 = vadd.f32 %v10869, %v10876
    %v10880 = vadd.f32 %v10870, %v10876
    %v10881 = vadd.f32 %v10871, %v10876
    %v10882 = vmax.f32 %v10878, 0.0
    %v10883 = vmax.f32 %v10879, 0.0
    %v10884 = vmax.f32 %v10880, 0.0
    %v10885 = vmax.f32 %v10881, 0.0
    %v10890 = vcombine.high %v10882, %v10882
    %v10892 = vunpack.c.l.s4 1983009808
    %v10893 = vunpack.c.0.s8 %v10892
    %v10894 = vlaneseq
    %v10895 = vshrl.u32 %v10894, 7
    %v10896 = vsub.s32 %v10893, %v10895
    %v10897 = vrot.slane %v10882, %v10896
    %v10899 = vunpack.c.l.s4 1983009808
    %v10900 = vunpack.c.0.s8 %v10899
    %v10901 = vlaneseq
    %v10902 = vshrl.u32 %v10901, 7
    %v10903 = vsub.s32 %v10900, %v10902
    %v10904 = vrot.slane %v10890, %v10903
    %v10905 = vcombine.high %v10897, %v10897
    %v10906 = vcombine.high %v10904, %v10904
    %v10907 = vcombine.high %v10883, %v10883
    %v10909 = vunpack.c.l.s4 1983009808
    %v10910 = vunpack.c.0.s8 %v10909
    %v10911 = vlaneseq
    %v10912 = vshrl.u32 %v10911, 7
    %v10913 = vsub.s32 %v10910, %v10912
    %v10914 = vrot.slane %v10883, %v10913
    %v10916 = vunpack.c.l.s4 1983009808
    %v10917 = vunpack.c.0.s8 %v10916
    %v10918 = vlaneseq
    %v10919 = vshrl.u32 %v10918, 7
    %v10920 = vsub.s32 %v10917, %v10919
    %v10921 = vrot.slane %v10907, %v10920
    %v10922 = vcombine.high %v10914, %v10914
    %v10923 = vcombine.high %v10921, %v10921
    %v10924 = vcombine.high %v10884, %v10884
    %v10926 = vunpack.c.l.s4 1983009808
    %v10927 = vunpack.c.0.s8 %v10926
    %v10928 = vlaneseq
    %v10929 = vshrl.u32 %v10928, 7
    %v10930 = vsub.s32 %v10927, %v10929
    %v10931 = vrot.slane %v10884, %v10930
    %v10933 = vunpack.c.l.s4 1983009808
    %v10934 = vunpack.c.0.s8 %v10933
    %v10935 = vlaneseq
    %v10936 = vshrl.u32 %v10935, 7
    %v10937 = vsub.s32 %v10934, %v10936
    %v10938 = vrot.slane %v10924, %v10937
    %v10939 = vcombine.high %v10931, %v10931
    %v10940 = vcombine.high %v10938, %v10938
    %v10941 = vcombine.high %v10885, %v10885
    %v10943 = vunpack.c.l.s4 1983009808
    %v10944 = vunpack.c.0.s8 %v10943
    %v10945 = vlaneseq
    %v10946 = vshrl.u32 %v10945, 7
    %v10947 = vsub.s32 %v10944, %v10946
    %v10948 = vrot.slane %v10885, %v10947
    %v10950 = vunpack.c.l.s4 1983009808
    %v10951 = vunpack.c.0.s8 %v10950
    %v10952 = vlaneseq
    %v10953 = vshrl.u32 %v10952, 7
    %v10954 = vsub.s32 %v10951, %v10953
    %v10955 = vrot.slane %v10941, %v10954
    %v10956 = vcombine.high %v10948, %v10948
    %v10957 = vcombine.high %v10955, %v10955
    %v10974 = vrot.slane %v10897, 7
    %v10975 = vrot.slane %v10974, 2
    %v10976 = vrot.slane %v10905, 7
    %v10977 = vrot.slane %v10976, 2
    %v10978 = vrot.slane %v10914, 7
    %v10979 = vrot.slane %v10978, 2
    %v10980 = vrot.slane %v10922, 7
    %v10981 = vrot.slane %v10980, 2
    %v10982 = vrot.slane %v10931, 7
    %v10983 = vrot.slane %v10982, 2
    %v10984 = vrot.slane %v10939, 7
    %v10985 = vrot.slane %v10984, 2
    %v10986 = vrot.slane %v10948, 7
    %v10987 = vrot.slane %v10986, 2
    %v10988 = vrot.slane %v10956, 7
    %v10989 = vrot.slane %v10988, 2
    %v10998 = vmax.f32 %v10897, %v10975
    %v10999 = vmax.f32 %v10905, %v10977
    %v11000 = vmax.f32 %v10914, %v10979
    %v11001 = vmax.f32 %v10922, %v10981
    %v11002 = vmax.f32 %v10931, %v10983
    %v11003 = vmax.f32 %v10939, %v10985
    %v11004 = vmax.f32 %v10948, %v10987
    %v11005 = vmax.f32 %v10956, %v10989
    %v11006 = vrot.slane %v10904, 7
    %v11007 = vrot.slane %v11006, 2
    %v11008 = vrot.slane %v10906, 7
    %v11009 = vrot.slane %v11008, 2
    %v11010 = vrot.slane %v10921, 7
    %v11011 = vrot.slane %v11010, 2
    %v11012 = vrot.slane %v10923, 7
    %v11013 = vrot.slane %v11012, 2
    %v11014 = vrot.slane %v10938, 7
    %v11015 = vrot.slane %v11014, 2
    %v11016 = vrot.slane %v10940, 7
    %v11017 = vrot.slane %v11016, 2
    %v11018 = vrot.slane %v10955, 7
    %v11019 = vrot.slane %v11018, 2
    %v11020 = vrot.slane %v10957, 7
    %v11021 = vrot.slane %v11020, 2
    %v11030 = vmax.f32 %v10904, %v11007
    %v11031 = vmax.f32 %v10906, %v11009
    %v11032 = vmax.f32 %v10921, %v11011
    %v11033 = vmax.f32 %v10923, %v11013
    %v11034 = vmax.f32 %v10938, %v11015
    %v11035 = vmax.f32 %v10940, %v11017
    %v11036 = vmax.f32 %v10955, %v11019
    %v11037 = vmax.f32 %v10957, %v11021
    %v11038 = vmax.f32 %v10998, %v11030
    %v11039 = vmax.f32 %v10999, %v11031
    %v11040 = vmax.f32 %v11000, %v11032
    %v11041 = vmax.f32 %v11001, %v11033
    %v11042 = vmax.f32 %v11002, %v11034
    %v11043 = vmax.f32 %v11003, %v11035
    %v11044 = vmax.f32 %v11004, %v11036
    %v11045 = vmax.f32 %v11005, %v11037
    %11046 = vst [vmem:[#allocation5] sm:$0xf] 0.0
    %11047 = vst [vmem:[#allocation5 + $0x4] sm:$0xf] 0.0
    %11048 = vst [vmem:[#allocation5 + $0x8] sm:$0xf] 0.0
    %11049 = vst [vmem:[#allocation5 + $0xc] sm:$0xf] 0.0
    %11050 = vst [vmem:[#allocation5 + $0x10] sm:$0xf] 0.0
    %11051 = vst [vmem:[#allocation5 + $0x14] sm:$0xf] 0.0
    %11052 = vst [vmem:[#allocation5 + $0x18] sm:$0xf] 0.0
    %11053 = vst [vmem:[#allocation5 + $0x1c] sm:$0xf] 0.0
    %v11062 = vlaneseq
    %v11063 = vshrl.u32 %v11062, 7
    %v11064 = vsub.s32 0, %v11063
    %v11065 = vrot.slane %v11038, %v11064
    %v11066 = vlaneseq
    %v11067 = vshrl.u32 %v11066, 7
    %v11068 = vsub.s32 0, %v11067
    %v11069 = vrot.slane %v11039, %v11068
    %v11070 = vlaneseq
    %v11071 = vshrl.u32 %v11070, 7
    %v11072 = vsub.s32 0, %v11071
    %v11073 = vrot.slane %v11040, %v11072
    %v11074 = vlaneseq
    %v11075 = vshrl.u32 %v11074, 7
    %v11076 = vsub.s32 0, %v11075
    %v11077 = vrot.slane %v11041, %v11076
    %v11078 = vlaneseq
    %v11079 = vshrl.u32 %v11078, 7
    %v11080 = vsub.s32 0, %v11079
    %v11081 = vrot.slane %v11042, %v11080
    %v11082 = vlaneseq
    %v11083 = vshrl.u32 %v11082, 7
    %v11084 = vsub.s32 0, %v11083
    %v11085 = vrot.slane %v11043, %v11084
    %v11086 = vlaneseq
    %v11087 = vshrl.u32 %v11086, 7
    %v11088 = vsub.s32 0, %v11087
    %v11089 = vrot.slane %v11044, %v11088
    %v11090 = vlaneseq
    %v11091 = vshrl.u32 %v11090, 7
    %v11092 = vsub.s32 0, %v11091
    %v11093 = vrot.slane %v11045, %v11092
    %v11094 = vsel %vm7983, %v11069, %v11065
    %v11095 = vsel %vm7983, %v11077, %v11073
    %v11096 = vsel %vm7983, %v11085, %v11081
    %v11097 = vsel %vm7983, %v11093, %v11089
    %s11102 = scalar_lea.vmem [#allocation5], 4
    %11103 = vst [vmem:[%s11102 + $0x1] sm:$0x3] %v11094
    %11104 = vst [vmem:[%s11102 + $0x5] sm:$0x3] %v11095
    %11105 = vst [vmem:[%s11102 + $0x11] sm:$0x3] %v11096
    %11106 = vst [vmem:[%s11102 + $0x15] sm:$0x3] %v11097
    %v11107 = vld [vmem:[#allocation5] sm:$0x3]
    %v11108 = vld [vmem:[#allocation5 + $0x4] sm:$0x3]
    %v11109 = vld [vmem:[#allocation5 + $0x10] sm:$0x3]
    %v11110 = vld [vmem:[#allocation5 + $0x14] sm:$0x3]
    %v11111 = vld [vmem:[#allocation5 + $0x1] sm:$0x3]
    %v11112 = vld [vmem:[#allocation5 + $0x5] sm:$0x3]
    %v11113 = vld [vmem:[#allocation5 + $0x11] sm:$0x3]
    %v11114 = vld [vmem:[#allocation5 + $0x15] sm:$0x3]
    %v11115 = vld [vmem:[#allocation5 + $0x2] sm:$0x3]
    %v11116 = vld [vmem:[#allocation5 + $0x6] sm:$0x3]
    %v11117 = vld [vmem:[#allocation5 + $0x12] sm:$0x3]
    %v11118 = vld [vmem:[#allocation5 + $0x16] sm:$0x3]
    %v11119 = vld [vmem:[%s11102] sm:$0x3]
    %v11120 = vld [vmem:[%s11102 + $0x4] sm:$0x3]
    %v11121 = vld [vmem:[%s11102 + $0x10] sm:$0x3]
    %v11122 = vld [vmem:[%s11102 + $0x14] sm:$0x3]
    %v11123 = vld [vmem:[%s11102 + $0x1] sm:$0x3]
    %v11124 = vld [vmem:[%s11102 + $0x5] sm:$0x3]
    %v11125 = vld [vmem:[%s11102 + $0x11] sm:$0x3]
    %v11126 = vld [vmem:[%s11102 + $0x15] sm:$0x3]
    %v11127 = vld [vmem:[%s11102 + $0x2] sm:$0x3]
    %v11128 = vld [vmem:[%s11102 + $0x6] sm:$0x3]
    %v11129 = vld [vmem:[%s11102 + $0x12] sm:$0x3]
    %v11130 = vld [vmem:[%s11102 + $0x16] sm:$0x3]
    %s11131 = scalar_lea.vmem [#allocation5], 8
    %v11132 = vld [vmem:[%s11131] sm:$0x3]
    %v11133 = vld [vmem:[%s11131 + $0x4] sm:$0x3]
    %v11134 = vld [vmem:[%s11131 + $0x10] sm:$0x3]
    %v11135 = vld [vmem:[%s11131 + $0x14] sm:$0x3]
    %v11136 = vld [vmem:[%s11131 + $0x1] sm:$0x3]
    %v11137 = vld [vmem:[%s11131 + $0x5] sm:$0x3]
    %v11138 = vld [vmem:[%s11131 + $0x11] sm:$0x3]
    %v11139 = vld [vmem:[%s11131 + $0x15] sm:$0x3]
    %v11140 = vld [vmem:[%s11131 + $0x2] sm:$0x3]
    %v11141 = vld [vmem:[%s11131 + $0x6] sm:$0x3]
    %v11142 = vld [vmem:[%s11131 + $0x12] sm:$0x3]
    %v11143 = vld [vmem:[%s11131 + $0x16] sm:$0x3]
    %v11180 = vcombine.low %v11107, %v11111
    %v11181 = vcombine.low %v11115, %v11119
    %v11183 = vunpack.c.l.s4 1983009808
    %v11184 = vunpack.c.0.s8 %v11183
    %v11185 = vlaneseq
    %v11186 = vshrl.u32 %v11185, 7
    %v11187 = vsub.s32 %v11184, %v11186
    %v11188 = vrot.slane %v11180, %v11187
    %v11190 = vunpack.c.l.s4 1983009808
    %v11191 = vunpack.c.0.s8 %v11190
    %v11192 = vlaneseq
    %v11193 = vshrl.u32 %v11192, 7
    %v11194 = vsub.s32 %v11191, %v11193
    %v11195 = vrot.slane %v11181, %v11194
    %v11196 = vcombine.low %v11188, %v11195
    %v11197 = vcombine.low %v11123, %v11127
    %v11198 = vcombine.low %v11132, %v11136
    %v11200 = vunpack.c.l.s4 1983009808
    %v11201 = vunpack.c.0.s8 %v11200
    %v11202 = vlaneseq
    %v11203 = vshrl.u32 %v11202, 7
    %v11204 = vsub.s32 %v11201, %v11203
    %v11205 = vrot.slane %v11197, %v11204
    %v11207 = vunpack.c.l.s4 1983009808
    %v11208 = vunpack.c.0.s8 %v11207
    %v11209 = vlaneseq
    %v11210 = vshrl.u32 %v11209, 7
    %v11211 = vsub.s32 %v11208, %v11210
    %v11212 = vrot.slane %v11198, %v11211
    %v11213 = vcombine.low %v11205, %v11212
    %v11215 = vunpack.c.l.s4 1983009808
    %v11216 = vunpack.c.0.s8 %v11215
    %v11217 = vlaneseq
    %v11218 = vshrl.u32 %v11217, 7
    %v11219 = vsub.s32 %v11216, %v11218
    %v11220 = vrot.slane %v11140, %v11219
    %v11221 = vcombine.low %v11108, %v11112
    %v11222 = vcombine.low %v11116, %v11120
    %v11224 = vunpack.c.l.s4 1983009808
    %v11225 = vunpack.c.0.s8 %v11224
    %v11226 = vlaneseq
    %v11227 = vshrl.u32 %v11226, 7
    %v11228 = vsub.s32 %v11225, %v11227
    %v11229 = vrot.slane %v11221, %v11228
    %v11231 = vunpack.c.l.s4 1983009808
    %v11232 = vunpack.c.0.s8 %v11231
    %v11233 = vlaneseq
    %v11234 = vshrl.u32 %v11233, 7
    %v11235 = vsub.s32 %v11232, %v11234
    %v11236 = vrot.slane %v11222, %v11235
    %v11237 = vcombine.low %v11229, %v11236
    %v11238 = vcombine.low %v11124, %v11128
    %v11239 = vcombine.low %v11133, %v11137
    %v11241 = vunpack.c.l.s4 1983009808
    %v11242 = vunpack.c.0.s8 %v11241
    %v11243 = vlaneseq
    %v11244 = vshrl.u32 %v11243, 7
    %v11245 = vsub.s32 %v11242, %v11244
    %v11246 = vrot.slane %v11238, %v11245
    %v11248 = vunpack.c.l.s4 1983009808
    %v11249 = vunpack.c.0.s8 %v11248
    %v11250 = vlaneseq
    %v11251 = vshrl.u32 %v11250, 7
    %v11252 = vsub.s32 %v11249, %v11251
    %v11253 = vrot.slane %v11239, %v11252
    %v11254 = vcombine.low %v11246, %v11253
    %v11256 = vunpack.c.l.s4 1983009808
    %v11257 = vunpack.c.0.s8 %v11256
    %v11258 = vlaneseq
    %v11259 = vshrl.u32 %v11258, 7
    %v11260 = vsub.s32 %v11257, %v11259
    %v11261 = vrot.slane %v11141, %v11260
    %v11262 = vcombine.low %v11109, %v11113
    %v11263 = vcombine.low %v11117, %v11121
    %v11265 = vunpack.c.l.s4 1983009808
    %v11266 = vunpack.c.0.s8 %v11265
    %v11267 = vlaneseq
    %v11268 = vshrl.u32 %v11267, 7
    %v11269 = vsub.s32 %v11266, %v11268
    %v11270 = vrot.slane %v11262, %v11269
    %v11272 = vunpack.c.l.s4 1983009808
    %v11273 = vunpack.c.0.s8 %v11272
    %v11274 = vlaneseq
    %v11275 = vshrl.u32 %v11274, 7
    %v11276 = vsub.s32 %v11273, %v11275
    %v11277 = vrot.slane %v11263, %v11276
    %v11278 = vcombine.low %v11270, %v11277
    %v11279 = vcombine.low %v11125, %v11129
    %v11280 = vcombine.low %v11134, %v11138
    %v11282 = vunpack.c.l.s4 1983009808
    %v11283 = vunpack.c.0.s8 %v11282
    %v11284 = vlaneseq
    %v11285 = vshrl.u32 %v11284, 7
    %v11286 = vsub.s32 %v11283, %v11285
    %v11287 = vrot.slane %v11279, %v11286
    %v11289 = vunpack.c.l.s4 1983009808
    %v11290 = vunpack.c.0.s8 %v11289
    %v11291 = vlaneseq
    %v11292 = vshrl.u32 %v11291, 7
    %v11293 = vsub.s32 %v11290, %v11292
    %v11294 = vrot.slane %v11280, %v11293
    %v11295 = vcombine.low %v11287, %v11294
    %v11297 = vunpack.c.l.s4 1983009808
    %v11298 = vunpack.c.0.s8 %v11297
    %v11299 = vlaneseq
    %v11300 = vshrl.u32 %v11299, 7
    %v11301 = vsub.s32 %v11298, %v11300
    %v11302 = vrot.slane %v11142, %v11301
    %v11303 = vcombine.low %v11110, %v11114
    %v11304 = vcombine.low %v11118, %v11122
    %v11306 = vunpack.c.l.s4 1983009808
    %v11307 = vunpack.c.0.s8 %v11306
    %v11308 = vlaneseq
    %v11309 = vshrl.u32 %v11308, 7
    %v11310 = vsub.s32 %v11307, %v11309
    %v11311 = vrot.slane %v11303, %v11310
    %v11313 = vunpack.c.l.s4 1983009808
    %v11314 = vunpack.c.0.s8 %v11313
    %v11315 = vlaneseq
    %v11316 = vshrl.u32 %v11315, 7
    %v11317 = vsub.s32 %v11314, %v11316
    %v11318 = vrot.slane %v11304, %v11317
    %v11319 = vcombine.low %v11311, %v11318
    %v11320 = vcombine.low %v11126, %v11130
    %v11321 = vcombine.low %v11135, %v11139
    %v11323 = vunpack.c.l.s4 1983009808
    %v11324 = vunpack.c.0.s8 %v11323
    %v11325 = vlaneseq
    %v11326 = vshrl.u32 %v11325, 7
    %v11327 = vsub.s32 %v11324, %v11326
    %v11328 = vrot.slane %v11320, %v11327
    %v11330 = vunpack.c.l.s4 1983009808
    %v11331 = vunpack.c.0.s8 %v11330
    %v11332 = vlaneseq
    %v11333 = vshrl.u32 %v11332, 7
    %v11334 = vsub.s32 %v11331, %v11333
    %v11335 = vrot.slane %v11321, %v11334
    %v11336 = vcombine.low %v11328, %v11335
    %v11338 = vunpack.c.l.s4 1983009808
    %v11339 = vunpack.c.0.s8 %v11338
    %v11340 = vlaneseq
    %v11341 = vshrl.u32 %v11340, 7
    %v11342 = vsub.s32 %v11339, %v11341
    %v11343 = vrot.slane %v11143, %v11342
    %v11344 = vld [vmem:[#allocation8] sm:$0xff]
    %v11345 = vld [vmem:[#allocation8 + $0x8] sm:$0xff]
    %v11346 = vld [vmem:[#allocation8 + $0x10] sm:$0xff]
    %v11347 = vld [vmem:[#allocation8 + $0x18] sm:$0xff]
    %v11348 = vld [vmem:[#allocation8 + $0x20] sm:$0xff]
    %v11349 = vld [vmem:[#allocation8 + $0x28] sm:$0xff]
    %v11350 = vld [vmem:[#allocation8 + $0x30] sm:$0xff]
    %v11351 = vld [vmem:[#allocation8 + $0x38] sm:$0xff]
    %v11352 = vld [vmem:[#allocation8 + $0x40] sm:$0xff]
    %v11353 = vld [vmem:[#allocation8 + $0x48] sm:$0xff]
    %v11354 = vld [vmem:[#allocation8 + $0x50] sm:$0xff]
    %v11355 = vld [vmem:[#allocation8 + $0x58] sm:$0xff]
    %v11356 = vld [vmem:[#allocation8 + $0x60] sm:$0xff]
    %v11357 = vld [vmem:[#allocation8 + $0x68] sm:$0xff]
    %v11358 = vld [vmem:[#allocation8 + $0x70] sm:$0xff]
    %v11359 = vld [vmem:[#allocation8 + $0x78] sm:$0xff]
    %v11360 = vld [vmem:[#allocation8 + $0x80] sm:$0xff]
    %v11361 = vld [vmem:[#allocation8 + $0x88] sm:$0xff]
    %v11362 = vld [vmem:[#allocation8 + $0x90] sm:$0xff]
    %v11363 = vld [vmem:[#allocation8 + $0x98] sm:$0xff]
    %v11364 = vld [vmem:[#allocation8 + $0xa0] sm:$0xff]
    %v11365 = vld [vmem:[#allocation8 + $0xa8] sm:$0xff]
    %v11366 = vld [vmem:[#allocation8 + $0xb0] sm:$0xff]
    %v11367 = vld [vmem:[#allocation8 + $0xb8] sm:$0xff]
    %v11368 = vld [vmem:[#allocation8 + $0xc0] sm:$0xff]
    %v11369 = vld [vmem:[#allocation8 + $0xc8] sm:$0xff]
    %v11370 = vld [vmem:[#allocation8 + $0xd0] sm:$0xff]
    %v11371 = vld [vmem:[#allocation8 + $0xd8] sm:$0xff]
    %v11372 = vld [vmem:[#allocation8 + $0xe0] sm:$0xff]
    %v11373 = vld [vmem:[#allocation8 + $0xe8] sm:$0xff]
    %v11374 = vld [vmem:[#allocation8 + $0xf0] sm:$0xff]
    %v11375 = vld [vmem:[#allocation8 + $0xf8] sm:$0xff]
    %v11376 = vld [vmem:[#allocation8 + $0x100] sm:$0xff]
    %v11377 = vld [vmem:[#allocation8 + $0x108] sm:$0xff]
    %v11378 = vld [vmem:[#allocation8 + $0x110] sm:$0xff]
    %v11379 = vld [vmem:[#allocation8 + $0x118] sm:$0xff]
    %v11380 = vld [vmem:[#allocation8 + $0x120] sm:$0xff]
    %v11381 = vld [vmem:[#allocation8 + $0x128] sm:$0xff]
    %v11382 = vld [vmem:[#allocation8 + $0x130] sm:$0xff]
    %v11383 = vld [vmem:[#allocation8 + $0x138] sm:$0xff]
    %v11384 = vld [vmem:[#allocation8 + $0x140] sm:$0xff]
    %v11385 = vld [vmem:[#allocation8 + $0x148] sm:$0xff]
    %v11386 = vld [vmem:[#allocation8 + $0x150] sm:$0xff]
    %v11387 = vld [vmem:[#allocation8 + $0x158] sm:$0xff]
    %v11388 = vld [vmem:[#allocation8 + $0x160] sm:$0xff]
    %v11389 = vld [vmem:[#allocation8 + $0x168] sm:$0xff]
    %v11390 = vld [vmem:[#allocation8 + $0x170] sm:$0xff]
    %v11391 = vld [vmem:[#allocation8 + $0x178] sm:$0xff]
    %v11392 = vld [vmem:[#allocation8 + $0x180] sm:$0xff]
    %v11393 = vld [vmem:[#allocation8 + $0x188] sm:$0xff]
    %v11394 = vld [vmem:[#allocation8 + $0x190] sm:$0xff]
    %v11395 = vld [vmem:[#allocation8 + $0x198] sm:$0xff]
    %v11396 = vld [vmem:[#allocation8 + $0x1a0] sm:$0xff]
    %v11397 = vld [vmem:[#allocation8 + $0x1a8] sm:$0xff]
    %v11398 = vld [vmem:[#allocation8 + $0x1b0] sm:$0xff]
    %v11399 = vld [vmem:[#allocation8 + $0x1b8] sm:$0xff]
    %v11400 = vld [vmem:[#allocation8 + $0x1c0] sm:$0xff]
    %v11401 = vld [vmem:[#allocation8 + $0x1c8] sm:$0xff]
    %v11402 = vld [vmem:[#allocation8 + $0x1d0] sm:$0xff]
    %v11403 = vld [vmem:[#allocation8 + $0x1d8] sm:$0xff]
    %v11404 = vld [vmem:[#allocation8 + $0x1e0] sm:$0xff]
    %v11405 = vld [vmem:[#allocation8 + $0x1e8] sm:$0xff]
    %v11406 = vld [vmem:[#allocation8 + $0x1f0] sm:$0xff]
    %v11407 = vld [vmem:[#allocation8 + $0x1f8] sm:$0xff]
    %v11408 = vld [vmem:[#allocation8 + $0x200] sm:$0xff]
    %v11409 = vld [vmem:[#allocation8 + $0x208] sm:$0xff]
    %v11410 = vld [vmem:[#allocation8 + $0x210] sm:$0xff]
    %v11411 = vld [vmem:[#allocation8 + $0x218] sm:$0xff]
    %v11412 = vld [vmem:[#allocation8 + $0x220] sm:$0xff]
    %v11413 = vld [vmem:[#allocation8 + $0x228] sm:$0xff]
    %v11414 = vld [vmem:[#allocation8 + $0x230] sm:$0xff]
    %v11415 = vld [vmem:[#allocation8 + $0x238] sm:$0xff]
    %v11416 = vld [vmem:[#allocation8 + $0x240] sm:$0xff]
    %v11417 = vld [vmem:[#allocation8 + $0x248] sm:$0xff]
    %v11418 = vld [vmem:[#allocation8 + $0x250] sm:$0xff]
    %v11419 = vld [vmem:[#allocation8 + $0x258] sm:$0xff]
    %v11420 = vld [vmem:[#allocation8 + $0x260] sm:$0xff]
    %v11421 = vld [vmem:[#allocation8 + $0x268] sm:$0xff]
    %v11422 = vld [vmem:[#allocation8 + $0x270] sm:$0xff]
    %v11423 = vld [vmem:[#allocation8 + $0x278] sm:$0xff]
    %v11424 = vld [vmem:[#allocation8 + $0x280] sm:$0xff]
    %v11425 = vld [vmem:[#allocation8 + $0x288] sm:$0xff]
    %v11426 = vld [vmem:[#allocation8 + $0x290] sm:$0xff]
    %v11427 = vld [vmem:[#allocation8 + $0x298] sm:$0xff]
    %v11428 = vld [vmem:[#allocation8 + $0x2a0] sm:$0xff]
    %v11429 = vld [vmem:[#allocation8 + $0x2a8] sm:$0xff]
    %v11430 = vld [vmem:[#allocation8 + $0x2b0] sm:$0xff]
    %v11431 = vld [vmem:[#allocation8 + $0x2b8] sm:$0xff]
    %v11432 = vld [vmem:[#allocation8 + $0x2c0] sm:$0xff]
    %v11433 = vld [vmem:[#allocation8 + $0x2c8] sm:$0xff]
    %v11434 = vld [vmem:[#allocation8 + $0x2d0] sm:$0xff]
    %v11435 = vld [vmem:[#allocation8 + $0x2d8] sm:$0xff]
    %v11436 = vld [vmem:[#allocation8 + $0x2e0] sm:$0xff]
    %v11437 = vld [vmem:[#allocation8 + $0x2e8] sm:$0xff]
    %v11438 = vld [vmem:[#allocation8 + $0x2f0] sm:$0xff]
    %v11439 = vld [vmem:[#allocation8 + $0x2f8] sm:$0xff]
    %v11440 = vld [vmem:[#allocation8 + $0x300] sm:$0xff]
    %v11441 = vld [vmem:[#allocation8 + $0x308] sm:$0xff]
    %v11442 = vld [vmem:[#allocation8 + $0x310] sm:$0xff]
    %v11443 = vld [vmem:[#allocation8 + $0x318] sm:$0xff]
    %v11444 = vld [vmem:[#allocation8 + $0x320] sm:$0xff]
    %v11445 = vld [vmem:[#allocation8 + $0x328] sm:$0xff]
    %v11446 = vld [vmem:[#allocation8 + $0x330] sm:$0xff]
    %v11447 = vld [vmem:[#allocation8 + $0x338] sm:$0xff]
    %v11448 = vld [vmem:[#allocation8 + $0x340] sm:$0xff]
    %v11449 = vld [vmem:[#allocation8 + $0x348] sm:$0xff]
    %v11450 = vld [vmem:[#allocation8 + $0x350] sm:$0xff]
    %v11451 = vld [vmem:[#allocation8 + $0x358] sm:$0xff]
    %v11452 = vld [vmem:[#allocation8 + $0x360] sm:$0xff]
    %v11453 = vld [vmem:[#allocation8 + $0x368] sm:$0xff]
    %v11454 = vld [vmem:[#allocation8 + $0x370] sm:$0xff]
    %v11455 = vld [vmem:[#allocation8 + $0x378] sm:$0xff]
    %v11456 = vld [vmem:[#allocation8 + $0x380] sm:$0xff]
    %v11457 = vld [vmem:[#allocation8 + $0x388] sm:$0xff]
    %v11458 = vld [vmem:[#allocation8 + $0x390] sm:$0xff]
    %v11459 = vld [vmem:[#allocation8 + $0x398] sm:$0xff]
    %v11460 = vld [vmem:[#allocation8 + $0x3a0] sm:$0xff]
    %v11461 = vld [vmem:[#allocation8 + $0x3a8] sm:$0xff]
    %v11462 = vld [vmem:[#allocation8 + $0x3b0] sm:$0xff]
    %v11463 = vld [vmem:[#allocation8 + $0x3b8] sm:$0xff]
    %v11464 = vld [vmem:[#allocation8 + $0x3c0] sm:$0xff]
    %v11465 = vld [vmem:[#allocation8 + $0x3c8] sm:$0xff]
    %v11466 = vld [vmem:[#allocation8 + $0x3d0] sm:$0xff]
    %v11467 = vld [vmem:[#allocation8 + $0x3d8] sm:$0xff]
    %v11468 = vld [vmem:[#allocation8 + $0x3e0] sm:$0xff]
    %v11469 = vld [vmem:[#allocation8 + $0x3e8] sm:$0xff]
    %v11470 = vld [vmem:[#allocation8 + $0x3f0] sm:$0xff]
    %v11471 = vld [vmem:[#allocation8 + $0x3f8] sm:$0xff]
    %v11472 = vld [vmem:[#allocation8 + $0x400] sm:$0xff]
    %v11473 = vld [vmem:[#allocation8 + $0x408] sm:$0xff]
    %v11474 = vld [vmem:[#allocation8 + $0x410] sm:$0xff]
    %v11475 = vld [vmem:[#allocation8 + $0x418] sm:$0xff]
    %v11476 = vld [vmem:[#allocation8 + $0x420] sm:$0xff]
    %v11477 = vld [vmem:[#allocation8 + $0x428] sm:$0xff]
    %v11478 = vld [vmem:[#allocation8 + $0x430] sm:$0xff]
    %v11479 = vld [vmem:[#allocation8 + $0x438] sm:$0xff]
    %v11480 = vld [vmem:[#allocation8 + $0x440] sm:$0xff]
    %v11481 = vld [vmem:[#allocation8 + $0x448] sm:$0xff]
    %v11482 = vld [vmem:[#allocation8 + $0x450] sm:$0xff]
    %v11483 = vld [vmem:[#allocation8 + $0x458] sm:$0xff]
    %v11484 = vld [vmem:[#allocation8 + $0x460] sm:$0xff]
    %v11485 = vld [vmem:[#allocation8 + $0x468] sm:$0xff]
    %v11486 = vld [vmem:[#allocation8 + $0x470] sm:$0xff]
    %v11487 = vld [vmem:[#allocation8 + $0x478] sm:$0xff]
    %v11488 = vld [vmem:[#allocation8 + $0x480] sm:$0xff]
    %v11489 = vld [vmem:[#allocation8 + $0x488] sm:$0xff]
    %v11490 = vld [vmem:[#allocation8 + $0x490] sm:$0xff]
    %v11491 = vld [vmem:[#allocation8 + $0x498] sm:$0xff]
    %v11492 = vld [vmem:[#allocation8 + $0x4a0] sm:$0xff]
    %v11493 = vld [vmem:[#allocation8 + $0x4a8] sm:$0xff]
    %v11494 = vld [vmem:[#allocation8 + $0x4b0] sm:$0xff]
    %v11495 = vld [vmem:[#allocation8 + $0x4b8] sm:$0xff]
    %v11496 = vld [vmem:[#allocation8 + $0x4c0] sm:$0xff]
    %v11497 = vld [vmem:[#allocation8 + $0x4c8] sm:$0xff]
    %v11498 = vld [vmem:[#allocation8 + $0x4d0] sm:$0xff]
    %v11499 = vld [vmem:[#allocation8 + $0x4d8] sm:$0xff]
    %v11500 = vld [vmem:[#allocation8 + $0x4e0] sm:$0xff]
    %v11501 = vld [vmem:[#allocation8 + $0x4e8] sm:$0xff]
    %v11502 = vld [vmem:[#allocation8 + $0x4f0] sm:$0xff]
    %v11503 = vld [vmem:[#allocation8 + $0x4f8] sm:$0xff]
    %v11504 = vld [vmem:[#allocation8 + $0x500] sm:$0xff]
    %v11505 = vld [vmem:[#allocation8 + $0x508] sm:$0xff]
    %v11506 = vld [vmem:[#allocation8 + $0x510] sm:$0xff]
    %v11507 = vld [vmem:[#allocation8 + $0x518] sm:$0xff]
    %v11508 = vld [vmem:[#allocation8 + $0x520] sm:$0xff]
    %v11509 = vld [vmem:[#allocation8 + $0x528] sm:$0xff]
    %v11510 = vld [vmem:[#allocation8 + $0x530] sm:$0xff]
    %v11511 = vld [vmem:[#allocation8 + $0x538] sm:$0xff]
    %v11512 = vld [vmem:[#allocation8 + $0x540] sm:$0xff]
    %v11513 = vld [vmem:[#allocation8 + $0x548] sm:$0xff]
    %v11514 = vld [vmem:[#allocation8 + $0x550] sm:$0xff]
    %v11515 = vld [vmem:[#allocation8 + $0x558] sm:$0xff]
    %v11516 = vld [vmem:[#allocation8 + $0x560] sm:$0xff]
    %v11517 = vld [vmem:[#allocation8 + $0x568] sm:$0xff]
    %v11518 = vld [vmem:[#allocation8 + $0x570] sm:$0xff]
    %v11519 = vld [vmem:[#allocation8 + $0x578] sm:$0xff]
    %v11520 = vld [vmem:[#allocation8 + $0x580] sm:$0xff]
    %v11521 = vld [vmem:[#allocation8 + $0x588] sm:$0xff]
    %v11522 = vld [vmem:[#allocation8 + $0x590] sm:$0xff]
    %v11523 = vld [vmem:[#allocation8 + $0x598] sm:$0xff]
    %v11524 = vld [vmem:[#allocation8 + $0x5a0] sm:$0xff]
    %v11525 = vld [vmem:[#allocation8 + $0x5a8] sm:$0xff]
    %v11526 = vld [vmem:[#allocation8 + $0x5b0] sm:$0xff]
    %v11527 = vld [vmem:[#allocation8 + $0x5b8] sm:$0xff]
    %v11528 = vld [vmem:[#allocation8 + $0x5c0] sm:$0xff]
    %v11529 = vld [vmem:[#allocation8 + $0x5c8] sm:$0xff]
    %v11530 = vld [vmem:[#allocation8 + $0x5d0] sm:$0xff]
    %v11531 = vld [vmem:[#allocation8 + $0x5d8] sm:$0xff]
    %v11532 = vld [vmem:[#allocation8 + $0x5e0] sm:$0xff]
    %v11533 = vld [vmem:[#allocation8 + $0x5e8] sm:$0xff]
    %v11534 = vld [vmem:[#allocation8 + $0x5f0] sm:$0xff]
    %v11535 = vld [vmem:[#allocation8 + $0x5f8] sm:$0xff]
    %v11536 = vld [vmem:[#allocation8 + $0x600] sm:$0xff]
    %v11537 = vld [vmem:[#allocation8 + $0x608] sm:$0xff]
    %v11538 = vld [vmem:[#allocation8 + $0x610] sm:$0xff]
    %v11539 = vld [vmem:[#allocation8 + $0x618] sm:$0xff]
    %v11540 = vld [vmem:[#allocation8 + $0x620] sm:$0xff]
    %v11541 = vld [vmem:[#allocation8 + $0x628] sm:$0xff]
    %v11542 = vld [vmem:[#allocation8 + $0x630] sm:$0xff]
    %v11543 = vld [vmem:[#allocation8 + $0x638] sm:$0xff]
    %v11544 = vld [vmem:[#allocation8 + $0x640] sm:$0xff]
    %v11545 = vld [vmem:[#allocation8 + $0x648] sm:$0xff]
    %v11546 = vld [vmem:[#allocation8 + $0x650] sm:$0xff]
    %v11547 = vld [vmem:[#allocation8 + $0x658] sm:$0xff]
    %v11548 = vld [vmem:[#allocation8 + $0x660] sm:$0xff]
    %v11549 = vld [vmem:[#allocation8 + $0x668] sm:$0xff]
    %v11550 = vld [vmem:[#allocation8 + $0x670] sm:$0xff]
    %v11551 = vld [vmem:[#allocation8 + $0x678] sm:$0xff]
    %v11552 = vld [vmem:[#allocation8 + $0x680] sm:$0xff]
    %v11553 = vld [vmem:[#allocation8 + $0x688] sm:$0xff]
    %v11554 = vld [vmem:[#allocation8 + $0x690] sm:$0xff]
    %v11555 = vld [vmem:[#allocation8 + $0x698] sm:$0xff]
    %v11556 = vld [vmem:[#allocation8 + $0x6a0] sm:$0xff]
    %v11557 = vld [vmem:[#allocation8 + $0x6a8] sm:$0xff]
    %v11558 = vld [vmem:[#allocation8 + $0x6b0] sm:$0xff]
    %v11559 = vld [vmem:[#allocation8 + $0x6b8] sm:$0xff]
    %v11560 = vld [vmem:[#allocation8 + $0x6c0] sm:$0xff]
    %v11561 = vld [vmem:[#allocation8 + $0x6c8] sm:$0xff]
    %v11562 = vld [vmem:[#allocation8 + $0x6d0] sm:$0xff]
    %v11563 = vld [vmem:[#allocation8 + $0x6d8] sm:$0xff]
    %v11564 = vld [vmem:[#allocation8 + $0x6e0] sm:$0xff]
    %v11565 = vld [vmem:[#allocation8 + $0x6e8] sm:$0xff]
    %v11566 = vld [vmem:[#allocation8 + $0x6f0] sm:$0xff]
    %v11567 = vld [vmem:[#allocation8 + $0x6f8] sm:$0xff]
    %v11568 = vld [vmem:[#allocation8 + $0x700] sm:$0xff]
    %v11569 = vld [vmem:[#allocation8 + $0x708] sm:$0xff]
    %v11570 = vld [vmem:[#allocation8 + $0x710] sm:$0xff]
    %v11571 = vld [vmem:[#allocation8 + $0x718] sm:$0xff]
    %v11572 = vld [vmem:[#allocation8 + $0x720] sm:$0xff]
    %v11573 = vld [vmem:[#allocation8 + $0x728] sm:$0xff]
    %v11574 = vld [vmem:[#allocation8 + $0x730] sm:$0xff]
    %v11575 = vld [vmem:[#allocation8 + $0x738] sm:$0xff]
    %v11576 = vld [vmem:[#allocation8 + $0x740] sm:$0xff]
    %v11577 = vld [vmem:[#allocation8 + $0x748] sm:$0xff]
    %v11578 = vld [vmem:[#allocation8 + $0x750] sm:$0xff]
    %v11579 = vld [vmem:[#allocation8 + $0x758] sm:$0xff]
    %v11580 = vld [vmem:[#allocation8 + $0x760] sm:$0xff]
    %v11581 = vld [vmem:[#allocation8 + $0x768] sm:$0xff]
    %v11582 = vld [vmem:[#allocation8 + $0x770] sm:$0xff]
    %v11583 = vld [vmem:[#allocation8 + $0x778] sm:$0xff]
    %v11584 = vld [vmem:[#allocation8 + $0x780] sm:$0xff]
    %v11585 = vld [vmem:[#allocation8 + $0x788] sm:$0xff]
    %v11586 = vld [vmem:[#allocation8 + $0x790] sm:$0xff]
    %v11587 = vld [vmem:[#allocation8 + $0x798] sm:$0xff]
    %v11588 = vld [vmem:[#allocation8 + $0x7a0] sm:$0xff]
    %v11589 = vld [vmem:[#allocation8 + $0x7a8] sm:$0xff]
    %v11590 = vld [vmem:[#allocation8 + $0x7b0] sm:$0xff]
    %v11591 = vld [vmem:[#allocation8 + $0x7b8] sm:$0xff]
    %v11592 = vld [vmem:[#allocation8 + $0x7c0] sm:$0xff]
    %v11593 = vld [vmem:[#allocation8 + $0x7c8] sm:$0xff]
    %v11594 = vld [vmem:[#allocation8 + $0x7d0] sm:$0xff]
    %v11595 = vld [vmem:[#allocation8 + $0x7d8] sm:$0xff]
    %v11596 = vld [vmem:[#allocation8 + $0x7e0] sm:$0xff]
    %v11597 = vld [vmem:[#allocation8 + $0x7e8] sm:$0xff]
    %v11598 = vld [vmem:[#allocation8 + $0x7f0] sm:$0xff]
    %v11599 = vld [vmem:[#allocation8 + $0x7f8] sm:$0xff]
    %v11600 = vld [vmem:[#allocation8 + $0x800] sm:$0xff]
    %v11601 = vld [vmem:[#allocation8 + $0x808] sm:$0xff]
    %v11602 = vld [vmem:[#allocation8 + $0x810] sm:$0xff]
    %v11603 = vld [vmem:[#allocation8 + $0x818] sm:$0xff]
    %v11604 = vld [vmem:[#allocation8 + $0x820] sm:$0xff]
    %v11605 = vld [vmem:[#allocation8 + $0x828] sm:$0xff]
    %v11606 = vld [vmem:[#allocation8 + $0x830] sm:$0xff]
    %v11607 = vld [vmem:[#allocation8 + $0x838] sm:$0xff]
    %v11608 = vld [vmem:[#allocation8 + $0x840] sm:$0xff]
    %v11609 = vld [vmem:[#allocation8 + $0x848] sm:$0xff]
    %v11610 = vld [vmem:[#allocation8 + $0x850] sm:$0xff]
    %v11611 = vld [vmem:[#allocation8 + $0x858] sm:$0xff]
    %v11612 = vld [vmem:[#allocation8 + $0x860] sm:$0xff]
    %v11613 = vld [vmem:[#allocation8 + $0x868] sm:$0xff]
    %v11614 = vld [vmem:[#allocation8 + $0x870] sm:$0xff]
    %v11615 = vld [vmem:[#allocation8 + $0x878] sm:$0xff]
    %v11616 = vld [vmem:[#allocation8 + $0x880] sm:$0xff]
    %v11617 = vld [vmem:[#allocation8 + $0x888] sm:$0xff]
    %v11618 = vld [vmem:[#allocation8 + $0x890] sm:$0xff]
    %v11619 = vld [vmem:[#allocation8 + $0x898] sm:$0xff]
    %v11620 = vld [vmem:[#allocation8 + $0x8a0] sm:$0xff]
    %v11621 = vld [vmem:[#allocation8 + $0x8a8] sm:$0xff]
    %v11622 = vld [vmem:[#allocation8 + $0x8b0] sm:$0xff]
    %v11623 = vld [vmem:[#allocation8 + $0x8b8] sm:$0xff]
    %v11624 = vld [vmem:[#allocation8 + $0x8c0] sm:$0xff]
    %v11625 = vld [vmem:[#allocation8 + $0x8c8] sm:$0xff]
    %v11626 = vld [vmem:[#allocation8 + $0x8d0] sm:$0xff]
    %v11627 = vld [vmem:[#allocation8 + $0x8d8] sm:$0xff]
    %v11628 = vld [vmem:[#allocation8 + $0x8e0] sm:$0xff]
    %v11629 = vld [vmem:[#allocation8 + $0x8e8] sm:$0xff]
    %v11630 = vld [vmem:[#allocation8 + $0x8f0] sm:$0xff]
    %v11631 = vld [vmem:[#allocation8 + $0x8f8] sm:$0xff]
    %v11632 = vcombine.low %v11196, %v11237
    %v11633 = vcombine.high %v11196, %v11237
    %v11634 = vcombine.low %v11278, %v11319
    %v11635 = vcombine.high %v11278, %v11319
    %v11637 = vunpack.c.l.s4 1983009808
    %v11638 = vunpack.c.0.s8 %v11637
    %v11639 = vlaneseq
    %v11640 = vshrl.u32 %v11639, 7
    %v11641 = vsub.s32 %v11638, %v11640
    %v11642 = vrot.slane %v11632, %v11641
    %v11644 = vunpack.c.l.s4 1983009808
    %v11645 = vunpack.c.0.s8 %v11644
    %v11646 = vlaneseq
    %v11647 = vshrl.u32 %v11646, 7
    %v11648 = vsub.s32 %v11645, %v11647
    %v11649 = vrot.slane %v11633, %v11648
    %v11651 = vunpack.c.l.s4 1983009808
    %v11652 = vunpack.c.0.s8 %v11651
    %v11653 = vlaneseq
    %v11654 = vshrl.u32 %v11653, 7
    %v11655 = vsub.s32 %v11652, %v11654
    %v11656 = vrot.slane %v11634, %v11655
    %v11658 = vunpack.c.l.s4 1983009808
    %v11659 = vunpack.c.0.s8 %v11658
    %v11660 = vlaneseq
    %v11661 = vshrl.u32 %v11660, 7
    %v11662 = vsub.s32 %v11659, %v11661
    %v11663 = vrot.slane %v11635, %v11662
    %v11664 = vcombine.low %v11642, %v11656
    %v11665 = vcombine.high %v11642, %v11656
    %v11666 = vcombine.low %v11649, %v11663
    %v11667 = vcombine.high %v11649, %v11663
    %v11668 = vcombine.low %v11213, %v11254
    %v11669 = vcombine.high %v11213, %v11254
    %v11670 = vcombine.low %v11295, %v11336
    %v11671 = vcombine.high %v11295, %v11336
    %v11673 = vunpack.c.l.s4 1983009808
    %v11674 = vunpack.c.0.s8 %v11673
    %v11675 = vlaneseq
    %v11676 = vshrl.u32 %v11675, 7
    %v11677 = vsub.s32 %v11674, %v11676
    %v11678 = vrot.slane %v11668, %v11677
    %v11680 = vunpack.c.l.s4 1983009808
    %v11681 = vunpack.c.0.s8 %v11680
    %v11682 = vlaneseq
    %v11683 = vshrl.u32 %v11682, 7
    %v11684 = vsub.s32 %v11681, %v11683
    %v11685 = vrot.slane %v11669, %v11684
    %v11687 = vunpack.c.l.s4 1983009808
    %v11688 = vunpack.c.0.s8 %v11687
    %v11689 = vlaneseq
    %v11690 = vshrl.u32 %v11689, 7
    %v11691 = vsub.s32 %v11688, %v11690
    %v11692 = vrot.slane %v11670, %v11691
    %v11694 = vunpack.c.l.s4 1983009808
    %v11695 = vunpack.c.0.s8 %v11694
    %v11696 = vlaneseq
    %v11697 = vshrl.u32 %v11696, 7
    %v11698 = vsub.s32 %v11695, %v11697
    %v11699 = vrot.slane %v11671, %v11698
    %v11700 = vcombine.low %v11678, %v11692
    %v11701 = vcombine.high %v11678, %v11692
    %v11702 = vcombine.low %v11685, %v11699
    %v11703 = vcombine.high %v11685, %v11699
    %v11704 = vcombine.low %v11220, %v11261
    %v11705 = vcombine.low %v11302, %v11343
    %v11707 = vunpack.c.l.s4 1983009808
    %v11708 = vunpack.c.0.s8 %v11707
    %v11709 = vlaneseq
    %v11710 = vshrl.u32 %v11709, 7
    %v11711 = vsub.s32 %v11708, %v11710
    %v11712 = vrot.slane %v11704, %v11711
    %v11714 = vunpack.c.l.s4 1983009808
    %v11715 = vunpack.c.0.s8 %v11714
    %v11716 = vlaneseq
    %v11717 = vshrl.u32 %v11716, 7
    %v11718 = vsub.s32 %v11715, %v11717
    %v11719 = vrot.slane %v11705, %v11718
    %v11720 = vcombine.low %v11712, %v11719
    %11730 = vmatprep.subr.mxu0 %v11375
    %11731 = vmatpush1.msra.mxu0 %v11374
    %11732 = vmatprep.subr.mxu0 %v11373
    %11733 = vmatpush1.msra.mxu0 %v11372
    %11734 = vmatprep.subr.mxu0 %v11371
    %11735 = vmatpush1.msra.mxu0 %v11370
    %11736 = vmatprep.subr.mxu0 %v11369
    %11737 = vmatpush1.msra.mxu0 %v11368
    %11738 = vmatprep.subr.mxu0 %v11367
    %11739 = vmatpush1.msra.mxu0 %v11366
    %11740 = vmatprep.subr.mxu0 %v11365
    %11741 = vmatpush1.msra.mxu0 %v11364
    %11742 = vmatprep.subr.mxu0 %v11363
    %11743 = vmatpush1.msra.mxu0 %v11362
    %11744 = vmatprep.subr.mxu0 %v11361
    %11745 = vmatpush1.msra.mxu0 %v11360
    %11746 = vmatprep.subr.mxu0 %v11359
    %11747 = vmatpush1.msra.mxu0 %v11358
    %11748 = vmatprep.subr.mxu0 %v11357
    %11749 = vmatpush1.msra.mxu0 %v11356
    %11750 = vmatprep.subr.mxu0 %v11355
    %11751 = vmatpush1.msra.mxu0 %v11354
    %11752 = vmatprep.subr.mxu0 %v11353
    %11753 = vmatpush1.msra.mxu0 %v11352
    %11754 = vmatprep.subr.mxu0 %v11351
    %11755 = vmatpush1.msra.mxu0 %v11350
    %11756 = vmatprep.subr.mxu0 %v11349
    %11757 = vmatpush1.msra.mxu0 %v11348
    %11758 = vmatprep.subr.mxu0 %v11347
    %11759 = vmatpush1.msra.mxu0 %v11346
    %11760 = vmatprep.subr.mxu0 %v11345
    %11761 = vmatpush1.msra.mxu0 %v11344
    %11762 = vmatprep.subr.mxu0 %v11407
    %11763 = vmatpush2.msra.mxu0 %v11406
    %11764 = vmatprep.subr.mxu0 %v11405
    %11765 = vmatpush2.msra.mxu0 %v11404
    %11766 = vmatprep.subr.mxu0 %v11403
    %11767 = vmatpush2.msra.mxu0 %v11402
    %11768 = vmatprep.subr.mxu0 %v11401
    %11769 = vmatpush2.msra.mxu0 %v11400
    %11770 = vmatprep.subr.mxu0 %v11399
    %11771 = vmatpush2.msra.mxu0 %v11398
    %11772 = vmatprep.subr.mxu0 %v11397
    %11773 = vmatpush2.msra.mxu0 %v11396
    %11774 = vmatprep.subr.mxu0 %v11395
    %11775 = vmatpush2.msra.mxu0 %v11394
    %11776 = vmatprep.subr.mxu0 %v11393
    %11777 = vmatpush2.msra.mxu0 %v11392
    %11778 = vmatprep.subr.mxu0 %v11391
    %11779 = vmatpush2.msra.mxu0 %v11390
    %11780 = vmatprep.subr.mxu0 %v11389
    %11781 = vmatpush2.msra.mxu0 %v11388
    %11782 = vmatprep.subr.mxu0 %v11387
    %11783 = vmatpush2.msra.mxu0 %v11386
    %11784 = vmatprep.subr.mxu0 %v11385
    %11785 = vmatpush2.msra.mxu0 %v11384
    %11786 = vmatprep.subr.mxu0 %v11383
    %11787 = vmatpush2.msra.mxu0 %v11382
    %11788 = vmatprep.subr.mxu0 %v11381
    %11789 = vmatpush2.msra.mxu0 %v11380
    %11790 = vmatprep.subr.mxu0 %v11379
    %11791 = vmatpush2.msra.mxu0 %v11378
    %11792 = vmatprep.subr.mxu0 %v11377
    %11793 = vmatpush2.msra.mxu0 %v11376
    %11794 = vmatprep.mubr.f32.mxu0 %v11665
    %11795 = vmatmul.mubr.f32.gmra.mxu0 %v11664
    %v11796 = vpop.f32.mrf.mxu0
    %v11797 = vadd.f32 0.0, %v11796
    %v11798 = vpop.f32.mrf.mxu0
    %v11799 = vadd.f32 0.0, %v11798
    %11800 = vdwg.mxu0
    %11801 = vmatprep.subr.mxu0 %v11439
    %11802 = vmatpush1.msra.mxu0 %v11438
    %11803 = vmatprep.subr.mxu0 %v11437
    %11804 = vmatpush1.msra.mxu0 %v11436
    %11805 = vmatprep.subr.mxu0 %v11435
    %11806 = vmatpush1.msra.mxu0 %v11434
    %11807 = vmatprep.subr.mxu0 %v11433
    %11808 = vmatpush1.msra.mxu0 %v11432
    %11809 = vmatprep.subr.mxu0 %v11431
    %11810 = vmatpush1.msra.mxu0 %v11430
    %11811 = vmatprep.subr.mxu0 %v11429
    %11812 = vmatpush1.msra.mxu0 %v11428
    %11813 = vmatprep.subr.mxu0 %v11427
    %11814 = vmatpush1.msra.mxu0 %v11426
    %11815 = vmatprep.subr.mxu0 %v11425
    %11816 = vmatpush1.msra.mxu0 %v11424
    %11817 = vmatprep.subr.mxu0 %v11423
    %11818 = vmatpush1.msra.mxu0 %v11422
    %11819 = vmatprep.subr.mxu0 %v11421
    %11820 = vmatpush1.msra.mxu0 %v11420
    %11821 = vmatprep.subr.mxu0 %v11419
    %11822 = vmatpush1.msra.mxu0 %v11418
    %11823 = vmatprep.subr.mxu0 %v11417
    %11824 = vmatpush1.msra.mxu0 %v11416
    %11825 = vmatprep.subr.mxu0 %v11415
    %11826 = vmatpush1.msra.mxu0 %v11414
    %11827 = vmatprep.subr.mxu0 %v11413
    %11828 = vmatpush1.msra.mxu0 %v11412
    %11829 = vmatprep.subr.mxu0 %v11411
    %11830 = vmatpush1.msra.mxu0 %v11410
    %11831 = vmatprep.subr.mxu0 %v11409
    %11832 = vmatpush1.msra.mxu0 %v11408
    %11833 = vmatprep.subr.mxu0 %v11471
    %11834 = vmatpush2.msra.mxu0 %v11470
    %11835 = vmatprep.subr.mxu0 %v11469
    %11836 = vmatpush2.msra.mxu0 %v11468
    %11837 = vmatprep.subr.mxu0 %v11467
    %11838 = vmatpush2.msra.mxu0 %v11466
    %11839 = vmatprep.subr.mxu0 %v11465
    %11840 = vmatpush2.msra.mxu0 %v11464
    %11841 = vmatprep.subr.mxu0 %v11463
    %11842 = vmatpush2.msra.mxu0 %v11462
    %11843 = vmatprep.subr.mxu0 %v11461
    %11844 = vmatpush2.msra.mxu0 %v11460
    %11845 = vmatprep.subr.mxu0 %v11459
    %11846 = vmatpush2.msra.mxu0 %v11458
    %11847 = vmatprep.subr.mxu0 %v11457
    %11848 = vmatpush2.msra.mxu0 %v11456
    %11849 = vmatprep.subr.mxu0 %v11455
    %11850 = vmatpush2.msra.mxu0 %v11454
    %11851 = vmatprep.subr.mxu0 %v11453
    %11852 = vmatpush2.msra.mxu0 %v11452
    %11853 = vmatprep.subr.mxu0 %v11451
    %11854 = vmatpush2.msra.mxu0 %v11450
    %11855 = vmatprep.subr.mxu0 %v11449
    %11856 = vmatpush2.msra.mxu0 %v11448
    %11857 = vmatprep.subr.mxu0 %v11447
    %11858 = vmatpush2.msra.mxu0 %v11446
    %11859 = vmatprep.subr.mxu0 %v11445
    %11860 = vmatpush2.msra.mxu0 %v11444
    %11861 = vmatprep.subr.mxu0 %v11443
    %11862 = vmatpush2.msra.mxu0 %v11442
    %11863 = vmatprep.subr.mxu0 %v11441
    %11864 = vmatpush2.msra.mxu0 %v11440
    %11865 = vmatprep.mubr.f32.mxu0 %v11667
    %11866 = vmatmul.mubr.f32.gmra.mxu0 %v11666
    %v11867 = vpop.f32.mrf.mxu0
    %v11868 = vadd.f32 %v11797, %v11867
    %v11869 = vpop.f32.mrf.mxu0
    %v11870 = vadd.f32 %v11799, %v11869
    %11871 = vdwg.mxu0
    %11872 = vmatprep.subr.mxu0 %v11503
    %11873 = vmatpush1.msra.mxu0 %v11502
    %11874 = vmatprep.subr.mxu0 %v11501
    %11875 = vmatpush1.msra.mxu0 %v11500
    %11876 = vmatprep.subr.mxu0 %v11499
    %11877 = vmatpush1.msra.mxu0 %v11498
    %11878 = vmatprep.subr.mxu0 %v11497
    %11879 = vmatpush1.msra.mxu0 %v11496
    %11880 = vmatprep.subr.mxu0 %v11495
    %11881 = vmatpush1.msra.mxu0 %v11494
    %11882 = vmatprep.subr.mxu0 %v11493
    %11883 = vmatpush1.msra.mxu0 %v11492
    %11884 = vmatprep.subr.mxu0 %v11491
    %11885 = vmatpush1.msra.mxu0 %v11490
    %11886 = vmatprep.subr.mxu0 %v11489
    %11887 = vmatpush1.msra.mxu0 %v11488
    %11888 = vmatprep.subr.mxu0 %v11487
    %11889 = vmatpush1.msra.mxu0 %v11486
    %11890 = vmatprep.subr.mxu0 %v11485
    %11891 = vmatpush1.msra.mxu0 %v11484
    %11892 = vmatprep.subr.mxu0 %v11483
    %11893 = vmatpush1.msra.mxu0 %v11482
    %11894 = vmatprep.subr.mxu0 %v11481
    %11895 = vmatpush1.msra.mxu0 %v11480
    %11896 = vmatprep.subr.mxu0 %v11479
    %11897 = vmatpush1.msra.mxu0 %v11478
    %11898 = vmatprep.subr.mxu0 %v11477
    %11899 = vmatpush1.msra.mxu0 %v11476
    %11900 = vmatprep.subr.mxu0 %v11475
    %11901 = vmatpush1.msra.mxu0 %v11474
    %11902 = vmatprep.subr.mxu0 %v11473
    %11903 = vmatpush1.msra.mxu0 %v11472
    %11904 = vmatprep.subr.mxu0 %v11535
    %11905 = vmatpush2.msra.mxu0 %v11534
    %11906 = vmatprep.subr.mxu0 %v11533
    %11907 = vmatpush2.msra.mxu0 %v11532
    %11908 = vmatprep.subr.mxu0 %v11531
    %11909 = vmatpush2.msra.mxu0 %v11530
    %11910 = vmatprep.subr.mxu0 %v11529
    %11911 = vmatpush2.msra.mxu0 %v11528
    %11912 = vmatprep.subr.mxu0 %v11527
    %11913 = vmatpush2.msra.mxu0 %v11526
    %11914 = vmatprep.subr.mxu0 %v11525
    %11915 = vmatpush2.msra.mxu0 %v11524
    %11916 = vmatprep.subr.mxu0 %v11523
    %11917 = vmatpush2.msra.mxu0 %v11522
    %11918 = vmatprep.subr.mxu0 %v11521
    %11919 = vmatpush2.msra.mxu0 %v11520
    %11920 = vmatprep.subr.mxu0 %v11519
    %11921 = vmatpush2.msra.mxu0 %v11518
    %11922 = vmatprep.subr.mxu0 %v11517
    %11923 = vmatpush2.msra.mxu0 %v11516
    %11924 = vmatprep.subr.mxu0 %v11515
    %11925 = vmatpush2.msra.mxu0 %v11514
    %11926 = vmatprep.subr.mxu0 %v11513
    %11927 = vmatpush2.msra.mxu0 %v11512
    %11928 = vmatprep.subr.mxu0 %v11511
    %11929 = vmatpush2.msra.mxu0 %v11510
    %11930 = vmatprep.subr.mxu0 %v11509
    %11931 = vmatpush2.msra.mxu0 %v11508
    %11932 = vmatprep.subr.mxu0 %v11507
    %11933 = vmatpush2.msra.mxu0 %v11506
    %11934 = vmatprep.subr.mxu0 %v11505
    %11935 = vmatpush2.msra.mxu0 %v11504
    %11936 = vmatprep.mubr.f32.mxu0 %v11701
    %11937 = vmatmul.mubr.f32.gmra.mxu0 %v11700
    %v11938 = vpop.f32.mrf.mxu0
    %v11939 = vadd.f32 %v11868, %v11938
    %v11940 = vpop.f32.mrf.mxu0
    %v11941 = vadd.f32 %v11870, %v11940
    %11942 = vdwg.mxu0
    %11943 = vmatprep.subr.mxu0 %v11567
    %11944 = vmatpush1.msra.mxu0 %v11566
    %11945 = vmatprep.subr.mxu0 %v11565
    %11946 = vmatpush1.msra.mxu0 %v11564
    %11947 = vmatprep.subr.mxu0 %v11563
    %11948 = vmatpush1.msra.mxu0 %v11562
    %11949 = vmatprep.subr.mxu0 %v11561
    %11950 = vmatpush1.msra.mxu0 %v11560
    %11951 = vmatprep.subr.mxu0 %v11559
    %11952 = vmatpush1.msra.mxu0 %v11558
    %11953 = vmatprep.subr.mxu0 %v11557
    %11954 = vmatpush1.msra.mxu0 %v11556
    %11955 = vmatprep.subr.mxu0 %v11555
    %11956 = vmatpush1.msra.mxu0 %v11554
    %11957 = vmatprep.subr.mxu0 %v11553
    %11958 = vmatpush1.msra.mxu0 %v11552
    %11959 = vmatprep.subr.mxu0 %v11551
    %11960 = vmatpush1.msra.mxu0 %v11550
    %11961 = vmatprep.subr.mxu0 %v11549
    %11962 = vmatpush1.msra.mxu0 %v11548
    %11963 = vmatprep.subr.mxu0 %v11547
    %11964 = vmatpush1.msra.mxu0 %v11546
    %11965 = vmatprep.subr.mxu0 %v11545
    %11966 = vmatpush1.msra.mxu0 %v11544
    %11967 = vmatprep.subr.mxu0 %v11543
    %11968 = vmatpush1.msra.mxu0 %v11542
    %11969 = vmatprep.subr.mxu0 %v11541
    %11970 = vmatpush1.msra.mxu0 %v11540
    %11971 = vmatprep.subr.mxu0 %v11539
    %11972 = vmatpush1.msra.mxu0 %v11538
    %11973 = vmatprep.subr.mxu0 %v11537
    %11974 = vmatpush1.msra.mxu0 %v11536
    %11975 = vmatprep.subr.mxu0 %v11599
    %11976 = vmatpush2.msra.mxu0 %v11598
    %11977 = vmatprep.subr.mxu0 %v11597
    %11978 = vmatpush2.msra.mxu0 %v11596
    %11979 = vmatprep.subr.mxu0 %v11595
    %11980 = vmatpush2.msra.mxu0 %v11594
    %11981 = vmatprep.subr.mxu0 %v11593
    %11982 = vmatpush2.msra.mxu0 %v11592
    %11983 = vmatprep.subr.mxu0 %v11591
    %11984 = vmatpush2.msra.mxu0 %v11590
    %11985 = vmatprep.subr.mxu0 %v11589
    %11986 = vmatpush2.msra.mxu0 %v11588
    %11987 = vmatprep.subr.mxu0 %v11587
    %11988 = vmatpush2.msra.mxu0 %v11586
    %11989 = vmatprep.subr.mxu0 %v11585
    %11990 = vmatpush2.msra.mxu0 %v11584
    %11991 = vmatprep.subr.mxu0 %v11583
    %11992 = vmatpush2.msra.mxu0 %v11582
    %11993 = vmatprep.subr.mxu0 %v11581
    %11994 = vmatpush2.msra.mxu0 %v11580
    %11995 = vmatprep.subr.mxu0 %v11579
    %11996 = vmatpush2.msra.mxu0 %v11578
    %11997 = vmatprep.subr.mxu0 %v11577
    %11998 = vmatpush2.msra.mxu0 %v11576
    %11999 = vmatprep.subr.mxu0 %v11575
    %12000 = vmatpush2.msra.mxu0 %v11574
    %12001 = vmatprep.subr.mxu0 %v11573
    %12002 = vmatpush2.msra.mxu0 %v11572
    %12003 = vmatprep.subr.mxu0 %v11571
    %12004 = vmatpush2.msra.mxu0 %v11570
    %12005 = vmatprep.subr.mxu0 %v11569
    %12006 = vmatpush2.msra.mxu0 %v11568
    %12007 = vmatprep.mubr.f32.mxu0 %v11703
    %12008 = vmatmul.mubr.f32.gmra.mxu0 %v11702
    %v12009 = vpop.f32.mrf.mxu0
    %v12010 = vadd.f32 %v11939, %v12009
    %v12011 = vpop.f32.mrf.mxu0
    %v12012 = vadd.f32 %v11941, %v12011
    %12013 = vdwg.mxu0
    %12014 = vmatprep.subr.mxu0 %v11631
    %12015 = vmatpush1.msra.mxu0 %v11630
    %12016 = vmatprep.subr.mxu0 %v11629
    %12017 = vmatpush1.msra.mxu0 %v11628
    %12018 = vmatprep.subr.mxu0 %v11627
    %12019 = vmatpush1.msra.mxu0 %v11626
    %12020 = vmatprep.subr.mxu0 %v11625
    %12021 = vmatpush1.msra.mxu0 %v11624
    %12022 = vmatprep.subr.mxu0 %v11623
    %12023 = vmatpush1.msra.mxu0 %v11622
    %12024 = vmatprep.subr.mxu0 %v11621
    %12025 = vmatpush1.msra.mxu0 %v11620
    %12026 = vmatprep.subr.mxu0 %v11619
    %12027 = vmatpush1.msra.mxu0 %v11618
    %12028 = vmatprep.subr.mxu0 %v11617
    %12029 = vmatpush1.msra.mxu0 %v11616
    %12030 = vmatprep.subr.mxu0 %v11615
    %12031 = vmatpush1.msra.mxu0 %v11614
    %12032 = vmatprep.subr.mxu0 %v11613
    %12033 = vmatpush1.msra.mxu0 %v11612
    %12034 = vmatprep.subr.mxu0 %v11611
    %12035 = vmatpush1.msra.mxu0 %v11610
    %12036 = vmatprep.subr.mxu0 %v11609
    %12037 = vmatpush1.msra.mxu0 %v11608
    %12038 = vmatprep.subr.mxu0 %v11607
    %12039 = vmatpush1.msra.mxu0 %v11606
    %12040 = vmatprep.subr.mxu0 %v11605
    %12041 = vmatpush1.msra.mxu0 %v11604
    %12042 = vmatprep.subr.mxu0 %v11603
    %12043 = vmatpush1.msra.mxu0 %v11602
    %12044 = vmatprep.subr.mxu0 %v11601
    %12045 = vmatpush1.msra.mxu0 %v11600
    %12046 = vmatprep.subr.mxu0 0.0
    %12047 = vmatpush2.msra.mxu0 0.0
    %12048 = vmatprep.subr.mxu0 0.0
    %12049 = vmatpush2.msra.mxu0 0.0
    %12050 = vmatprep.subr.mxu0 0.0
    %12051 = vmatpush2.msra.mxu0 0.0
    %12052 = vmatprep.subr.mxu0 0.0
    %12053 = vmatpush2.msra.mxu0 0.0
    %12054 = vmatprep.subr.mxu0 0.0
    %12055 = vmatpush2.msra.mxu0 0.0
    %12056 = vmatprep.subr.mxu0 0.0
    %12057 = vmatpush2.msra.mxu0 0.0
    %12058 = vmatprep.subr.mxu0 0.0
    %12059 = vmatpush2.msra.mxu0 0.0
    %12060 = vmatprep.subr.mxu0 0.0
    %12061 = vmatpush2.msra.mxu0 0.0
    %12062 = vmatprep.subr.mxu0 0.0
    %12063 = vmatpush2.msra.mxu0 0.0
    %12064 = vmatprep.subr.mxu0 0.0
    %12065 = vmatpush2.msra.mxu0 0.0
    %12066 = vmatprep.subr.mxu0 0.0
    %12067 = vmatpush2.msra.mxu0 0.0
    %12068 = vmatprep.subr.mxu0 0.0
    %12069 = vmatpush2.msra.mxu0 0.0
    %12070 = vmatprep.subr.mxu0 0.0
    %12071 = vmatpush2.msra.mxu0 0.0
    %12072 = vmatprep.subr.mxu0 0.0
    %12073 = vmatpush2.msra.mxu0 0.0
    %12074 = vmatprep.subr.mxu0 0.0
    %12075 = vmatpush2.msra.mxu0 0.0
    %12076 = vmatprep.subr.mxu0 0.0
    %12077 = vmatpush2.msra.mxu0 0.0
    %12078 = vmatprep.mubr.f32.mxu0 0.0
    %12079 = vmatmul.mubr.f32.gmra.mxu0 %v11720
    %v12080 = vpop.f32.mrf.mxu0
    %v12081 = vadd.f32 %v12010, %v12080
    %v12082 = vpop.f32.mrf.mxu0
    %v12083 = vadd.f32 %v12012, %v12082
    %12084 = vdwg.mxu0
    %v12085 = vrot.slane %v12081, 4
    %v12086 = vadd.f32 %v12081, %v12085
    %v12087 = vrot.slane %v12086, 2
    %v12088 = vadd.f32 %v12086, %v12087
    %v12089 = vrot.slane %v12088, 1
    %v12090 = vadd.f32 %v12088, %v12089
    %v12091 = vrot.slane %v12083, 4
    %v12092 = vadd.f32 %v12083, %v12091
    %v12093 = vrot.slane %v12092, 2
    %v12094 = vadd.f32 %v12092, %v12093
    %v12095 = vrot.slane %v12094, 1
    %v12096 = vadd.f32 %v12094, %v12095
    %v12097 = vrcp.pop 8.0
    %v12098 = vmul.f32 %v12090, %v12097
    %v12099 = vmul.f32 %v12096, %v12097
    %v12100 = vsub.f32 %v12081, %v12098
    %v12101 = vsub.f32 %v12083, %v12099
    %v12102 = vmul.f32 %v12100, %v12100
    %v12103 = vmul.f32 %v12101, %v12101
    %v12104 = vrot.slane %v12102, 4
    %v12105 = vadd.f32 %v12102, %v12104
    %v12106 = vrot.slane %v12105, 2
    %v12107 = vadd.f32 %v12105, %v12106
    %v12108 = vrot.slane %v12107, 1
    %v12109 = vadd.f32 %v12107, %v12108
    %v12110 = vrot.slane %v12103, 4
    %v12111 = vadd.f32 %v12103, %v12110
    %v12112 = vrot.slane %v12111, 2
    %v12113 = vadd.f32 %v12111, %v12112
    %v12114 = vrot.slane %v12113, 1
    %v12115 = vadd.f32 %v12113, %v12114
    %v12116 = vmul.f32 %v12109, %v12097
    %v12117 = vmul.f32 %v12115, %v12097
    %v12118 = vld [vmem:[#allocation19] sm:$0x3]
    %v12119 = vadd.f32 %v12116, 1e-05
    %v12120 = vadd.f32 %v12117, 1e-05
    %v12121 = vrsqrt.pop %v12119
    %v12122 = vrsqrt.pop %v12120
    %v12125 = vcombine.low %v12121, %v12122
    %v12127 = vunpack.c.l.s4 1966171168
    %v12128 = vunpack.c.0.s8 %v12127
    %v12129 = vlaneseq
    %v12130 = vshrl.u32 %v12129, 7
    %v12131 = vsub.s32 %v12128, %v12130
    %v12132 = vrot.slane %v12125, %v12131
    %v12134 = vunpack.c.l.s4 1966171168
    %v12135 = vunpack.c.0.s8 %v12134
    %v12136 = vlaneseq
    %v12137 = vshrl.u32 %v12136, 7
    %v12138 = vsub.s32 %v12135, %v12137
    %v12139 = vrot.slane %v12132, %v12138
    %v12141 = vmul.f32 %v12118, %v12139
    %v12142 = vld [vmem:[#allocation20] sm:$0x3]
    %v12144 = vlaneseq
    %v12145 = vshrl.u32 %v12144, 7
    %v12146 = vsub.s32 0, %v12145
    %v12147 = vrot.slane %v12141, %v12146
    %v12148 = vlaneseq
    %v12149 = vshrl.u32 %v12148, 7
    %v12150 = vsub.s32 1, %v12149
    %v12151 = vrot.slane %v12141, %v12150
    %v12154 = vmul.f32 %v12098, %v12147
    %v12155 = vmul.f32 %v12099, %v12151
    %v12158 = vcombine.low %v12154, %v12155
    %v12160 = vunpack.c.l.s4 1966171168
    %v12161 = vunpack.c.0.s8 %v12160
    %v12162 = vlaneseq
    %v12163 = vshrl.u32 %v12162, 7
    %v12164 = vsub.s32 %v12161, %v12163
    %v12165 = vrot.slane %v12158, %v12164
    %v12167 = vunpack.c.l.s4 1966171168
    %v12168 = vunpack.c.0.s8 %v12167
    %v12169 = vlaneseq
    %v12170 = vshrl.u32 %v12169, 7
    %v12171 = vsub.s32 %v12168, %v12170
    %v12172 = vrot.slane %v12165, %v12171
    %v12174 = vsub.f32 %v12142, %v12172
    %v12175 = vmul.f32 %v12081, %v12147
    %v12176 = vmul.f32 %v12083, %v12151
    %v12178 = vlaneseq
    %v12179 = vshrl.u32 %v12178, 7
    %v12180 = vsub.s32 0, %v12179
    %v12181 = vrot.slane %v12174, %v12180
    %v12182 = vlaneseq
    %v12183 = vshrl.u32 %v12182, 7
    %v12184 = vsub.s32 1, %v12183
    %v12185 = vrot.slane %v12174, %v12184
    %v12188 = vadd.f32 %v12175, %v12181
    %v12189 = vadd.f32 %v12176, %v12185
    %v12190 = vmax.f32 %v12188, 0.0
    %v12191 = vmax.f32 %v12189, 0.0
    %v12194 = vcombine.low %v12190, %v12191
    %v12195 = vcombine.high %v12190, %v12191
    %v12198 = vcombine.high %v12194, %v12194
    %v12199 = vcombine.high %v12195, %v12195
    %vm12202 = vcmask 1043456
    %v12203 = vsel %vm12202, %v12194, 0.0
    %v12204 = vrot.slane %v12203, 4
    %v12205 = vadd.f32 %v12203, %v12204
    %v12206 = vrot.slane %v12205, 2
    %v12207 = vadd.f32 %v12205, %v12206
    %v12208 = vrot.slane %v12207, 1
    %v12209 = vadd.f32 %v12207, %v12208
    %v12210 = vsel %vm12202, %v12198, 0.0
    %v12211 = vrot.slane %v12210, 4
    %v12212 = vadd.f32 %v12210, %v12211
    %v12213 = vrot.slane %v12212, 2
    %v12214 = vadd.f32 %v12212, %v12213
    %v12215 = vrot.slane %v12214, 1
    %v12216 = vadd.f32 %v12214, %v12215
    %v12217 = vsel %vm12202, %v12195, 0.0
    %v12218 = vrot.slane %v12217, 4
    %v12219 = vadd.f32 %v12217, %v12218
    %v12220 = vrot.slane %v12219, 2
    %v12221 = vadd.f32 %v12219, %v12220
    %v12222 = vrot.slane %v12221, 1
    %v12223 = vadd.f32 %v12221, %v12222
    %v12224 = vsel %vm12202, %v12199, 0.0
    %v12225 = vrot.slane %v12224, 4
    %v12226 = vadd.f32 %v12224, %v12225
    %v12227 = vrot.slane %v12226, 2
    %v12228 = vadd.f32 %v12226, %v12227
    %v12229 = vrot.slane %v12228, 1
    %v12230 = vadd.f32 %v12228, %v12229
    %v12231 = vrcp.pop 4.0
    %v12232 = vmul.f32 %v12209, %v12231
    %v12233 = vmul.f32 %v12216, %v12231
    %v12234 = vmul.f32 %v12223, %v12231
    %v12235 = vmul.f32 %v12230, %v12231
    %v12240 = vcombine.low %v12232, %v12233
    %v12242 = vunpack.c.l.s4 1983009808
    %v12243 = vunpack.c.0.s8 %v12242
    %v12244 = vlaneseq
    %v12245 = vshrl.u32 %v12244, 7
    %v12246 = vsub.s32 %v12243, %v12245
    %v12247 = vrot.slane %v12240, %v12246
    %v12248 = vcombine.low %v12234, %v12235
    %v12250 = vunpack.c.l.s4 1983009808
    %v12251 = vunpack.c.0.s8 %v12250
    %v12252 = vlaneseq
    %v12253 = vshrl.u32 %v12252, 7
    %v12254 = vsub.s32 %v12251, %v12253
    %v12255 = vrot.slane %v12248, %v12254
    %v12256 = vsel %vm7989, %v12247, %v12247
    %v12257 = vsel %vm7993, %v12247, %v12256
    %v12258 = vrot.slane %v12255, 7
    %v12259 = vsel %vm7983, %v12258, %v12257
    %v12260 = vsel %vm7987, %v12258, %v12259
    %v12261 = vsel %vm7991, %v12258, %v12260
    %v12262 = vsel %vm7995, %v12258, %v12261
    %12264 = vst [vmem:[%s13] sm:$0xf] %v12262
    // Predicated region
    $region94: #{custom_cnn_forward.1} parent=1 // pred_check
      _
    $region95: #{custom_cnn_forward.1} parent=1 // pred_check_branch
      %12266 = sbr.rel (0) target = $region97
    $region96: #{custom_cnn_forward.1} parent=1 // pred_region
      _
    $region97: #{custom_cnn_forward.1} parent=1 // pred_fallthru
      _
    // Predicated region
    $region98: #{custom_cnn_forward.1} parent=1 // pred_check
      _
    $region99: #{custom_cnn_forward.1} parent=1 // pred_check_branch
      %12268 = sbr.rel (0) target = $region101
    $region100: #{custom_cnn_forward.1} parent=1 // pred_region
      _
    $region101: #{custom_cnn_forward.1} parent=1 // pred_fallthru
      _
    %12269 = vsyncpa [#allocation7], 1
    %12270 = vsyncpa [#allocation9], 1
    %12271 = vsyncpa [#allocation12], 1
    %12272 = vsyncpa [#allocation15], 1
    %12273 = vsyncpa [#allocation18], 1
    %12274 = vsyncpa [#allocation21], 1

</llo_original>
